<compile_context>
chip_gen: v6e
topology: v6e:2x2x1
jax: 0.10.0
libtpu: 0.0.40
codegen_flags: <defaults>
</compile_context>

<pallas_src>
import functools

import jax
import jax.numpy as jnp
from jax.experimental import pallas as pl
from jax.experimental.pallas import tpu as pltpu

BN_EPS = 1e-5
LRELU_SLOPE = 0.2

FUSED_MAX_M = 1024  # rows at/below this use the single fused kernel
TILE_M = 512        # rows per grid step in the tiled two-pass path (mult. of 8)
OUT_PAD = 128       # classifier output padded to a lane-dense 128 columns


def _vmem_spec():
    return pl.BlockSpec(memory_space=pltpu.MemorySpace.VMEM)


# ---------------------------------------------------------------------------
# Pallas kernels
# ---------------------------------------------------------------------------
def _mm_bn_lrelu_fused_kernel(x_ref, w_ref, g_ref, b_ref, o_ref):
    """o = LeakyReLU(BN(x @ w)); BN batch stats over rows (per column).

    Bias before BN is omitted (cancelled by mean subtraction).  Stats use one
    traversal (sum / sum-of-squares) and the BN affine is folded into
    scale/shift so normalization is a single fused multiply-add pass.
    """
    y = jnp.dot(x_ref[...], w_ref[...], preferred_element_type=jnp.float32)
    m = y.shape[0]
    s = jnp.sum(y, axis=0, keepdims=True)
    sq = jnp.sum(y * y, axis=0, keepdims=True)
    mean = s * (1.0 / m)
    var = sq * (1.0 / m) - mean * mean           # biased variance (train mode)
    inv = jax.lax.rsqrt(var + BN_EPS)
    scale = g_ref[...] * inv
    shift = b_ref[...] - mean * scale
    y = y * scale + shift
    o_ref[...] = jnp.where(y > 0, y, LRELU_SLOPE * y).astype(o_ref.dtype)


def _mm_stats_kernel(x_ref, w_ref, y_ref, s_ref, sq_ref):
    """Tiled pass 1: y_tile = x_tile @ w; emit per-tile per-column partial
    sum / sum-of-squares (broadcast over 8 sublanes to keep blocks aligned)."""
    y = jnp.dot(x_ref[...], w_ref[...], preferred_element_type=jnp.float32)
    y_ref[...] = y
    n = y.shape[1]
    s = jnp.sum(y, axis=0)
    sq = jnp.sum(y * y, axis=0)
    s_ref[...] = jnp.broadcast_to(s, (8, n))
    sq_ref[...] = jnp.broadcast_to(sq, (8, n))


def _bn_lrelu_kernel(y_ref, scale_ref, shift_ref, o_ref):
    """Tiled pass 2: o = LeakyReLU(y * scale + shift)."""
    y = y_ref[...] * scale_ref[...] + shift_ref[...]
    o_ref[...] = jnp.where(y > 0, y, LRELU_SLOPE * y).astype(o_ref.dtype)


def _fc_head_kernel(x_ref, w1_ref, g_ref, b_ref, w2_ref, b2_ref, o_ref):
    """Fused FC head: Linear(2304->1024) + BN1d + LeakyReLU + Linear(1024->128).

    Keeps the (B,1024) intermediate on-chip (no HBM round trip, one launch).
    """
    y = jnp.dot(x_ref[...], w1_ref[...], preferred_element_type=jnp.float32)
    m = y.shape[0]
    s = jnp.sum(y, axis=0, keepdims=True)
    sq = jnp.sum(y * y, axis=0, keepdims=True)
    mean = s * (1.0 / m)
    var = sq * (1.0 / m) - mean * mean
    inv = jax.lax.rsqrt(var + BN_EPS)
    scale = g_ref[...] * inv
    shift = b_ref[...] - mean * scale
    y = y * scale + shift
    y = jnp.where(y > 0, y, LRELU_SLOPE * y)
    o_ref[...] = (
        jnp.dot(y.astype(w2_ref.dtype), w2_ref[...],
                preferred_element_type=jnp.float32)
        + b2_ref[...]
    ).astype(o_ref.dtype)


# ---------------------------------------------------------------------------
# Kernel wrappers
# ---------------------------------------------------------------------------
def matmul_bn_lrelu(x, w, gamma, beta, out_dtype=jnp.float32):
    """LeakyReLU(BN(x @ w)) with per-column batch statistics.

    x: (M, K) f32/bf16, w: (K, N) bf16 (pre-packed), gamma/beta: (1, N) f32.
    Small M -> single fused kernel; large M -> M-tiled two-pass BN.
    """
    M, K = x.shape
    N = w.shape[1]
    xb = x.astype(jnp.bfloat16)
    out_bytes = jnp.dtype(out_dtype).itemsize

    if M <= FUSED_MAX_M:
        return pl.pallas_call(
            _mm_bn_lrelu_fused_kernel,
            out_shape=jax.ShapeDtypeStruct((M, N), out_dtype),
            in_specs=[_vmem_spec()] * 4,
            out_specs=_vmem_spec(),
            cost_estimate=pl.CostEstimate(
                flops=2 * M * K * N, transcendentals=0,
                bytes_accessed=2 * M * K + 2 * K * N + out_bytes * M * N),
        )(xb, w, gamma, beta)

    # ---- Tiled two-pass path (large batches) ------------------------------
    grid_m = pl.cdiv(M, TILE_M)
    m_pad = grid_m * TILE_M
    if m_pad != M:
        # Zero rows contribute nothing to sum/sumsq (no bias before BN), so
        # only the divisor (true M) has to be corrected below.
        xb = jnp.pad(xb, ((0, m_pad - M), (0, 0)))

    y, ps, psq = pl.pallas_call(
        _mm_stats_kernel,
        out_shape=(jax.ShapeDtypeStruct((m_pad, N), jnp.float32),
                   jax.ShapeDtypeStruct((grid_m * 8, N), jnp.float32),
                   jax.ShapeDtypeStruct((grid_m * 8, N), jnp.float32)),
        grid=(grid_m,),
        in_specs=[pl.BlockSpec((TILE_M, K), lambda i: (i, 0)),
                  pl.BlockSpec((K, N), lambda i: (0, 0))],
        out_specs=(pl.BlockSpec((TILE_M, N), lambda i: (i, 0)),
                   pl.BlockSpec((8, N), lambda i: (i, 0)),
                   pl.BlockSpec((8, N), lambda i: (i, 0))),
        compiler_params=pltpu.CompilerParams(
            dimension_semantics=("parallel",)),
        cost_estimate=pl.CostEstimate(
            flops=2 * m_pad * K * N, transcendentals=0,
            bytes_accessed=2 * m_pad * K + 2 * K * N + 4 * m_pad * N),
    )(xb, w)

    total_s = ps[0::8].sum(axis=0)        # (N,)
    total_sq = psq[0::8].sum(axis=0)      # (N,)
    mean = total_s / M
    var = total_sq / M - mean * mean
    inv = jax.lax.rsqrt(var + BN_EPS)
    g = gamma.reshape(-1)
    scale = (g * inv).reshape(1, N)
    shift = (beta.reshape(-1) - mean * g * inv).reshape(1, N)

    out = pl.pallas_call(
        _bn_lrelu_kernel,
        out_shape=jax.ShapeDtypeStruct((m_pad, N), out_dtype),
        grid=(grid_m,),
        in_specs=[pl.BlockSpec((TILE_M, N), lambda i: (i, 0)),
                  pl.BlockSpec((1, N), lambda i: (0, 0)),
                  pl.BlockSpec((1, N), lambda i: (0, 0))],
        out_specs=pl.BlockSpec((TILE_M, N), lambda i: (i, 0)),
        compiler_params=pltpu.CompilerParams(
            dimension_semantics=("parallel",)),
    )(y, scale, shift)
    return out[:M]


def fc_head(h, params):
    """Fused fc1+BN1d+LReLU+fc2 over the whole batch (weights fit VMEM)."""
    # TODO(synk): assumes the whole batch fits VMEM in one shot (fine for GAN
    # batch sizes); very large batches would need an M-tiled two-pass variant.
    B = h.shape[0]
    n_pad = params["fc2_w"].shape[1]
    return pl.pallas_call(
        _fc_head_kernel,
        out_shape=jax.ShapeDtypeStruct((B, n_pad), jnp.float32),
        in_specs=[_vmem_spec()] * 6,
        out_specs=_vmem_spec(),
    )(h.astype(jnp.bfloat16), params["fc1_w"], params["bn4_g"],
      params["bn4_b"], params["fc2_w"], params["fc2_b"])


# ---------------------------------------------------------------------------
# Glue: im2col (NHWC) so each conv becomes a single matmul on the MXU
# ---------------------------------------------------------------------------
def im2col_nhwc(x, kh, kw, stride, pad):
    """x: (B, H, W, C) -> (B*Ho*Wo, kh*kw*C), columns in (ki, kj, c) order."""
    # TODO(synk): for very large batches, fold this into the Pallas kernel as
    # a K-loop over the 16 (ki,kj) taps to avoid materializing the expanded
    # im2col matrix in HBM.
    B, H, W, C = x.shape
    Ho = (H + 2 * pad - kh) // stride + 1
    Wo = (W + 2 * pad - kw) // stride + 1
    xp = jnp.pad(x, ((0, 0), (pad, pad), (pad, pad), (0, 0)))
    patches = []
    for i in range(kh):
        for j in range(kw):
            patches.append(
                xp[:, i: i + stride * Ho: stride, j: j + stride * Wo: stride, :]
            )                                          # (B, Ho, Wo, C)
    col = jnp.concatenate(patches, axis=-1)            # (B, Ho, Wo, kh*kw*C)
    return col.reshape(B * Ho * Wo, kh * kw * C), Ho, Wo


def conv_block(h, params, idx):
    """Conv2d(4,2,1) + BN2d(batch stats) + LeakyReLU(0.2), NHWC bf16 in/out."""
    w = params[f"conv{idx}_w"]          # (kh*kw*Cin, Cout) bf16, pre-packed
    g = params[f"bn{idx}_g"]
    b = params[f"bn{idx}_b"]
    B = h.shape[0]
    cols, Ho, Wo = im2col_nhwc(h, 4, 4, 2, 1)
    y = matmul_bn_lrelu(cols, w, g, b, out_dtype=jnp.bfloat16)  # (B*Ho*Wo, Cout)
    return y.reshape(B, Ho, Wo, w.shape[1])             # stay NHWC, bf16


# ---------------------------------------------------------------------------
# Parameters: raw (PyTorch-layout) init + one-time kernel-layout preparation
# ---------------------------------------------------------------------------
def init_raw_params(key, class_num):
    """Mirrors utils.initialize_weights: N(0, 0.02) weights, zero biases,
    BN gamma=1 / beta=0.  Conv/fc1 biases are omitted: they are zero AND are
    mathematically cancelled by train-mode BN mean subtraction."""
    ks = jax.random.split(key, 8)
    p = {}
    p["conv1_w"] = 0.02 * jax.random.normal(ks[0], (64, 1, 4, 4), jnp.float32)
    p["bn1_g"], p["bn1_b"] = jnp.ones((64,), jnp.float32), jnp.zeros((64,), jnp.float32)
    p["conv2_w"] = 0.02 * jax.random.normal(ks[1], (128, 64, 4, 4), jnp.float32)
    p["bn2_g"], p["bn2_b"] = jnp.ones((128,), jnp.float32), jnp.zeros((128,), jnp.float32)
    p["conv3_w"] = 0.02 * jax.random.normal(ks[2], (256, 128, 4, 4), jnp.float32)
    p["bn3_g"], p["bn3_b"] = jnp.ones((256,), jnp.float32), jnp.zeros((256,), jnp.float32)
    p["fc1_w"] = 0.02 * jax.random.normal(ks[3], (1024, 256 * 3 * 3), jnp.float32)
    p["bn4_g"], p["bn4_b"] = jnp.ones((1024,), jnp.float32), jnp.zeros((1024,), jnp.float32)
    p["fc2_w"] = 0.02 * jax.random.normal(ks[4], (class_num + 1, 1024), jnp.float32)
    p["fc2_b"] = jnp.zeros((class_num + 1,), jnp.float32)
    return p


def prepare_params(raw):
    """One-time packing: pre-transposed bf16 matmul weights in the layouts the
    kernels want (no per-call reshapes/transposes in the forward pass)."""
    p = {}
    for idx in (1, 2, 3):
        w = raw[f"conv{idx}_w"]                        # (Cout, Cin, kh, kw)
        cout = w.shape[0]
        # (kh, kw, Cin, Cout) flatten -> rows in (ki, kj, c) order = im2col cols
        p[f"conv{idx}_w"] = (
            w.transpose(2, 3, 1, 0).reshape(-1, cout).astype(jnp.bfloat16))
        p[f"bn{idx}_g"] = raw[f"bn{idx}_g"].reshape(1, cout)
        p[f"bn{idx}_b"] = raw[f"bn{idx}_b"].reshape(1, cout)

    # fc1 columns are indexed (c, h, w) in PyTorch's NCHW flatten; permute them
    # once to the NHWC flatten order (h, w, c) used by the kernel path.
    fc1 = raw["fc1_w"].reshape(1024, 256, 3, 3).transpose(0, 2, 3, 1)
    p["fc1_w"] = fc1.reshape(1024, 2304).T.astype(jnp.bfloat16)   # (2304, 1024)
    p["bn4_g"] = raw["bn4_g"].reshape(1, 1024)
    p["bn4_b"] = raw["bn4_b"].reshape(1, 1024)

    # Classifier: pad to 128 lane-dense output columns (unmasked full stores).
    nout = raw["fc2_w"].shape[0]
    w2 = jnp.zeros((1024, OUT_PAD), jnp.float32).at[:, :nout].set(raw["fc2_w"].T)
    b2 = jnp.zeros((1, OUT_PAD), jnp.float32).at[:, :nout].set(raw["fc2_b"])
    p["fc2_w"] = w2.astype(jnp.bfloat16)
    p["fc2_b"] = b2
    return p


# ---------------------------------------------------------------------------
# Full forward pass (== discriminator.forward, train-mode BN)
# ---------------------------------------------------------------------------
def discriminator_forward(params, x, num_out):
    """x: (B, 1, 28, 28) NCHW float32 -> logits (B, num_out) float32."""
    B = x.shape[0]
    # NHWC once at entry; bf16 once at entry (same rounding point as the ref,
    # which casts to bf16 at every conv/fc input anyway).
    h = jnp.transpose(x, (0, 2, 3, 1)).astype(jnp.bfloat16)
    h = conv_block(h, params, 1)                        # (B, 14, 14, 64)  bf16
    h = conv_block(h, params, 2)                        # (B, 7, 7, 128)   bf16
    h = conv_block(h, params, 3)                        # (B, 3, 3, 256)   bf16
    h = h.reshape(B, 3 * 3 * 256)     # NHWC flatten (fc1 columns pre-permuted)
    logits = fc_head(h, params)                         # (B, 128) lane-padded
    return logits[:, :num_out]
    # TODO(synk): BatchNorm running-mean/var updates (training bookkeeping) are
    # not reproduced; they do not affect the train-mode forward output.


# ---------------------------------------------------------------------------
# Pure-JAX reference (PyTorch recipe, NCHW, same bf16 matmul rounding)
# ---------------------------------------------------------------------------
def _ref_forward(raw, x):
    def conv_bn_lrelu_ref(h, w, gamma, beta):
        y = jax.lax.conv_general_dilated(
            h.astype(jnp.bfloat16), w.astype(jnp.bfloat16),
            window_strides=(2, 2), padding=((1, 1), (1, 1)),
            dimension_numbers=("NCHW", "OIHW", "NCHW"),
            preferred_element_type=jnp.float32)
        mean = y.mean(axis=(0, 2, 3), keepdims=True)
        var = ((y - mean) ** 2).mean(axis=(0, 2, 3), keepdims=True)
        y = (y - mean) * jax.lax.rsqrt(var + BN_EPS)
        y = y * gamma.reshape(1, -1, 1, 1) + beta.reshape(1, -1, 1, 1)
        return jnp.where(y > 0, y, LRELU_SLOPE * y)

    h = conv_bn_lrelu_ref(x, raw["conv1_w"], raw["bn1_g"], raw["bn1_b"])
    h = conv_bn_lrelu_ref(h, raw["conv2_w"], raw["bn2_g"], raw["bn2_b"])
    h = conv_bn_lrelu_ref(h, raw["conv3_w"], raw["bn3_g"], raw["bn3_b"])
    h = h.reshape(h.shape[0], -1)                       # NCHW flatten (PyTorch)
    y = jnp.dot(h.astype(jnp.bfloat16), raw["fc1_w"].T.astype(jnp.bfloat16),
                preferred_element_type=jnp.float32)
    mean = y.mean(axis=0)
    var = ((y - mean) ** 2).mean(axis=0)
    y = (y - mean) * jax.lax.rsqrt(var + BN_EPS) * raw["bn4_g"] + raw["bn4_b"]
    y = jnp.where(y > 0, y, LRELU_SLOPE * y)
    return (jnp.dot(y.astype(jnp.bfloat16), raw["fc2_w"].T.astype(jnp.bfloat16),
                    preferred_element_type=jnp.float32) + raw["fc2_b"])


if __name__ == "__main__":
    key = jax.random.PRNGKey(0)
    k_param, k_input = jax.random.split(key)

    class_num = 10
    num_out = class_num + 1

    raw = init_raw_params(k_param, class_num)
    params = prepare_params(raw)

    fwd = jax.jit(functools.partial(discriminator_forward, num_out=num_out))
    ref_fn = jax.jit(_ref_forward)

    # batch=2 exercises the fully fused per-layer path; batch=16 additionally
    # exercises the M-tiled two-pass BN path (conv1: M = 16*196 > FUSED_MAX_M).
    for batch in (2, 16):
        x = jax.random.normal(jax.random.fold_in(k_input, batch),
                              (batch, 1, 28, 28), jnp.float32)
        out = fwd(params, x)
        jax.block_until_ready(out)
        assert out.shape == (batch, num_out), out.shape
        assert out.dtype == jnp.float32

        ref = ref_fn(raw, x)
        jax.block_until_ready(ref)
        assert jnp.allclose(out, ref, atol=5e-2, rtol=5e-2), (
            batch, float(jnp.max(jnp.abs(out - ref))))

    print("KERNEL_OK")
</pallas_src>

<mosaic_0001>
module attributes {stable_mosaic.version = 11 : i64} {
  func.func @_mm_bn_lrelu_fused_kernel(%arg0: memref<392x16xbf16, #tpu.memory_space<vmem>>, %arg1: memref<16x64xbf16, #tpu.memory_space<vmem>>, %arg2: memref<1x64xf32, #tpu.memory_space<vmem>>, %arg3: memref<1x64xf32, #tpu.memory_space<vmem>>, %arg4: memref<392x64xbf16, #tpu.memory_space<vmem>>) attributes {dimension_semantics = [], scalar_prefetch = 0 : i64, scratch_operands = 0 : i64, tpu.core_type = #tpu.core_type<tc>} {
    %c0 = arith.constant 0 : index
    %c0_0 = arith.constant 0 : index
    %0 = vector.load %arg0[%c0, %c0_0] : memref<392x16xbf16, #tpu.memory_space<vmem>>, vector<392x16xbf16>
    %c0_1 = arith.constant 0 : index
    %c0_2 = arith.constant 0 : index
    %1 = vector.load %arg1[%c0_1, %c0_2] : memref<16x64xbf16, #tpu.memory_space<vmem>>, vector<16x64xbf16>
    %cst = arith.constant dense<0.000000e+00> : vector<392x64xf32>
    %2 = tpu.matmul %0, %1, %cst {dimension_numbers = #tpu.dot_dimension_numbers<[1], [0], [0], [1], [0, 0, 1, 1], [], []>} : vector<392x16xbf16>, vector<16x64xbf16>, vector<392x64xf32> -> vector<392x64xf32>
    %cst_3 = arith.constant dense<0.000000e+00> : vector<64xf32>
    %3 = vector.multi_reduction <add>, %2, %cst_3 [0] : vector<392x64xf32> to vector<64xf32>
    %4 = vector.shape_cast %3 : vector<64xf32> to vector<1x64xf32>
    %5 = arith.mulf %2, %2 : vector<392x64xf32>
    %cst_4 = arith.constant dense<0.000000e+00> : vector<64xf32>
    %6 = vector.multi_reduction <add>, %5, %cst_4 [0] : vector<392x64xf32> to vector<64xf32>
    %7 = vector.shape_cast %6 : vector<64xf32> to vector<1x64xf32>
    %cst_5 = arith.constant 0.00255102036 : f32
    %8 = vector.broadcast %cst_5 : f32 to vector<1x64xf32>
    %9 = arith.mulf %4, %8 : vector<1x64xf32>
    %cst_6 = arith.constant 0.00255102036 : f32
    %10 = vector.broadcast %cst_6 : f32 to vector<1x64xf32>
    %11 = arith.mulf %7, %10 : vector<1x64xf32>
    %12 = arith.mulf %9, %9 : vector<1x64xf32>
    %13 = arith.subf %11, %12 : vector<1x64xf32>
    %cst_7 = arith.constant 9.99999974E-6 : f32
    %14 = vector.broadcast %cst_7 : f32 to vector<1x64xf32>
    %15 = arith.addf %13, %14 : vector<1x64xf32>
    %16 = math.rsqrt %15 : vector<1x64xf32>
    %c0_8 = arith.constant 0 : index
    %c0_9 = arith.constant 0 : index
    %17 = vector.load %arg2[%c0_8, %c0_9] : memref<1x64xf32, #tpu.memory_space<vmem>>, vector<1x64xf32>
    %18 = arith.mulf %17, %16 : vector<1x64xf32>
    %c0_10 = arith.constant 0 : index
    %c0_11 = arith.constant 0 : index
    %19 = vector.load %arg3[%c0_10, %c0_11] : memref<1x64xf32, #tpu.memory_space<vmem>>, vector<1x64xf32>
    %20 = arith.mulf %9, %18 : vector<1x64xf32>
    %21 = arith.subf %19, %20 : vector<1x64xf32>
    %22 = vector.broadcast %18 : vector<1x64xf32> to vector<392x64xf32>
    %23 = arith.mulf %2, %22 : vector<392x64xf32>
    %24 = vector.broadcast %21 : vector<1x64xf32> to vector<392x64xf32>
    %25 = arith.addf %23, %24 : vector<392x64xf32>
    %cst_12 = arith.constant 0.000000e+00 : f32
    %26 = vector.broadcast %cst_12 : f32 to vector<392x64xf32>
    %27 = arith.cmpf ogt, %25, %26 : vector<392x64xf32>
    %cst_13 = arith.constant 2.000000e-01 : f32
    %28 = vector.broadcast %cst_13 : f32 to vector<392x64xf32>
    %29 = arith.mulf %28, %25 : vector<392x64xf32>
    %30 = arith.select %27, %25, %29 : vector<392x64xi1>, vector<392x64xf32>
    %31 = arith.truncf %30 : vector<392x64xf32> to vector<392x64xbf16>
    %c0_14 = arith.constant 0 : index
    %c0_15 = arith.constant 0 : index
    %32 = vector.load %arg4[%c0_14, %c0_15] : memref<392x64xbf16, #tpu.memory_space<vmem>>, vector<392x64xbf16>
    tpu.vector_store %arg4[%c0_14, %c0_15], %31 {strides = array<i32>} : memref<392x64xbf16, #tpu.memory_space<vmem>>, vector<392x64xbf16>,
    return
  }
}

module attributes {stable_mosaic.version = 11 : i64} {
  func.func @_mm_bn_lrelu_fused_kernel(%arg0: memref<98x1024xbf16, #tpu.memory_space<vmem>>, %arg1: memref<1024x128xbf16, #tpu.memory_space<vmem>>, %arg2: memref<1x128xf32, #tpu.memory_space<vmem>>, %arg3: memref<1x128xf32, #tpu.memory_space<vmem>>, %arg4: memref<98x128xbf16, #tpu.memory_space<vmem>>) attributes {dimension_semantics = [], scalar_prefetch = 0 : i64, scratch_operands = 0 : i64, tpu.core_type = #tpu.core_type<tc>} {
    %c0 = arith.constant 0 : index
    %c0_0 = arith.constant 0 : index
    %0 = vector.load %arg0[%c0, %c0_0] : memref<98x1024xbf16, #tpu.memory_space<vmem>>, vector<98x1024xbf16>
    %c0_1 = arith.constant 0 : index
    %c0_2 = arith.constant 0 : index
    %1 = vector.load %arg1[%c0_1, %c0_2] : memref<1024x128xbf16, #tpu.memory_space<vmem>>, vector<1024x128xbf16>
    %cst = arith.constant dense<0.000000e+00> : vector<98x128xf32>
    %2 = tpu.matmul %0, %1, %cst {dimension_numbers = #tpu.dot_dimension_numbers<[1], [0], [0], [1], [0, 0, 1, 1], [], []>} : vector<98x1024xbf16>, vector<1024x128xbf16>, vector<98x128xf32> -> vector<98x128xf32>
    %cst_3 = arith.constant dense<0.000000e+00> : vector<128xf32>
    %3 = vector.multi_reduction <add>, %2, %cst_3 [0] : vector<98x128xf32> to vector<128xf32>
    %4 = vector.shape_cast %3 : vector<128xf32> to vector<1x128xf32>
    %5 = arith.mulf %2, %2 : vector<98x128xf32>
    %cst_4 = arith.constant dense<0.000000e+00> : vector<128xf32>
    %6 = vector.multi_reduction <add>, %5, %cst_4 [0] : vector<98x128xf32> to vector<128xf32>
    %7 = vector.shape_cast %6 : vector<128xf32> to vector<1x128xf32>
    %cst_5 = arith.constant 0.0102040814 : f32
    %8 = vector.broadcast %cst_5 : f32 to vector<1x128xf32>
    %9 = arith.mulf %4, %8 : vector<1x128xf32>
    %cst_6 = arith.constant 0.0102040814 : f32
    %10 = vector.broadcast %cst_6 : f32 to vector<1x128xf32>
    %11 = arith.mulf %7, %10 : vector<1x128xf32>
    %12 = arith.mulf %9, %9 : vector<1x128xf32>
    %13 = arith.subf %11, %12 : vector<1x128xf32>
    %cst_7 = arith.constant 9.99999974E-6 : f32
    %14 = vector.broadcast %cst_7 : f32 to vector<1x128xf32>
    %15 = arith.addf %13, %14 : vector<1x128xf32>
    %16 = math.rsqrt %15 : vector<1x128xf32>
    %c0_8 = arith.constant 0 : index
    %c0_9 = arith.constant 0 : index
    %17 = vector.load %arg2[%c0_8, %c0_9] : memref<1x128xf32, #tpu.memory_space<vmem>>, vector<1x128xf32>
    %18 = arith.mulf %17, %16 : vector<1x128xf32>
    %c0_10 = arith.constant 0 : index
    %c0_11 = arith.constant 0 : index
    %19 = vector.load %arg3[%c0_10, %c0_11] : memref<1x128xf32, #tpu.memory_space<vmem>>, vector<1x128xf32>
    %20 = arith.mulf %9, %18 : vector<1x128xf32>
    %21 = arith.subf %19, %20 : vector<1x128xf32>
    %22 = vector.broadcast %18 : vector<1x128xf32> to vector<98x128xf32>
    %23 = arith.mulf %2, %22 : vector<98x128xf32>
    %24 = vector.broadcast %21 : vector<1x128xf32> to vector<98x128xf32>
    %25 = arith.addf %23, %24 : vector<98x128xf32>
    %cst_12 = arith.constant 0.000000e+00 : f32
    %26 = vector.broadcast %cst_12 : f32 to vector<98x128xf32>
    %27 = arith.cmpf ogt, %25, %26 : vector<98x128xf32>
    %cst_13 = arith.constant 2.000000e-01 : f32
    %28 = vector.broadcast %cst_13 : f32 to vector<98x128xf32>
    %29 = arith.mulf %28, %25 : vector<98x128xf32>
    %30 = arith.select %27, %25, %29 : vector<98x128xi1>, vector<98x128xf32>
    %31 = arith.truncf %30 : vector<98x128xf32> to vector<98x128xbf16>
    %c0_14 = arith.constant 0 : index
    %c0_15 = arith.constant 0 : index
    %32 = vector.load %arg4[%c0_14, %c0_15] : memref<98x128xbf16, #tpu.memory_space<vmem>>, vector<98x128xbf16>
    tpu.vector_store %arg4[%c0_14, %c0_15], %31 {strides = array<i32>} : memref<98x128xbf16, #tpu.memory_space<vmem>>, vector<98x128xbf16>,
    return
  }
}

module attributes {stable_mosaic.version = 11 : i64} {
  func.func @_mm_bn_lrelu_fused_kernel(%arg0: memref<18x2048xbf16, #tpu.memory_space<vmem>>, %arg1: memref<2048x256xbf16, #tpu.memory_space<vmem>>, %arg2: memref<1x256xf32, #tpu.memory_space<vmem>>, %arg3: memref<1x256xf32, #tpu.memory_space<vmem>>, %arg4: memref<18x256xbf16, #tpu.memory_space<vmem>>) attributes {dimension_semantics = [], scalar_prefetch = 0 : i64, scratch_operands = 0 : i64, tpu.core_type = #tpu.core_type<tc>} {
    %c0 = arith.constant 0 : index
    %c0_0 = arith.constant 0 : index
    %0 = vector.load %arg0[%c0, %c0_0] : memref<18x2048xbf16, #tpu.memory_space<vmem>>, vector<18x2048xbf16>
    %c0_1 = arith.constant 0 : index
    %c0_2 = arith.constant 0 : index
    %1 = vector.load %arg1[%c0_1, %c0_2] : memref<2048x256xbf16, #tpu.memory_space<vmem>>, vector<2048x256xbf16>
    %cst = arith.constant dense<0.000000e+00> : vector<18x256xf32>
    %2 = tpu.matmul %0, %1, %cst {dimension_numbers = #tpu.dot_dimension_numbers<[1], [0], [0], [1], [0, 0, 1, 1], [], []>} : vector<18x2048xbf16>, vector<2048x256xbf16>, vector<18x256xf32> -> vector<18x256xf32>
    %cst_3 = arith.constant dense<0.000000e+00> : vector<256xf32>
    %3 = vector.multi_reduction <add>, %2, %cst_3 [0] : vector<18x256xf32> to vector<256xf32>
    %4 = vector.shape_cast %3 : vector<256xf32> to vector<1x256xf32>
    %5 = arith.mulf %2, %2 : vector<18x256xf32>
    %cst_4 = arith.constant dense<0.000000e+00> : vector<256xf32>
    %6 = vector.multi_reduction <add>, %5, %cst_4 [0] : vector<18x256xf32> to vector<256xf32>
    %7 = vector.shape_cast %6 : vector<256xf32> to vector<1x256xf32>
    %cst_5 = arith.constant 0.055555556 : f32
    %8 = vector.broadcast %cst_5 : f32 to vector<1x256xf32>
    %9 = arith.mulf %4, %8 : vector<1x256xf32>
    %cst_6 = arith.constant 0.055555556 : f32
    %10 = vector.broadcast %cst_6 : f32 to vector<1x256xf32>
    %11 = arith.mulf %7, %10 : vector<1x256xf32>
    %12 = arith.mulf %9, %9 : vector<1x256xf32>
    %13 = arith.subf %11, %12 : vector<1x256xf32>
    %cst_7 = arith.constant 9.99999974E-6 : f32
    %14 = vector.broadcast %cst_7 : f32 to vector<1x256xf32>
    %15 = arith.addf %13, %14 : vector<1x256xf32>
    %16 = math.rsqrt %15 : vector<1x256xf32>
    %c0_8 = arith.constant 0 : index
    %c0_9 = arith.constant 0 : index
    %17 = vector.load %arg2[%c0_8, %c0_9] : memref<1x256xf32, #tpu.memory_space<vmem>>, vector<1x256xf32>
    %18 = arith.mulf %17, %16 : vector<1x256xf32>
    %c0_10 = arith.constant 0 : index
    %c0_11 = arith.constant 0 : index
    %19 = vector.load %arg3[%c0_10, %c0_11] : memref<1x256xf32, #tpu.memory_space<vmem>>, vector<1x256xf32>
    %20 = arith.mulf %9, %18 : vector<1x256xf32>
    %21 = arith.subf %19, %20 : vector<1x256xf32>
    %22 = vector.broadcast %18 : vector<1x256xf32> to vector<18x256xf32>
    %23 = arith.mulf %2, %22 : vector<18x256xf32>
    %24 = vector.broadcast %21 : vector<1x256xf32> to vector<18x256xf32>
    %25 = arith.addf %23, %24 : vector<18x256xf32>
    %cst_12 = arith.constant 0.000000e+00 : f32
    %26 = vector.broadcast %cst_12 : f32 to vector<18x256xf32>
    %27 = arith.cmpf ogt, %25, %26 : vector<18x256xf32>
    %cst_13 = arith.constant 2.000000e-01 : f32
    %28 = vector.broadcast %cst_13 : f32 to vector<18x256xf32>
    %29 = arith.mulf %28, %25 : vector<18x256xf32>
    %30 = arith.select %27, %25, %29 : vector<18x256xi1>, vector<18x256xf32>
    %31 = arith.truncf %30 : vector<18x256xf32> to vector<18x256xbf16>
    %c0_14 = arith.constant 0 : index
    %c0_15 = arith.constant 0 : index
    %32 = vector.load %arg4[%c0_14, %c0_15] : memref<18x256xbf16, #tpu.memory_space<vmem>>, vector<18x256xbf16>
    tpu.vector_store %arg4[%c0_14, %c0_15], %31 {strides = array<i32>} : memref<18x256xbf16, #tpu.memory_space<vmem>>, vector<18x256xbf16>,
    return
  }
}

module attributes {stable_mosaic.version = 11 : i64} {
  func.func @_fc_head_kernel(%arg0: memref<2x2304xbf16, #tpu.memory_space<vmem>>, %arg1: memref<2304x1024xbf16, #tpu.memory_space<vmem>>, %arg2: memref<1x1024xf32, #tpu.memory_space<vmem>>, %arg3: memref<1x1024xf32, #tpu.memory_space<vmem>>, %arg4: memref<1024x128xbf16, #tpu.memory_space<vmem>>, %arg5: memref<1x128xf32, #tpu.memory_space<vmem>>, %arg6: memref<2x128xf32, #tpu.memory_space<vmem>>) attributes {dimension_semantics = [], scalar_prefetch = 0 : i64, scratch_operands = 0 : i64, tpu.core_type = #tpu.core_type<tc>} {
    %c0 = arith.constant 0 : index
    %c0_0 = arith.constant 0 : index
    %0 = vector.load %arg0[%c0, %c0_0] : memref<2x2304xbf16, #tpu.memory_space<vmem>>, vector<2x2304xbf16>
    %c0_1 = arith.constant 0 : index
    %c0_2 = arith.constant 0 : index
    %1 = vector.load %arg1[%c0_1, %c0_2] : memref<2304x1024xbf16, #tpu.memory_space<vmem>>, vector<2304x1024xbf16>
    %cst = arith.constant dense<0.000000e+00> : vector<2x1024xf32>
    %2 = tpu.matmul %0, %1, %cst {dimension_numbers = #tpu.dot_dimension_numbers<[1], [0], [0], [1], [0, 0, 1, 1], [], []>} : vector<2x2304xbf16>, vector<2304x1024xbf16>, vector<2x1024xf32> -> vector<2x1024xf32>
    %cst_3 = arith.constant dense<0.000000e+00> : vector<1024xf32>
    %3 = vector.multi_reduction <add>, %2, %cst_3 [0] : vector<2x1024xf32> to vector<1024xf32>
    %4 = vector.shape_cast %3 : vector<1024xf32> to vector<1x1024xf32>
    %5 = arith.mulf %2, %2 : vector<2x1024xf32>
    %cst_4 = arith.constant dense<0.000000e+00> : vector<1024xf32>
    %6 = vector.multi_reduction <add>, %5, %cst_4 [0] : vector<2x1024xf32> to vector<1024xf32>
    %7 = vector.shape_cast %6 : vector<1024xf32> to vector<1x1024xf32>
    %cst_5 = arith.constant 5.000000e-01 : f32
    %8 = vector.broadcast %cst_5 : f32 to vector<1x1024xf32>
    %9 = arith.mulf %4, %8 : vector<1x1024xf32>
    %cst_6 = arith.constant 5.000000e-01 : f32
    %10 = vector.broadcast %cst_6 : f32 to vector<1x1024xf32>
    %11 = arith.mulf %7, %10 : vector<1x1024xf32>
    %12 = arith.mulf %9, %9 : vector<1x1024xf32>
    %13 = arith.subf %11, %12 : vector<1x1024xf32>
    %cst_7 = arith.constant 9.99999974E-6 : f32
    %14 = vector.broadcast %cst_7 : f32 to vector<1x1024xf32>
    %15 = arith.addf %13, %14 : vector<1x1024xf32>
    %16 = math.rsqrt %15 : vector<1x1024xf32>
    %c0_8 = arith.constant 0 : index
    %c0_9 = arith.constant 0 : index
    %17 = vector.load %arg2[%c0_8, %c0_9] : memref<1x1024xf32, #tpu.memory_space<vmem>>, vector<1x1024xf32>
    %18 = arith.mulf %17, %16 : vector<1x1024xf32>
    %c0_10 = arith.constant 0 : index
    %c0_11 = arith.constant 0 : index
    %19 = vector.load %arg3[%c0_10, %c0_11] : memref<1x1024xf32, #tpu.memory_space<vmem>>, vector<1x1024xf32>
    %20 = arith.mulf %9, %18 : vector<1x1024xf32>
    %21 = arith.subf %19, %20 : vector<1x1024xf32>
    %22 = vector.broadcast %18 : vector<1x1024xf32> to vector<2x1024xf32>
    %23 = arith.mulf %2, %22 : vector<2x1024xf32>
    %24 = vector.broadcast %21 : vector<1x1024xf32> to vector<2x1024xf32>
    %25 = arith.addf %23, %24 : vector<2x1024xf32>
    %cst_12 = arith.constant 0.000000e+00 : f32
    %26 = vector.broadcast %cst_12 : f32 to vector<2x1024xf32>
    %27 = arith.cmpf ogt, %25, %26 : vector<2x1024xf32>
    %cst_13 = arith.constant 2.000000e-01 : f32
    %28 = vector.broadcast %cst_13 : f32 to vector<2x1024xf32>
    %29 = arith.mulf %28, %25 : vector<2x1024xf32>
    %30 = arith.select %27, %25, %29 : vector<2x1024xi1>, vector<2x1024xf32>
    %31 = arith.truncf %30 : vector<2x1024xf32> to vector<2x1024xbf16>
    %c0_14 = arith.constant 0 : index
    %c0_15 = arith.constant 0 : index
    %32 = vector.load %arg4[%c0_14, %c0_15] : memref<1024x128xbf16, #tpu.memory_space<vmem>>, vector<1024x128xbf16>
    %cst_16 = arith.constant dense<0.000000e+00> : vector<2x128xf32>
    %33 = tpu.matmul %31, %32, %cst_16 {dimension_numbers = #tpu.dot_dimension_numbers<[1], [0], [0], [1], [0, 0, 1, 1], [], []>} : vector<2x1024xbf16>, vector<1024x128xbf16>, vector<2x128xf32> -> vector<2x128xf32>
    %c0_17 = arith.constant 0 : index
    %c0_18 = arith.constant 0 : index
    %34 = vector.load %arg5[%c0_17, %c0_18] : memref<1x128xf32, #tpu.memory_space<vmem>>, vector<1x128xf32>
    %35 = vector.broadcast %34 : vector<1x128xf32> to vector<2x128xf32>
    %36 = arith.addf %33, %35 : vector<2x128xf32>
    %c0_19 = arith.constant 0 : index
    %c0_20 = arith.constant 0 : index
    %37 = vector.load %arg6[%c0_19, %c0_20] : memref<2x128xf32, #tpu.memory_space<vmem>>, vector<2x128xf32>
    tpu.vector_store %arg6[%c0_19, %c0_20], %36 {strides = array<i32>} : memref<2x128xf32, #tpu.memory_space<vmem>>, vector<2x128xf32>,
    return
  }
}

</mosaic_0001>

<llo_original>
// kernel: discriminator_forward.4
$region0: #{discriminator_forward.4}
  #allocation0 [shape = 'u32[]', space=smem, size = 0x4, offset = 0x4, fixed_abs, tag = 'smem constant byte address 0x4 - core index']
  #allocation1 [shape = 'u32[144,128]{1,0:T(1,128)}', space=vmem, size = 0x12000, scoped, tag = 'internal scratch']
  %s0 = inlined_call_operand.vmem [shape: bf16[392,16], index: 0, kind: input, shape index: {}]
  %s1 = inlined_call_operand.hbm [shape: bf16[16,64], index: 1, kind: input, shape index: {}]
  %s2 = inlined_call_operand.hbm [shape: f32[1,64], index: 2, kind: input, shape index: {}]
  %s3 = inlined_call_operand.hbm [shape: f32[1,64], index: 3, kind: input, shape index: {}]
  %s4 = inlined_call_operand.vmem [shape: bf16[392,64], index: 4, kind: output, shape index: {}]
  %s5 = sld [smem:[#allocation0]]
  $region38: #{discriminator_forward.4} parent=0
    _
  %s7 = ssub.s32 1, %s5
  %s8 = scalar_select 0, %s7, %s5
  $region1: #{discriminator_forward.4} parent=0
    #allocation2 [shape = 'u8[4096]{0}', space=vmem, size = 0x1000, scoped, tag = 'input window, operand 1, single buffered']
    #allocation3 [shape = 's32[1]{0}', space=sflag, size = 0x4, scoped, tag = 'scoped memory for discriminator_forward.4']
    #allocation4 [shape = 'u8[512]{0}', space=vmem, size = 0x400, scoped, tag = 'input window, operand 2, single buffered']
    #allocation5 [shape = 's32[1]{0}', space=sflag, size = 0x4, scoped, tag = 'scoped memory for discriminator_forward.4']
    #allocation6 [shape = 'u8[512]{0}', space=vmem, size = 0x400, scoped, tag = 'input window, operand 3, single buffered']
    %9 = vsyncpa [#allocation3], 0
    %10 = vsyncpa [#allocation5], 0
    // Predicated region
    $region2: #{discriminator_forward.4} parent=1 // pred_check
      _
    $region3: #{discriminator_forward.4} parent=1 // pred_check_branch
      %12 = sbr.rel (0) target = $region5
    $region4: #{discriminator_forward.4} parent=1 // pred_region
      _
    $region5: #{discriminator_forward.4} parent=1 // pred_fallthru
      _
    // Predicated region
    $region6: #{discriminator_forward.4} parent=1 // pred_check
      _
    $region7: #{discriminator_forward.4} parent=1 // pred_check_branch
      %14 = sbr.rel (0) target = $region9
    $region8: #{discriminator_forward.4} parent=1 // pred_region
      %s16 = ssub.s32 128, 128
      %17 = vsyncadd [#allocation3], %s16
      %s18 = sshll.u32 [#allocation2], 4
      %s19 = int_to_ptr.vmem [resolvable:$true] %s18
      %24 = dma.hbm_to_vmem [thread:$0]  %s1, 128, %s19, [#allocation3], 64, 64, 4
    $region9: #{discriminator_forward.4} parent=1 // pred_fallthru
      _
    // Predicated region
    $region10: #{discriminator_forward.4} parent=1 // pred_check
      _
    $region11: #{discriminator_forward.4} parent=1 // pred_check_branch
      %26 = sbr.rel (0) target = $region13
    $region12: #{discriminator_forward.4} parent=1 // pred_region
      %s28 = ssub.s32 16, 16
      %29 = vsyncadd [#allocation5], %s28
      %s31 = sshll.u32 [#allocation4], 4
      %s32 = int_to_ptr.vmem [resolvable:$true] %s31
      %34 = dma.hbm_to_vmem [thread:$0]  %s2, 16, %s32, [#allocation5]
    $region13: #{discriminator_forward.4} parent=1 // pred_fallthru
      _
    // Predicated region
    $region14: #{discriminator_forward.4} parent=1 // pred_check
      _
    $region15: #{discriminator_forward.4} parent=1 // pred_check_branch
      %36 = sbr.rel (0) target = $region17
    $region16: #{discriminator_forward.4} parent=1 // pred_region
      %s38 = ssub.s32 16, 16
      %39 = vsyncadd [#allocation5], %s38
      %s41 = sshll.u32 [#allocation6], 4
      %s42 = int_to_ptr.vmem [resolvable:$true] %s41
      %44 = dma.hbm_to_vmem [thread:$0]  %s3, 16, %s42, [#allocation5]
    $region17: #{discriminator_forward.4} parent=1 // pred_fallthru
      _
    // Predicated region
    $region18: #{discriminator_forward.4} parent=1 // pred_check
      _
    $region19: #{discriminator_forward.4} parent=1 // pred_check_branch
      %46 = sbr.rel (0) target = $region21
    $region20: #{discriminator_forward.4} parent=1 // pred_region
      %47 = dma.done [#allocation3], 128
    $region21: #{discriminator_forward.4} parent=1 // pred_fallthru
      _
    // Predicated region
    $region22: #{discriminator_forward.4} parent=1 // pred_check
      _
    $region23: #{discriminator_forward.4} parent=1 // pred_check_branch
      %49 = sbr.rel (0) target = $region25
    $region24: #{discriminator_forward.4} parent=1 // pred_region
      %50 = dma.done [#allocation5], 16
    $region25: #{discriminator_forward.4} parent=1 // pred_fallthru
      _
    // Predicated region
    $region26: #{discriminator_forward.4} parent=1 // pred_check
      _
    $region27: #{discriminator_forward.4} parent=1 // pred_check_branch
      %52 = sbr.rel (0) target = $region29
    $region28: #{discriminator_forward.4} parent=1 // pred_region
      %53 = dma.done [#allocation5], 16
    $region29: #{discriminator_forward.4} parent=1 // pred_fallthru
      _
    %v55 = vld [vmem:[%s0] sm:$0xf]
    %v56 = vld [vmem:[%s0 + $0x4] sm:$0xf]
    %v57 = vld [vmem:[%s0 + $0x8] sm:$0xf]
    %v58 = vld [vmem:[%s0 + $0xc] sm:$0xf]
    %v59 = vld [vmem:[%s0 + $0x10] sm:$0xf]
    %v60 = vld [vmem:[%s0 + $0x14] sm:$0xf]
    %v61 = vld [vmem:[%s0 + $0x18] sm:$0xf]
    %v62 = vld [vmem:[%s0 + $0x1c] sm:$0xf]
    %v63 = vld [vmem:[%s0 + $0x20] sm:$0xf]
    %v64 = vld [vmem:[%s0 + $0x24] sm:$0xf]
    %v65 = vld [vmem:[%s0 + $0x28] sm:$0xf]
    %v66 = vld [vmem:[%s0 + $0x2c] sm:$0xf]
    %v67 = vld [vmem:[%s0 + $0x30] sm:$0xf]
    %v68 = vld [vmem:[%s0 + $0x34] sm:$0xf]
    %v69 = vld [vmem:[%s0 + $0x38] sm:$0xf]
    %v70 = vld [vmem:[%s0 + $0x3c] sm:$0xf]
    %v71 = vld [vmem:[%s0 + $0x40] sm:$0xf]
    %v72 = vld [vmem:[%s0 + $0x44] sm:$0xf]
    %v73 = vld [vmem:[%s0 + $0x48] sm:$0xf]
    %v74 = vld [vmem:[%s0 + $0x4c] sm:$0xf]
    %v75 = vld [vmem:[%s0 + $0x50] sm:$0xf]
    %v76 = vld [vmem:[%s0 + $0x54] sm:$0xf]
    %v77 = vld [vmem:[%s0 + $0x58] sm:$0xf]
    %v78 = vld [vmem:[%s0 + $0x5c] sm:$0xf]
    %v79 = vld [vmem:[%s0 + $0x60] sm:$0xf]
    %v80 = vld [vmem:[%s0 + $0x64] sm:$0xf]
    %v81 = vld [vmem:[%s0 + $0x68] sm:$0xf]
    %v82 = vld [vmem:[%s0 + $0x6c] sm:$0xf]
    %v83 = vld [vmem:[%s0 + $0x70] sm:$0xf]
    %v84 = vld [vmem:[%s0 + $0x74] sm:$0xf]
    %v85 = vld [vmem:[%s0 + $0x78] sm:$0xf]
    %v86 = vld [vmem:[%s0 + $0x7c] sm:$0xf]
    %v87 = vld [vmem:[%s0 + $0x80] sm:$0xf]
    %v88 = vld [vmem:[%s0 + $0x84] sm:$0xf]
    %v89 = vld [vmem:[%s0 + $0x88] sm:$0xf]
    %v90 = vld [vmem:[%s0 + $0x8c] sm:$0xf]
    %v91 = vld [vmem:[%s0 + $0x90] sm:$0xf]
    %v92 = vld [vmem:[%s0 + $0x94] sm:$0xf]
    %v93 = vld [vmem:[%s0 + $0x98] sm:$0xf]
    %v94 = vld [vmem:[%s0 + $0x9c] sm:$0xf]
    %v95 = vld [vmem:[%s0 + $0xa0] sm:$0xf]
    %v96 = vld [vmem:[%s0 + $0xa4] sm:$0xf]
    %v97 = vld [vmem:[%s0 + $0xa8] sm:$0xf]
    %v98 = vld [vmem:[%s0 + $0xac] sm:$0xf]
    %v99 = vld [vmem:[%s0 + $0xb0] sm:$0xf]
    %v100 = vld [vmem:[%s0 + $0xb4] sm:$0xf]
    %v101 = vld [vmem:[%s0 + $0xb8] sm:$0xf]
    %v102 = vld [vmem:[%s0 + $0xbc] sm:$0xf]
    %v103 = vld [vmem:[%s0 + $0xc0] sm:$0xf]
    %v104 = vld [vmem:[#allocation2] sm:$0xf]
    %v105 = vld [vmem:[#allocation2 + $0x4] sm:$0xf]
    %v155 = vunpack.c.l.b16 %v55
    %v156 = vunpack.c.l.b16 %v56
    %v157 = vunpack.c.l.b16 %v57
    %v158 = vunpack.c.l.b16 %v58
    %v159 = vunpack.c.l.b16 %v59
    %v160 = vunpack.c.l.b16 %v60
    %v161 = vunpack.c.l.b16 %v61
    %v162 = vunpack.c.l.b16 %v62
    %v163 = vunpack.c.l.b16 %v63
    %v164 = vunpack.c.l.b16 %v64
    %v165 = vunpack.c.l.b16 %v65
    %v166 = vunpack.c.l.b16 %v66
    %v167 = vunpack.c.l.b16 %v67
    %v168 = vunpack.c.l.b16 %v68
    %v169 = vunpack.c.l.b16 %v69
    %v170 = vunpack.c.l.b16 %v70
    %v171 = vunpack.c.l.b16 %v71
    %v172 = vunpack.c.l.b16 %v72
    %v173 = vunpack.c.l.b16 %v73
    %v174 = vunpack.c.l.b16 %v74
    %v175 = vunpack.c.l.b16 %v75
    %v176 = vunpack.c.l.b16 %v76
    %v177 = vunpack.c.l.b16 %v77
    %v178 = vunpack.c.l.b16 %v78
    %v179 = vunpack.c.l.b16 %v79
    %v180 = vunpack.c.l.b16 %v80
    %v181 = vunpack.c.l.b16 %v81
    %v182 = vunpack.c.l.b16 %v82
    %v183 = vunpack.c.l.b16 %v83
    %v184 = vunpack.c.l.b16 %v84
    %v185 = vunpack.c.l.b16 %v85
    %v186 = vunpack.c.l.b16 %v86
    %v187 = vunpack.c.l.b16 %v87
    %v188 = vunpack.c.l.b16 %v88
    %v189 = vunpack.c.l.b16 %v89
    %v190 = vunpack.c.l.b16 %v90
    %v191 = vunpack.c.l.b16 %v91
    %v192 = vunpack.c.l.b16 %v92
    %v193 = vunpack.c.l.b16 %v93
    %v194 = vunpack.c.l.b16 %v94
    %v195 = vunpack.c.l.b16 %v95
    %v196 = vunpack.c.l.b16 %v96
    %v197 = vunpack.c.l.b16 %v97
    %v198 = vunpack.c.l.b16 %v98
    %v199 = vunpack.c.l.b16 %v99
    %v200 = vunpack.c.l.b16 %v100
    %v201 = vunpack.c.l.b16 %v101
    %v202 = vunpack.c.l.b16 %v102
    %v203 = vunpack.c.l.b16 %v103
    %v204 = vpack.c.b16 %v156, %v155
    %v205 = vpack.c.b16 %v158, %v157
    %v206 = vpack.c.b16 %v160, %v159
    %v207 = vpack.c.b16 %v162, %v161
    %v208 = vpack.c.b16 %v164, %v163
    %v209 = vpack.c.b16 %v166, %v165
    %v210 = vpack.c.b16 %v168, %v167
    %v211 = vpack.c.b16 %v170, %v169
    %v212 = vpack.c.b16 %v172, %v171
    %v213 = vpack.c.b16 %v174, %v173
    %v214 = vpack.c.b16 %v176, %v175
    %v215 = vpack.c.b16 %v178, %v177
    %v216 = vpack.c.b16 %v180, %v179
    %v217 = vpack.c.b16 %v182, %v181
    %v218 = vpack.c.b16 %v184, %v183
    %v219 = vpack.c.b16 %v186, %v185
    %v220 = vpack.c.b16 %v188, %v187
    %v221 = vpack.c.b16 %v190, %v189
    %v222 = vpack.c.b16 %v192, %v191
    %v223 = vpack.c.b16 %v194, %v193
    %v224 = vpack.c.b16 %v196, %v195
    %v225 = vpack.c.b16 %v198, %v197
    %v226 = vpack.c.b16 %v200, %v199
    %v227 = vpack.c.b16 %v202, %v201
    %v228 = vpack.c.b16 %v203, %v203
    %v231 = vunpack.c.l.b16 %v104
    %v232 = vunpack.c.l.b16 %v105
    %v233 = vpack.c.b16 %v232, %v231
    %vm235 = vcmask 130048
    %v237 = vsel %vm235, %v204, 0
    %v240 = vsel %vm235, %v205, 0
    %v243 = vsel %vm235, %v206, 0
    %v246 = vsel %vm235, %v207, 0
    %v249 = vsel %vm235, %v208, 0
    %v252 = vsel %vm235, %v209, 0
    %v255 = vsel %vm235, %v210, 0
    %v258 = vsel %vm235, %v211, 0
    %v261 = vsel %vm235, %v212, 0
    %v264 = vsel %vm235, %v213, 0
    %v267 = vsel %vm235, %v214, 0
    %v270 = vsel %vm235, %v215, 0
    %v273 = vsel %vm235, %v216, 0
    %v276 = vsel %vm235, %v217, 0
    %v279 = vsel %vm235, %v218, 0
    %v282 = vsel %vm235, %v219, 0
    %v285 = vsel %vm235, %v220, 0
    %v288 = vsel %vm235, %v221, 0
    %v291 = vsel %vm235, %v222, 0
    %v294 = vsel %vm235, %v223, 0
    %v297 = vsel %vm235, %v224, 0
    %v300 = vsel %vm235, %v225, 0
    %v303 = vsel %vm235, %v226, 0
    %v306 = vsel %vm235, %v227, 0
    %v309 = vsel %vm235, %v228, 0
    %311 = vmatprep.subr.bf16.mxu0 0
    %312 = vmatpush1.bf16.msra.mxu0 0
    %313 = vmatprep.subr.bf16.mxu0 0
    %314 = vmatpush1.bf16.msra.mxu0 0
    %315 = vmatprep.subr.bf16.mxu0 0
    %316 = vmatpush1.bf16.msra.mxu0 0
    %317 = vmatprep.subr.bf16.mxu0 0
    %318 = vmatpush1.bf16.msra.mxu0 0
    %319 = vmatprep.subr.bf16.mxu0 0
    %320 = vmatpush1.bf16.msra.mxu0 0
    %321 = vmatprep.subr.bf16.mxu0 0
    %322 = vmatpush1.bf16.msra.mxu0 0
    %323 = vmatprep.subr.bf16.mxu0 0
    %324 = vmatpush1.bf16.msra.mxu0 0
    %325 = vmatprep.subr.bf16.mxu0 0
    %326 = vmatpush1.bf16.msra.mxu0 %v233
    %327 = vmatprep.subr.bf16.mxu0 0
    %328 = vmatpush2.bf16.msra.mxu0 0
    %329 = vmatprep.subr.bf16.mxu0 0
    %330 = vmatpush2.bf16.msra.mxu0 0
    %331 = vmatprep.subr.bf16.mxu0 0
    %332 = vmatpush2.bf16.msra.mxu0 0
    %333 = vmatprep.subr.bf16.mxu0 0
    %334 = vmatpush2.bf16.msra.mxu0 0
    %335 = vmatprep.subr.bf16.mxu0 0
    %336 = vmatpush2.bf16.msra.mxu0 0
    %337 = vmatprep.subr.bf16.mxu0 0
    %338 = vmatpush2.bf16.msra.mxu0 0
    %339 = vmatprep.subr.bf16.mxu0 0
    %340 = vmatpush2.bf16.msra.mxu0 0
    %341 = vmatprep.subr.bf16.mxu0 0
    %342 = vmatpush2.bf16.msra.mxu0 0
    %343 = vmatprep.mubr.bf16.mxu0 0
    %344 = vmatmul.mubr.bf16.gmra.mxu0 %v237
    %v345 = vpop.f32.mrf.mxu0
    %v346 = vadd.f32 0.0, %v345
    %v347 = vpop.f32.mrf.mxu0
    %v348 = vpop.f32.mrf.mxu0
    %v349 = vadd.f32 0.0, %v348
    %v350 = vpop.f32.mrf.mxu0
    %351 = vmatprep.mubr.bf16.mxu0 0
    %352 = vmatmul.mubr.bf16.gmra.mxu0 %v240
    %v353 = vpop.f32.mrf.mxu0
    %v354 = vadd.f32 0.0, %v353
    %v355 = vpop.f32.mrf.mxu0
    %v356 = vpop.f32.mrf.mxu0
    %v357 = vadd.f32 0.0, %v356
    %v358 = vpop.f32.mrf.mxu0
    %359 = vmatprep.mubr.bf16.mxu0 0
    %360 = vmatmul.mubr.bf16.gmra.mxu0 %v243
    %v361 = vpop.f32.mrf.mxu0
    %v362 = vadd.f32 0.0, %v361
    %v363 = vpop.f32.mrf.mxu0
    %v364 = vpop.f32.mrf.mxu0
    %v365 = vadd.f32 0.0, %v364
    %v366 = vpop.f32.mrf.mxu0
    %367 = vmatprep.mubr.bf16.mxu0 0
    %368 = vmatmul.mubr.bf16.gmra.mxu0 %v246
    %v369 = vpop.f32.mrf.mxu0
    %v370 = vadd.f32 0.0, %v369
    %v371 = vpop.f32.mrf.mxu0
    %v372 = vpop.f32.mrf.mxu0
    %v373 = vadd.f32 0.0, %v372
    %v374 = vpop.f32.mrf.mxu0
    %375 = vmatprep.mubr.bf16.mxu0 0
    %376 = vmatmul.mubr.bf16.gmra.mxu0 %v249
    %v377 = vpop.f32.mrf.mxu0
    %v378 = vadd.f32 0.0, %v377
    %v379 = vpop.f32.mrf.mxu0
    %v380 = vpop.f32.mrf.mxu0
    %v381 = vadd.f32 0.0, %v380
    %v382 = vpop.f32.mrf.mxu0
    %383 = vmatprep.mubr.bf16.mxu0 0
    %384 = vmatmul.mubr.bf16.gmra.mxu0 %v252
    %v385 = vpop.f32.mrf.mxu0
    %v386 = vadd.f32 0.0, %v385
    %v387 = vpop.f32.mrf.mxu0
    %v388 = vpop.f32.mrf.mxu0
    %v389 = vadd.f32 0.0, %v388
    %v390 = vpop.f32.mrf.mxu0
    %391 = vmatprep.mubr.bf16.mxu0 0
    %392 = vmatmul.mubr.bf16.gmra.mxu0 %v255
    %v393 = vpop.f32.mrf.mxu0
    %v394 = vadd.f32 0.0, %v393
    %v395 = vpop.f32.mrf.mxu0
    %v396 = vpop.f32.mrf.mxu0
    %v397 = vadd.f32 0.0, %v396
    %v398 = vpop.f32.mrf.mxu0
    %399 = vmatprep.mubr.bf16.mxu0 0
    %400 = vmatmul.mubr.bf16.gmra.mxu0 %v258
    %v401 = vpop.f32.mrf.mxu0
    %v402 = vadd.f32 0.0, %v401
    %v403 = vpop.f32.mrf.mxu0
    %v404 = vpop.f32.mrf.mxu0
    %v405 = vadd.f32 0.0, %v404
    %v406 = vpop.f32.mrf.mxu0
    %407 = vmatprep.mubr.bf16.mxu0 0
    %408 = vmatmul.mubr.bf16.gmra.mxu0 %v261
    %v409 = vpop.f32.mrf.mxu0
    %v410 = vadd.f32 0.0, %v409
    %v411 = vpop.f32.mrf.mxu0
    %v412 = vpop.f32.mrf.mxu0
    %v413 = vadd.f32 0.0, %v412
    %v414 = vpop.f32.mrf.mxu0
    %415 = vmatprep.mubr.bf16.mxu0 0
    %416 = vmatmul.mubr.bf16.gmra.mxu0 %v264
    %v417 = vpop.f32.mrf.mxu0
    %v418 = vadd.f32 0.0, %v417
    %v419 = vpop.f32.mrf.mxu0
    %v420 = vpop.f32.mrf.mxu0
    %v421 = vadd.f32 0.0, %v420
    %v422 = vpop.f32.mrf.mxu0
    %423 = vmatprep.mubr.bf16.mxu0 0
    %424 = vmatmul.mubr.bf16.gmra.mxu0 %v267
    %v425 = vpop.f32.mrf.mxu0
    %v426 = vadd.f32 0.0, %v425
    %v427 = vpop.f32.mrf.mxu0
    %v428 = vpop.f32.mrf.mxu0
    %v429 = vadd.f32 0.0, %v428
    %v430 = vpop.f32.mrf.mxu0
    %431 = vmatprep.mubr.bf16.mxu0 0
    %432 = vmatmul.mubr.bf16.gmra.mxu0 %v270
    %v433 = vpop.f32.mrf.mxu0
    %v434 = vadd.f32 0.0, %v433
    %v435 = vpop.f32.mrf.mxu0
    %v436 = vpop.f32.mrf.mxu0
    %v437 = vadd.f32 0.0, %v436
    %v438 = vpop.f32.mrf.mxu0
    %439 = vmatprep.mubr.bf16.mxu0 0
    %440 = vmatmul.mubr.bf16.gmra.mxu0 %v273
    %v441 = vpop.f32.mrf.mxu0
    %v442 = vadd.f32 0.0, %v441
    %v443 = vpop.f32.mrf.mxu0
    %v444 = vpop.f32.mrf.mxu0
    %v445 = vadd.f32 0.0, %v444
    %v446 = vpop.f32.mrf.mxu0
    %447 = vmatprep.mubr.bf16.mxu0 0
    %448 = vmatmul.mubr.bf16.gmra.mxu0 %v276
    %v449 = vpop.f32.mrf.mxu0
    %v450 = vadd.f32 0.0, %v449
    %v451 = vpop.f32.mrf.mxu0
    %v452 = vpop.f32.mrf.mxu0
    %v453 = vadd.f32 0.0, %v452
    %v454 = vpop.f32.mrf.mxu0
    %455 = vmatprep.mubr.bf16.mxu0 0
    %456 = vmatmul.mubr.bf16.gmra.mxu0 %v279
    %v457 = vpop.f32.mrf.mxu0
    %v458 = vadd.f32 0.0, %v457
    %v459 = vpop.f32.mrf.mxu0
    %v460 = vpop.f32.mrf.mxu0
    %v461 = vadd.f32 0.0, %v460
    %v462 = vpop.f32.mrf.mxu0
    %463 = vmatprep.mubr.bf16.mxu0 0
    %464 = vmatmul.mubr.bf16.gmra.mxu0 %v282
    %v465 = vpop.f32.mrf.mxu0
    %v466 = vadd.f32 0.0, %v465
    %v467 = vpop.f32.mrf.mxu0
    %v468 = vpop.f32.mrf.mxu0
    %v469 = vadd.f32 0.0, %v468
    %v470 = vpop.f32.mrf.mxu0
    %471 = vmatprep.mubr.bf16.mxu0 0
    %472 = vmatmul.mubr.bf16.gmra.mxu0 %v285
    %v473 = vpop.f32.mrf.mxu0
    %v474 = vadd.f32 0.0, %v473
    %v475 = vpop.f32.mrf.mxu0
    %v476 = vpop.f32.mrf.mxu0
    %v477 = vadd.f32 0.0, %v476
    %v478 = vpop.f32.mrf.mxu0
    %479 = vmatprep.mubr.bf16.mxu0 0
    %480 = vmatmul.mubr.bf16.gmra.mxu0 %v288
    %v481 = vpop.f32.mrf.mxu0
    %v482 = vadd.f32 0.0, %v481
    %v483 = vpop.f32.mrf.mxu0
    %v484 = vpop.f32.mrf.mxu0
    %v485 = vadd.f32 0.0, %v484
    %v486 = vpop.f32.mrf.mxu0
    %487 = vmatprep.mubr.bf16.mxu0 0
    %488 = vmatmul.mubr.bf16.gmra.mxu0 %v291
    %v489 = vpop.f32.mrf.mxu0
    %v490 = vadd.f32 0.0, %v489
    %v491 = vpop.f32.mrf.mxu0
    %v492 = vpop.f32.mrf.mxu0
    %v493 = vadd.f32 0.0, %v492
    %v494 = vpop.f32.mrf.mxu0
    %495 = vmatprep.mubr.bf16.mxu0 0
    %496 = vmatmul.mubr.bf16.gmra.mxu0 %v294
    %v497 = vpop.f32.mrf.mxu0
    %v498 = vadd.f32 0.0, %v497
    %v499 = vpop.f32.mrf.mxu0
    %v500 = vpop.f32.mrf.mxu0
    %v501 = vadd.f32 0.0, %v500
    %v502 = vpop.f32.mrf.mxu0
    %503 = vmatprep.mubr.bf16.mxu0 0
    %504 = vmatmul.mubr.bf16.gmra.mxu0 %v297
    %v505 = vpop.f32.mrf.mxu0
    %v506 = vadd.f32 0.0, %v505
    %v507 = vpop.f32.mrf.mxu0
    %v508 = vpop.f32.mrf.mxu0
    %v509 = vadd.f32 0.0, %v508
    %v510 = vpop.f32.mrf.mxu0
    %511 = vmatprep.mubr.bf16.mxu0 0
    %512 = vmatmul.mubr.bf16.gmra.mxu0 %v300
    %v513 = vpop.f32.mrf.mxu0
    %v514 = vadd.f32 0.0, %v513
    %v515 = vpop.f32.mrf.mxu0
    %v516 = vpop.f32.mrf.mxu0
    %v517 = vadd.f32 0.0, %v516
    %v518 = vpop.f32.mrf.mxu0
    %519 = vmatprep.mubr.bf16.mxu0 0
    %520 = vmatmul.mubr.bf16.gmra.mxu0 %v303
    %v521 = vpop.f32.mrf.mxu0
    %v522 = vadd.f32 0.0, %v521
    %v523 = vpop.f32.mrf.mxu0
    %v524 = vpop.f32.mrf.mxu0
    %v525 = vadd.f32 0.0, %v524
    %v526 = vpop.f32.mrf.mxu0
    %527 = vmatprep.mubr.bf16.mxu0 0
    %528 = vmatmul.mubr.bf16.gmra.mxu0 %v306
    %v529 = vpop.f32.mrf.mxu0
    %v530 = vadd.f32 0.0, %v529
    %v531 = vpop.f32.mrf.mxu0
    %v532 = vpop.f32.mrf.mxu0
    %v533 = vadd.f32 0.0, %v532
    %v534 = vpop.f32.mrf.mxu0
    %535 = vmatprep.mubr.bf16.mxu0 0
    %536 = vmatmul.mubr.bf16.gmra.mxu0 %v309
    %v537 = vpop.f32.mrf.mxu0
    %v538 = vadd.f32 0.0, %v537
    %v539 = vpop.f32.mrf.mxu0
    %v540 = vpop.f32.mrf.mxu0
    %v541 = vpop.f32.mrf.mxu0
    %542 = vdwg.mxu0
    %vm543 = vcmask 523264
    %v544 = vsel %vm543, %v346, 0.0
    %v545 = vsel %vm543, %v349, 0.0
    %v546 = vadd.f32 %v544, %v545
    %v547 = vsel %vm543, %v354, 0.0
    %v548 = vadd.f32 %v546, %v547
    %v549 = vsel %vm543, %v357, 0.0
    %v550 = vadd.f32 %v548, %v549
    %v551 = vsel %vm543, %v362, 0.0
    %v552 = vadd.f32 %v550, %v551
    %v553 = vsel %vm543, %v365, 0.0
    %v554 = vadd.f32 %v552, %v553
    %v555 = vsel %vm543, %v370, 0.0
    %v556 = vadd.f32 %v554, %v555
    %v557 = vsel %vm543, %v373, 0.0
    %v558 = vadd.f32 %v556, %v557
    %v559 = vsel %vm543, %v378, 0.0
    %v560 = vadd.f32 %v558, %v559
    %v561 = vsel %vm543, %v381, 0.0
    %v562 = vadd.f32 %v560, %v561
    %v563 = vsel %vm543, %v386, 0.0
    %v564 = vadd.f32 %v562, %v563
    %v565 = vsel %vm543, %v389, 0.0
    %v566 = vadd.f32 %v564, %v565
    %v567 = vsel %vm543, %v394, 0.0
    %v568 = vadd.f32 %v566, %v567
    %v569 = vsel %vm543, %v397, 0.0
    %v570 = vadd.f32 %v568, %v569
    %v571 = vsel %vm543, %v402, 0.0
    %v572 = vadd.f32 %v570, %v571
    %v573 = vsel %vm543, %v405, 0.0
    %v574 = vadd.f32 %v572, %v573
    %v575 = vsel %vm543, %v410, 0.0
    %v576 = vadd.f32 %v574, %v575
    %v577 = vsel %vm543, %v413, 0.0
    %v578 = vadd.f32 %v576, %v577
    %v579 = vsel %vm543, %v418, 0.0
    %v580 = vadd.f32 %v578, %v579
    %v581 = vsel %vm543, %v421, 0.0
    %v582 = vadd.f32 %v580, %v581
    %v583 = vsel %vm543, %v426, 0.0
    %v584 = vadd.f32 %v582, %v583
    %v585 = vsel %vm543, %v429, 0.0
    %v586 = vadd.f32 %v584, %v585
    %v587 = vsel %vm543, %v434, 0.0
    %v588 = vadd.f32 %v586, %v587
    %v589 = vsel %vm543, %v437, 0.0
    %v590 = vadd.f32 %v588, %v589
    %v591 = vsel %vm543, %v442, 0.0
    %v592 = vadd.f32 %v590, %v591
    %v593 = vsel %vm543, %v445, 0.0
    %v594 = vadd.f32 %v592, %v593
    %v595 = vsel %vm543, %v450, 0.0
    %v596 = vadd.f32 %v594, %v595
    %v597 = vsel %vm543, %v453, 0.0
    %v598 = vadd.f32 %v596, %v597
    %v599 = vsel %vm543, %v458, 0.0
    %v600 = vadd.f32 %v598, %v599
    %v601 = vsel %vm543, %v461, 0.0
    %v602 = vadd.f32 %v600, %v601
    %v603 = vsel %vm543, %v466, 0.0
    %v604 = vadd.f32 %v602, %v603
    %v605 = vsel %vm543, %v469, 0.0
    %v606 = vadd.f32 %v604, %v605
    %v607 = vsel %vm543, %v474, 0.0
    %v608 = vadd.f32 %v606, %v607
    %v609 = vsel %vm543, %v477, 0.0
    %v610 = vadd.f32 %v608, %v609
    %v611 = vsel %vm543, %v482, 0.0
    %v612 = vadd.f32 %v610, %v611
    %v613 = vsel %vm543, %v485, 0.0
    %v614 = vadd.f32 %v612, %v613
    %v615 = vsel %vm543, %v490, 0.0
    %v616 = vadd.f32 %v614, %v615
    %v617 = vsel %vm543, %v493, 0.0
    %v618 = vadd.f32 %v616, %v617
    %v619 = vsel %vm543, %v498, 0.0
    %v620 = vadd.f32 %v618, %v619
    %v621 = vsel %vm543, %v501, 0.0
    %v622 = vadd.f32 %v620, %v621
    %v623 = vsel %vm543, %v506, 0.0
    %v624 = vadd.f32 %v622, %v623
    %v625 = vsel %vm543, %v509, 0.0
    %v626 = vadd.f32 %v624, %v625
    %v627 = vsel %vm543, %v514, 0.0
    %v628 = vadd.f32 %v626, %v627
    %v629 = vsel %vm543, %v517, 0.0
    %v630 = vadd.f32 %v628, %v629
    %v631 = vsel %vm543, %v522, 0.0
    %v632 = vadd.f32 %v630, %v631
    %v633 = vsel %vm543, %v525, 0.0
    %v634 = vadd.f32 %v632, %v633
    %v635 = vsel %vm543, %v530, 0.0
    %v636 = vadd.f32 %v634, %v635
    %v637 = vsel %vm543, %v533, 0.0
    %v638 = vadd.f32 %v636, %v637
    %v639 = vsel %vm543, %v538, 0.0
    %v640 = vadd.f32 %v638, %v639
    %v641 = vrot.slane %v640, 4
    %v642 = vadd.f32 %v640, %v641
    %v643 = vrot.slane %v642, 2
    %v644 = vadd.f32 %v642, %v643
    %v645 = vrot.slane %v644, 1
    %v646 = vadd.f32 %v644, %v645
    %v647 = vmul.f32 %v346, %v346
    %v648 = vmul.f32 %v349, %v349
    %v649 = vmul.f32 %v354, %v354
    %v650 = vmul.f32 %v357, %v357
    %v651 = vmul.f32 %v362, %v362
    %v652 = vmul.f32 %v365, %v365
    %v653 = vmul.f32 %v370, %v370
    %v654 = vmul.f32 %v373, %v373
    %v655 = vmul.f32 %v378, %v378
    %v656 = vmul.f32 %v381, %v381
    %v657 = vmul.f32 %v386, %v386
    %v658 = vmul.f32 %v389, %v389
    %v659 = vmul.f32 %v394, %v394
    %v660 = vmul.f32 %v397, %v397
    %v661 = vmul.f32 %v402, %v402
    %v662 = vmul.f32 %v405, %v405
    %v663 = vmul.f32 %v410, %v410
    %v664 = vmul.f32 %v413, %v413
    %v665 = vmul.f32 %v418, %v418
    %v666 = vmul.f32 %v421, %v421
    %v667 = vmul.f32 %v426, %v426
    %v668 = vmul.f32 %v429, %v429
    %v669 = vmul.f32 %v434, %v434
    %v670 = vmul.f32 %v437, %v437
    %v671 = vmul.f32 %v442, %v442
    %v672 = vmul.f32 %v445, %v445
    %v673 = vmul.f32 %v450, %v450
    %v674 = vmul.f32 %v453, %v453
    %v675 = vmul.f32 %v458, %v458
    %v676 = vmul.f32 %v461, %v461
    %v677 = vmul.f32 %v466, %v466
    %v678 = vmul.f32 %v469, %v469
    %v679 = vmul.f32 %v474, %v474
    %v680 = vmul.f32 %v477, %v477
    %v681 = vmul.f32 %v482, %v482
    %v682 = vmul.f32 %v485, %v485
    %v683 = vmul.f32 %v490, %v490
    %v684 = vmul.f32 %v493, %v493
    %v685 = vmul.f32 %v498, %v498
    %v686 = vmul.f32 %v501, %v501
    %v687 = vmul.f32 %v506, %v506
    %v688 = vmul.f32 %v509, %v509
    %v689 = vmul.f32 %v514, %v514
    %v690 = vmul.f32 %v517, %v517
    %v691 = vmul.f32 %v522, %v522
    %v692 = vmul.f32 %v525, %v525
    %v693 = vmul.f32 %v530, %v530
    %v694 = vmul.f32 %v533, %v533
    %v695 = vmul.f32 %v538, %v538
    %v696 = vsel %vm543, %v647, 0.0
    %v697 = vsel %vm543, %v648, 0.0
    %v698 = vadd.f32 %v696, %v697
    %v699 = vsel %vm543, %v649, 0.0
    %v700 = vadd.f32 %v698, %v699
    %v701 = vsel %vm543, %v650, 0.0
    %v702 = vadd.f32 %v700, %v701
    %v703 = vsel %vm543, %v651, 0.0
    %v704 = vadd.f32 %v702, %v703
    %v705 = vsel %vm543, %v652, 0.0
    %v706 = vadd.f32 %v704, %v705
    %v707 = vsel %vm543, %v653, 0.0
    %v708 = vadd.f32 %v706, %v707
    %v709 = vsel %vm543, %v654, 0.0
    %v710 = vadd.f32 %v708, %v709
    %v711 = vsel %vm543, %v655, 0.0
    %v712 = vadd.f32 %v710, %v711
    %v713 = vsel %vm543, %v656, 0.0
    %v714 = vadd.f32 %v712, %v713
    %v715 = vsel %vm543, %v657, 0.0
    %v716 = vadd.f32 %v714, %v715
    %v717 = vsel %vm543, %v658, 0.0
    %v718 = vadd.f32 %v716, %v717
    %v719 = vsel %vm543, %v659, 0.0
    %v720 = vadd.f32 %v718, %v719
    %v721 = vsel %vm543, %v660, 0.0
    %v722 = vadd.f32 %v720, %v721
    %v723 = vsel %vm543, %v661, 0.0
    %v724 = vadd.f32 %v722, %v723
    %v725 = vsel %vm543, %v662, 0.0
    %v726 = vadd.f32 %v724, %v725
    %v727 = vsel %vm543, %v663, 0.0
    %v728 = vadd.f32 %v726, %v727
    %v729 = vsel %vm543, %v664, 0.0
    %v730 = vadd.f32 %v728, %v729
    %v731 = vsel %vm543, %v665, 0.0
    %v732 = vadd.f32 %v730, %v731
    %v733 = vsel %vm543, %v666, 0.0
    %v734 = vadd.f32 %v732, %v733
    %v735 = vsel %vm543, %v667, 0.0
    %v736 = vadd.f32 %v734, %v735
    %v737 = vsel %vm543, %v668, 0.0
    %v738 = vadd.f32 %v736, %v737
    %v739 = vsel %vm543, %v669, 0.0
    %v740 = vadd.f32 %v738, %v739
    %v741 = vsel %vm543, %v670, 0.0
    %v742 = vadd.f32 %v740, %v741
    %v743 = vsel %vm543, %v671, 0.0
    %v744 = vadd.f32 %v742, %v743
    %v745 = vsel %vm543, %v672, 0.0
    %v746 = vadd.f32 %v744, %v745
    %v747 = vsel %vm543, %v673, 0.0
    %v748 = vadd.f32 %v746, %v747
    %v749 = vsel %vm543, %v674, 0.0
    %v750 = vadd.f32 %v748, %v749
    %v751 = vsel %vm543, %v675, 0.0
    %v752 = vadd.f32 %v750, %v751
    %v753 = vsel %vm543, %v676, 0.0
    %v754 = vadd.f32 %v752, %v753
    %v755 = vsel %vm543, %v677, 0.0
    %v756 = vadd.f32 %v754, %v755
    %v757 = vsel %vm543, %v678, 0.0
    %v758 = vadd.f32 %v756, %v757
    %v759 = vsel %vm543, %v679, 0.0
    %v760 = vadd.f32 %v758, %v759
    %v761 = vsel %vm543, %v680, 0.0
    %v762 = vadd.f32 %v760, %v761
    %v763 = vsel %vm543, %v681, 0.0
    %v764 = vadd.f32 %v762, %v763
    %v765 = vsel %vm543, %v682, 0.0
    %v766 = vadd.f32 %v764, %v765
    %v767 = vsel %vm543, %v683, 0.0
    %v768 = vadd.f32 %v766, %v767
    %v769 = vsel %vm543, %v684, 0.0
    %v770 = vadd.f32 %v768, %v769
    %v771 = vsel %vm543, %v685, 0.0
    %v772 = vadd.f32 %v770, %v771
    %v773 = vsel %vm543, %v686, 0.0
    %v774 = vadd.f32 %v772, %v773
    %v775 = vsel %vm543, %v687, 0.0
    %v776 = vadd.f32 %v774, %v775
    %v777 = vsel %vm543, %v688, 0.0
    %v778 = vadd.f32 %v776, %v777
    %v779 = vsel %vm543, %v689, 0.0
    %v780 = vadd.f32 %v778, %v779
    %v781 = vsel %vm543, %v690, 0.0
    %v782 = vadd.f32 %v780, %v781
    %v783 = vsel %vm543, %v691, 0.0
    %v784 = vadd.f32 %v782, %v783
    %v785 = vsel %vm543, %v692, 0.0
    %v786 = vadd.f32 %v784, %v785
    %v787 = vsel %vm543, %v693, 0.0
    %v788 = vadd.f32 %v786, %v787
    %v789 = vsel %vm543, %v694, 0.0
    %v790 = vadd.f32 %v788, %v789
    %v791 = vsel %vm543, %v695, 0.0
    %v792 = vadd.f32 %v790, %v791
    %v793 = vrot.slane %v792, 4
    %v794 = vadd.f32 %v792, %v793
    %v795 = vrot.slane %v794, 2
    %v796 = vadd.f32 %v794, %v795
    %v797 = vrot.slane %v796, 1
    %v798 = vadd.f32 %v796, %v797
    %v799 = vmul.f32 %v646, 0.0025510204
    %v800 = vmul.f32 %v798, 0.0025510204
    %v801 = vmul.f32 %v799, %v799
    %v802 = vsub.f32 %v800, %v801
    %v803 = vadd.f32 %v802, 1e-05
    %v804 = vrsqrt.pop %v803
    %v805 = vld [vmem:[#allocation4] sm:$0x1]
    %v806 = vmul.f32 %v805, %v804
    %v807 = vld [vmem:[#allocation6] sm:$0x1]
    %v808 = vmul.f32 %v799, %v806
    %v809 = vsub.f32 %v807, %v808
    %v811 = vlaneseq
    %v812 = vshrl.u32 %v811, 7
    %v813 = vsub.s32 0, %v812
    %v814 = vrot.slane %v806, %v813
    %v816 = vmul.f32 %v346, %v814
    %v817 = vmul.f32 %v349, %v814
    %v818 = vmul.f32 %v354, %v814
    %v819 = vmul.f32 %v357, %v814
    %v820 = vmul.f32 %v362, %v814
    %v821 = vmul.f32 %v365, %v814
    %v822 = vmul.f32 %v370, %v814
    %v823 = vmul.f32 %v373, %v814
    %v824 = vmul.f32 %v378, %v814
    %v825 = vmul.f32 %v381, %v814
    %v826 = vmul.f32 %v386, %v814
    %v827 = vmul.f32 %v389, %v814
    %v828 = vmul.f32 %v394, %v814
    %v829 = vmul.f32 %v397, %v814
    %v830 = vmul.f32 %v402, %v814
    %v831 = vmul.f32 %v405, %v814
    %v832 = vmul.f32 %v410, %v814
    %v833 = vmul.f32 %v413, %v814
    %v834 = vmul.f32 %v418, %v814
    %v835 = vmul.f32 %v421, %v814
    %v836 = vmul.f32 %v426, %v814
    %v837 = vmul.f32 %v429, %v814
    %v838 = vmul.f32 %v434, %v814
    %v839 = vmul.f32 %v437, %v814
    %v840 = vmul.f32 %v442, %v814
    %v841 = vmul.f32 %v445, %v814
    %v842 = vmul.f32 %v450, %v814
    %v843 = vmul.f32 %v453, %v814
    %v844 = vmul.f32 %v458, %v814
    %v845 = vmul.f32 %v461, %v814
    %v846 = vmul.f32 %v466, %v814
    %v847 = vmul.f32 %v469, %v814
    %v848 = vmul.f32 %v474, %v814
    %v849 = vmul.f32 %v477, %v814
    %v850 = vmul.f32 %v482, %v814
    %v851 = vmul.f32 %v485, %v814
    %v852 = vmul.f32 %v490, %v814
    %v853 = vmul.f32 %v493, %v814
    %v854 = vmul.f32 %v498, %v814
    %v855 = vmul.f32 %v501, %v814
    %v856 = vmul.f32 %v506, %v814
    %v857 = vmul.f32 %v509, %v814
    %v858 = vmul.f32 %v514, %v814
    %v859 = vmul.f32 %v517, %v814
    %v860 = vmul.f32 %v522, %v814
    %v861 = vmul.f32 %v525, %v814
    %v862 = vmul.f32 %v530, %v814
    %v863 = vmul.f32 %v533, %v814
    %v864 = vmul.f32 %v538, %v814
    %v866 = vlaneseq
    %v867 = vshrl.u32 %v866, 7
    %v868 = vsub.s32 0, %v867
    %v869 = vrot.slane %v809, %v868
    %v871 = vadd.f32 %v816, %v869
    %v872 = vadd.f32 %v817, %v869
    %v873 = vadd.f32 %v818, %v869
    %v874 = vadd.f32 %v819, %v869
    %v875 = vadd.f32 %v820, %v869
    %v876 = vadd.f32 %v821, %v869
    %v877 = vadd.f32 %v822, %v869
    %v878 = vadd.f32 %v823, %v869
    %v879 = vadd.f32 %v824, %v869
    %v880 = vadd.f32 %v825, %v869
    %v881 = vadd.f32 %v826, %v869
    %v882 = vadd.f32 %v827, %v869
    %v883 = vadd.f32 %v828, %v869
    %v884 = vadd.f32 %v829, %v869
    %v885 = vadd.f32 %v830, %v869
    %v886 = vadd.f32 %v831, %v869
    %v887 = vadd.f32 %v832, %v869
    %v888 = vadd.f32 %v833, %v869
    %v889 = vadd.f32 %v834, %v869
    %v890 = vadd.f32 %v835, %v869
    %v891 = vadd.f32 %v836, %v869
    %v892 = vadd.f32 %v837, %v869
    %v893 = vadd.f32 %v838, %v869
    %v894 = vadd.f32 %v839, %v869
    %v895 = vadd.f32 %v840, %v869
    %v896 = vadd.f32 %v841, %v869
    %v897 = vadd.f32 %v842, %v869
    %v898 = vadd.f32 %v843, %v869
    %v899 = vadd.f32 %v844, %v869
    %v900 = vadd.f32 %v845, %v869
    %v901 = vadd.f32 %v846, %v869
    %v902 = vadd.f32 %v847, %v869
    %v903 = vadd.f32 %v848, %v869
    %v904 = vadd.f32 %v849, %v869
    %v905 = vadd.f32 %v850, %v869
    %v906 = vadd.f32 %v851, %v869
    %v907 = vadd.f32 %v852, %v869
    %v908 = vadd.f32 %v853, %v869
    %v909 = vadd.f32 %v854, %v869
    %v910 = vadd.f32 %v855, %v869
    %v911 = vadd.f32 %v856, %v869
    %v912 = vadd.f32 %v857, %v869
    %v913 = vadd.f32 %v858, %v869
    %v914 = vadd.f32 %v859, %v869
    %v915 = vadd.f32 %v860, %v869
    %v916 = vadd.f32 %v861, %v869
    %v917 = vadd.f32 %v862, %v869
    %v918 = vadd.f32 %v863, %v869
    %v919 = vadd.f32 %v864, %v869
    %vm920 = vcmp.gt.f32.partialorder %v871, 0.0
    %vm921 = vcmp.gt.f32.partialorder %v872, 0.0
    %vm922 = vcmp.gt.f32.partialorder %v873, 0.0
    %vm923 = vcmp.gt.f32.partialorder %v874, 0.0
    %vm924 = vcmp.gt.f32.partialorder %v875, 0.0
    %vm925 = vcmp.gt.f32.partialorder %v876, 0.0
    %vm926 = vcmp.gt.f32.partialorder %v877, 0.0
    %vm927 = vcmp.gt.f32.partialorder %v878, 0.0
    %vm928 = vcmp.gt.f32.partialorder %v879, 0.0
    %vm929 = vcmp.gt.f32.partialorder %v880, 0.0
    %vm930 = vcmp.gt.f32.partialorder %v881, 0.0
    %vm931 = vcmp.gt.f32.partialorder %v882, 0.0
    %vm932 = vcmp.gt.f32.partialorder %v883, 0.0
    %vm933 = vcmp.gt.f32.partialorder %v884, 0.0
    %vm934 = vcmp.gt.f32.partialorder %v885, 0.0
    %vm935 = vcmp.gt.f32.partialorder %v886, 0.0
    %vm936 = vcmp.gt.f32.partialorder %v887, 0.0
    %vm937 = vcmp.gt.f32.partialorder %v888, 0.0
    %vm938 = vcmp.gt.f32.partialorder %v889, 0.0
    %vm939 = vcmp.gt.f32.partialorder %v890, 0.0
    %vm940 = vcmp.gt.f32.partialorder %v891, 0.0
    %vm941 = vcmp.gt.f32.partialorder %v892, 0.0
    %vm942 = vcmp.gt.f32.partialorder %v893, 0.0
    %vm943 = vcmp.gt.f32.partialorder %v894, 0.0
    %vm944 = vcmp.gt.f32.partialorder %v895, 0.0
    %vm945 = vcmp.gt.f32.partialorder %v896, 0.0
    %vm946 = vcmp.gt.f32.partialorder %v897, 0.0
    %vm947 = vcmp.gt.f32.partialorder %v898, 0.0
    %vm948 = vcmp.gt.f32.partialorder %v899, 0.0
    %vm949 = vcmp.gt.f32.partialorder %v900, 0.0
    %vm950 = vcmp.gt.f32.partialorder %v901, 0.0
    %vm951 = vcmp.gt.f32.partialorder %v902, 0.0
    %vm952 = vcmp.gt.f32.partialorder %v903, 0.0
    %vm953 = vcmp.gt.f32.partialorder %v904, 0.0
    %vm954 = vcmp.gt.f32.partialorder %v905, 0.0
    %vm955 = vcmp.gt.f32.partialorder %v906, 0.0
    %vm956 = vcmp.gt.f32.partialorder %v907, 0.0
    %vm957 = vcmp.gt.f32.partialorder %v908, 0.0
    %vm958 = vcmp.gt.f32.partialorder %v909, 0.0
    %vm959 = vcmp.gt.f32.partialorder %v910, 0.0
    %vm960 = vcmp.gt.f32.partialorder %v911, 0.0
    %vm961 = vcmp.gt.f32.partialorder %v912, 0.0
    %vm962 = vcmp.gt.f32.partialorder %v913, 0.0
    %vm963 = vcmp.gt.f32.partialorder %v914, 0.0
    %vm964 = vcmp.gt.f32.partialorder %v915, 0.0
    %vm965 = vcmp.gt.f32.partialorder %v916, 0.0
    %vm966 = vcmp.gt.f32.partialorder %v917, 0.0
    %vm967 = vcmp.gt.f32.partialorder %v918, 0.0
    %vm968 = vcmp.gt.f32.partialorder %v919, 0.0
    %v969 = vmul.f32 %v871, 0.2
    %v970 = vmul.f32 %v872, 0.2
    %v971 = vmul.f32 %v873, 0.2
    %v972 = vmul.f32 %v874, 0.2
    %v973 = vmul.f32 %v875, 0.2
    %v974 = vmul.f32 %v876, 0.2
    %v975 = vmul.f32 %v877, 0.2
    %v976 = vmul.f32 %v878, 0.2
    %v977 = vmul.f32 %v879, 0.2
    %v978 = vmul.f32 %v880, 0.2
    %v979 = vmul.f32 %v881, 0.2
    %v980 = vmul.f32 %v882, 0.2
    %v981 = vmul.f32 %v883, 0.2
    %v982 = vmul.f32 %v884, 0.2
    %v983 = vmul.f32 %v885, 0.2
    %v984 = vmul.f32 %v886, 0.2
    %v985 = vmul.f32 %v887, 0.2
    %v986 = vmul.f32 %v888, 0.2
    %v987 = vmul.f32 %v889, 0.2
    %v988 = vmul.f32 %v890, 0.2
    %v989 = vmul.f32 %v891, 0.2
    %v990 = vmul.f32 %v892, 0.2
    %v991 = vmul.f32 %v893, 0.2
    %v992 = vmul.f32 %v894, 0.2
    %v993 = vmul.f32 %v895, 0.2
    %v994 = vmul.f32 %v896, 0.2
    %v995 = vmul.f32 %v897, 0.2
    %v996 = vmul.f32 %v898, 0.2
    %v997 = vmul.f32 %v899, 0.2
    %v998 = vmul.f32 %v900, 0.2
    %v999 = vmul.f32 %v901, 0.2
    %v1000 = vmul.f32 %v902, 0.2
    %v1001 = vmul.f32 %v903, 0.2
    %v1002 = vmul.f32 %v904, 0.2
    %v1003 = vmul.f32 %v905, 0.2
    %v1004 = vmul.f32 %v906, 0.2
    %v1005 = vmul.f32 %v907, 0.2
    %v1006 = vmul.f32 %v908, 0.2
    %v1007 = vmul.f32 %v909, 0.2
    %v1008 = vmul.f32 %v910, 0.2
    %v1009 = vmul.f32 %v911, 0.2
    %v1010 = vmul.f32 %v912, 0.2
    %v1011 = vmul.f32 %v913, 0.2
    %v1012 = vmul.f32 %v914, 0.2
    %v1013 = vmul.f32 %v915, 0.2
    %v1014 = vmul.f32 %v916, 0.2
    %v1015 = vmul.f32 %v917, 0.2
    %v1016 = vmul.f32 %v918, 0.2
    %v1017 = vmul.f32 %v919, 0.2
    %v1018 = vsel %vm920, %v871, %v969
    %v1019 = vsel %vm921, %v872, %v970
    %v1020 = vsel %vm922, %v873, %v971
    %v1021 = vsel %vm923, %v874, %v972
    %v1022 = vsel %vm924, %v875, %v973
    %v1023 = vsel %vm925, %v876, %v974
    %v1024 = vsel %vm926, %v877, %v975
    %v1025 = vsel %vm927, %v878, %v976
    %v1026 = vsel %vm928, %v879, %v977
    %v1027 = vsel %vm929, %v880, %v978
    %v1028 = vsel %vm930, %v881, %v979
    %v1029 = vsel %vm931, %v882, %v980
    %v1030 = vsel %vm932, %v883, %v981
    %v1031 = vsel %vm933, %v884, %v982
    %v1032 = vsel %vm934, %v885, %v983
    %v1033 = vsel %vm935, %v886, %v984
    %v1034 = vsel %vm936, %v887, %v985
    %v1035 = vsel %vm937, %v888, %v986
    %v1036 = vsel %vm938, %v889, %v987
    %v1037 = vsel %vm939, %v890, %v988
    %v1038 = vsel %vm940, %v891, %v989
    %v1039 = vsel %vm941, %v892, %v990
    %v1040 = vsel %vm942, %v893, %v991
    %v1041 = vsel %vm943, %v894, %v992
    %v1042 = vsel %vm944, %v895, %v993
    %v1043 = vsel %vm945, %v896, %v994
    %v1044 = vsel %vm946, %v897, %v995
    %v1045 = vsel %vm947, %v898, %v996
    %v1046 = vsel %vm948, %v899, %v997
    %v1047 = vsel %vm949, %v900, %v998
    %v1048 = vsel %vm950, %v901, %v999
    %v1049 = vsel %vm951, %v902, %v1000
    %v1050 = vsel %vm952, %v903, %v1001
    %v1051 = vsel %vm953, %v904, %v1002
    %v1052 = vsel %vm954, %v905, %v1003
    %v1053 = vsel %vm955, %v906, %v1004
    %v1054 = vsel %vm956, %v907, %v1005
    %v1055 = vsel %vm957, %v908, %v1006
    %v1056 = vsel %vm958, %v909, %v1007
    %v1057 = vsel %vm959, %v910, %v1008
    %v1058 = vsel %vm960, %v911, %v1009
    %v1059 = vsel %vm961, %v912, %v1010
    %v1060 = vsel %vm962, %v913, %v1011
    %v1061 = vsel %vm963, %v914, %v1012
    %v1062 = vsel %vm964, %v915, %v1013
    %v1063 = vsel %vm965, %v916, %v1014
    %v1064 = vsel %vm966, %v917, %v1015
    %v1065 = vsel %vm967, %v918, %v1016
    %v1066 = vsel %vm968, %v919, %v1017
    %v1067 = vpack.c.bf16 %v1019, %v1018
    %v1068 = vpack.c.bf16 %v1021, %v1020
    %v1069 = vpack.c.bf16 %v1023, %v1022
    %v1070 = vpack.c.bf16 %v1025, %v1024
    %v1071 = vpack.c.bf16 %v1027, %v1026
    %v1072 = vpack.c.bf16 %v1029, %v1028
    %v1073 = vpack.c.bf16 %v1031, %v1030
    %v1074 = vpack.c.bf16 %v1033, %v1032
    %v1075 = vpack.c.bf16 %v1035, %v1034
    %v1076 = vpack.c.bf16 %v1037, %v1036
    %v1077 = vpack.c.bf16 %v1039, %v1038
    %v1078 = vpack.c.bf16 %v1041, %v1040
    %v1079 = vpack.c.bf16 %v1043, %v1042
    %v1080 = vpack.c.bf16 %v1045, %v1044
    %v1081 = vpack.c.bf16 %v1047, %v1046
    %v1082 = vpack.c.bf16 %v1049, %v1048
    %v1083 = vpack.c.bf16 %v1051, %v1050
    %v1084 = vpack.c.bf16 %v1053, %v1052
    %v1085 = vpack.c.bf16 %v1055, %v1054
    %v1086 = vpack.c.bf16 %v1057, %v1056
    %v1087 = vpack.c.bf16 %v1059, %v1058
    %v1088 = vpack.c.bf16 %v1061, %v1060
    %v1089 = vpack.c.bf16 %v1063, %v1062
    %v1090 = vpack.c.bf16 %v1065, %v1064
    %v1091 = vpack.c.bf16 %v1066, %v1066
    %v1117 = vunpack.c.l.b16 %v1067
    %v1118 = vunpack.c.h.b16 %v1067
    %v1119 = vunpack.c.l.b16 %v1068
    %v1120 = vunpack.c.h.b16 %v1068
    %v1121 = vunpack.c.l.b16 %v1069
    %v1122 = vunpack.c.h.b16 %v1069
    %v1123 = vunpack.c.l.b16 %v1070
    %v1124 = vunpack.c.h.b16 %v1070
    %v1125 = vunpack.c.l.b16 %v1071
    %v1126 = vunpack.c.h.b16 %v1071
    %v1127 = vunpack.c.l.b16 %v1072
    %v1128 = vunpack.c.h.b16 %v1072
    %v1129 = vunpack.c.l.b16 %v1073
    %v1130 = vunpack.c.h.b16 %v1073
    %v1131 = vunpack.c.l.b16 %v1074
    %v1132 = vunpack.c.h.b16 %v1074
    %v1133 = vunpack.c.l.b16 %v1075
    %v1134 = vunpack.c.h.b16 %v1075
    %v1135 = vunpack.c.l.b16 %v1076
    %v1136 = vunpack.c.h.b16 %v1076
    %v1137 = vunpack.c.l.b16 %v1077
    %v1138 = vunpack.c.h.b16 %v1077
    %v1139 = vunpack.c.l.b16 %v1078
    %v1140 = vunpack.c.h.b16 %v1078
    %v1141 = vunpack.c.l.b16 %v1079
    %v1142 = vunpack.c.h.b16 %v1079
    %v1143 = vunpack.c.l.b16 %v1080
    %v1144 = vunpack.c.h.b16 %v1080
    %v1145 = vunpack.c.l.b16 %v1081
    %v1146 = vunpack.c.h.b16 %v1081
    %v1147 = vunpack.c.l.b16 %v1082
    %v1148 = vunpack.c.h.b16 %v1082
    %v1149 = vunpack.c.l.b16 %v1083
    %v1150 = vunpack.c.h.b16 %v1083
    %v1151 = vunpack.c.l.b16 %v1084
    %v1152 = vunpack.c.h.b16 %v1084
    %v1153 = vunpack.c.l.b16 %v1085
    %v1154 = vunpack.c.h.b16 %v1085
    %v1155 = vunpack.c.l.b16 %v1086
    %v1156 = vunpack.c.h.b16 %v1086
    %v1157 = vunpack.c.l.b16 %v1087
    %v1158 = vunpack.c.h.b16 %v1087
    %v1159 = vunpack.c.l.b16 %v1088
    %v1160 = vunpack.c.h.b16 %v1088
    %v1161 = vunpack.c.l.b16 %v1089
    %v1162 = vunpack.c.h.b16 %v1089
    %v1163 = vunpack.c.l.b16 %v1090
    %v1164 = vunpack.c.h.b16 %v1090
    %v1165 = vunpack.c.l.b16 %v1091
    %v1166 = vpack.c.b16 %v1117, %v1117
    %v1167 = vpack.c.b16 %v1118, %v1118
    %v1168 = vpack.c.b16 %v1119, %v1119
    %v1169 = vpack.c.b16 %v1120, %v1120
    %v1170 = vpack.c.b16 %v1121, %v1121
    %v1171 = vpack.c.b16 %v1122, %v1122
    %v1172 = vpack.c.b16 %v1123, %v1123
    %v1173 = vpack.c.b16 %v1124, %v1124
    %v1174 = vpack.c.b16 %v1125, %v1125
    %v1175 = vpack.c.b16 %v1126, %v1126
    %v1176 = vpack.c.b16 %v1127, %v1127
    %v1177 = vpack.c.b16 %v1128, %v1128
    %v1178 = vpack.c.b16 %v1129, %v1129
    %v1179 = vpack.c.b16 %v1130, %v1130
    %v1180 = vpack.c.b16 %v1131, %v1131
    %v1181 = vpack.c.b16 %v1132, %v1132
    %v1182 = vpack.c.b16 %v1133, %v1133
    %v1183 = vpack.c.b16 %v1134, %v1134
    %v1184 = vpack.c.b16 %v1135, %v1135
    %v1185 = vpack.c.b16 %v1136, %v1136
    %v1186 = vpack.c.b16 %v1137, %v1137
    %v1187 = vpack.c.b16 %v1138, %v1138
    %v1188 = vpack.c.b16 %v1139, %v1139
    %v1189 = vpack.c.b16 %v1140, %v1140
    %v1190 = vpack.c.b16 %v1141, %v1141
    %v1191 = vpack.c.b16 %v1142, %v1142
    %v1192 = vpack.c.b16 %v1143, %v1143
    %v1193 = vpack.c.b16 %v1144, %v1144
    %v1194 = vpack.c.b16 %v1145, %v1145
    %v1195 = vpack.c.b16 %v1146, %v1146
    %v1196 = vpack.c.b16 %v1147, %v1147
    %v1197 = vpack.c.b16 %v1148, %v1148
    %v1198 = vpack.c.b16 %v1149, %v1149
    %v1199 = vpack.c.b16 %v1150, %v1150
    %v1200 = vpack.c.b16 %v1151, %v1151
    %v1201 = vpack.c.b16 %v1152, %v1152
    %v1202 = vpack.c.b16 %v1153, %v1153
    %v1203 = vpack.c.b16 %v1154, %v1154
    %v1204 = vpack.c.b16 %v1155, %v1155
    %v1205 = vpack.c.b16 %v1156, %v1156
    %v1206 = vpack.c.b16 %v1157, %v1157
    %v1207 = vpack.c.b16 %v1158, %v1158
    %v1208 = vpack.c.b16 %v1159, %v1159
    %v1209 = vpack.c.b16 %v1160, %v1160
    %v1210 = vpack.c.b16 %v1161, %v1161
    %v1211 = vpack.c.b16 %v1162, %v1162
    %v1212 = vpack.c.b16 %v1163, %v1163
    %v1213 = vpack.c.b16 %v1164, %v1164
    %v1214 = vpack.c.b16 %v1165, %v1165
    %vm1264 = vcmask 519168
    %1265 = vst.msk [vmem:[%s4] sm:$0xf] %vm1264, %v1166
    %1266 = vst.msk [vmem:[%s4 + $0x4] sm:$0xf] %vm1264, %v1167
    %1267 = vst.msk [vmem:[%s4 + $0x8] sm:$0xf] %vm1264, %v1168
    %1268 = vst.msk [vmem:[%s4 + $0xc] sm:$0xf] %vm1264, %v1169
    %1269 = vst.msk [vmem:[%s4 + $0x10] sm:$0xf] %vm1264, %v1170
    %1270 = vst.msk [vmem:[%s4 + $0x14] sm:$0xf] %vm1264, %v1171
    %1271 = vst.msk [vmem:[%s4 + $0x18] sm:$0xf] %vm1264, %v1172
    %1272 = vst.msk [vmem:[%s4 + $0x1c] sm:$0xf] %vm1264, %v1173
    %1273 = vst.msk [vmem:[%s4 + $0x20] sm:$0xf] %vm1264, %v1174
    %1274 = vst.msk [vmem:[%s4 + $0x24] sm:$0xf] %vm1264, %v1175
    %1275 = vst.msk [vmem:[%s4 + $0x28] sm:$0xf] %vm1264, %v1176
    %1276 = vst.msk [vmem:[%s4 + $0x2c] sm:$0xf] %vm1264, %v1177
    %1277 = vst.msk [vmem:[%s4 + $0x30] sm:$0xf] %vm1264, %v1178
    %1278 = vst.msk [vmem:[%s4 + $0x34] sm:$0xf] %vm1264, %v1179
    %1279 = vst.msk [vmem:[%s4 + $0x38] sm:$0xf] %vm1264, %v1180
    %1280 = vst.msk [vmem:[%s4 + $0x3c] sm:$0xf] %vm1264, %v1181
    %1281 = vst.msk [vmem:[%s4 + $0x40] sm:$0xf] %vm1264, %v1182
    %1282 = vst.msk [vmem:[%s4 + $0x44] sm:$0xf] %vm1264, %v1183
    %1283 = vst.msk [vmem:[%s4 + $0x48] sm:$0xf] %vm1264, %v1184
    %1284 = vst.msk [vmem:[%s4 + $0x4c] sm:$0xf] %vm1264, %v1185
    %1285 = vst.msk [vmem:[%s4 + $0x50] sm:$0xf] %vm1264, %v1186
    %1286 = vst.msk [vmem:[%s4 + $0x54] sm:$0xf] %vm1264, %v1187
    %1287 = vst.msk [vmem:[%s4 + $0x58] sm:$0xf] %vm1264, %v1188
    %1288 = vst.msk [vmem:[%s4 + $0x5c] sm:$0xf] %vm1264, %v1189
    %1289 = vst.msk [vmem:[%s4 + $0x60] sm:$0xf] %vm1264, %v1190
    %1290 = vst.msk [vmem:[%s4 + $0x64] sm:$0xf] %vm1264, %v1191
    %1291 = vst.msk [vmem:[%s4 + $0x68] sm:$0xf] %vm1264, %v1192
    %1292 = vst.msk [vmem:[%s4 + $0x6c] sm:$0xf] %vm1264, %v1193
    %1293 = vst.msk [vmem:[%s4 + $0x70] sm:$0xf] %vm1264, %v1194
    %1294 = vst.msk [vmem:[%s4 + $0x74] sm:$0xf] %vm1264, %v1195
    %1295 = vst.msk [vmem:[%s4 + $0x78] sm:$0xf] %vm1264, %v1196
    %1296 = vst.msk [vmem:[%s4 + $0x7c] sm:$0xf] %vm1264, %v1197
    %1297 = vst.msk [vmem:[%s4 + $0x80] sm:$0xf] %vm1264, %v1198
    %1298 = vst.msk [vmem:[%s4 + $0x84] sm:$0xf] %vm1264, %v1199
    %1299 = vst.msk [vmem:[%s4 + $0x88] sm:$0xf] %vm1264, %v1200
    %1300 = vst.msk [vmem:[%s4 + $0x8c] sm:$0xf] %vm1264, %v1201
    %1301 = vst.msk [vmem:[%s4 + $0x90] sm:$0xf] %vm1264, %v1202
    %1302 = vst.msk [vmem:[%s4 + $0x94] sm:$0xf] %vm1264, %v1203
    %1303 = vst.msk [vmem:[%s4 + $0x98] sm:$0xf] %vm1264, %v1204
    %1304 = vst.msk [vmem:[%s4 + $0x9c] sm:$0xf] %vm1264, %v1205
    %1305 = vst.msk [vmem:[%s4 + $0xa0] sm:$0xf] %vm1264, %v1206
    %1306 = vst.msk [vmem:[%s4 + $0xa4] sm:$0xf] %vm1264, %v1207
    %1307 = vst.msk [vmem:[%s4 + $0xa8] sm:$0xf] %vm1264, %v1208
    %1308 = vst.msk [vmem:[%s4 + $0xac] sm:$0xf] %vm1264, %v1209
    %1309 = vst.msk [vmem:[%s4 + $0xb0] sm:$0xf] %vm1264, %v1210
    %1310 = vst.msk [vmem:[%s4 + $0xb4] sm:$0xf] %vm1264, %v1211
    %1311 = vst.msk [vmem:[%s4 + $0xb8] sm:$0xf] %vm1264, %v1212
    %1312 = vst.msk [vmem:[%s4 + $0xbc] sm:$0xf] %vm1264, %v1213
    %1313 = vst.msk [vmem:[%s4 + $0xc0] sm:$0xf] %vm1264, %v1214
    // Predicated region
    $region30: #{discriminator_forward.4} parent=1 // pred_check
      _
    $region31: #{discriminator_forward.4} parent=1 // pred_check_branch
      %1315 = sbr.rel (0) target = $region33
    $region32: #{discriminator_forward.4} parent=1 // pred_region
      _
    $region33: #{discriminator_forward.4} parent=1 // pred_fallthru
      _
    // Predicated region
    $region34: #{discriminator_forward.4} parent=1 // pred_check
      _
    $region35: #{discriminator_forward.4} parent=1 // pred_check_branch
      %1317 = sbr.rel (0) target = $region37
    $region36: #{discriminator_forward.4} parent=1 // pred_region
      _
    $region37: #{discriminator_forward.4} parent=1 // pred_fallthru
      _
    %1318 = vsyncpa [#allocation3], 1
    %1319 = vsyncpa [#allocation5], 1

// kernel: discriminator_forward.5
$region0: #{discriminator_forward.5}
  #allocation0 [shape = 'u32[]', space=smem, size = 0x4, offset = 0x4, fixed_abs, tag = 'smem constant byte address 0x4 - core index']
  #allocation1 [shape = 'u32[144,128]{1,0:T(1,128)}', space=vmem, size = 0x12000, scoped, tag = 'internal scratch']
  %s0 = inlined_call_operand.vmem [shape: bf16[98,1024], index: 0, kind: input, shape index: {}]
  %s1 = inlined_call_operand.hbm [shape: bf16[1024,128], index: 1, kind: input, shape index: {}]
  %s2 = inlined_call_operand.hbm [shape: f32[1,128], index: 2, kind: input, shape index: {}]
  %s3 = inlined_call_operand.hbm [shape: f32[1,128], index: 3, kind: input, shape index: {}]
  %s4 = inlined_call_operand.vmem [shape: bf16[98,128], index: 4, kind: output, shape index: {}]
  %s5 = sld [smem:[#allocation0]]
  $region38: #{discriminator_forward.5} parent=0
    _
  %s7 = ssub.s32 1, %s5
  %s8 = scalar_select 0, %s7, %s5
  $region1: #{discriminator_forward.5} parent=0
    #allocation2 [shape = 'u8[262144]{0}', space=vmem, size = 0x40000, scoped, tag = 'input window, operand 1, single buffered']
    #allocation3 [shape = 's32[1]{0}', space=sflag, size = 0x4, scoped, tag = 'scoped memory for discriminator_forward.5']
    #allocation4 [shape = 'u8[512]{0}', space=vmem, size = 0x400, scoped, tag = 'input window, operand 2, single buffered']
    #allocation5 [shape = 's32[1]{0}', space=sflag, size = 0x4, scoped, tag = 'scoped memory for discriminator_forward.5']
    #allocation6 [shape = 'u8[512]{0}', space=vmem, size = 0x400, scoped, tag = 'input window, operand 3, single buffered']
    %9 = vsyncpa [#allocation3], 0
    %10 = vsyncpa [#allocation5], 0
    // Predicated region
    $region2: #{discriminator_forward.5} parent=1 // pred_check
      _
    $region3: #{discriminator_forward.5} parent=1 // pred_check_branch
      %12 = sbr.rel (0) target = $region5
    $region4: #{discriminator_forward.5} parent=1 // pred_region
      _
    $region5: #{discriminator_forward.5} parent=1 // pred_fallthru
      _
    // Predicated region
    $region6: #{discriminator_forward.5} parent=1 // pred_check
      _
    $region7: #{discriminator_forward.5} parent=1 // pred_check_branch
      %14 = sbr.rel (0) target = $region9
    $region8: #{discriminator_forward.5} parent=1 // pred_region
      %s16 = ssub.s32 8192, 8192
      %17 = vsyncadd [#allocation3], %s16
      %s18 = sshll.u32 [#allocation2], 4
      %s19 = int_to_ptr.vmem [resolvable:$true] %s18
      %24 = dma.hbm_to_vmem [thread:$0]  %s1, 8192, %s19, [#allocation3], 64, 64, 4
    $region9: #{discriminator_forward.5} parent=1 // pred_fallthru
      _
    // Predicated region
    $region10: #{discriminator_forward.5} parent=1 // pred_check
      _
    $region11: #{discriminator_forward.5} parent=1 // pred_check_branch
      %26 = sbr.rel (0) target = $region13
    $region12: #{discriminator_forward.5} parent=1 // pred_region
      %s28 = ssub.s32 16, 16
      %29 = vsyncadd [#allocation5], %s28
      %s31 = sshll.u32 [#allocation4], 4
      %s32 = int_to_ptr.vmem [resolvable:$true] %s31
      %34 = dma.hbm_to_vmem [thread:$0]  %s2, 16, %s32, [#allocation5]
    $region13: #{discriminator_forward.5} parent=1 // pred_fallthru
      _
    // Predicated region
    $region14: #{discriminator_forward.5} parent=1 // pred_check
      _
    $region15: #{discriminator_forward.5} parent=1 // pred_check_branch
      %36 = sbr.rel (0) target = $region17
    $region16: #{discriminator_forward.5} parent=1 // pred_region
      %s38 = ssub.s32 16, 16
      %39 = vsyncadd [#allocation5], %s38
      %s41 = sshll.u32 [#allocation6], 4
      %s42 = int_to_ptr.vmem [resolvable:$true] %s41
      %44 = dma.hbm_to_vmem [thread:$0]  %s3, 16, %s42, [#allocation5]
    $region17: #{discriminator_forward.5} parent=1 // pred_fallthru
      _
    // Predicated region
    $region18: #{discriminator_forward.5} parent=1 // pred_check
      _
    $region19: #{discriminator_forward.5} parent=1 // pred_check_branch
      %46 = sbr.rel (0) target = $region21
    $region20: #{discriminator_forward.5} parent=1 // pred_region
      %47 = dma.done [#allocation3], 8192
    $region21: #{discriminator_forward.5} parent=1 // pred_fallthru
      _
    // Predicated region
    $region22: #{discriminator_forward.5} parent=1 // pred_check
      _
    $region23: #{discriminator_forward.5} parent=1 // pred_check_branch
      %49 = sbr.rel (0) target = $region25
    $region24: #{discriminator_forward.5} parent=1 // pred_region
      %50 = dma.done [#allocation5], 16
    $region25: #{discriminator_forward.5} parent=1 // pred_fallthru
      _
    // Predicated region
    $region26: #{discriminator_forward.5} parent=1 // pred_check
      _
    $region27: #{discriminator_forward.5} parent=1 // pred_check_branch
      %52 = sbr.rel (0) target = $region29
    $region28: #{discriminator_forward.5} parent=1 // pred_region
      %53 = dma.done [#allocation5], 16
    $region29: #{discriminator_forward.5} parent=1 // pred_fallthru
      _
    %v55 = vld [vmem:[%s0] sm:$0xff]
    %v56 = vld [vmem:[%s0 + $0x8] sm:$0xff]
    %v57 = vld [vmem:[%s0 + $0x10] sm:$0xff]
    %v58 = vld [vmem:[%s0 + $0x18] sm:$0xff]
    %v59 = vld [vmem:[%s0 + $0x20] sm:$0xff]
    %v60 = vld [vmem:[%s0 + $0x28] sm:$0xff]
    %v61 = vld [vmem:[%s0 + $0x30] sm:$0xff]
    %v62 = vld [vmem:[%s0 + $0x38] sm:$0xff]
    %v63 = vld [vmem:[%s0 + $0x40] sm:$0xff]
    %v64 = vld [vmem:[%s0 + $0x48] sm:$0xff]
    %v65 = vld [vmem:[%s0 + $0x50] sm:$0xff]
    %v66 = vld [vmem:[%s0 + $0x58] sm:$0xff]
    %v67 = vld [vmem:[%s0 + $0x60] sm:$0xff]
    %v68 = vld [vmem:[%s0 + $0x68] sm:$0xff]
    %v69 = vld [vmem:[%s0 + $0x70] sm:$0xff]
    %v70 = vld [vmem:[%s0 + $0x78] sm:$0xff]
    %v71 = vld [vmem:[%s0 + $0x80] sm:$0xff]
    %v72 = vld [vmem:[%s0 + $0x88] sm:$0xff]
    %v73 = vld [vmem:[%s0 + $0x90] sm:$0xff]
    %v74 = vld [vmem:[%s0 + $0x98] sm:$0xff]
    %v75 = vld [vmem:[%s0 + $0xa0] sm:$0xff]
    %v76 = vld [vmem:[%s0 + $0xa8] sm:$0xff]
    %v77 = vld [vmem:[%s0 + $0xb0] sm:$0xff]
    %v78 = vld [vmem:[%s0 + $0xb8] sm:$0xff]
    %v79 = vld [vmem:[%s0 + $0xc0] sm:$0xff]
    %v80 = vld [vmem:[%s0 + $0xc8] sm:$0xff]
    %v81 = vld [vmem:[%s0 + $0xd0] sm:$0xff]
    %v82 = vld [vmem:[%s0 + $0xd8] sm:$0xff]
    %v83 = vld [vmem:[%s0 + $0xe0] sm:$0xff]
    %v84 = vld [vmem:[%s0 + $0xe8] sm:$0xff]
    %v85 = vld [vmem:[%s0 + $0xf0] sm:$0xff]
    %v86 = vld [vmem:[%s0 + $0xf8] sm:$0xff]
    %v87 = vld [vmem:[%s0 + $0x100] sm:$0xff]
    %v88 = vld [vmem:[%s0 + $0x108] sm:$0xff]
    %v89 = vld [vmem:[%s0 + $0x110] sm:$0xff]
    %v90 = vld [vmem:[%s0 + $0x118] sm:$0xff]
    %v91 = vld [vmem:[%s0 + $0x120] sm:$0xff]
    %v92 = vld [vmem:[%s0 + $0x128] sm:$0xff]
    %v93 = vld [vmem:[%s0 + $0x130] sm:$0xff]
    %v94 = vld [vmem:[%s0 + $0x138] sm:$0xff]
    %v95 = vld [vmem:[%s0 + $0x140] sm:$0xff]
    %v96 = vld [vmem:[%s0 + $0x148] sm:$0xff]
    %v97 = vld [vmem:[%s0 + $0x150] sm:$0xff]
    %v98 = vld [vmem:[%s0 + $0x158] sm:$0xff]
    %v99 = vld [vmem:[%s0 + $0x160] sm:$0xff]
    %v100 = vld [vmem:[%s0 + $0x168] sm:$0xff]
    %v101 = vld [vmem:[%s0 + $0x170] sm:$0xff]
    %v102 = vld [vmem:[%s0 + $0x178] sm:$0xff]
    %v103 = vld [vmem:[%s0 + $0x180] sm:$0x11]
    %v104 = vld [vmem:[%s0 + $0x188] sm:$0x11]
    %v105 = vld [vmem:[%s0 + $0x190] sm:$0x11]
    %v106 = vld [vmem:[%s0 + $0x198] sm:$0x11]
    %v107 = vld [vmem:[#allocation2] sm:$0xf]
    %v108 = vld [vmem:[#allocation2 + $0x4] sm:$0xf]
    %v109 = vld [vmem:[#allocation2 + $0x8] sm:$0xf]
    %v110 = vld [vmem:[#allocation2 + $0xc] sm:$0xf]
    %v111 = vld [vmem:[#allocation2 + $0x10] sm:$0xf]
    %v112 = vld [vmem:[#allocation2 + $0x14] sm:$0xf]
    %v113 = vld [vmem:[#allocation2 + $0x18] sm:$0xf]
    %v114 = vld [vmem:[#allocation2 + $0x1c] sm:$0xf]
    %v115 = vld [vmem:[#allocation2 + $0x20] sm:$0xf]
    %v116 = vld [vmem:[#allocation2 + $0x24] sm:$0xf]
    %v117 = vld [vmem:[#allocation2 + $0x28] sm:$0xf]
    %v118 = vld [vmem:[#allocation2 + $0x2c] sm:$0xf]
    %v119 = vld [vmem:[#allocation2 + $0x30] sm:$0xf]
    %v120 = vld [vmem:[#allocation2 + $0x34] sm:$0xf]
    %v121 = vld [vmem:[#allocation2 + $0x38] sm:$0xf]
    %v122 = vld [vmem:[#allocation2 + $0x3c] sm:$0xf]
    %v123 = vld [vmem:[#allocation2 + $0x40] sm:$0xf]
    %v124 = vld [vmem:[#allocation2 + $0x44] sm:$0xf]
    %v125 = vld [vmem:[#allocation2 + $0x48] sm:$0xf]
    %v126 = vld [vmem:[#allocation2 + $0x4c] sm:$0xf]
    %v127 = vld [vmem:[#allocation2 + $0x50] sm:$0xf]
    %v128 = vld [vmem:[#allocation2 + $0x54] sm:$0xf]
    %v129 = vld [vmem:[#allocation2 + $0x58] sm:$0xf]
    %v130 = vld [vmem:[#allocation2 + $0x5c] sm:$0xf]
    %v131 = vld [vmem:[#allocation2 + $0x60] sm:$0xf]
    %v132 = vld [vmem:[#allocation2 + $0x64] sm:$0xf]
    %v133 = vld [vmem:[#allocation2 + $0x68] sm:$0xf]
    %v134 = vld [vmem:[#allocation2 + $0x6c] sm:$0xf]
    %v135 = vld [vmem:[#allocation2 + $0x70] sm:$0xf]
    %v136 = vld [vmem:[#allocation2 + $0x74] sm:$0xf]
    %v137 = vld [vmem:[#allocation2 + $0x78] sm:$0xf]
    %v138 = vld [vmem:[#allocation2 + $0x7c] sm:$0xf]
    %v139 = vld [vmem:[#allocation2 + $0x80] sm:$0xf]
    %v140 = vld [vmem:[#allocation2 + $0x84] sm:$0xf]
    %v141 = vld [vmem:[#allocation2 + $0x88] sm:$0xf]
    %v142 = vld [vmem:[#allocation2 + $0x8c] sm:$0xf]
    %v143 = vld [vmem:[#allocation2 + $0x90] sm:$0xf]
    %v144 = vld [vmem:[#allocation2 + $0x94] sm:$0xf]
    %v145 = vld [vmem:[#allocation2 + $0x98] sm:$0xf]
    %v146 = vld [vmem:[#allocation2 + $0x9c] sm:$0xf]
    %v147 = vld [vmem:[#allocation2 + $0xa0] sm:$0xf]
    %v148 = vld [vmem:[#allocation2 + $0xa4] sm:$0xf]
    %v149 = vld [vmem:[#allocation2 + $0xa8] sm:$0xf]
    %v150 = vld [vmem:[#allocation2 + $0xac] sm:$0xf]
    %v151 = vld [vmem:[#allocation2 + $0xb0] sm:$0xf]
    %v152 = vld [vmem:[#allocation2 + $0xb4] sm:$0xf]
    %v153 = vld [vmem:[#allocation2 + $0xb8] sm:$0xf]
    %v154 = vld [vmem:[#allocation2 + $0xbc] sm:$0xf]
    %v155 = vld [vmem:[#allocation2 + $0xc0] sm:$0xf]
    %v156 = vld [vmem:[#allocation2 + $0xc4] sm:$0xf]
    %v157 = vld [vmem:[#allocation2 + $0xc8] sm:$0xf]
    %v158 = vld [vmem:[#allocation2 + $0xcc] sm:$0xf]
    %v159 = vld [vmem:[#allocation2 + $0xd0] sm:$0xf]
    %v160 = vld [vmem:[#allocation2 + $0xd4] sm:$0xf]
    %v161 = vld [vmem:[#allocation2 + $0xd8] sm:$0xf]
    %v162 = vld [vmem:[#allocation2 + $0xdc] sm:$0xf]
    %v163 = vld [vmem:[#allocation2 + $0xe0] sm:$0xf]
    %v164 = vld [vmem:[#allocation2 + $0xe4] sm:$0xf]
    %v165 = vld [vmem:[#allocation2 + $0xe8] sm:$0xf]
    %v166 = vld [vmem:[#allocation2 + $0xec] sm:$0xf]
    %v167 = vld [vmem:[#allocation2 + $0xf0] sm:$0xf]
    %v168 = vld [vmem:[#allocation2 + $0xf4] sm:$0xf]
    %v169 = vld [vmem:[#allocation2 + $0xf8] sm:$0xf]
    %v170 = vld [vmem:[#allocation2 + $0xfc] sm:$0xf]
    %v171 = vld [vmem:[#allocation2 + $0x100] sm:$0xf]
    %v172 = vld [vmem:[#allocation2 + $0x104] sm:$0xf]
    %v173 = vld [vmem:[#allocation2 + $0x108] sm:$0xf]
    %v174 = vld [vmem:[#allocation2 + $0x10c] sm:$0xf]
    %v175 = vld [vmem:[#allocation2 + $0x110] sm:$0xf]
    %v176 = vld [vmem:[#allocation2 + $0x114] sm:$0xf]
    %v177 = vld [vmem:[#allocation2 + $0x118] sm:$0xf]
    %v178 = vld [vmem:[#allocation2 + $0x11c] sm:$0xf]
    %v179 = vld [vmem:[#allocation2 + $0x120] sm:$0xf]
    %v180 = vld [vmem:[#allocation2 + $0x124] sm:$0xf]
    %v181 = vld [vmem:[#allocation2 + $0x128] sm:$0xf]
    %v182 = vld [vmem:[#allocation2 + $0x12c] sm:$0xf]
    %v183 = vld [vmem:[#allocation2 + $0x130] sm:$0xf]
    %v184 = vld [vmem:[#allocation2 + $0x134] sm:$0xf]
    %v185 = vld [vmem:[#allocation2 + $0x138] sm:$0xf]
    %v186 = vld [vmem:[#allocation2 + $0x13c] sm:$0xf]
    %v187 = vld [vmem:[#allocation2 + $0x140] sm:$0xf]
    %v188 = vld [vmem:[#allocation2 + $0x144] sm:$0xf]
    %v189 = vld [vmem:[#allocation2 + $0x148] sm:$0xf]
    %v190 = vld [vmem:[#allocation2 + $0x14c] sm:$0xf]
    %v191 = vld [vmem:[#allocation2 + $0x150] sm:$0xf]
    %v192 = vld [vmem:[#allocation2 + $0x154] sm:$0xf]
    %v193 = vld [vmem:[#allocation2 + $0x158] sm:$0xf]
    %v194 = vld [vmem:[#allocation2 + $0x15c] sm:$0xf]
    %v195 = vld [vmem:[#allocation2 + $0x160] sm:$0xf]
    %v196 = vld [vmem:[#allocation2 + $0x164] sm:$0xf]
    %v197 = vld [vmem:[#allocation2 + $0x168] sm:$0xf]
    %v198 = vld [vmem:[#allocation2 + $0x16c] sm:$0xf]
    %v199 = vld [vmem:[#allocation2 + $0x170] sm:$0xf]
    %v200 = vld [vmem:[#allocation2 + $0x174] sm:$0xf]
    %v201 = vld [vmem:[#allocation2 + $0x178] sm:$0xf]
    %v202 = vld [vmem:[#allocation2 + $0x17c] sm:$0xf]
    %v203 = vld [vmem:[#allocation2 + $0x180] sm:$0xf]
    %v204 = vld [vmem:[#allocation2 + $0x184] sm:$0xf]
    %v205 = vld [vmem:[#allocation2 + $0x188] sm:$0xf]
    %v206 = vld [vmem:[#allocation2 + $0x18c] sm:$0xf]
    %v207 = vld [vmem:[#allocation2 + $0x190] sm:$0xf]
    %v208 = vld [vmem:[#allocation2 + $0x194] sm:$0xf]
    %v209 = vld [vmem:[#allocation2 + $0x198] sm:$0xf]
    %v210 = vld [vmem:[#allocation2 + $0x19c] sm:$0xf]
    %v211 = vld [vmem:[#allocation2 + $0x1a0] sm:$0xf]
    %v212 = vld [vmem:[#allocation2 + $0x1a4] sm:$0xf]
    %v213 = vld [vmem:[#allocation2 + $0x1a8] sm:$0xf]
    %v214 = vld [vmem:[#allocation2 + $0x1ac] sm:$0xf]
    %v215 = vld [vmem:[#allocation2 + $0x1b0] sm:$0xf]
    %v216 = vld [vmem:[#allocation2 + $0x1b4] sm:$0xf]
    %v217 = vld [vmem:[#allocation2 + $0x1b8] sm:$0xf]
    %v218 = vld [vmem:[#allocation2 + $0x1bc] sm:$0xf]
    %v219 = vld [vmem:[#allocation2 + $0x1c0] sm:$0xf]
    %v220 = vld [vmem:[#allocation2 + $0x1c4] sm:$0xf]
    %v221 = vld [vmem:[#allocation2 + $0x1c8] sm:$0xf]
    %v222 = vld [vmem:[#allocation2 + $0x1cc] sm:$0xf]
    %v223 = vld [vmem:[#allocation2 + $0x1d0] sm:$0xf]
    %v224 = vld [vmem:[#allocation2 + $0x1d4] sm:$0xf]
    %v225 = vld [vmem:[#allocation2 + $0x1d8] sm:$0xf]
    %v226 = vld [vmem:[#allocation2 + $0x1dc] sm:$0xf]
    %v227 = vld [vmem:[#allocation2 + $0x1e0] sm:$0xf]
    %v228 = vld [vmem:[#allocation2 + $0x1e4] sm:$0xf]
    %v229 = vld [vmem:[#allocation2 + $0x1e8] sm:$0xf]
    %v230 = vld [vmem:[#allocation2 + $0x1ec] sm:$0xf]
    %v231 = vld [vmem:[#allocation2 + $0x1f0] sm:$0xf]
    %v232 = vld [vmem:[#allocation2 + $0x1f4] sm:$0xf]
    %v233 = vld [vmem:[#allocation2 + $0x1f8] sm:$0xf]
    %v234 = vld [vmem:[#allocation2 + $0x1fc] sm:$0xf]
    %v287 = vunpack.c.l.b16 %v55
    %v288 = vunpack.c.h.b16 %v55
    %v289 = vunpack.c.l.b16 %v56
    %v290 = vunpack.c.h.b16 %v56
    %v291 = vunpack.c.l.b16 %v57
    %v292 = vunpack.c.h.b16 %v57
    %v293 = vunpack.c.l.b16 %v58
    %v294 = vunpack.c.h.b16 %v58
    %v295 = vunpack.c.l.b16 %v59
    %v296 = vunpack.c.h.b16 %v59
    %v297 = vunpack.c.l.b16 %v60
    %v298 = vunpack.c.h.b16 %v60
    %v299 = vunpack.c.l.b16 %v61
    %v300 = vunpack.c.h.b16 %v61
    %v301 = vunpack.c.l.b16 %v62
    %v302 = vunpack.c.h.b16 %v62
    %v303 = vunpack.c.l.b16 %v63
    %v304 = vunpack.c.h.b16 %v63
    %v305 = vunpack.c.l.b16 %v64
    %v306 = vunpack.c.h.b16 %v64
    %v307 = vunpack.c.l.b16 %v65
    %v308 = vunpack.c.h.b16 %v65
    %v309 = vunpack.c.l.b16 %v66
    %v310 = vunpack.c.h.b16 %v66
    %v311 = vunpack.c.l.b16 %v67
    %v312 = vunpack.c.h.b16 %v67
    %v313 = vunpack.c.l.b16 %v68
    %v314 = vunpack.c.h.b16 %v68
    %v315 = vunpack.c.l.b16 %v69
    %v316 = vunpack.c.h.b16 %v69
    %v317 = vunpack.c.l.b16 %v70
    %v318 = vunpack.c.h.b16 %v70
    %v319 = vunpack.c.l.b16 %v71
    %v320 = vunpack.c.h.b16 %v71
    %v321 = vunpack.c.l.b16 %v72
    %v322 = vunpack.c.h.b16 %v72
    %v323 = vunpack.c.l.b16 %v73
    %v324 = vunpack.c.h.b16 %v73
    %v325 = vunpack.c.l.b16 %v74
    %v326 = vunpack.c.h.b16 %v74
    %v327 = vunpack.c.l.b16 %v75
    %v328 = vunpack.c.h.b16 %v75
    %v329 = vunpack.c.l.b16 %v76
    %v330 = vunpack.c.h.b16 %v76
    %v331 = vunpack.c.l.b16 %v77
    %v332 = vunpack.c.h.b16 %v77
    %v333 = vunpack.c.l.b16 %v78
    %v334 = vunpack.c.h.b16 %v78
    %v335 = vunpack.c.l.b16 %v79
    %v336 = vunpack.c.h.b16 %v79
    %v337 = vunpack.c.l.b16 %v80
    %v338 = vunpack.c.h.b16 %v80
    %v339 = vunpack.c.l.b16 %v81
    %v340 = vunpack.c.h.b16 %v81
    %v341 = vunpack.c.l.b16 %v82
    %v342 = vunpack.c.h.b16 %v82
    %v343 = vunpack.c.l.b16 %v83
    %v344 = vunpack.c.h.b16 %v83
    %v345 = vunpack.c.l.b16 %v84
    %v346 = vunpack.c.h.b16 %v84
    %v347 = vunpack.c.l.b16 %v85
    %v348 = vunpack.c.h.b16 %v85
    %v349 = vunpack.c.l.b16 %v86
    %v350 = vunpack.c.h.b16 %v86
    %v351 = vunpack.c.l.b16 %v87
    %v352 = vunpack.c.h.b16 %v87
    %v353 = vunpack.c.l.b16 %v88
    %v354 = vunpack.c.h.b16 %v88
    %v355 = vunpack.c.l.b16 %v89
    %v356 = vunpack.c.h.b16 %v89
    %v357 = vunpack.c.l.b16 %v90
    %v358 = vunpack.c.h.b16 %v90
    %v359 = vunpack.c.l.b16 %v91
    %v360 = vunpack.c.h.b16 %v91
    %v361 = vunpack.c.l.b16 %v92
    %v362 = vunpack.c.h.b16 %v92
    %v363 = vunpack.c.l.b16 %v93
    %v364 = vunpack.c.h.b16 %v93
    %v365 = vunpack.c.l.b16 %v94
    %v366 = vunpack.c.h.b16 %v94
    %v367 = vunpack.c.l.b16 %v95
    %v368 = vunpack.c.h.b16 %v95
    %v369 = vunpack.c.l.b16 %v96
    %v370 = vunpack.c.h.b16 %v96
    %v371 = vunpack.c.l.b16 %v97
    %v372 = vunpack.c.h.b16 %v97
    %v373 = vunpack.c.l.b16 %v98
    %v374 = vunpack.c.h.b16 %v98
    %v375 = vunpack.c.l.b16 %v99
    %v376 = vunpack.c.h.b16 %v99
    %v377 = vunpack.c.l.b16 %v100
    %v378 = vunpack.c.h.b16 %v100
    %v379 = vunpack.c.l.b16 %v101
    %v380 = vunpack.c.h.b16 %v101
    %v381 = vunpack.c.l.b16 %v102
    %v382 = vunpack.c.h.b16 %v102
    %v383 = vunpack.c.l.b16 %v103
    %v384 = vunpack.c.h.b16 %v103
    %v385 = vunpack.c.l.b16 %v104
    %v386 = vunpack.c.h.b16 %v104
    %v387 = vunpack.c.l.b16 %v105
    %v388 = vunpack.c.h.b16 %v105
    %v389 = vunpack.c.l.b16 %v106
    %v390 = vunpack.c.h.b16 %v106
    %v391 = vpack.c.b16 %v295, %v287
    %v392 = vpack.c.b16 %v296, %v288
    %v393 = vpack.c.b16 %v297, %v289
    %v394 = vpack.c.b16 %v298, %v290
    %v395 = vpack.c.b16 %v299, %v291
    %v396 = vpack.c.b16 %v300, %v292
    %v397 = vpack.c.b16 %v301, %v293
    %v398 = vpack.c.b16 %v302, %v294
    %v399 = vpack.c.b16 %v311, %v303
    %v400 = vpack.c.b16 %v312, %v304
    %v401 = vpack.c.b16 %v313, %v305
    %v402 = vpack.c.b16 %v314, %v306
    %v403 = vpack.c.b16 %v315, %v307
    %v404 = vpack.c.b16 %v316, %v308
    %v405 = vpack.c.b16 %v317, %v309
    %v406 = vpack.c.b16 %v318, %v310
    %v407 = vpack.c.b16 %v327, %v319
    %v408 = vpack.c.b16 %v328, %v320
    %v409 = vpack.c.b16 %v329, %v321
    %v410 = vpack.c.b16 %v330, %v322
    %v411 = vpack.c.b16 %v331, %v323
    %v412 = vpack.c.b16 %v332, %v324
    %v413 = vpack.c.b16 %v333, %v325
    %v414 = vpack.c.b16 %v334, %v326
    %v415 = vpack.c.b16 %v343, %v335
    %v416 = vpack.c.b16 %v344, %v336
    %v417 = vpack.c.b16 %v345, %v337
    %v418 = vpack.c.b16 %v346, %v338
    %v419 = vpack.c.b16 %v347, %v339
    %v420 = vpack.c.b16 %v348, %v340
    %v421 = vpack.c.b16 %v349, %v341
    %v422 = vpack.c.b16 %v350, %v342
    %v423 = vpack.c.b16 %v359, %v351
    %v424 = vpack.c.b16 %v360, %v352
    %v425 = vpack.c.b16 %v361, %v353
    %v426 = vpack.c.b16 %v362, %v354
    %v427 = vpack.c.b16 %v363, %v355
    %v428 = vpack.c.b16 %v364, %v356
    %v429 = vpack.c.b16 %v365, %v357
    %v430 = vpack.c.b16 %v366, %v358
    %v431 = vpack.c.b16 %v375, %v367
    %v432 = vpack.c.b16 %v376, %v368
    %v433 = vpack.c.b16 %v377, %v369
    %v434 = vpack.c.b16 %v378, %v370
    %v435 = vpack.c.b16 %v379, %v371
    %v436 = vpack.c.b16 %v380, %v372
    %v437 = vpack.c.b16 %v381, %v373
    %v438 = vpack.c.b16 %v382, %v374
    %v439 = vpack.c.b16 %v383, %v383
    %v440 = vpack.c.b16 %v384, %v384
    %v441 = vpack.c.b16 %v385, %v385
    %v442 = vpack.c.b16 %v386, %v386
    %v443 = vpack.c.b16 %v387, %v387
    %v444 = vpack.c.b16 %v388, %v388
    %v445 = vpack.c.b16 %v389, %v389
    %v446 = vpack.c.b16 %v390, %v390
    %v631 = vunpack.c.l.b16 %v107
    %v632 = vunpack.c.l.b16 %v108
    %v633 = vunpack.c.l.b16 %v109
    %v634 = vunpack.c.l.b16 %v110
    %v635 = vunpack.c.l.b16 %v111
    %v636 = vunpack.c.l.b16 %v112
    %v637 = vunpack.c.l.b16 %v113
    %v638 = vunpack.c.l.b16 %v114
    %v639 = vunpack.c.l.b16 %v115
    %v640 = vunpack.c.l.b16 %v116
    %v641 = vunpack.c.l.b16 %v117
    %v642 = vunpack.c.l.b16 %v118
    %v643 = vunpack.c.l.b16 %v119
    %v644 = vunpack.c.l.b16 %v120
    %v645 = vunpack.c.l.b16 %v121
    %v646 = vunpack.c.l.b16 %v122
    %v647 = vunpack.c.l.b16 %v123
    %v648 = vunpack.c.l.b16 %v124
    %v649 = vunpack.c.l.b16 %v125
    %v650 = vunpack.c.l.b16 %v126
    %v651 = vunpack.c.l.b16 %v127
    %v652 = vunpack.c.l.b16 %v128
    %v653 = vunpack.c.l.b16 %v129
    %v654 = vunpack.c.l.b16 %v130
    %v655 = vunpack.c.l.b16 %v131
    %v656 = vunpack.c.l.b16 %v132
    %v657 = vunpack.c.l.b16 %v133
    %v658 = vunpack.c.l.b16 %v134
    %v659 = vunpack.c.l.b16 %v135
    %v660 = vunpack.c.l.b16 %v136
    %v661 = vunpack.c.l.b16 %v137
    %v662 = vunpack.c.l.b16 %v138
    %v663 = vunpack.c.l.b16 %v139
    %v664 = vunpack.c.l.b16 %v140
    %v665 = vunpack.c.l.b16 %v141
    %v666 = vunpack.c.l.b16 %v142
    %v667 = vunpack.c.l.b16 %v143
    %v668 = vunpack.c.l.b16 %v144
    %v669 = vunpack.c.l.b16 %v145
    %v670 = vunpack.c.l.b16 %v146
    %v671 = vunpack.c.l.b16 %v147
    %v672 = vunpack.c.l.b16 %v148
    %v673 = vunpack.c.l.b16 %v149
    %v674 = vunpack.c.l.b16 %v150
    %v675 = vunpack.c.l.b16 %v151
    %v676 = vunpack.c.l.b16 %v152
    %v677 = vunpack.c.l.b16 %v153
    %v678 = vunpack.c.l.b16 %v154
    %v679 = vunpack.c.l.b16 %v155
    %v680 = vunpack.c.l.b16 %v156
    %v681 = vunpack.c.l.b16 %v157
    %v682 = vunpack.c.l.b16 %v158
    %v683 = vunpack.c.l.b16 %v159
    %v684 = vunpack.c.l.b16 %v160
    %v685 = vunpack.c.l.b16 %v161
    %v686 = vunpack.c.l.b16 %v162
    %v687 = vunpack.c.l.b16 %v163
    %v688 = vunpack.c.l.b16 %v164
    %v689 = vunpack.c.l.b16 %v165
    %v690 = vunpack.c.l.b16 %v166
    %v691 = vunpack.c.l.b16 %v167
    %v692 = vunpack.c.l.b16 %v168
    %v693 = vunpack.c.l.b16 %v169
    %v694 = vunpack.c.l.b16 %v170
    %v695 = vunpack.c.l.b16 %v171
    %v696 = vunpack.c.l.b16 %v172
    %v697 = vunpack.c.l.b16 %v173
    %v698 = vunpack.c.l.b16 %v174
    %v699 = vunpack.c.l.b16 %v175
    %v700 = vunpack.c.l.b16 %v176
    %v701 = vunpack.c.l.b16 %v177
    %v702 = vunpack.c.l.b16 %v178
    %v703 = vunpack.c.l.b16 %v179
    %v704 = vunpack.c.l.b16 %v180
    %v705 = vunpack.c.l.b16 %v181
    %v706 = vunpack.c.l.b16 %v182
    %v707 = vunpack.c.l.b16 %v183
    %v708 = vunpack.c.l.b16 %v184
    %v709 = vunpack.c.l.b16 %v185
    %v710 = vunpack.c.l.b16 %v186
    %v711 = vunpack.c.l.b16 %v187
    %v712 = vunpack.c.l.b16 %v188
    %v713 = vunpack.c.l.b16 %v189
    %v714 = vunpack.c.l.b16 %v190
    %v715 = vunpack.c.l.b16 %v191
    %v716 = vunpack.c.l.b16 %v192
    %v717 = vunpack.c.l.b16 %v193
    %v718 = vunpack.c.l.b16 %v194
    %v719 = vunpack.c.l.b16 %v195
    %v720 = vunpack.c.l.b16 %v196
    %v721 = vunpack.c.l.b16 %v197
    %v722 = vunpack.c.l.b16 %v198
    %v723 = vunpack.c.l.b16 %v199
    %v724 = vunpack.c.l.b16 %v200
    %v725 = vunpack.c.l.b16 %v201
    %v726 = vunpack.c.l.b16 %v202
    %v727 = vunpack.c.l.b16 %v203
    %v728 = vunpack.c.l.b16 %v204
    %v729 = vunpack.c.l.b16 %v205
    %v730 = vunpack.c.l.b16 %v206
    %v731 = vunpack.c.l.b16 %v207
    %v732 = vunpack.c.l.b16 %v208
    %v733 = vunpack.c.l.b16 %v209
    %v734 = vunpack.c.l.b16 %v210
    %v735 = vunpack.c.l.b16 %v211
    %v736 = vunpack.c.l.b16 %v212
    %v737 = vunpack.c.l.b16 %v213
    %v738 = vunpack.c.l.b16 %v214
    %v739 = vunpack.c.l.b16 %v215
    %v740 = vunpack.c.l.b16 %v216
    %v741 = vunpack.c.l.b16 %v217
    %v742 = vunpack.c.l.b16 %v218
    %v743 = vunpack.c.l.b16 %v219
    %v744 = vunpack.c.l.b16 %v220
    %v745 = vunpack.c.l.b16 %v221
    %v746 = vunpack.c.l.b16 %v222
    %v747 = vunpack.c.l.b16 %v223
    %v748 = vunpack.c.l.b16 %v224
    %v749 = vunpack.c.l.b16 %v225
    %v750 = vunpack.c.l.b16 %v226
    %v751 = vunpack.c.l.b16 %v227
    %v752 = vunpack.c.l.b16 %v228
    %v753 = vunpack.c.l.b16 %v229
    %v754 = vunpack.c.l.b16 %v230
    %v755 = vunpack.c.l.b16 %v231
    %v756 = vunpack.c.l.b16 %v232
    %v757 = vunpack.c.l.b16 %v233
    %v758 = vunpack.c.l.b16 %v234
    %v759 = vpack.c.b16 %v632, %v631
    %v760 = vpack.c.b16 %v634, %v633
    %v761 = vpack.c.b16 %v636, %v635
    %v762 = vpack.c.b16 %v638, %v637
    %v763 = vpack.c.b16 %v640, %v639
    %v764 = vpack.c.b16 %v642, %v641
    %v765 = vpack.c.b16 %v644, %v643
    %v766 = vpack.c.b16 %v646, %v645
    %v767 = vpack.c.b16 %v648, %v647
    %v768 = vpack.c.b16 %v650, %v649
    %v769 = vpack.c.b16 %v652, %v651
    %v770 = vpack.c.b16 %v654, %v653
    %v771 = vpack.c.b16 %v656, %v655
    %v772 = vpack.c.b16 %v658, %v657
    %v773 = vpack.c.b16 %v660, %v659
    %v774 = vpack.c.b16 %v662, %v661
    %v775 = vpack.c.b16 %v664, %v663
    %v776 = vpack.c.b16 %v666, %v665
    %v777 = vpack.c.b16 %v668, %v667
    %v778 = vpack.c.b16 %v670, %v669
    %v779 = vpack.c.b16 %v672, %v671
    %v780 = vpack.c.b16 %v674, %v673
    %v781 = vpack.c.b16 %v676, %v675
    %v782 = vpack.c.b16 %v678, %v677
    %v783 = vpack.c.b16 %v680, %v679
    %v784 = vpack.c.b16 %v682, %v681
    %v785 = vpack.c.b16 %v684, %v683
    %v786 = vpack.c.b16 %v686, %v685
    %v787 = vpack.c.b16 %v688, %v687
    %v788 = vpack.c.b16 %v690, %v689
    %v789 = vpack.c.b16 %v692, %v691
    %v790 = vpack.c.b16 %v694, %v693
    %v791 = vpack.c.b16 %v696, %v695
    %v792 = vpack.c.b16 %v698, %v697
    %v793 = vpack.c.b16 %v700, %v699
    %v794 = vpack.c.b16 %v702, %v701
    %v795 = vpack.c.b16 %v704, %v703
    %v796 = vpack.c.b16 %v706, %v705
    %v797 = vpack.c.b16 %v708, %v707
    %v798 = vpack.c.b16 %v710, %v709
    %v799 = vpack.c.b16 %v712, %v711
    %v800 = vpack.c.b16 %v714, %v713
    %v801 = vpack.c.b16 %v716, %v715
    %v802 = vpack.c.b16 %v718, %v717
    %v803 = vpack.c.b16 %v720, %v719
    %v804 = vpack.c.b16 %v722, %v721
    %v805 = vpack.c.b16 %v724, %v723
    %v806 = vpack.c.b16 %v726, %v725
    %v807 = vpack.c.b16 %v728, %v727
    %v808 = vpack.c.b16 %v730, %v729
    %v809 = vpack.c.b16 %v732, %v731
    %v810 = vpack.c.b16 %v734, %v733
    %v811 = vpack.c.b16 %v736, %v735
    %v812 = vpack.c.b16 %v738, %v737
    %v813 = vpack.c.b16 %v740, %v739
    %v814 = vpack.c.b16 %v742, %v741
    %v815 = vpack.c.b16 %v744, %v743
    %v816 = vpack.c.b16 %v746, %v745
    %v817 = vpack.c.b16 %v748, %v747
    %v818 = vpack.c.b16 %v750, %v749
    %v819 = vpack.c.b16 %v752, %v751
    %v820 = vpack.c.b16 %v754, %v753
    %v821 = vpack.c.b16 %v756, %v755
    %v822 = vpack.c.b16 %v758, %v757
    %887 = vmatprep.subr.bf16.mxu0 0
    %888 = vmatpush1.bf16.msra.mxu0 %v766
    %889 = vmatprep.subr.bf16.mxu0 0
    %890 = vmatpush1.bf16.msra.mxu0 %v765
    %891 = vmatprep.subr.bf16.mxu0 0
    %892 = vmatpush1.bf16.msra.mxu0 %v764
    %893 = vmatprep.subr.bf16.mxu0 0
    %894 = vmatpush1.bf16.msra.mxu0 %v763
    %895 = vmatprep.subr.bf16.mxu0 0
    %896 = vmatpush1.bf16.msra.mxu0 %v762
    %897 = vmatprep.subr.bf16.mxu0 0
    %898 = vmatpush1.bf16.msra.mxu0 %v761
    %899 = vmatprep.subr.bf16.mxu0 0
    %900 = vmatpush1.bf16.msra.mxu0 %v760
    %901 = vmatprep.subr.bf16.mxu0 0
    %902 = vmatpush1.bf16.msra.mxu0 %v759
    %903 = vmatprep.subr.bf16.mxu0 0
    %904 = vmatpush2.bf16.msra.mxu0 %v774
    %905 = vmatprep.subr.bf16.mxu0 0
    %906 = vmatpush2.bf16.msra.mxu0 %v773
    %907 = vmatprep.subr.bf16.mxu0 0
    %908 = vmatpush2.bf16.msra.mxu0 %v772
    %909 = vmatprep.subr.bf16.mxu0 0
    %910 = vmatpush2.bf16.msra.mxu0 %v771
    %911 = vmatprep.subr.bf16.mxu0 0
    %912 = vmatpush2.bf16.msra.mxu0 %v770
    %913 = vmatprep.subr.bf16.mxu0 0
    %914 = vmatpush2.bf16.msra.mxu0 %v769
    %915 = vmatprep.subr.bf16.mxu0 0
    %916 = vmatpush2.bf16.msra.mxu0 %v768
    %917 = vmatprep.subr.bf16.mxu0 0
    %918 = vmatpush2.bf16.msra.mxu0 %v767
    %919 = vmatprep.mubr.bf16.mxu0 %v392
    %920 = vmatmul.mubr.bf16.gmra.mxu0 %v391
    %v921 = vpop.f32.mrf.mxu0
    %v922 = vadd.f32 0.0, %v921
    %v923 = vpop.f32.mrf.mxu0
    %v924 = vpop.f32.mrf.mxu0
    %v925 = vadd.f32 0.0, %v924
    %v926 = vpop.f32.mrf.mxu0
    %927 = vmatprep.mubr.bf16.mxu0 %v400
    %928 = vmatmul.mubr.bf16.gmra.mxu0 %v399
    %v929 = vpop.f32.mrf.mxu0
    %v930 = vadd.f32 0.0, %v929
    %v931 = vpop.f32.mrf.mxu0
    %v932 = vpop.f32.mrf.mxu0
    %v933 = vadd.f32 0.0, %v932
    %v934 = vpop.f32.mrf.mxu0
    %935 = vmatprep.mubr.bf16.mxu0 %v408
    %936 = vmatmul.mubr.bf16.gmra.mxu0 %v407
    %v937 = vpop.f32.mrf.mxu0
    %v938 = vadd.f32 0.0, %v937
    %v939 = vpop.f32.mrf.mxu0
    %v940 = vpop.f32.mrf.mxu0
    %v941 = vadd.f32 0.0, %v940
    %v942 = vpop.f32.mrf.mxu0
    %943 = vmatprep.mubr.bf16.mxu0 %v416
    %944 = vmatmul.mubr.bf16.gmra.mxu0 %v415
    %v945 = vpop.f32.mrf.mxu0
    %v946 = vadd.f32 0.0, %v945
    %v947 = vpop.f32.mrf.mxu0
    %v948 = vpop.f32.mrf.mxu0
    %v949 = vadd.f32 0.0, %v948
    %v950 = vpop.f32.mrf.mxu0
    %951 = vmatprep.mubr.bf16.mxu0 %v424
    %952 = vmatmul.mubr.bf16.gmra.mxu0 %v423
    %v953 = vpop.f32.mrf.mxu0
    %v954 = vadd.f32 0.0, %v953
    %v955 = vpop.f32.mrf.mxu0
    %v956 = vpop.f32.mrf.mxu0
    %v957 = vadd.f32 0.0, %v956
    %v958 = vpop.f32.mrf.mxu0
    %959 = vmatprep.mubr.bf16.mxu0 %v432
    %960 = vmatmul.mubr.bf16.gmra.mxu0 %v431
    %v961 = vpop.f32.mrf.mxu0
    %v962 = vadd.f32 0.0, %v961
    %v963 = vpop.f32.mrf.mxu0
    %v964 = vpop.f32.mrf.mxu0
    %v965 = vadd.f32 0.0, %v964
    %v966 = vpop.f32.mrf.mxu0
    %967 = vmatprep.mubr.bf16.mxu0 %v440
    %968 = vmatmul.mubr.bf16.gmra.mxu0 %v439
    %v969 = vpop.f32.mrf.mxu0
    %v970 = vadd.f32 0.0, %v969
    %v971 = vpop.f32.mrf.mxu0
    %v972 = vpop.f32.mrf.mxu0
    %v973 = vpop.f32.mrf.mxu0
    %974 = vdwg.mxu0
    %975 = vmatprep.subr.bf16.mxu0 0
    %976 = vmatpush1.bf16.msra.mxu0 %v782
    %977 = vmatprep.subr.bf16.mxu0 0
    %978 = vmatpush1.bf16.msra.mxu0 %v781
    %979 = vmatprep.subr.bf16.mxu0 0
    %980 = vmatpush1.bf16.msra.mxu0 %v780
    %981 = vmatprep.subr.bf16.mxu0 0
    %982 = vmatpush1.bf16.msra.mxu0 %v779
    %983 = vmatprep.subr.bf16.mxu0 0
    %984 = vmatpush1.bf16.msra.mxu0 %v778
    %985 = vmatprep.subr.bf16.mxu0 0
    %986 = vmatpush1.bf16.msra.mxu0 %v777
    %987 = vmatprep.subr.bf16.mxu0 0
    %988 = vmatpush1.bf16.msra.mxu0 %v776
    %989 = vmatprep.subr.bf16.mxu0 0
    %990 = vmatpush1.bf16.msra.mxu0 %v775
    %991 = vmatprep.subr.bf16.mxu0 0
    %992 = vmatpush2.bf16.msra.mxu0 %v790
    %993 = vmatprep.subr.bf16.mxu0 0
    %994 = vmatpush2.bf16.msra.mxu0 %v789
    %995 = vmatprep.subr.bf16.mxu0 0
    %996 = vmatpush2.bf16.msra.mxu0 %v788
    %997 = vmatprep.subr.bf16.mxu0 0
    %998 = vmatpush2.bf16.msra.mxu0 %v787
    %999 = vmatprep.subr.bf16.mxu0 0
    %1000 = vmatpush2.bf16.msra.mxu0 %v786
    %1001 = vmatprep.subr.bf16.mxu0 0
    %1002 = vmatpush2.bf16.msra.mxu0 %v785
    %1003 = vmatprep.subr.bf16.mxu0 0
    %1004 = vmatpush2.bf16.msra.mxu0 %v784
    %1005 = vmatprep.subr.bf16.mxu0 0
    %1006 = vmatpush2.bf16.msra.mxu0 %v783
    %1007 = vmatprep.mubr.bf16.mxu0 %v394
    %1008 = vmatmul.mubr.bf16.gmra.mxu0 %v393
    %v1009 = vpop.f32.mrf.mxu0
    %v1010 = vadd.f32 %v922, %v1009
    %v1011 = vpop.f32.mrf.mxu0
    %v1012 = vpop.f32.mrf.mxu0
    %v1013 = vadd.f32 %v925, %v1012
    %v1014 = vpop.f32.mrf.mxu0
    %1015 = vmatprep.mubr.bf16.mxu0 %v402
    %1016 = vmatmul.mubr.bf16.gmra.mxu0 %v401
    %v1017 = vpop.f32.mrf.mxu0
    %v1018 = vadd.f32 %v930, %v1017
    %v1019 = vpop.f32.mrf.mxu0
    %v1020 = vpop.f32.mrf.mxu0
    %v1021 = vadd.f32 %v933, %v1020
    %v1022 = vpop.f32.mrf.mxu0
    %1023 = vmatprep.mubr.bf16.mxu0 %v410
    %1024 = vmatmul.mubr.bf16.gmra.mxu0 %v409
    %v1025 = vpop.f32.mrf.mxu0
    %v1026 = vadd.f32 %v938, %v1025
    %v1027 = vpop.f32.mrf.mxu0
    %v1028 = vpop.f32.mrf.mxu0
    %v1029 = vadd.f32 %v941, %v1028
    %v1030 = vpop.f32.mrf.mxu0
    %1031 = vmatprep.mubr.bf16.mxu0 %v418
    %1032 = vmatmul.mubr.bf16.gmra.mxu0 %v417
    %v1033 = vpop.f32.mrf.mxu0
    %v1034 = vadd.f32 %v946, %v1033
    %v1035 = vpop.f32.mrf.mxu0
    %v1036 = vpop.f32.mrf.mxu0
    %v1037 = vadd.f32 %v949, %v1036
    %v1038 = vpop.f32.mrf.mxu0
    %1039 = vmatprep.mubr.bf16.mxu0 %v426
    %1040 = vmatmul.mubr.bf16.gmra.mxu0 %v425
    %v1041 = vpop.f32.mrf.mxu0
    %v1042 = vadd.f32 %v954, %v1041
    %v1043 = vpop.f32.mrf.mxu0
    %v1044 = vpop.f32.mrf.mxu0
    %v1045 = vadd.f32 %v957, %v1044
    %v1046 = vpop.f32.mrf.mxu0
    %1047 = vmatprep.mubr.bf16.mxu0 %v434
    %1048 = vmatmul.mubr.bf16.gmra.mxu0 %v433
    %v1049 = vpop.f32.mrf.mxu0
    %v1050 = vadd.f32 %v962, %v1049
    %v1051 = vpop.f32.mrf.mxu0
    %v1052 = vpop.f32.mrf.mxu0
    %v1053 = vadd.f32 %v965, %v1052
    %v1054 = vpop.f32.mrf.mxu0
    %1055 = vmatprep.mubr.bf16.mxu0 %v442
    %1056 = vmatmul.mubr.bf16.gmra.mxu0 %v441
    %v1057 = vpop.f32.mrf.mxu0
    %v1058 = vadd.f32 %v970, %v1057
    %v1059 = vpop.f32.mrf.mxu0
    %v1060 = vpop.f32.mrf.mxu0
    %v1061 = vpop.f32.mrf.mxu0
    %1062 = vdwg.mxu0
    %1063 = vmatprep.subr.bf16.mxu0 0
    %1064 = vmatpush1.bf16.msra.mxu0 %v798
    %1065 = vmatprep.subr.bf16.mxu0 0
    %1066 = vmatpush1.bf16.msra.mxu0 %v797
    %1067 = vmatprep.subr.bf16.mxu0 0
    %1068 = vmatpush1.bf16.msra.mxu0 %v796
    %1069 = vmatprep.subr.bf16.mxu0 0
    %1070 = vmatpush1.bf16.msra.mxu0 %v795
    %1071 = vmatprep.subr.bf16.mxu0 0
    %1072 = vmatpush1.bf16.msra.mxu0 %v794
    %1073 = vmatprep.subr.bf16.mxu0 0
    %1074 = vmatpush1.bf16.msra.mxu0 %v793
    %1075 = vmatprep.subr.bf16.mxu0 0
    %1076 = vmatpush1.bf16.msra.mxu0 %v792
    %1077 = vmatprep.subr.bf16.mxu0 0
    %1078 = vmatpush1.bf16.msra.mxu0 %v791
    %1079 = vmatprep.subr.bf16.mxu0 0
    %1080 = vmatpush2.bf16.msra.mxu0 %v806
    %1081 = vmatprep.subr.bf16.mxu0 0
    %1082 = vmatpush2.bf16.msra.mxu0 %v805
    %1083 = vmatprep.subr.bf16.mxu0 0
    %1084 = vmatpush2.bf16.msra.mxu0 %v804
    %1085 = vmatprep.subr.bf16.mxu0 0
    %1086 = vmatpush2.bf16.msra.mxu0 %v803
    %1087 = vmatprep.subr.bf16.mxu0 0
    %1088 = vmatpush2.bf16.msra.mxu0 %v802
    %1089 = vmatprep.subr.bf16.mxu0 0
    %1090 = vmatpush2.bf16.msra.mxu0 %v801
    %1091 = vmatprep.subr.bf16.mxu0 0
    %1092 = vmatpush2.bf16.msra.mxu0 %v800
    %1093 = vmatprep.subr.bf16.mxu0 0
    %1094 = vmatpush2.bf16.msra.mxu0 %v799
    %1095 = vmatprep.mubr.bf16.mxu0 %v396
    %1096 = vmatmul.mubr.bf16.gmra.mxu0 %v395
    %v1097 = vpop.f32.mrf.mxu0
    %v1098 = vadd.f32 %v1010, %v1097
    %v1099 = vpop.f32.mrf.mxu0
    %v1100 = vpop.f32.mrf.mxu0
    %v1101 = vadd.f32 %v1013, %v1100
    %v1102 = vpop.f32.mrf.mxu0
    %1103 = vmatprep.mubr.bf16.mxu0 %v404
    %1104 = vmatmul.mubr.bf16.gmra.mxu0 %v403
    %v1105 = vpop.f32.mrf.mxu0
    %v1106 = vadd.f32 %v1018, %v1105
    %v1107 = vpop.f32.mrf.mxu0
    %v1108 = vpop.f32.mrf.mxu0
    %v1109 = vadd.f32 %v1021, %v1108
    %v1110 = vpop.f32.mrf.mxu0
    %1111 = vmatprep.mubr.bf16.mxu0 %v412
    %1112 = vmatmul.mubr.bf16.gmra.mxu0 %v411
    %v1113 = vpop.f32.mrf.mxu0
    %v1114 = vadd.f32 %v1026, %v1113
    %v1115 = vpop.f32.mrf.mxu0
    %v1116 = vpop.f32.mrf.mxu0
    %v1117 = vadd.f32 %v1029, %v1116
    %v1118 = vpop.f32.mrf.mxu0
    %1119 = vmatprep.mubr.bf16.mxu0 %v420
    %1120 = vmatmul.mubr.bf16.gmra.mxu0 %v419
    %v1121 = vpop.f32.mrf.mxu0
    %v1122 = vadd.f32 %v1034, %v1121
    %v1123 = vpop.f32.mrf.mxu0
    %v1124 = vpop.f32.mrf.mxu0
    %v1125 = vadd.f32 %v1037, %v1124
    %v1126 = vpop.f32.mrf.mxu0
    %1127 = vmatprep.mubr.bf16.mxu0 %v428
    %1128 = vmatmul.mubr.bf16.gmra.mxu0 %v427
    %v1129 = vpop.f32.mrf.mxu0
    %v1130 = vadd.f32 %v1042, %v1129
    %v1131 = vpop.f32.mrf.mxu0
    %v1132 = vpop.f32.mrf.mxu0
    %v1133 = vadd.f32 %v1045, %v1132
    %v1134 = vpop.f32.mrf.mxu0
    %1135 = vmatprep.mubr.bf16.mxu0 %v436
    %1136 = vmatmul.mubr.bf16.gmra.mxu0 %v435
    %v1137 = vpop.f32.mrf.mxu0
    %v1138 = vadd.f32 %v1050, %v1137
    %v1139 = vpop.f32.mrf.mxu0
    %v1140 = vpop.f32.mrf.mxu0
    %v1141 = vadd.f32 %v1053, %v1140
    %v1142 = vpop.f32.mrf.mxu0
    %1143 = vmatprep.mubr.bf16.mxu0 %v444
    %1144 = vmatmul.mubr.bf16.gmra.mxu0 %v443
    %v1145 = vpop.f32.mrf.mxu0
    %v1146 = vadd.f32 %v1058, %v1145
    %v1147 = vpop.f32.mrf.mxu0
    %v1148 = vpop.f32.mrf.mxu0
    %v1149 = vpop.f32.mrf.mxu0
    %1150 = vdwg.mxu0
    %1151 = vmatprep.subr.bf16.mxu0 0
    %1152 = vmatpush1.bf16.msra.mxu0 %v814
    %1153 = vmatprep.subr.bf16.mxu0 0
    %1154 = vmatpush1.bf16.msra.mxu0 %v813
    %1155 = vmatprep.subr.bf16.mxu0 0
    %1156 = vmatpush1.bf16.msra.mxu0 %v812
    %1157 = vmatprep.subr.bf16.mxu0 0
    %1158 = vmatpush1.bf16.msra.mxu0 %v811
    %1159 = vmatprep.subr.bf16.mxu0 0
    %1160 = vmatpush1.bf16.msra.mxu0 %v810
    %1161 = vmatprep.subr.bf16.mxu0 0
    %1162 = vmatpush1.bf16.msra.mxu0 %v809
    %1163 = vmatprep.subr.bf16.mxu0 0
    %1164 = vmatpush1.bf16.msra.mxu0 %v808
    %1165 = vmatprep.subr.bf16.mxu0 0
    %1166 = vmatpush1.bf16.msra.mxu0 %v807
    %1167 = vmatprep.subr.bf16.mxu0 0
    %1168 = vmatpush2.bf16.msra.mxu0 %v822
    %1169 = vmatprep.subr.bf16.mxu0 0
    %1170 = vmatpush2.bf16.msra.mxu0 %v821
    %1171 = vmatprep.subr.bf16.mxu0 0
    %1172 = vmatpush2.bf16.msra.mxu0 %v820
    %1173 = vmatprep.subr.bf16.mxu0 0
    %1174 = vmatpush2.bf16.msra.mxu0 %v819
    %1175 = vmatprep.subr.bf16.mxu0 0
    %1176 = vmatpush2.bf16.msra.mxu0 %v818
    %1177 = vmatprep.subr.bf16.mxu0 0
    %1178 = vmatpush2.bf16.msra.mxu0 %v817
    %1179 = vmatprep.subr.bf16.mxu0 0
    %1180 = vmatpush2.bf16.msra.mxu0 %v816
    %1181 = vmatprep.subr.bf16.mxu0 0
    %1182 = vmatpush2.bf16.msra.mxu0 %v815
    %1183 = vmatprep.mubr.bf16.mxu0 %v398
    %1184 = vmatmul.mubr.bf16.gmra.mxu0 %v397
    %v1185 = vpop.f32.mrf.mxu0
    %v1186 = vadd.f32 %v1098, %v1185
    %v1187 = vpop.f32.mrf.mxu0
    %v1188 = vpop.f32.mrf.mxu0
    %v1189 = vadd.f32 %v1101, %v1188
    %v1190 = vpop.f32.mrf.mxu0
    %1191 = vmatprep.mubr.bf16.mxu0 %v406
    %1192 = vmatmul.mubr.bf16.gmra.mxu0 %v405
    %v1193 = vpop.f32.mrf.mxu0
    %v1194 = vadd.f32 %v1106, %v1193
    %v1195 = vpop.f32.mrf.mxu0
    %v1196 = vpop.f32.mrf.mxu0
    %v1197 = vadd.f32 %v1109, %v1196
    %v1198 = vpop.f32.mrf.mxu0
    %1199 = vmatprep.mubr.bf16.mxu0 %v414
    %1200 = vmatmul.mubr.bf16.gmra.mxu0 %v413
    %v1201 = vpop.f32.mrf.mxu0
    %v1202 = vadd.f32 %v1114, %v1201
    %v1203 = vpop.f32.mrf.mxu0
    %v1204 = vpop.f32.mrf.mxu0
    %v1205 = vadd.f32 %v1117, %v1204
    %v1206 = vpop.f32.mrf.mxu0
    %1207 = vmatprep.mubr.bf16.mxu0 %v422
    %1208 = vmatmul.mubr.bf16.gmra.mxu0 %v421
    %v1209 = vpop.f32.mrf.mxu0
    %v1210 = vadd.f32 %v1122, %v1209
    %v1211 = vpop.f32.mrf.mxu0
    %v1212 = vpop.f32.mrf.mxu0
    %v1213 = vadd.f32 %v1125, %v1212
    %v1214 = vpop.f32.mrf.mxu0
    %1215 = vmatprep.mubr.bf16.mxu0 %v430
    %1216 = vmatmul.mubr.bf16.gmra.mxu0 %v429
    %v1217 = vpop.f32.mrf.mxu0
    %v1218 = vadd.f32 %v1130, %v1217
    %v1219 = vpop.f32.mrf.mxu0
    %v1220 = vpop.f32.mrf.mxu0
    %v1221 = vadd.f32 %v1133, %v1220
    %v1222 = vpop.f32.mrf.mxu0
    %1223 = vmatprep.mubr.bf16.mxu0 %v438
    %1224 = vmatmul.mubr.bf16.gmra.mxu0 %v437
    %v1225 = vpop.f32.mrf.mxu0
    %v1226 = vadd.f32 %v1138, %v1225
    %v1227 = vpop.f32.mrf.mxu0
    %v1228 = vpop.f32.mrf.mxu0
    %v1229 = vadd.f32 %v1141, %v1228
    %v1230 = vpop.f32.mrf.mxu0
    %1231 = vmatprep.mubr.bf16.mxu0 %v446
    %1232 = vmatmul.mubr.bf16.gmra.mxu0 %v445
    %v1233 = vpop.f32.mrf.mxu0
    %v1234 = vadd.f32 %v1146, %v1233
    %v1235 = vpop.f32.mrf.mxu0
    %v1236 = vpop.f32.mrf.mxu0
    %v1237 = vpop.f32.mrf.mxu0
    %1238 = vdwg.mxu0
    %v1239 = vadd.f32 %v1186, %v1189
    %v1240 = vadd.f32 %v1239, %v1194
    %v1241 = vadd.f32 %v1240, %v1197
    %v1242 = vadd.f32 %v1241, %v1202
    %v1243 = vadd.f32 %v1242, %v1205
    %v1244 = vadd.f32 %v1243, %v1210
    %v1245 = vadd.f32 %v1244, %v1213
    %v1246 = vadd.f32 %v1245, %v1218
    %v1247 = vadd.f32 %v1246, %v1221
    %v1248 = vadd.f32 %v1247, %v1226
    %v1249 = vadd.f32 %v1248, %v1229
    %vm1250 = vcmask 1041408
    %v1251 = vsel %vm1250, %v1234, 0.0
    %v1252 = vadd.f32 %v1249, %v1251
    %v1253 = vrot.slane %v1252, 4
    %v1254 = vadd.f32 %v1252, %v1253
    %v1255 = vrot.slane %v1254, 2
    %v1256 = vadd.f32 %v1254, %v1255
    %v1257 = vrot.slane %v1256, 1
    %v1258 = vadd.f32 %v1256, %v1257
    %v1259 = vmul.f32 %v1186, %v1186
    %v1260 = vmul.f32 %v1189, %v1189
    %v1261 = vmul.f32 %v1194, %v1194
    %v1262 = vmul.f32 %v1197, %v1197
    %v1263 = vmul.f32 %v1202, %v1202
    %v1264 = vmul.f32 %v1205, %v1205
    %v1265 = vmul.f32 %v1210, %v1210
    %v1266 = vmul.f32 %v1213, %v1213
    %v1267 = vmul.f32 %v1218, %v1218
    %v1268 = vmul.f32 %v1221, %v1221
    %v1269 = vmul.f32 %v1226, %v1226
    %v1270 = vmul.f32 %v1229, %v1229
    %v1271 = vmul.f32 %v1234, %v1234
    %v1272 = vadd.f32 %v1259, %v1260
    %v1273 = vadd.f32 %v1272, %v1261
    %v1274 = vadd.f32 %v1273, %v1262
    %v1275 = vadd.f32 %v1274, %v1263
    %v1276 = vadd.f32 %v1275, %v1264
    %v1277 = vadd.f32 %v1276, %v1265
    %v1278 = vadd.f32 %v1277, %v1266
    %v1279 = vadd.f32 %v1278, %v1267
    %v1280 = vadd.f32 %v1279, %v1268
    %v1281 = vadd.f32 %v1280, %v1269
    %v1282 = vadd.f32 %v1281, %v1270
    %v1283 = vsel %vm1250, %v1271, 0.0
    %v1284 = vadd.f32 %v1282, %v1283
    %v1285 = vrot.slane %v1284, 4
    %v1286 = vadd.f32 %v1284, %v1285
    %v1287 = vrot.slane %v1286, 2
    %v1288 = vadd.f32 %v1286, %v1287
    %v1289 = vrot.slane %v1288, 1
    %v1290 = vadd.f32 %v1288, %v1289
    %v1291 = vmul.f32 %v1258, 0.010204081
    %v1292 = vmul.f32 %v1290, 0.010204081
    %v1293 = vmul.f32 %v1291, %v1291
    %v1294 = vsub.f32 %v1292, %v1293
    %v1295 = vadd.f32 %v1294, 1e-05
    %v1296 = vrsqrt.pop %v1295
    %v1297 = vld [vmem:[#allocation4] sm:$0x1]
    %v1298 = vmul.f32 %v1297, %v1296
    %v1299 = vld [vmem:[#allocation6] sm:$0x1]
    %v1300 = vmul.f32 %v1291, %v1298
    %v1301 = vsub.f32 %v1299, %v1300
    %v1303 = vlaneseq
    %v1304 = vshrl.u32 %v1303, 7
    %v1305 = vsub.s32 0, %v1304
    %v1306 = vrot.slane %v1298, %v1305
    %v1308 = vmul.f32 %v1186, %v1306
    %v1309 = vmul.f32 %v1189, %v1306
    %v1310 = vmul.f32 %v1194, %v1306
    %v1311 = vmul.f32 %v1197, %v1306
    %v1312 = vmul.f32 %v1202, %v1306
    %v1313 = vmul.f32 %v1205, %v1306
    %v1314 = vmul.f32 %v1210, %v1306
    %v1315 = vmul.f32 %v1213, %v1306
    %v1316 = vmul.f32 %v1218, %v1306
    %v1317 = vmul.f32 %v1221, %v1306
    %v1318 = vmul.f32 %v1226, %v1306
    %v1319 = vmul.f32 %v1229, %v1306
    %v1320 = vmul.f32 %v1234, %v1306
    %v1322 = vlaneseq
    %v1323 = vshrl.u32 %v1322, 7
    %v1324 = vsub.s32 0, %v1323
    %v1325 = vrot.slane %v1301, %v1324
    %v1327 = vadd.f32 %v1308, %v1325
    %v1328 = vadd.f32 %v1309, %v1325
    %v1329 = vadd.f32 %v1310, %v1325
    %v1330 = vadd.f32 %v1311, %v1325
    %v1331 = vadd.f32 %v1312, %v1325
    %v1332 = vadd.f32 %v1313, %v1325
    %v1333 = vadd.f32 %v1314, %v1325
    %v1334 = vadd.f32 %v1315, %v1325
    %v1335 = vadd.f32 %v1316, %v1325
    %v1336 = vadd.f32 %v1317, %v1325
    %v1337 = vadd.f32 %v1318, %v1325
    %v1338 = vadd.f32 %v1319, %v1325
    %v1339 = vadd.f32 %v1320, %v1325
    %vm1340 = vcmp.gt.f32.partialorder %v1327, 0.0
    %vm1341 = vcmp.gt.f32.partialorder %v1328, 0.0
    %vm1342 = vcmp.gt.f32.partialorder %v1329, 0.0
    %vm1343 = vcmp.gt.f32.partialorder %v1330, 0.0
    %vm1344 = vcmp.gt.f32.partialorder %v1331, 0.0
    %vm1345 = vcmp.gt.f32.partialorder %v1332, 0.0
    %vm1346 = vcmp.gt.f32.partialorder %v1333, 0.0
    %vm1347 = vcmp.gt.f32.partialorder %v1334, 0.0
    %vm1348 = vcmp.gt.f32.partialorder %v1335, 0.0
    %vm1349 = vcmp.gt.f32.partialorder %v1336, 0.0
    %vm1350 = vcmp.gt.f32.partialorder %v1337, 0.0
    %vm1351 = vcmp.gt.f32.partialorder %v1338, 0.0
    %vm1352 = vcmp.gt.f32.partialorder %v1339, 0.0
    %v1353 = vmul.f32 %v1327, 0.2
    %v1354 = vmul.f32 %v1328, 0.2
    %v1355 = vmul.f32 %v1329, 0.2
    %v1356 = vmul.f32 %v1330, 0.2
    %v1357 = vmul.f32 %v1331, 0.2
    %v1358 = vmul.f32 %v1332, 0.2
    %v1359 = vmul.f32 %v1333, 0.2
    %v1360 = vmul.f32 %v1334, 0.2
    %v1361 = vmul.f32 %v1335, 0.2
    %v1362 = vmul.f32 %v1336, 0.2
    %v1363 = vmul.f32 %v1337, 0.2
    %v1364 = vmul.f32 %v1338, 0.2
    %v1365 = vmul.f32 %v1339, 0.2
    %v1366 = vsel %vm1340, %v1327, %v1353
    %v1367 = vsel %vm1341, %v1328, %v1354
    %v1368 = vsel %vm1342, %v1329, %v1355
    %v1369 = vsel %vm1343, %v1330, %v1356
    %v1370 = vsel %vm1344, %v1331, %v1357
    %v1371 = vsel %vm1345, %v1332, %v1358
    %v1372 = vsel %vm1346, %v1333, %v1359
    %v1373 = vsel %vm1347, %v1334, %v1360
    %v1374 = vsel %vm1348, %v1335, %v1361
    %v1375 = vsel %vm1349, %v1336, %v1362
    %v1376 = vsel %vm1350, %v1337, %v1363
    %v1377 = vsel %vm1351, %v1338, %v1364
    %v1378 = vsel %vm1352, %v1339, %v1365
    %v1379 = vpack.c.bf16 %v1367, %v1366
    %v1380 = vpack.c.bf16 %v1369, %v1368
    %v1381 = vpack.c.bf16 %v1371, %v1370
    %v1382 = vpack.c.bf16 %v1373, %v1372
    %v1383 = vpack.c.bf16 %v1375, %v1374
    %v1384 = vpack.c.bf16 %v1377, %v1376
    %v1385 = vpack.c.bf16 %v1378, %v1378
    %v1393 = vunpack.c.l.b16 %v1379
    %v1394 = vunpack.c.h.b16 %v1379
    %v1395 = vunpack.c.l.b16 %v1380
    %v1396 = vunpack.c.h.b16 %v1380
    %v1397 = vunpack.c.l.b16 %v1381
    %v1398 = vunpack.c.h.b16 %v1381
    %v1399 = vunpack.c.l.b16 %v1382
    %v1400 = vunpack.c.h.b16 %v1382
    %v1401 = vunpack.c.l.b16 %v1383
    %v1402 = vunpack.c.h.b16 %v1383
    %v1403 = vunpack.c.l.b16 %v1384
    %v1404 = vunpack.c.h.b16 %v1384
    %v1405 = vunpack.c.l.b16 %v1385
    %v1406 = vpack.c.b16 %v1393, %v1393
    %v1407 = vpack.c.b16 %v1394, %v1394
    %v1408 = vpack.c.b16 %v1395, %v1395
    %v1409 = vpack.c.b16 %v1396, %v1396
    %v1410 = vpack.c.b16 %v1397, %v1397
    %v1411 = vpack.c.b16 %v1398, %v1398
    %v1412 = vpack.c.b16 %v1399, %v1399
    %v1413 = vpack.c.b16 %v1400, %v1400
    %v1414 = vpack.c.b16 %v1401, %v1401
    %v1415 = vpack.c.b16 %v1402, %v1402
    %v1416 = vpack.c.b16 %v1403, %v1403
    %v1417 = vpack.c.b16 %v1404, %v1404
    %v1418 = vpack.c.b16 %v1405, %v1405
    %1432 = vst [vmem:[%s4] sm:$0xf] %v1406
    %1433 = vst [vmem:[%s4 + $0x4] sm:$0xf] %v1407
    %1434 = vst [vmem:[%s4 + $0x8] sm:$0xf] %v1408
    %1435 = vst [vmem:[%s4 + $0xc] sm:$0xf] %v1409
    %1436 = vst [vmem:[%s4 + $0x10] sm:$0xf] %v1410
    %1437 = vst [vmem:[%s4 + $0x14] sm:$0xf] %v1411
    %1438 = vst [vmem:[%s4 + $0x18] sm:$0xf] %v1412
    %1439 = vst [vmem:[%s4 + $0x1c] sm:$0xf] %v1413
    %1440 = vst [vmem:[%s4 + $0x20] sm:$0xf] %v1414
    %1441 = vst [vmem:[%s4 + $0x24] sm:$0xf] %v1415
    %1442 = vst [vmem:[%s4 + $0x28] sm:$0xf] %v1416
    %1443 = vst [vmem:[%s4 + $0x2c] sm:$0xf] %v1417
    %1444 = vst [vmem:[%s4 + $0x30] sm:$0x1] %v1418
    // Predicated region
    $region30: #{discriminator_forward.5} parent=1 // pred_check
      _
    $region31: #{discriminator_forward.5} parent=1 // pred_check_branch
      %1446 = sbr.rel (0) target = $region33
    $region32: #{discriminator_forward.5} parent=1 // pred_region
      _
    $region33: #{discriminator_forward.5} parent=1 // pred_fallthru
      _
    // Predicated region
    $region34: #{discriminator_forward.5} parent=1 // pred_check
      _
    $region35: #{discriminator_forward.5} parent=1 // pred_check_branch
      %1448 = sbr.rel (0) target = $region37
    $region36: #{discriminator_forward.5} parent=1 // pred_region
      _
    $region37: #{discriminator_forward.5} parent=1 // pred_fallthru
      _
    %1449 = vsyncpa [#allocation3], 1
    %1450 = vsyncpa [#allocation5], 1

// kernel: discriminator_forward.6
$region0: #{discriminator_forward.6}
  #allocation0 [shape = 'u32[]', space=smem, size = 0x4, offset = 0x4, fixed_abs, tag = 'smem constant byte address 0x4 - core index']
  #allocation1 [shape = 'u32[144,128]{1,0:T(1,128)}', space=vmem, size = 0x12000, scoped, tag = 'internal scratch']
  %s0 = inlined_call_operand.vmem [shape: bf16[18,2048], index: 0, kind: input, shape index: {}]
  %s1 = inlined_call_operand.hbm [shape: bf16[2048,256], index: 1, kind: input, shape index: {}]
  %s2 = inlined_call_operand.vmem [shape: f32[1,256], index: 2, kind: input, shape index: {}]
  %s3 = inlined_call_operand.vmem [shape: f32[1,256], index: 3, kind: input, shape index: {}]
  %s4 = inlined_call_operand.vmem [shape: bf16[18,256], index: 4, kind: output, shape index: {}]
  %s5 = sld [smem:[#allocation0]]
  $region30: #{discriminator_forward.6} parent=0
    _
  %s7 = ssub.s32 1, %s5
  %s8 = scalar_select 0, %s7, %s5
  $region1: #{discriminator_forward.6} parent=0
    #allocation2 [shape = 'u8[1048576]{0}', space=vmem, size = 0x100000, scoped, tag = 'input window, operand 1, single buffered']
    #allocation3 [shape = 's32[1]{0}', space=sflag, size = 0x4, scoped, tag = 'scoped memory for discriminator_forward.6']
    %9 = vsyncpa [#allocation3], 0
    // Predicated region
    $region2: #{discriminator_forward.6} parent=1 // pred_check
      _
    $region3: #{discriminator_forward.6} parent=1 // pred_check_branch
      %11 = sbr.rel (0) target = $region5
    $region4: #{discriminator_forward.6} parent=1 // pred_region
      _
    $region5: #{discriminator_forward.6} parent=1 // pred_fallthru
      _
    // Predicated region
    $region6: #{discriminator_forward.6} parent=1 // pred_check
      _
    $region7: #{discriminator_forward.6} parent=1 // pred_check_branch
      %13 = sbr.rel (0) target = $region9
    $region8: #{discriminator_forward.6} parent=1 // pred_region
      %s15 = ssub.s32 32768, 32768
      %16 = vsyncadd [#allocation3], %s15
      %s17 = sshll.u32 [#allocation2], 4
      %s18 = int_to_ptr.vmem [resolvable:$true] %s17
      %23 = dma.hbm_to_vmem [thread:$0]  %s1, 32768, %s18, [#allocation3], 128, 128, 8
    $region9: #{discriminator_forward.6} parent=1 // pred_fallthru
      _
    // Predicated region
    $region10: #{discriminator_forward.6} parent=1 // pred_check
      _
    $region11: #{discriminator_forward.6} parent=1 // pred_check_branch
      %25 = sbr.rel (0) target = $region13
    $region12: #{discriminator_forward.6} parent=1 // pred_region
      _
    $region13: #{discriminator_forward.6} parent=1 // pred_fallthru
      _
    // Predicated region
    $region14: #{discriminator_forward.6} parent=1 // pred_check
      _
    $region15: #{discriminator_forward.6} parent=1 // pred_check_branch
      %27 = sbr.rel (0) target = $region17
    $region16: #{discriminator_forward.6} parent=1 // pred_region
      _
    $region17: #{discriminator_forward.6} parent=1 // pred_fallthru
      _
    // Predicated region
    $region18: #{discriminator_forward.6} parent=1 // pred_check
      _
    $region19: #{discriminator_forward.6} parent=1 // pred_check_branch
      %29 = sbr.rel (0) target = $region21
    $region20: #{discriminator_forward.6} parent=1 // pred_region
      %30 = dma.done [#allocation3], 32768
    $region21: #{discriminator_forward.6} parent=1 // pred_fallthru
      _
    %v31 = vld [vmem:[%s0] sm:$0xff]
    %v32 = vld [vmem:[%s0 + $0x8] sm:$0xff]
    %v33 = vld [vmem:[%s0 + $0x10] sm:$0xff]
    %v34 = vld [vmem:[%s0 + $0x18] sm:$0xff]
    %v35 = vld [vmem:[%s0 + $0x20] sm:$0xff]
    %v36 = vld [vmem:[%s0 + $0x28] sm:$0xff]
    %v37 = vld [vmem:[%s0 + $0x30] sm:$0xff]
    %v38 = vld [vmem:[%s0 + $0x38] sm:$0xff]
    %v39 = vld [vmem:[%s0 + $0x40] sm:$0xff]
    %v40 = vld [vmem:[%s0 + $0x48] sm:$0xff]
    %v41 = vld [vmem:[%s0 + $0x50] sm:$0xff]
    %v42 = vld [vmem:[%s0 + $0x58] sm:$0xff]
    %v43 = vld [vmem:[%s0 + $0x60] sm:$0xff]
    %v44 = vld [vmem:[%s0 + $0x68] sm:$0xff]
    %v45 = vld [vmem:[%s0 + $0x70] sm:$0xff]
    %v46 = vld [vmem:[%s0 + $0x78] sm:$0xff]
    %v47 = vld [vmem:[%s0 + $0x80] sm:$0x11]
    %v48 = vld [vmem:[%s0 + $0x88] sm:$0x11]
    %v49 = vld [vmem:[%s0 + $0x90] sm:$0x11]
    %v50 = vld [vmem:[%s0 + $0x98] sm:$0x11]
    %v51 = vld [vmem:[%s0 + $0xa0] sm:$0x11]
    %v52 = vld [vmem:[%s0 + $0xa8] sm:$0x11]
    %v53 = vld [vmem:[%s0 + $0xb0] sm:$0x11]
    %v54 = vld [vmem:[%s0 + $0xb8] sm:$0x11]
    %v55 = vld [vmem:[#allocation2] sm:$0xff]
    %v56 = vld [vmem:[#allocation2 + $0x8] sm:$0xff]
    %v57 = vld [vmem:[#allocation2 + $0x10] sm:$0xff]
    %v58 = vld [vmem:[#allocation2 + $0x18] sm:$0xff]
    %v59 = vld [vmem:[#allocation2 + $0x20] sm:$0xff]
    %v60 = vld [vmem:[#allocation2 + $0x28] sm:$0xff]
    %v61 = vld [vmem:[#allocation2 + $0x30] sm:$0xff]
    %v62 = vld [vmem:[#allocation2 + $0x38] sm:$0xff]
    %v63 = vld [vmem:[#allocation2 + $0x40] sm:$0xff]
    %v64 = vld [vmem:[#allocation2 + $0x48] sm:$0xff]
    %v65 = vld [vmem:[#allocation2 + $0x50] sm:$0xff]
    %v66 = vld [vmem:[#allocation2 + $0x58] sm:$0xff]
    %v67 = vld [vmem:[#allocation2 + $0x60] sm:$0xff]
    %v68 = vld [vmem:[#allocation2 + $0x68] sm:$0xff]
    %v69 = vld [vmem:[#allocation2 + $0x70] sm:$0xff]
    %v70 = vld [vmem:[#allocation2 + $0x78] sm:$0xff]
    %v71 = vld [vmem:[#allocation2 + $0x80] sm:$0xff]
    %v72 = vld [vmem:[#allocation2 + $0x88] sm:$0xff]
    %v73 = vld [vmem:[#allocation2 + $0x90] sm:$0xff]
    %v74 = vld [vmem:[#allocation2 + $0x98] sm:$0xff]
    %v75 = vld [vmem:[#allocation2 + $0xa0] sm:$0xff]
    %v76 = vld [vmem:[#allocation2 + $0xa8] sm:$0xff]
    %v77 = vld [vmem:[#allocation2 + $0xb0] sm:$0xff]
    %v78 = vld [vmem:[#allocation2 + $0xb8] sm:$0xff]
    %v79 = vld [vmem:[#allocation2 + $0xc0] sm:$0xff]
    %v80 = vld [vmem:[#allocation2 + $0xc8] sm:$0xff]
    %v81 = vld [vmem:[#allocation2 + $0xd0] sm:$0xff]
    %v82 = vld [vmem:[#allocation2 + $0xd8] sm:$0xff]
    %v83 = vld [vmem:[#allocation2 + $0xe0] sm:$0xff]
    %v84 = vld [vmem:[#allocation2 + $0xe8] sm:$0xff]
    %v85 = vld [vmem:[#allocation2 + $0xf0] sm:$0xff]
    %v86 = vld [vmem:[#allocation2 + $0xf8] sm:$0xff]
    %v87 = vld [vmem:[#allocation2 + $0x100] sm:$0xff]
    %v88 = vld [vmem:[#allocation2 + $0x108] sm:$0xff]
    %v89 = vld [vmem:[#allocation2 + $0x110] sm:$0xff]
    %v90 = vld [vmem:[#allocation2 + $0x118] sm:$0xff]
    %v91 = vld [vmem:[#allocation2 + $0x120] sm:$0xff]
    %v92 = vld [vmem:[#allocation2 + $0x128] sm:$0xff]
    %v93 = vld [vmem:[#allocation2 + $0x130] sm:$0xff]
    %v94 = vld [vmem:[#allocation2 + $0x138] sm:$0xff]
    %v95 = vld [vmem:[#allocation2 + $0x140] sm:$0xff]
    %v96 = vld [vmem:[#allocation2 + $0x148] sm:$0xff]
    %v97 = vld [vmem:[#allocation2 + $0x150] sm:$0xff]
    %v98 = vld [vmem:[#allocation2 + $0x158] sm:$0xff]
    %v99 = vld [vmem:[#allocation2 + $0x160] sm:$0xff]
    %v100 = vld [vmem:[#allocation2 + $0x168] sm:$0xff]
    %v101 = vld [vmem:[#allocation2 + $0x170] sm:$0xff]
    %v102 = vld [vmem:[#allocation2 + $0x178] sm:$0xff]
    %v103 = vld [vmem:[#allocation2 + $0x180] sm:$0xff]
    %v104 = vld [vmem:[#allocation2 + $0x188] sm:$0xff]
    %v105 = vld [vmem:[#allocation2 + $0x190] sm:$0xff]
    %v106 = vld [vmem:[#allocation2 + $0x198] sm:$0xff]
    %v107 = vld [vmem:[#allocation2 + $0x1a0] sm:$0xff]
    %v108 = vld [vmem:[#allocation2 + $0x1a8] sm:$0xff]
    %v109 = vld [vmem:[#allocation2 + $0x1b0] sm:$0xff]
    %v110 = vld [vmem:[#allocation2 + $0x1b8] sm:$0xff]
    %v111 = vld [vmem:[#allocation2 + $0x1c0] sm:$0xff]
    %v112 = vld [vmem:[#allocation2 + $0x1c8] sm:$0xff]
    %v113 = vld [vmem:[#allocation2 + $0x1d0] sm:$0xff]
    %v114 = vld [vmem:[#allocation2 + $0x1d8] sm:$0xff]
    %v115 = vld [vmem:[#allocation2 + $0x1e0] sm:$0xff]
    %v116 = vld [vmem:[#allocation2 + $0x1e8] sm:$0xff]
    %v117 = vld [vmem:[#allocation2 + $0x1f0] sm:$0xff]
    %v118 = vld [vmem:[#allocation2 + $0x1f8] sm:$0xff]
    %v119 = vld [vmem:[#allocation2 + $0x200] sm:$0xff]
    %v120 = vld [vmem:[#allocation2 + $0x208] sm:$0xff]
    %v121 = vld [vmem:[#allocation2 + $0x210] sm:$0xff]
    %v122 = vld [vmem:[#allocation2 + $0x218] sm:$0xff]
    %v123 = vld [vmem:[#allocation2 + $0x220] sm:$0xff]
    %v124 = vld [vmem:[#allocation2 + $0x228] sm:$0xff]
    %v125 = vld [vmem:[#allocation2 + $0x230] sm:$0xff]
    %v126 = vld [vmem:[#allocation2 + $0x238] sm:$0xff]
    %v127 = vld [vmem:[#allocation2 + $0x240] sm:$0xff]
    %v128 = vld [vmem:[#allocation2 + $0x248] sm:$0xff]
    %v129 = vld [vmem:[#allocation2 + $0x250] sm:$0xff]
    %v130 = vld [vmem:[#allocation2 + $0x258] sm:$0xff]
    %v131 = vld [vmem:[#allocation2 + $0x260] sm:$0xff]
    %v132 = vld [vmem:[#allocation2 + $0x268] sm:$0xff]
    %v133 = vld [vmem:[#allocation2 + $0x270] sm:$0xff]
    %v134 = vld [vmem:[#allocation2 + $0x278] sm:$0xff]
    %v135 = vld [vmem:[#allocation2 + $0x280] sm:$0xff]
    %v136 = vld [vmem:[#allocation2 + $0x288] sm:$0xff]
    %v137 = vld [vmem:[#allocation2 + $0x290] sm:$0xff]
    %v138 = vld [vmem:[#allocation2 + $0x298] sm:$0xff]
    %v139 = vld [vmem:[#allocation2 + $0x2a0] sm:$0xff]
    %v140 = vld [vmem:[#allocation2 + $0x2a8] sm:$0xff]
    %v141 = vld [vmem:[#allocation2 + $0x2b0] sm:$0xff]
    %v142 = vld [vmem:[#allocation2 + $0x2b8] sm:$0xff]
    %v143 = vld [vmem:[#allocation2 + $0x2c0] sm:$0xff]
    %v144 = vld [vmem:[#allocation2 + $0x2c8] sm:$0xff]
    %v145 = vld [vmem:[#allocation2 + $0x2d0] sm:$0xff]
    %v146 = vld [vmem:[#allocation2 + $0x2d8] sm:$0xff]
    %v147 = vld [vmem:[#allocation2 + $0x2e0] sm:$0xff]
    %v148 = vld [vmem:[#allocation2 + $0x2e8] sm:$0xff]
    %v149 = vld [vmem:[#allocation2 + $0x2f0] sm:$0xff]
    %v150 = vld [vmem:[#allocation2 + $0x2f8] sm:$0xff]
    %v151 = vld [vmem:[#allocation2 + $0x300] sm:$0xff]
    %v152 = vld [vmem:[#allocation2 + $0x308] sm:$0xff]
    %v153 = vld [vmem:[#allocation2 + $0x310] sm:$0xff]
    %v154 = vld [vmem:[#allocation2 + $0x318] sm:$0xff]
    %v155 = vld [vmem:[#allocation2 + $0x320] sm:$0xff]
    %v156 = vld [vmem:[#allocation2 + $0x328] sm:$0xff]
    %v157 = vld [vmem:[#allocation2 + $0x330] sm:$0xff]
    %v158 = vld [vmem:[#allocation2 + $0x338] sm:$0xff]
    %v159 = vld [vmem:[#allocation2 + $0x340] sm:$0xff]
    %v160 = vld [vmem:[#allocation2 + $0x348] sm:$0xff]
    %v161 = vld [vmem:[#allocation2 + $0x350] sm:$0xff]
    %v162 = vld [vmem:[#allocation2 + $0x358] sm:$0xff]
    %v163 = vld [vmem:[#allocation2 + $0x360] sm:$0xff]
    %v164 = vld [vmem:[#allocation2 + $0x368] sm:$0xff]
    %v165 = vld [vmem:[#allocation2 + $0x370] sm:$0xff]
    %v166 = vld [vmem:[#allocation2 + $0x378] sm:$0xff]
    %v167 = vld [vmem:[#allocation2 + $0x380] sm:$0xff]
    %v168 = vld [vmem:[#allocation2 + $0x388] sm:$0xff]
    %v169 = vld [vmem:[#allocation2 + $0x390] sm:$0xff]
    %v170 = vld [vmem:[#allocation2 + $0x398] sm:$0xff]
    %v171 = vld [vmem:[#allocation2 + $0x3a0] sm:$0xff]
    %v172 = vld [vmem:[#allocation2 + $0x3a8] sm:$0xff]
    %v173 = vld [vmem:[#allocation2 + $0x3b0] sm:$0xff]
    %v174 = vld [vmem:[#allocation2 + $0x3b8] sm:$0xff]
    %v175 = vld [vmem:[#allocation2 + $0x3c0] sm:$0xff]
    %v176 = vld [vmem:[#allocation2 + $0x3c8] sm:$0xff]
    %v177 = vld [vmem:[#allocation2 + $0x3d0] sm:$0xff]
    %v178 = vld [vmem:[#allocation2 + $0x3d8] sm:$0xff]
    %v179 = vld [vmem:[#allocation2 + $0x3e0] sm:$0xff]
    %v180 = vld [vmem:[#allocation2 + $0x3e8] sm:$0xff]
    %v181 = vld [vmem:[#allocation2 + $0x3f0] sm:$0xff]
    %v182 = vld [vmem:[#allocation2 + $0x3f8] sm:$0xff]
    %v183 = vld [vmem:[#allocation2 + $0x400] sm:$0xff]
    %v184 = vld [vmem:[#allocation2 + $0x408] sm:$0xff]
    %v185 = vld [vmem:[#allocation2 + $0x410] sm:$0xff]
    %v186 = vld [vmem:[#allocation2 + $0x418] sm:$0xff]
    %v187 = vld [vmem:[#allocation2 + $0x420] sm:$0xff]
    %v188 = vld [vmem:[#allocation2 + $0x428] sm:$0xff]
    %v189 = vld [vmem:[#allocation2 + $0x430] sm:$0xff]
    %v190 = vld [vmem:[#allocation2 + $0x438] sm:$0xff]
    %v191 = vld [vmem:[#allocation2 + $0x440] sm:$0xff]
    %v192 = vld [vmem:[#allocation2 + $0x448] sm:$0xff]
    %v193 = vld [vmem:[#allocation2 + $0x450] sm:$0xff]
    %v194 = vld [vmem:[#allocation2 + $0x458] sm:$0xff]
    %v195 = vld [vmem:[#allocation2 + $0x460] sm:$0xff]
    %v196 = vld [vmem:[#allocation2 + $0x468] sm:$0xff]
    %v197 = vld [vmem:[#allocation2 + $0x470] sm:$0xff]
    %v198 = vld [vmem:[#allocation2 + $0x478] sm:$0xff]
    %v199 = vld [vmem:[#allocation2 + $0x480] sm:$0xff]
    %v200 = vld [vmem:[#allocation2 + $0x488] sm:$0xff]
    %v201 = vld [vmem:[#allocation2 + $0x490] sm:$0xff]
    %v202 = vld [vmem:[#allocation2 + $0x498] sm:$0xff]
    %v203 = vld [vmem:[#allocation2 + $0x4a0] sm:$0xff]
    %v204 = vld [vmem:[#allocation2 + $0x4a8] sm:$0xff]
    %v205 = vld [vmem:[#allocation2 + $0x4b0] sm:$0xff]
    %v206 = vld [vmem:[#allocation2 + $0x4b8] sm:$0xff]
    %v207 = vld [vmem:[#allocation2 + $0x4c0] sm:$0xff]
    %v208 = vld [vmem:[#allocation2 + $0x4c8] sm:$0xff]
    %v209 = vld [vmem:[#allocation2 + $0x4d0] sm:$0xff]
    %v210 = vld [vmem:[#allocation2 + $0x4d8] sm:$0xff]
    %v211 = vld [vmem:[#allocation2 + $0x4e0] sm:$0xff]
    %v212 = vld [vmem:[#allocation2 + $0x4e8] sm:$0xff]
    %v213 = vld [vmem:[#allocation2 + $0x4f0] sm:$0xff]
    %v214 = vld [vmem:[#allocation2 + $0x4f8] sm:$0xff]
    %v215 = vld [vmem:[#allocation2 + $0x500] sm:$0xff]
    %v216 = vld [vmem:[#allocation2 + $0x508] sm:$0xff]
    %v217 = vld [vmem:[#allocation2 + $0x510] sm:$0xff]
    %v218 = vld [vmem:[#allocation2 + $0x518] sm:$0xff]
    %v219 = vld [vmem:[#allocation2 + $0x520] sm:$0xff]
    %v220 = vld [vmem:[#allocation2 + $0x528] sm:$0xff]
    %v221 = vld [vmem:[#allocation2 + $0x530] sm:$0xff]
    %v222 = vld [vmem:[#allocation2 + $0x538] sm:$0xff]
    %v223 = vld [vmem:[#allocation2 + $0x540] sm:$0xff]
    %v224 = vld [vmem:[#allocation2 + $0x548] sm:$0xff]
    %v225 = vld [vmem:[#allocation2 + $0x550] sm:$0xff]
    %v226 = vld [vmem:[#allocation2 + $0x558] sm:$0xff]
    %v227 = vld [vmem:[#allocation2 + $0x560] sm:$0xff]
    %v228 = vld [vmem:[#allocation2 + $0x568] sm:$0xff]
    %v229 = vld [vmem:[#allocation2 + $0x570] sm:$0xff]
    %v230 = vld [vmem:[#allocation2 + $0x578] sm:$0xff]
    %v231 = vld [vmem:[#allocation2 + $0x580] sm:$0xff]
    %v232 = vld [vmem:[#allocation2 + $0x588] sm:$0xff]
    %v233 = vld [vmem:[#allocation2 + $0x590] sm:$0xff]
    %v234 = vld [vmem:[#allocation2 + $0x598] sm:$0xff]
    %v235 = vld [vmem:[#allocation2 + $0x5a0] sm:$0xff]
    %v236 = vld [vmem:[#allocation2 + $0x5a8] sm:$0xff]
    %v237 = vld [vmem:[#allocation2 + $0x5b0] sm:$0xff]
    %v238 = vld [vmem:[#allocation2 + $0x5b8] sm:$0xff]
    %v239 = vld [vmem:[#allocation2 + $0x5c0] sm:$0xff]
    %v240 = vld [vmem:[#allocation2 + $0x5c8] sm:$0xff]
    %v241 = vld [vmem:[#allocation2 + $0x5d0] sm:$0xff]
    %v242 = vld [vmem:[#allocation2 + $0x5d8] sm:$0xff]
    %v243 = vld [vmem:[#allocation2 + $0x5e0] sm:$0xff]
    %v244 = vld [vmem:[#allocation2 + $0x5e8] sm:$0xff]
    %v245 = vld [vmem:[#allocation2 + $0x5f0] sm:$0xff]
    %v246 = vld [vmem:[#allocation2 + $0x5f8] sm:$0xff]
    %v247 = vld [vmem:[#allocation2 + $0x600] sm:$0xff]
    %v248 = vld [vmem:[#allocation2 + $0x608] sm:$0xff]
    %v249 = vld [vmem:[#allocation2 + $0x610] sm:$0xff]
    %v250 = vld [vmem:[#allocation2 + $0x618] sm:$0xff]
    %v251 = vld [vmem:[#allocation2 + $0x620] sm:$0xff]
    %v252 = vld [vmem:[#allocation2 + $0x628] sm:$0xff]
    %v253 = vld [vmem:[#allocation2 + $0x630] sm:$0xff]
    %v254 = vld [vmem:[#allocation2 + $0x638] sm:$0xff]
    %v255 = vld [vmem:[#allocation2 + $0x640] sm:$0xff]
    %v256 = vld [vmem:[#allocation2 + $0x648] sm:$0xff]
    %v257 = vld [vmem:[#allocation2 + $0x650] sm:$0xff]
    %v258 = vld [vmem:[#allocation2 + $0x658] sm:$0xff]
    %v259 = vld [vmem:[#allocation2 + $0x660] sm:$0xff]
    %v260 = vld [vmem:[#allocation2 + $0x668] sm:$0xff]
    %v261 = vld [vmem:[#allocation2 + $0x670] sm:$0xff]
    %v262 = vld [vmem:[#allocation2 + $0x678] sm:$0xff]
    %v263 = vld [vmem:[#allocation2 + $0x680] sm:$0xff]
    %v264 = vld [vmem:[#allocation2 + $0x688] sm:$0xff]
    %v265 = vld [vmem:[#allocation2 + $0x690] sm:$0xff]
    %v266 = vld [vmem:[#allocation2 + $0x698] sm:$0xff]
    %v267 = vld [vmem:[#allocation2 + $0x6a0] sm:$0xff]
    %v268 = vld [vmem:[#allocation2 + $0x6a8] sm:$0xff]
    %v269 = vld [vmem:[#allocation2 + $0x6b0] sm:$0xff]
    %v270 = vld [vmem:[#allocation2 + $0x6b8] sm:$0xff]
    %v271 = vld [vmem:[#allocation2 + $0x6c0] sm:$0xff]
    %v272 = vld [vmem:[#allocation2 + $0x6c8] sm:$0xff]
    %v273 = vld [vmem:[#allocation2 + $0x6d0] sm:$0xff]
    %v274 = vld [vmem:[#allocation2 + $0x6d8] sm:$0xff]
    %v275 = vld [vmem:[#allocation2 + $0x6e0] sm:$0xff]
    %v276 = vld [vmem:[#allocation2 + $0x6e8] sm:$0xff]
    %v277 = vld [vmem:[#allocation2 + $0x6f0] sm:$0xff]
    %v278 = vld [vmem:[#allocation2 + $0x6f8] sm:$0xff]
    %v279 = vld [vmem:[#allocation2 + $0x700] sm:$0xff]
    %v280 = vld [vmem:[#allocation2 + $0x708] sm:$0xff]
    %v281 = vld [vmem:[#allocation2 + $0x710] sm:$0xff]
    %v282 = vld [vmem:[#allocation2 + $0x718] sm:$0xff]
    %v283 = vld [vmem:[#allocation2 + $0x720] sm:$0xff]
    %v284 = vld [vmem:[#allocation2 + $0x728] sm:$0xff]
    %v285 = vld [vmem:[#allocation2 + $0x730] sm:$0xff]
    %v286 = vld [vmem:[#allocation2 + $0x738] sm:$0xff]
    %v287 = vld [vmem:[#allocation2 + $0x740] sm:$0xff]
    %v288 = vld [vmem:[#allocation2 + $0x748] sm:$0xff]
    %v289 = vld [vmem:[#allocation2 + $0x750] sm:$0xff]
    %v290 = vld [vmem:[#allocation2 + $0x758] sm:$0xff]
    %v291 = vld [vmem:[#allocation2 + $0x760] sm:$0xff]
    %v292 = vld [vmem:[#allocation2 + $0x768] sm:$0xff]
    %v293 = vld [vmem:[#allocation2 + $0x770] sm:$0xff]
    %v294 = vld [vmem:[#allocation2 + $0x778] sm:$0xff]
    %v295 = vld [vmem:[#allocation2 + $0x780] sm:$0xff]
    %v296 = vld [vmem:[#allocation2 + $0x788] sm:$0xff]
    %v297 = vld [vmem:[#allocation2 + $0x790] sm:$0xff]
    %v298 = vld [vmem:[#allocation2 + $0x798] sm:$0xff]
    %v299 = vld [vmem:[#allocation2 + $0x7a0] sm:$0xff]
    %v300 = vld [vmem:[#allocation2 + $0x7a8] sm:$0xff]
    %v301 = vld [vmem:[#allocation2 + $0x7b0] sm:$0xff]
    %v302 = vld [vmem:[#allocation2 + $0x7b8] sm:$0xff]
    %v303 = vld [vmem:[#allocation2 + $0x7c0] sm:$0xff]
    %v304 = vld [vmem:[#allocation2 + $0x7c8] sm:$0xff]
    %v305 = vld [vmem:[#allocation2 + $0x7d0] sm:$0xff]
    %v306 = vld [vmem:[#allocation2 + $0x7d8] sm:$0xff]
    %v307 = vld [vmem:[#allocation2 + $0x7e0] sm:$0xff]
    %v308 = vld [vmem:[#allocation2 + $0x7e8] sm:$0xff]
    %v309 = vld [vmem:[#allocation2 + $0x7f0] sm:$0xff]
    %v310 = vld [vmem:[#allocation2 + $0x7f8] sm:$0xff]
    %v335 = vunpack.c.l.b16 %v31
    %v336 = vunpack.c.h.b16 %v31
    %v337 = vunpack.c.l.b16 %v32
    %v338 = vunpack.c.h.b16 %v32
    %v339 = vunpack.c.l.b16 %v33
    %v340 = vunpack.c.h.b16 %v33
    %v341 = vunpack.c.l.b16 %v34
    %v342 = vunpack.c.h.b16 %v34
    %v343 = vunpack.c.l.b16 %v35
    %v344 = vunpack.c.h.b16 %v35
    %v345 = vunpack.c.l.b16 %v36
    %v346 = vunpack.c.h.b16 %v36
    %v347 = vunpack.c.l.b16 %v37
    %v348 = vunpack.c.h.b16 %v37
    %v349 = vunpack.c.l.b16 %v38
    %v350 = vunpack.c.h.b16 %v38
    %v351 = vunpack.c.l.b16 %v39
    %v352 = vunpack.c.h.b16 %v39
    %v353 = vunpack.c.l.b16 %v40
    %v354 = vunpack.c.h.b16 %v40
    %v355 = vunpack.c.l.b16 %v41
    %v356 = vunpack.c.h.b16 %v41
    %v357 = vunpack.c.l.b16 %v42
    %v358 = vunpack.c.h.b16 %v42
    %v359 = vunpack.c.l.b16 %v43
    %v360 = vunpack.c.h.b16 %v43
    %v361 = vunpack.c.l.b16 %v44
    %v362 = vunpack.c.h.b16 %v44
    %v363 = vunpack.c.l.b16 %v45
    %v364 = vunpack.c.h.b16 %v45
    %v365 = vunpack.c.l.b16 %v46
    %v366 = vunpack.c.h.b16 %v46
    %v367 = vunpack.c.l.b16 %v47
    %v368 = vunpack.c.h.b16 %v47
    %v369 = vunpack.c.l.b16 %v48
    %v370 = vunpack.c.h.b16 %v48
    %v371 = vunpack.c.l.b16 %v49
    %v372 = vunpack.c.h.b16 %v49
    %v373 = vunpack.c.l.b16 %v50
    %v374 = vunpack.c.h.b16 %v50
    %v375 = vunpack.c.l.b16 %v51
    %v376 = vunpack.c.h.b16 %v51
    %v377 = vunpack.c.l.b16 %v52
    %v378 = vunpack.c.h.b16 %v52
    %v379 = vunpack.c.l.b16 %v53
    %v380 = vunpack.c.h.b16 %v53
    %v381 = vunpack.c.l.b16 %v54
    %v382 = vunpack.c.h.b16 %v54
    %v383 = vpack.c.b16 %v351, %v335
    %v384 = vpack.c.b16 %v352, %v336
    %v385 = vpack.c.b16 %v353, %v337
    %v386 = vpack.c.b16 %v354, %v338
    %v387 = vpack.c.b16 %v355, %v339
    %v388 = vpack.c.b16 %v356, %v340
    %v389 = vpack.c.b16 %v357, %v341
    %v390 = vpack.c.b16 %v358, %v342
    %v391 = vpack.c.b16 %v359, %v343
    %v392 = vpack.c.b16 %v360, %v344
    %v393 = vpack.c.b16 %v361, %v345
    %v394 = vpack.c.b16 %v362, %v346
    %v395 = vpack.c.b16 %v363, %v347
    %v396 = vpack.c.b16 %v364, %v348
    %v397 = vpack.c.b16 %v365, %v349
    %v398 = vpack.c.b16 %v366, %v350
    %v399 = vpack.c.b16 %v367, %v367
    %v400 = vpack.c.b16 %v368, %v368
    %v401 = vpack.c.b16 %v369, %v369
    %v402 = vpack.c.b16 %v370, %v370
    %v403 = vpack.c.b16 %v371, %v371
    %v404 = vpack.c.b16 %v372, %v372
    %v405 = vpack.c.b16 %v373, %v373
    %v406 = vpack.c.b16 %v374, %v374
    %v407 = vpack.c.b16 %v375, %v375
    %v408 = vpack.c.b16 %v376, %v376
    %v409 = vpack.c.b16 %v377, %v377
    %v410 = vpack.c.b16 %v378, %v378
    %v411 = vpack.c.b16 %v379, %v379
    %v412 = vpack.c.b16 %v380, %v380
    %v413 = vpack.c.b16 %v381, %v381
    %v414 = vpack.c.b16 %v382, %v382
    %v703 = vunpack.c.l.b16 %v55
    %v704 = vunpack.c.h.b16 %v55
    %v705 = vunpack.c.l.b16 %v56
    %v706 = vunpack.c.h.b16 %v56
    %v707 = vunpack.c.l.b16 %v57
    %v708 = vunpack.c.h.b16 %v57
    %v709 = vunpack.c.l.b16 %v58
    %v710 = vunpack.c.h.b16 %v58
    %v711 = vunpack.c.l.b16 %v59
    %v712 = vunpack.c.h.b16 %v59
    %v713 = vunpack.c.l.b16 %v60
    %v714 = vunpack.c.h.b16 %v60
    %v715 = vunpack.c.l.b16 %v61
    %v716 = vunpack.c.h.b16 %v61
    %v717 = vunpack.c.l.b16 %v62
    %v718 = vunpack.c.h.b16 %v62
    %v719 = vunpack.c.l.b16 %v63
    %v720 = vunpack.c.h.b16 %v63
    %v721 = vunpack.c.l.b16 %v64
    %v722 = vunpack.c.h.b16 %v64
    %v723 = vunpack.c.l.b16 %v65
    %v724 = vunpack.c.h.b16 %v65
    %v725 = vunpack.c.l.b16 %v66
    %v726 = vunpack.c.h.b16 %v66
    %v727 = vunpack.c.l.b16 %v67
    %v728 = vunpack.c.h.b16 %v67
    %v729 = vunpack.c.l.b16 %v68
    %v730 = vunpack.c.h.b16 %v68
    %v731 = vunpack.c.l.b16 %v69
    %v732 = vunpack.c.h.b16 %v69
    %v733 = vunpack.c.l.b16 %v70
    %v734 = vunpack.c.h.b16 %v70
    %v735 = vunpack.c.l.b16 %v71
    %v736 = vunpack.c.h.b16 %v71
    %v737 = vunpack.c.l.b16 %v72
    %v738 = vunpack.c.h.b16 %v72
    %v739 = vunpack.c.l.b16 %v73
    %v740 = vunpack.c.h.b16 %v73
    %v741 = vunpack.c.l.b16 %v74
    %v742 = vunpack.c.h.b16 %v74
    %v743 = vunpack.c.l.b16 %v75
    %v744 = vunpack.c.h.b16 %v75
    %v745 = vunpack.c.l.b16 %v76
    %v746 = vunpack.c.h.b16 %v76
    %v747 = vunpack.c.l.b16 %v77
    %v748 = vunpack.c.h.b16 %v77
    %v749 = vunpack.c.l.b16 %v78
    %v750 = vunpack.c.h.b16 %v78
    %v751 = vunpack.c.l.b16 %v79
    %v752 = vunpack.c.h.b16 %v79
    %v753 = vunpack.c.l.b16 %v80
    %v754 = vunpack.c.h.b16 %v80
    %v755 = vunpack.c.l.b16 %v81
    %v756 = vunpack.c.h.b16 %v81
    %v757 = vunpack.c.l.b16 %v82
    %v758 = vunpack.c.h.b16 %v82
    %v759 = vunpack.c.l.b16 %v83
    %v760 = vunpack.c.h.b16 %v83
    %v761 = vunpack.c.l.b16 %v84
    %v762 = vunpack.c.h.b16 %v84
    %v763 = vunpack.c.l.b16 %v85
    %v764 = vunpack.c.h.b16 %v85
    %v765 = vunpack.c.l.b16 %v86
    %v766 = vunpack.c.h.b16 %v86
    %v767 = vunpack.c.l.b16 %v87
    %v768 = vunpack.c.h.b16 %v87
    %v769 = vunpack.c.l.b16 %v88
    %v770 = vunpack.c.h.b16 %v88
    %v771 = vunpack.c.l.b16 %v89
    %v772 = vunpack.c.h.b16 %v89
    %v773 = vunpack.c.l.b16 %v90
    %v774 = vunpack.c.h.b16 %v90
    %v775 = vunpack.c.l.b16 %v91
    %v776 = vunpack.c.h.b16 %v91
    %v777 = vunpack.c.l.b16 %v92
    %v778 = vunpack.c.h.b16 %v92
    %v779 = vunpack.c.l.b16 %v93
    %v780 = vunpack.c.h.b16 %v93
    %v781 = vunpack.c.l.b16 %v94
    %v782 = vunpack.c.h.b16 %v94
    %v783 = vunpack.c.l.b16 %v95
    %v784 = vunpack.c.h.b16 %v95
    %v785 = vunpack.c.l.b16 %v96
    %v786 = vunpack.c.h.b16 %v96
    %v787 = vunpack.c.l.b16 %v97
    %v788 = vunpack.c.h.b16 %v97
    %v789 = vunpack.c.l.b16 %v98
    %v790 = vunpack.c.h.b16 %v98
    %v791 = vunpack.c.l.b16 %v99
    %v792 = vunpack.c.h.b16 %v99
    %v793 = vunpack.c.l.b16 %v100
    %v794 = vunpack.c.h.b16 %v100
    %v795 = vunpack.c.l.b16 %v101
    %v796 = vunpack.c.h.b16 %v101
    %v797 = vunpack.c.l.b16 %v102
    %v798 = vunpack.c.h.b16 %v102
    %v799 = vunpack.c.l.b16 %v103
    %v800 = vunpack.c.h.b16 %v103
    %v801 = vunpack.c.l.b16 %v104
    %v802 = vunpack.c.h.b16 %v104
    %v803 = vunpack.c.l.b16 %v105
    %v804 = vunpack.c.h.b16 %v105
    %v805 = vunpack.c.l.b16 %v106
    %v806 = vunpack.c.h.b16 %v106
    %v807 = vunpack.c.l.b16 %v107
    %v808 = vunpack.c.h.b16 %v107
    %v809 = vunpack.c.l.b16 %v108
    %v810 = vunpack.c.h.b16 %v108
    %v811 = vunpack.c.l.b16 %v109
    %v812 = vunpack.c.h.b16 %v109
    %v813 = vunpack.c.l.b16 %v110
    %v814 = vunpack.c.h.b16 %v110
    %v815 = vunpack.c.l.b16 %v111
    %v816 = vunpack.c.h.b16 %v111
    %v817 = vunpack.c.l.b16 %v112
    %v818 = vunpack.c.h.b16 %v112
    %v819 = vunpack.c.l.b16 %v113
    %v820 = vunpack.c.h.b16 %v113
    %v821 = vunpack.c.l.b16 %v114
    %v822 = vunpack.c.h.b16 %v114
    %v823 = vunpack.c.l.b16 %v115
    %v824 = vunpack.c.h.b16 %v115
    %v825 = vunpack.c.l.b16 %v116
    %v826 = vunpack.c.h.b16 %v116
    %v827 = vunpack.c.l.b16 %v117
    %v828 = vunpack.c.h.b16 %v117
    %v829 = vunpack.c.l.b16 %v118
    %v830 = vunpack.c.h.b16 %v118
    %v831 = vunpack.c.l.b16 %v119
    %v832 = vunpack.c.h.b16 %v119
    %v833 = vunpack.c.l.b16 %v120
    %v834 = vunpack.c.h.b16 %v120
    %v835 = vunpack.c.l.b16 %v121
    %v836 = vunpack.c.h.b16 %v121
    %v837 = vunpack.c.l.b16 %v122
    %v838 = vunpack.c.h.b16 %v122
    %v839 = vunpack.c.l.b16 %v123
    %v840 = vunpack.c.h.b16 %v123
    %v841 = vunpack.c.l.b16 %v124
    %v842 = vunpack.c.h.b16 %v124
    %v843 = vunpack.c.l.b16 %v125
    %v844 = vunpack.c.h.b16 %v125
    %v845 = vunpack.c.l.b16 %v126
    %v846 = vunpack.c.h.b16 %v126
    %v847 = vunpack.c.l.b16 %v127
    %v848 = vunpack.c.h.b16 %v127
    %v849 = vunpack.c.l.b16 %v128
    %v850 = vunpack.c.h.b16 %v128
    %v851 = vunpack.c.l.b16 %v129
    %v852 = vunpack.c.h.b16 %v129
    %v853 = vunpack.c.l.b16 %v130
    %v854 = vunpack.c.h.b16 %v130
    %v855 = vunpack.c.l.b16 %v131
    %v856 = vunpack.c.h.b16 %v131
    %v857 = vunpack.c.l.b16 %v132
    %v858 = vunpack.c.h.b16 %v132
    %v859 = vunpack.c.l.b16 %v133
    %v860 = vunpack.c.h.b16 %v133
    %v861 = vunpack.c.l.b16 %v134
    %v862 = vunpack.c.h.b16 %v134
    %v863 = vunpack.c.l.b16 %v135
    %v864 = vunpack.c.h.b16 %v135
    %v865 = vunpack.c.l.b16 %v136
    %v866 = vunpack.c.h.b16 %v136
    %v867 = vunpack.c.l.b16 %v137
    %v868 = vunpack.c.h.b16 %v137
    %v869 = vunpack.c.l.b16 %v138
    %v870 = vunpack.c.h.b16 %v138
    %v871 = vunpack.c.l.b16 %v139
    %v872 = vunpack.c.h.b16 %v139
    %v873 = vunpack.c.l.b16 %v140
    %v874 = vunpack.c.h.b16 %v140
    %v875 = vunpack.c.l.b16 %v141
    %v876 = vunpack.c.h.b16 %v141
    %v877 = vunpack.c.l.b16 %v142
    %v878 = vunpack.c.h.b16 %v142
    %v879 = vunpack.c.l.b16 %v143
    %v880 = vunpack.c.h.b16 %v143
    %v881 = vunpack.c.l.b16 %v144
    %v882 = vunpack.c.h.b16 %v144
    %v883 = vunpack.c.l.b16 %v145
    %v884 = vunpack.c.h.b16 %v145
    %v885 = vunpack.c.l.b16 %v146
    %v886 = vunpack.c.h.b16 %v146
    %v887 = vunpack.c.l.b16 %v147
    %v888 = vunpack.c.h.b16 %v147
    %v889 = vunpack.c.l.b16 %v148
    %v890 = vunpack.c.h.b16 %v148
    %v891 = vunpack.c.l.b16 %v149
    %v892 = vunpack.c.h.b16 %v149
    %v893 = vunpack.c.l.b16 %v150
    %v894 = vunpack.c.h.b16 %v150
    %v895 = vunpack.c.l.b16 %v151
    %v896 = vunpack.c.h.b16 %v151
    %v897 = vunpack.c.l.b16 %v152
    %v898 = vunpack.c.h.b16 %v152
    %v899 = vunpack.c.l.b16 %v153
    %v900 = vunpack.c.h.b16 %v153
    %v901 = vunpack.c.l.b16 %v154
    %v902 = vunpack.c.h.b16 %v154
    %v903 = vunpack.c.l.b16 %v155
    %v904 = vunpack.c.h.b16 %v155
    %v905 = vunpack.c.l.b16 %v156
    %v906 = vunpack.c.h.b16 %v156
    %v907 = vunpack.c.l.b16 %v157
    %v908 = vunpack.c.h.b16 %v157
    %v909 = vunpack.c.l.b16 %v158
    %v910 = vunpack.c.h.b16 %v158
    %v911 = vunpack.c.l.b16 %v159
    %v912 = vunpack.c.h.b16 %v159
    %v913 = vunpack.c.l.b16 %v160
    %v914 = vunpack.c.h.b16 %v160
    %v915 = vunpack.c.l.b16 %v161
    %v916 = vunpack.c.h.b16 %v161
    %v917 = vunpack.c.l.b16 %v162
    %v918 = vunpack.c.h.b16 %v162
    %v919 = vunpack.c.l.b16 %v163
    %v920 = vunpack.c.h.b16 %v163
    %v921 = vunpack.c.l.b16 %v164
    %v922 = vunpack.c.h.b16 %v164
    %v923 = vunpack.c.l.b16 %v165
    %v924 = vunpack.c.h.b16 %v165
    %v925 = vunpack.c.l.b16 %v166
    %v926 = vunpack.c.h.b16 %v166
    %v927 = vunpack.c.l.b16 %v167
    %v928 = vunpack.c.h.b16 %v167
    %v929 = vunpack.c.l.b16 %v168
    %v930 = vunpack.c.h.b16 %v168
    %v931 = vunpack.c.l.b16 %v169
    %v932 = vunpack.c.h.b16 %v169
    %v933 = vunpack.c.l.b16 %v170
    %v934 = vunpack.c.h.b16 %v170
    %v935 = vunpack.c.l.b16 %v171
    %v936 = vunpack.c.h.b16 %v171
    %v937 = vunpack.c.l.b16 %v172
    %v938 = vunpack.c.h.b16 %v172
    %v939 = vunpack.c.l.b16 %v173
    %v940 = vunpack.c.h.b16 %v173
    %v941 = vunpack.c.l.b16 %v174
    %v942 = vunpack.c.h.b16 %v174
    %v943 = vunpack.c.l.b16 %v175
    %v944 = vunpack.c.h.b16 %v175
    %v945 = vunpack.c.l.b16 %v176
    %v946 = vunpack.c.h.b16 %v176
    %v947 = vunpack.c.l.b16 %v177
    %v948 = vunpack.c.h.b16 %v177
    %v949 = vunpack.c.l.b16 %v178
    %v950 = vunpack.c.h.b16 %v178
    %v951 = vunpack.c.l.b16 %v179
    %v952 = vunpack.c.h.b16 %v179
    %v953 = vunpack.c.l.b16 %v180
    %v954 = vunpack.c.h.b16 %v180
    %v955 = vunpack.c.l.b16 %v181
    %v956 = vunpack.c.h.b16 %v181
    %v957 = vunpack.c.l.b16 %v182
    %v958 = vunpack.c.h.b16 %v182
    %v959 = vunpack.c.l.b16 %v183
    %v960 = vunpack.c.h.b16 %v183
    %v961 = vunpack.c.l.b16 %v184
    %v962 = vunpack.c.h.b16 %v184
    %v963 = vunpack.c.l.b16 %v185
    %v964 = vunpack.c.h.b16 %v185
    %v965 = vunpack.c.l.b16 %v186
    %v966 = vunpack.c.h.b16 %v186
    %v967 = vunpack.c.l.b16 %v187
    %v968 = vunpack.c.h.b16 %v187
    %v969 = vunpack.c.l.b16 %v188
    %v970 = vunpack.c.h.b16 %v188
    %v971 = vunpack.c.l.b16 %v189
    %v972 = vunpack.c.h.b16 %v189
    %v973 = vunpack.c.l.b16 %v190
    %v974 = vunpack.c.h.b16 %v190
    %v975 = vunpack.c.l.b16 %v191
    %v976 = vunpack.c.h.b16 %v191
    %v977 = vunpack.c.l.b16 %v192
    %v978 = vunpack.c.h.b16 %v192
    %v979 = vunpack.c.l.b16 %v193
    %v980 = vunpack.c.h.b16 %v193
    %v981 = vunpack.c.l.b16 %v194
    %v982 = vunpack.c.h.b16 %v194
    %v983 = vunpack.c.l.b16 %v195
    %v984 = vunpack.c.h.b16 %v195
    %v985 = vunpack.c.l.b16 %v196
    %v986 = vunpack.c.h.b16 %v196
    %v987 = vunpack.c.l.b16 %v197
    %v988 = vunpack.c.h.b16 %v197
    %v989 = vunpack.c.l.b16 %v198
    %v990 = vunpack.c.h.b16 %v198
    %v991 = vunpack.c.l.b16 %v199
    %v992 = vunpack.c.h.b16 %v199
    %v993 = vunpack.c.l.b16 %v200
    %v994 = vunpack.c.h.b16 %v200
    %v995 = vunpack.c.l.b16 %v201
    %v996 = vunpack.c.h.b16 %v201
    %v997 = vunpack.c.l.b16 %v202
    %v998 = vunpack.c.h.b16 %v202
    %v999 = vunpack.c.l.b16 %v203
    %v1000 = vunpack.c.h.b16 %v203
    %v1001 = vunpack.c.l.b16 %v204
    %v1002 = vunpack.c.h.b16 %v204
    %v1003 = vunpack.c.l.b16 %v205
    %v1004 = vunpack.c.h.b16 %v205
    %v1005 = vunpack.c.l.b16 %v206
    %v1006 = vunpack.c.h.b16 %v206
    %v1007 = vunpack.c.l.b16 %v207
    %v1008 = vunpack.c.h.b16 %v207
    %v1009 = vunpack.c.l.b16 %v208
    %v1010 = vunpack.c.h.b16 %v208
    %v1011 = vunpack.c.l.b16 %v209
    %v1012 = vunpack.c.h.b16 %v209
    %v1013 = vunpack.c.l.b16 %v210
    %v1014 = vunpack.c.h.b16 %v210
    %v1015 = vunpack.c.l.b16 %v211
    %v1016 = vunpack.c.h.b16 %v211
    %v1017 = vunpack.c.l.b16 %v212
    %v1018 = vunpack.c.h.b16 %v212
    %v1019 = vunpack.c.l.b16 %v213
    %v1020 = vunpack.c.h.b16 %v213
    %v1021 = vunpack.c.l.b16 %v214
    %v1022 = vunpack.c.h.b16 %v214
    %v1023 = vunpack.c.l.b16 %v215
    %v1024 = vunpack.c.h.b16 %v215
    %v1025 = vunpack.c.l.b16 %v216
    %v1026 = vunpack.c.h.b16 %v216
    %v1027 = vunpack.c.l.b16 %v217
    %v1028 = vunpack.c.h.b16 %v217
    %v1029 = vunpack.c.l.b16 %v218
    %v1030 = vunpack.c.h.b16 %v218
    %v1031 = vunpack.c.l.b16 %v219
    %v1032 = vunpack.c.h.b16 %v219
    %v1033 = vunpack.c.l.b16 %v220
    %v1034 = vunpack.c.h.b16 %v220
    %v1035 = vunpack.c.l.b16 %v221
    %v1036 = vunpack.c.h.b16 %v221
    %v1037 = vunpack.c.l.b16 %v222
    %v1038 = vunpack.c.h.b16 %v222
    %v1039 = vunpack.c.l.b16 %v223
    %v1040 = vunpack.c.h.b16 %v223
    %v1041 = vunpack.c.l.b16 %v224
    %v1042 = vunpack.c.h.b16 %v224
    %v1043 = vunpack.c.l.b16 %v225
    %v1044 = vunpack.c.h.b16 %v225
    %v1045 = vunpack.c.l.b16 %v226
    %v1046 = vunpack.c.h.b16 %v226
    %v1047 = vunpack.c.l.b16 %v227
    %v1048 = vunpack.c.h.b16 %v227
    %v1049 = vunpack.c.l.b16 %v228
    %v1050 = vunpack.c.h.b16 %v228
    %v1051 = vunpack.c.l.b16 %v229
    %v1052 = vunpack.c.h.b16 %v229
    %v1053 = vunpack.c.l.b16 %v230
    %v1054 = vunpack.c.h.b16 %v230
    %v1055 = vunpack.c.l.b16 %v231
    %v1056 = vunpack.c.h.b16 %v231
    %v1057 = vunpack.c.l.b16 %v232
    %v1058 = vunpack.c.h.b16 %v232
    %v1059 = vunpack.c.l.b16 %v233
    %v1060 = vunpack.c.h.b16 %v233
    %v1061 = vunpack.c.l.b16 %v234
    %v1062 = vunpack.c.h.b16 %v234
    %v1063 = vunpack.c.l.b16 %v235
    %v1064 = vunpack.c.h.b16 %v235
    %v1065 = vunpack.c.l.b16 %v236
    %v1066 = vunpack.c.h.b16 %v236
    %v1067 = vunpack.c.l.b16 %v237
    %v1068 = vunpack.c.h.b16 %v237
    %v1069 = vunpack.c.l.b16 %v238
    %v1070 = vunpack.c.h.b16 %v238
    %v1071 = vunpack.c.l.b16 %v239
    %v1072 = vunpack.c.h.b16 %v239
    %v1073 = vunpack.c.l.b16 %v240
    %v1074 = vunpack.c.h.b16 %v240
    %v1075 = vunpack.c.l.b16 %v241
    %v1076 = vunpack.c.h.b16 %v241
    %v1077 = vunpack.c.l.b16 %v242
    %v1078 = vunpack.c.h.b16 %v242
    %v1079 = vunpack.c.l.b16 %v243
    %v1080 = vunpack.c.h.b16 %v243
    %v1081 = vunpack.c.l.b16 %v244
    %v1082 = vunpack.c.h.b16 %v244
    %v1083 = vunpack.c.l.b16 %v245
    %v1084 = vunpack.c.h.b16 %v245
    %v1085 = vunpack.c.l.b16 %v246
    %v1086 = vunpack.c.h.b16 %v246
    %v1087 = vunpack.c.l.b16 %v247
    %v1088 = vunpack.c.h.b16 %v247
    %v1089 = vunpack.c.l.b16 %v248
    %v1090 = vunpack.c.h.b16 %v248
    %v1091 = vunpack.c.l.b16 %v249
    %v1092 = vunpack.c.h.b16 %v249
    %v1093 = vunpack.c.l.b16 %v250
    %v1094 = vunpack.c.h.b16 %v250
    %v1095 = vunpack.c.l.b16 %v251
    %v1096 = vunpack.c.h.b16 %v251
    %v1097 = vunpack.c.l.b16 %v252
    %v1098 = vunpack.c.h.b16 %v252
    %v1099 = vunpack.c.l.b16 %v253
    %v1100 = vunpack.c.h.b16 %v253
    %v1101 = vunpack.c.l.b16 %v254
    %v1102 = vunpack.c.h.b16 %v254
    %v1103 = vunpack.c.l.b16 %v255
    %v1104 = vunpack.c.h.b16 %v255
    %v1105 = vunpack.c.l.b16 %v256
    %v1106 = vunpack.c.h.b16 %v256
    %v1107 = vunpack.c.l.b16 %v257
    %v1108 = vunpack.c.h.b16 %v257
    %v1109 = vunpack.c.l.b16 %v258
    %v1110 = vunpack.c.h.b16 %v258
    %v1111 = vunpack.c.l.b16 %v259
    %v1112 = vunpack.c.h.b16 %v259
    %v1113 = vunpack.c.l.b16 %v260
    %v1114 = vunpack.c.h.b16 %v260
    %v1115 = vunpack.c.l.b16 %v261
    %v1116 = vunpack.c.h.b16 %v261
    %v1117 = vunpack.c.l.b16 %v262
    %v1118 = vunpack.c.h.b16 %v262
    %v1119 = vunpack.c.l.b16 %v263
    %v1120 = vunpack.c.h.b16 %v263
    %v1121 = vunpack.c.l.b16 %v264
    %v1122 = vunpack.c.h.b16 %v264
    %v1123 = vunpack.c.l.b16 %v265
    %v1124 = vunpack.c.h.b16 %v265
    %v1125 = vunpack.c.l.b16 %v266
    %v1126 = vunpack.c.h.b16 %v266
    %v1127 = vunpack.c.l.b16 %v267
    %v1128 = vunpack.c.h.b16 %v267
    %v1129 = vunpack.c.l.b16 %v268
    %v1130 = vunpack.c.h.b16 %v268
    %v1131 = vunpack.c.l.b16 %v269
    %v1132 = vunpack.c.h.b16 %v269
    %v1133 = vunpack.c.l.b16 %v270
    %v1134 = vunpack.c.h.b16 %v270
    %v1135 = vunpack.c.l.b16 %v271
    %v1136 = vunpack.c.h.b16 %v271
    %v1137 = vunpack.c.l.b16 %v272
    %v1138 = vunpack.c.h.b16 %v272
    %v1139 = vunpack.c.l.b16 %v273
    %v1140 = vunpack.c.h.b16 %v273
    %v1141 = vunpack.c.l.b16 %v274
    %v1142 = vunpack.c.h.b16 %v274
    %v1143 = vunpack.c.l.b16 %v275
    %v1144 = vunpack.c.h.b16 %v275
    %v1145 = vunpack.c.l.b16 %v276
    %v1146 = vunpack.c.h.b16 %v276
    %v1147 = vunpack.c.l.b16 %v277
    %v1148 = vunpack.c.h.b16 %v277
    %v1149 = vunpack.c.l.b16 %v278
    %v1150 = vunpack.c.h.b16 %v278
    %v1151 = vunpack.c.l.b16 %v279
    %v1152 = vunpack.c.h.b16 %v279
    %v1153 = vunpack.c.l.b16 %v280
    %v1154 = vunpack.c.h.b16 %v280
    %v1155 = vunpack.c.l.b16 %v281
    %v1156 = vunpack.c.h.b16 %v281
    %v1157 = vunpack.c.l.b16 %v282
    %v1158 = vunpack.c.h.b16 %v282
    %v1159 = vunpack.c.l.b16 %v283
    %v1160 = vunpack.c.h.b16 %v283
    %v1161 = vunpack.c.l.b16 %v284
    %v1162 = vunpack.c.h.b16 %v284
    %v1163 = vunpack.c.l.b16 %v285
    %v1164 = vunpack.c.h.b16 %v285
    %v1165 = vunpack.c.l.b16 %v286
    %v1166 = vunpack.c.h.b16 %v286
    %v1167 = vunpack.c.l.b16 %v287
    %v1168 = vunpack.c.h.b16 %v287
    %v1169 = vunpack.c.l.b16 %v288
    %v1170 = vunpack.c.h.b16 %v288
    %v1171 = vunpack.c.l.b16 %v289
    %v1172 = vunpack.c.h.b16 %v289
    %v1173 = vunpack.c.l.b16 %v290
    %v1174 = vunpack.c.h.b16 %v290
    %v1175 = vunpack.c.l.b16 %v291
    %v1176 = vunpack.c.h.b16 %v291
    %v1177 = vunpack.c.l.b16 %v292
    %v1178 = vunpack.c.h.b16 %v292
    %v1179 = vunpack.c.l.b16 %v293
    %v1180 = vunpack.c.h.b16 %v293
    %v1181 = vunpack.c.l.b16 %v294
    %v1182 = vunpack.c.h.b16 %v294
    %v1183 = vunpack.c.l.b16 %v295
    %v1184 = vunpack.c.h.b16 %v295
    %v1185 = vunpack.c.l.b16 %v296
    %v1186 = vunpack.c.h.b16 %v296
    %v1187 = vunpack.c.l.b16 %v297
    %v1188 = vunpack.c.h.b16 %v297
    %v1189 = vunpack.c.l.b16 %v298
    %v1190 = vunpack.c.h.b16 %v298
    %v1191 = vunpack.c.l.b16 %v299
    %v1192 = vunpack.c.h.b16 %v299
    %v1193 = vunpack.c.l.b16 %v300
    %v1194 = vunpack.c.h.b16 %v300
    %v1195 = vunpack.c.l.b16 %v301
    %v1196 = vunpack.c.h.b16 %v301
    %v1197 = vunpack.c.l.b16 %v302
    %v1198 = vunpack.c.h.b16 %v302
    %v1199 = vunpack.c.l.b16 %v303
    %v1200 = vunpack.c.h.b16 %v303
    %v1201 = vunpack.c.l.b16 %v304
    %v1202 = vunpack.c.h.b16 %v304
    %v1203 = vunpack.c.l.b16 %v305
    %v1204 = vunpack.c.h.b16 %v305
    %v1205 = vunpack.c.l.b16 %v306
    %v1206 = vunpack.c.h.b16 %v306
    %v1207 = vunpack.c.l.b16 %v307
    %v1208 = vunpack.c.h.b16 %v307
    %v1209 = vunpack.c.l.b16 %v308
    %v1210 = vunpack.c.h.b16 %v308
    %v1211 = vunpack.c.l.b16 %v309
    %v1212 = vunpack.c.h.b16 %v309
    %v1213 = vunpack.c.l.b16 %v310
    %v1214 = vunpack.c.h.b16 %v310
    %v1215 = vpack.c.b16 %v705, %v703
    %v1216 = vpack.c.b16 %v706, %v704
    %v1217 = vpack.c.b16 %v709, %v707
    %v1218 = vpack.c.b16 %v710, %v708
    %v1219 = vpack.c.b16 %v713, %v711
    %v1220 = vpack.c.b16 %v714, %v712
    %v1221 = vpack.c.b16 %v717, %v715
    %v1222 = vpack.c.b16 %v718, %v716
    %v1223 = vpack.c.b16 %v721, %v719
    %v1224 = vpack.c.b16 %v722, %v720
    %v1225 = vpack.c.b16 %v725, %v723
    %v1226 = vpack.c.b16 %v726, %v724
    %v1227 = vpack.c.b16 %v729, %v727
    %v1228 = vpack.c.b16 %v730, %v728
    %v1229 = vpack.c.b16 %v733, %v731
    %v1230 = vpack.c.b16 %v734, %v732
    %v1231 = vpack.c.b16 %v737, %v735
    %v1232 = vpack.c.b16 %v738, %v736
    %v1233 = vpack.c.b16 %v741, %v739
    %v1234 = vpack.c.b16 %v742, %v740
    %v1235 = vpack.c.b16 %v745, %v743
    %v1236 = vpack.c.b16 %v746, %v744
    %v1237 = vpack.c.b16 %v749, %v747
    %v1238 = vpack.c.b16 %v750, %v748
    %v1239 = vpack.c.b16 %v753, %v751
    %v1240 = vpack.c.b16 %v754, %v752
    %v1241 = vpack.c.b16 %v757, %v755
    %v1242 = vpack.c.b16 %v758, %v756
    %v1243 = vpack.c.b16 %v761, %v759
    %v1244 = vpack.c.b16 %v762, %v760
    %v1245 = vpack.c.b16 %v765, %v763
    %v1246 = vpack.c.b16 %v766, %v764
    %v1247 = vpack.c.b16 %v769, %v767
    %v1248 = vpack.c.b16 %v770, %v768
    %v1249 = vpack.c.b16 %v773, %v771
    %v1250 = vpack.c.b16 %v774, %v772
    %v1251 = vpack.c.b16 %v777, %v775
    %v1252 = vpack.c.b16 %v778, %v776
    %v1253 = vpack.c.b16 %v781, %v779
    %v1254 = vpack.c.b16 %v782, %v780
    %v1255 = vpack.c.b16 %v785, %v783
    %v1256 = vpack.c.b16 %v786, %v784
    %v1257 = vpack.c.b16 %v789, %v787
    %v1258 = vpack.c.b16 %v790, %v788
    %v1259 = vpack.c.b16 %v793, %v791
    %v1260 = vpack.c.b16 %v794, %v792
    %v1261 = vpack.c.b16 %v797, %v795
    %v1262 = vpack.c.b16 %v798, %v796
    %v1263 = vpack.c.b16 %v801, %v799
    %v1264 = vpack.c.b16 %v802, %v800
    %v1265 = vpack.c.b16 %v805, %v803
    %v1266 = vpack.c.b16 %v806, %v804
    %v1267 = vpack.c.b16 %v809, %v807
    %v1268 = vpack.c.b16 %v810, %v808
    %v1269 = vpack.c.b16 %v813, %v811
    %v1270 = vpack.c.b16 %v814, %v812
    %v1271 = vpack.c.b16 %v817, %v815
    %v1272 = vpack.c.b16 %v818, %v816
    %v1273 = vpack.c.b16 %v821, %v819
    %v1274 = vpack.c.b16 %v822, %v820
    %v1275 = vpack.c.b16 %v825, %v823
    %v1276 = vpack.c.b16 %v826, %v824
    %v1277 = vpack.c.b16 %v829, %v827
    %v1278 = vpack.c.b16 %v830, %v828
    %v1279 = vpack.c.b16 %v833, %v831
    %v1280 = vpack.c.b16 %v834, %v832
    %v1281 = vpack.c.b16 %v837, %v835
    %v1282 = vpack.c.b16 %v838, %v836
    %v1283 = vpack.c.b16 %v841, %v839
    %v1284 = vpack.c.b16 %v842, %v840
    %v1285 = vpack.c.b16 %v845, %v843
    %v1286 = vpack.c.b16 %v846, %v844
    %v1287 = vpack.c.b16 %v849, %v847
    %v1288 = vpack.c.b16 %v850, %v848
    %v1289 = vpack.c.b16 %v853, %v851
    %v1290 = vpack.c.b16 %v854, %v852
    %v1291 = vpack.c.b16 %v857, %v855
    %v1292 = vpack.c.b16 %v858, %v856
    %v1293 = vpack.c.b16 %v861, %v859
    %v1294 = vpack.c.b16 %v862, %v860
    %v1295 = vpack.c.b16 %v865, %v863
    %v1296 = vpack.c.b16 %v866, %v864
    %v1297 = vpack.c.b16 %v869, %v867
    %v1298 = vpack.c.b16 %v870, %v868
    %v1299 = vpack.c.b16 %v873, %v871
    %v1300 = vpack.c.b16 %v874, %v872
    %v1301 = vpack.c.b16 %v877, %v875
    %v1302 = vpack.c.b16 %v878, %v876
    %v1303 = vpack.c.b16 %v881, %v879
    %v1304 = vpack.c.b16 %v882, %v880
    %v1305 = vpack.c.b16 %v885, %v883
    %v1306 = vpack.c.b16 %v886, %v884
    %v1307 = vpack.c.b16 %v889, %v887
    %v1308 = vpack.c.b16 %v890, %v888
    %v1309 = vpack.c.b16 %v893, %v891
    %v1310 = vpack.c.b16 %v894, %v892
    %v1311 = vpack.c.b16 %v897, %v895
    %v1312 = vpack.c.b16 %v898, %v896
    %v1313 = vpack.c.b16 %v901, %v899
    %v1314 = vpack.c.b16 %v902, %v900
    %v1315 = vpack.c.b16 %v905, %v903
    %v1316 = vpack.c.b16 %v906, %v904
    %v1317 = vpack.c.b16 %v909, %v907
    %v1318 = vpack.c.b16 %v910, %v908
    %v1319 = vpack.c.b16 %v913, %v911
    %v1320 = vpack.c.b16 %v914, %v912
    %v1321 = vpack.c.b16 %v917, %v915
    %v1322 = vpack.c.b16 %v918, %v916
    %v1323 = vpack.c.b16 %v921, %v919
    %v1324 = vpack.c.b16 %v922, %v920
    %v1325 = vpack.c.b16 %v925, %v923
    %v1326 = vpack.c.b16 %v926, %v924
    %v1327 = vpack.c.b16 %v929, %v927
    %v1328 = vpack.c.b16 %v930, %v928
    %v1329 = vpack.c.b16 %v933, %v931
    %v1330 = vpack.c.b16 %v934, %v932
    %v1331 = vpack.c.b16 %v937, %v935
    %v1332 = vpack.c.b16 %v938, %v936
    %v1333 = vpack.c.b16 %v941, %v939
    %v1334 = vpack.c.b16 %v942, %v940
    %v1335 = vpack.c.b16 %v945, %v943
    %v1336 = vpack.c.b16 %v946, %v944
    %v1337 = vpack.c.b16 %v949, %v947
    %v1338 = vpack.c.b16 %v950, %v948
    %v1339 = vpack.c.b16 %v953, %v951
    %v1340 = vpack.c.b16 %v954, %v952
    %v1341 = vpack.c.b16 %v957, %v955
    %v1342 = vpack.c.b16 %v958, %v956
    %v1343 = vpack.c.b16 %v961, %v959
    %v1344 = vpack.c.b16 %v962, %v960
    %v1345 = vpack.c.b16 %v965, %v963
    %v1346 = vpack.c.b16 %v966, %v964
    %v1347 = vpack.c.b16 %v969, %v967
    %v1348 = vpack.c.b16 %v970, %v968
    %v1349 = vpack.c.b16 %v973, %v971
    %v1350 = vpack.c.b16 %v974, %v972
    %v1351 = vpack.c.b16 %v977, %v975
    %v1352 = vpack.c.b16 %v978, %v976
    %v1353 = vpack.c.b16 %v981, %v979
    %v1354 = vpack.c.b16 %v982, %v980
    %v1355 = vpack.c.b16 %v985, %v983
    %v1356 = vpack.c.b16 %v986, %v984
    %v1357 = vpack.c.b16 %v989, %v987
    %v1358 = vpack.c.b16 %v990, %v988
    %v1359 = vpack.c.b16 %v993, %v991
    %v1360 = vpack.c.b16 %v994, %v992
    %v1361 = vpack.c.b16 %v997, %v995
    %v1362 = vpack.c.b16 %v998, %v996
    %v1363 = vpack.c.b16 %v1001, %v999
    %v1364 = vpack.c.b16 %v1002, %v1000
    %v1365 = vpack.c.b16 %v1005, %v1003
    %v1366 = vpack.c.b16 %v1006, %v1004
    %v1367 = vpack.c.b16 %v1009, %v1007
    %v1368 = vpack.c.b16 %v1010, %v1008
    %v1369 = vpack.c.b16 %v1013, %v1011
    %v1370 = vpack.c.b16 %v1014, %v1012
    %v1371 = vpack.c.b16 %v1017, %v1015
    %v1372 = vpack.c.b16 %v1018, %v1016
    %v1373 = vpack.c.b16 %v1021, %v1019
    %v1374 = vpack.c.b16 %v1022, %v1020
    %v1375 = vpack.c.b16 %v1025, %v1023
    %v1376 = vpack.c.b16 %v1026, %v1024
    %v1377 = vpack.c.b16 %v1029, %v1027
    %v1378 = vpack.c.b16 %v1030, %v1028
    %v1379 = vpack.c.b16 %v1033, %v1031
    %v1380 = vpack.c.b16 %v1034, %v1032
    %v1381 = vpack.c.b16 %v1037, %v1035
    %v1382 = vpack.c.b16 %v1038, %v1036
    %v1383 = vpack.c.b16 %v1041, %v1039
    %v1384 = vpack.c.b16 %v1042, %v1040
    %v1385 = vpack.c.b16 %v1045, %v1043
    %v1386 = vpack.c.b16 %v1046, %v1044
    %v1387 = vpack.c.b16 %v1049, %v1047
    %v1388 = vpack.c.b16 %v1050, %v1048
    %v1389 = vpack.c.b16 %v1053, %v1051
    %v1390 = vpack.c.b16 %v1054, %v1052
    %v1391 = vpack.c.b16 %v1057, %v1055
    %v1392 = vpack.c.b16 %v1058, %v1056
    %v1393 = vpack.c.b16 %v1061, %v1059
    %v1394 = vpack.c.b16 %v1062, %v1060
    %v1395 = vpack.c.b16 %v1065, %v1063
    %v1396 = vpack.c.b16 %v1066, %v1064
    %v1397 = vpack.c.b16 %v1069, %v1067
    %v1398 = vpack.c.b16 %v1070, %v1068
    %v1399 = vpack.c.b16 %v1073, %v1071
    %v1400 = vpack.c.b16 %v1074, %v1072
    %v1401 = vpack.c.b16 %v1077, %v1075
    %v1402 = vpack.c.b16 %v1078, %v1076
    %v1403 = vpack.c.b16 %v1081, %v1079
    %v1404 = vpack.c.b16 %v1082, %v1080
    %v1405 = vpack.c.b16 %v1085, %v1083
    %v1406 = vpack.c.b16 %v1086, %v1084
    %v1407 = vpack.c.b16 %v1089, %v1087
    %v1408 = vpack.c.b16 %v1090, %v1088
    %v1409 = vpack.c.b16 %v1093, %v1091
    %v1410 = vpack.c.b16 %v1094, %v1092
    %v1411 = vpack.c.b16 %v1097, %v1095
    %v1412 = vpack.c.b16 %v1098, %v1096
    %v1413 = vpack.c.b16 %v1101, %v1099
    %v1414 = vpack.c.b16 %v1102, %v1100
    %v1415 = vpack.c.b16 %v1105, %v1103
    %v1416 = vpack.c.b16 %v1106, %v1104
    %v1417 = vpack.c.b16 %v1109, %v1107
    %v1418 = vpack.c.b16 %v1110, %v1108
    %v1419 = vpack.c.b16 %v1113, %v1111
    %v1420 = vpack.c.b16 %v1114, %v1112
    %v1421 = vpack.c.b16 %v1117, %v1115
    %v1422 = vpack.c.b16 %v1118, %v1116
    %v1423 = vpack.c.b16 %v1121, %v1119
    %v1424 = vpack.c.b16 %v1122, %v1120
    %v1425 = vpack.c.b16 %v1125, %v1123
    %v1426 = vpack.c.b16 %v1126, %v1124
    %v1427 = vpack.c.b16 %v1129, %v1127
    %v1428 = vpack.c.b16 %v1130, %v1128
    %v1429 = vpack.c.b16 %v1133, %v1131
    %v1430 = vpack.c.b16 %v1134, %v1132
    %v1431 = vpack.c.b16 %v1137, %v1135
    %v1432 = vpack.c.b16 %v1138, %v1136
    %v1433 = vpack.c.b16 %v1141, %v1139
    %v1434 = vpack.c.b16 %v1142, %v1140
    %v1435 = vpack.c.b16 %v1145, %v1143
    %v1436 = vpack.c.b16 %v1146, %v1144
    %v1437 = vpack.c.b16 %v1149, %v1147
    %v1438 = vpack.c.b16 %v1150, %v1148
    %v1439 = vpack.c.b16 %v1153, %v1151
    %v1440 = vpack.c.b16 %v1154, %v1152
    %v1441 = vpack.c.b16 %v1157, %v1155
    %v1442 = vpack.c.b16 %v1158, %v1156
    %v1443 = vpack.c.b16 %v1161, %v1159
    %v1444 = vpack.c.b16 %v1162, %v1160
    %v1445 = vpack.c.b16 %v1165, %v1163
    %v1446 = vpack.c.b16 %v1166, %v1164
    %v1447 = vpack.c.b16 %v1169, %v1167
    %v1448 = vpack.c.b16 %v1170, %v1168
    %v1449 = vpack.c.b16 %v1173, %v1171
    %v1450 = vpack.c.b16 %v1174, %v1172
    %v1451 = vpack.c.b16 %v1177, %v1175
    %v1452 = vpack.c.b16 %v1178, %v1176
    %v1453 = vpack.c.b16 %v1181, %v1179
    %v1454 = vpack.c.b16 %v1182, %v1180
    %v1455 = vpack.c.b16 %v1185, %v1183
    %v1456 = vpack.c.b16 %v1186, %v1184
    %v1457 = vpack.c.b16 %v1189, %v1187
    %v1458 = vpack.c.b16 %v1190, %v1188
    %v1459 = vpack.c.b16 %v1193, %v1191
    %v1460 = vpack.c.b16 %v1194, %v1192
    %v1461 = vpack.c.b16 %v1197, %v1195
    %v1462 = vpack.c.b16 %v1198, %v1196
    %v1463 = vpack.c.b16 %v1201, %v1199
    %v1464 = vpack.c.b16 %v1202, %v1200
    %v1465 = vpack.c.b16 %v1205, %v1203
    %v1466 = vpack.c.b16 %v1206, %v1204
    %v1467 = vpack.c.b16 %v1209, %v1207
    %v1468 = vpack.c.b16 %v1210, %v1208
    %v1469 = vpack.c.b16 %v1213, %v1211
    %v1470 = vpack.c.b16 %v1214, %v1212
    %1727 = vmatprep.subr.bf16.mxu0 %v1230
    %1728 = vmatpush1.bf16.msra.mxu0 %v1229
    %1729 = vmatprep.subr.bf16.mxu0 %v1228
    %1730 = vmatpush1.bf16.msra.mxu0 %v1227
    %1731 = vmatprep.subr.bf16.mxu0 %v1226
    %1732 = vmatpush1.bf16.msra.mxu0 %v1225
    %1733 = vmatprep.subr.bf16.mxu0 %v1224
    %1734 = vmatpush1.bf16.msra.mxu0 %v1223
    %1735 = vmatprep.subr.bf16.mxu0 %v1222
    %1736 = vmatpush1.bf16.msra.mxu0 %v1221
    %1737 = vmatprep.subr.bf16.mxu0 %v1220
    %1738 = vmatpush1.bf16.msra.mxu0 %v1219
    %1739 = vmatprep.subr.bf16.mxu0 %v1218
    %1740 = vmatpush1.bf16.msra.mxu0 %v1217
    %1741 = vmatprep.subr.bf16.mxu0 %v1216
    %1742 = vmatpush1.bf16.msra.mxu0 %v1215
    %1743 = vmatprep.subr.bf16.mxu0 %v1246
    %1744 = vmatpush2.bf16.msra.mxu0 %v1245
    %1745 = vmatprep.subr.bf16.mxu0 %v1244
    %1746 = vmatpush2.bf16.msra.mxu0 %v1243
    %1747 = vmatprep.subr.bf16.mxu0 %v1242
    %1748 = vmatpush2.bf16.msra.mxu0 %v1241
    %1749 = vmatprep.subr.bf16.mxu0 %v1240
    %1750 = vmatpush2.bf16.msra.mxu0 %v1239
    %1751 = vmatprep.subr.bf16.mxu0 %v1238
    %1752 = vmatpush2.bf16.msra.mxu0 %v1237
    %1753 = vmatprep.subr.bf16.mxu0 %v1236
    %1754 = vmatpush2.bf16.msra.mxu0 %v1235
    %1755 = vmatprep.subr.bf16.mxu0 %v1234
    %1756 = vmatpush2.bf16.msra.mxu0 %v1233
    %1757 = vmatprep.subr.bf16.mxu0 %v1232
    %1758 = vmatpush2.bf16.msra.mxu0 %v1231
    %1759 = vmatprep.mubr.bf16.mxu0 %v384
    %1760 = vmatmul.mubr.bf16.gmra.mxu0 %v383
    %v1761 = vpop.f32.mrf.mxu0
    %v1762 = vadd.f32 0.0, %v1761
    %v1763 = vpop.f32.mrf.mxu0
    %v1764 = vadd.f32 0.0, %v1763
    %v1765 = vpop.f32.mrf.mxu0
    %v1766 = vadd.f32 0.0, %v1765
    %v1767 = vpop.f32.mrf.mxu0
    %v1768 = vadd.f32 0.0, %v1767
    %1769 = vmatprep.mubr.bf16.mxu0 %v400
    %1770 = vmatmul.mubr.bf16.gmra.mxu0 %v399
    %v1771 = vpop.f32.mrf.mxu0
    %v1772 = vadd.f32 0.0, %v1771
    %v1773 = vpop.f32.mrf.mxu0
    %v1774 = vadd.f32 0.0, %v1773
    %v1775 = vpop.f32.mrf.mxu0
    %v1776 = vpop.f32.mrf.mxu0
    %1777 = vdwg.mxu0
    %1778 = vmatprep.subr.bf16.mxu0 %v1262
    %1779 = vmatpush1.bf16.msra.mxu0 %v1261
    %1780 = vmatprep.subr.bf16.mxu0 %v1260
    %1781 = vmatpush1.bf16.msra.mxu0 %v1259
    %1782 = vmatprep.subr.bf16.mxu0 %v1258
    %1783 = vmatpush1.bf16.msra.mxu0 %v1257
    %1784 = vmatprep.subr.bf16.mxu0 %v1256
    %1785 = vmatpush1.bf16.msra.mxu0 %v1255
    %1786 = vmatprep.subr.bf16.mxu0 %v1254
    %1787 = vmatpush1.bf16.msra.mxu0 %v1253
    %1788 = vmatprep.subr.bf16.mxu0 %v1252
    %1789 = vmatpush1.bf16.msra.mxu0 %v1251
    %1790 = vmatprep.subr.bf16.mxu0 %v1250
    %1791 = vmatpush1.bf16.msra.mxu0 %v1249
    %1792 = vmatprep.subr.bf16.mxu0 %v1248
    %1793 = vmatpush1.bf16.msra.mxu0 %v1247
    %1794 = vmatprep.subr.bf16.mxu0 %v1278
    %1795 = vmatpush2.bf16.msra.mxu0 %v1277
    %1796 = vmatprep.subr.bf16.mxu0 %v1276
    %1797 = vmatpush2.bf16.msra.mxu0 %v1275
    %1798 = vmatprep.subr.bf16.mxu0 %v1274
    %1799 = vmatpush2.bf16.msra.mxu0 %v1273
    %1800 = vmatprep.subr.bf16.mxu0 %v1272
    %1801 = vmatpush2.bf16.msra.mxu0 %v1271
    %1802 = vmatprep.subr.bf16.mxu0 %v1270
    %1803 = vmatpush2.bf16.msra.mxu0 %v1269
    %1804 = vmatprep.subr.bf16.mxu0 %v1268
    %1805 = vmatpush2.bf16.msra.mxu0 %v1267
    %1806 = vmatprep.subr.bf16.mxu0 %v1266
    %1807 = vmatpush2.bf16.msra.mxu0 %v1265
    %1808 = vmatprep.subr.bf16.mxu0 %v1264
    %1809 = vmatpush2.bf16.msra.mxu0 %v1263
    %1810 = vmatprep.mubr.bf16.mxu0 %v386
    %1811 = vmatmul.mubr.bf16.gmra.mxu0 %v385
    %v1812 = vpop.f32.mrf.mxu0
    %v1813 = vadd.f32 %v1762, %v1812
    %v1814 = vpop.f32.mrf.mxu0
    %v1815 = vadd.f32 %v1764, %v1814
    %v1816 = vpop.f32.mrf.mxu0
    %v1817 = vadd.f32 %v1766, %v1816
    %v1818 = vpop.f32.mrf.mxu0
    %v1819 = vadd.f32 %v1768, %v1818
    %1820 = vmatprep.mubr.bf16.mxu0 %v402
    %1821 = vmatmul.mubr.bf16.gmra.mxu0 %v401
    %v1822 = vpop.f32.mrf.mxu0
    %v1823 = vadd.f32 %v1772, %v1822
    %v1824 = vpop.f32.mrf.mxu0
    %v1825 = vadd.f32 %v1774, %v1824
    %v1826 = vpop.f32.mrf.mxu0
    %v1827 = vpop.f32.mrf.mxu0
    %1828 = vdwg.mxu0
    %1829 = vmatprep.subr.bf16.mxu0 %v1294
    %1830 = vmatpush1.bf16.msra.mxu0 %v1293
    %1831 = vmatprep.subr.bf16.mxu0 %v1292
    %1832 = vmatpush1.bf16.msra.mxu0 %v1291
    %1833 = vmatprep.subr.bf16.mxu0 %v1290
    %1834 = vmatpush1.bf16.msra.mxu0 %v1289
    %1835 = vmatprep.subr.bf16.mxu0 %v1288
    %1836 = vmatpush1.bf16.msra.mxu0 %v1287
    %1837 = vmatprep.subr.bf16.mxu0 %v1286
    %1838 = vmatpush1.bf16.msra.mxu0 %v1285
    %1839 = vmatprep.subr.bf16.mxu0 %v1284
    %1840 = vmatpush1.bf16.msra.mxu0 %v1283
    %1841 = vmatprep.subr.bf16.mxu0 %v1282
    %1842 = vmatpush1.bf16.msra.mxu0 %v1281
    %1843 = vmatprep.subr.bf16.mxu0 %v1280
    %1844 = vmatpush1.bf16.msra.mxu0 %v1279
    %1845 = vmatprep.subr.bf16.mxu0 %v1310
    %1846 = vmatpush2.bf16.msra.mxu0 %v1309
    %1847 = vmatprep.subr.bf16.mxu0 %v1308
    %1848 = vmatpush2.bf16.msra.mxu0 %v1307
    %1849 = vmatprep.subr.bf16.mxu0 %v1306
    %1850 = vmatpush2.bf16.msra.mxu0 %v1305
    %1851 = vmatprep.subr.bf16.mxu0 %v1304
    %1852 = vmatpush2.bf16.msra.mxu0 %v1303
    %1853 = vmatprep.subr.bf16.mxu0 %v1302
    %1854 = vmatpush2.bf16.msra.mxu0 %v1301
    %1855 = vmatprep.subr.bf16.mxu0 %v1300
    %1856 = vmatpush2.bf16.msra.mxu0 %v1299
    %1857 = vmatprep.subr.bf16.mxu0 %v1298
    %1858 = vmatpush2.bf16.msra.mxu0 %v1297
    %1859 = vmatprep.subr.bf16.mxu0 %v1296
    %1860 = vmatpush2.bf16.msra.mxu0 %v1295
    %1861 = vmatprep.mubr.bf16.mxu0 %v388
    %1862 = vmatmul.mubr.bf16.gmra.mxu0 %v387
    %v1863 = vpop.f32.mrf.mxu0
    %v1864 = vadd.f32 %v1813, %v1863
    %v1865 = vpop.f32.mrf.mxu0
    %v1866 = vadd.f32 %v1815, %v1865
    %v1867 = vpop.f32.mrf.mxu0
    %v1868 = vadd.f32 %v1817, %v1867
    %v1869 = vpop.f32.mrf.mxu0
    %v1870 = vadd.f32 %v1819, %v1869
    %1871 = vmatprep.mubr.bf16.mxu0 %v404
    %1872 = vmatmul.mubr.bf16.gmra.mxu0 %v403
    %v1873 = vpop.f32.mrf.mxu0
    %v1874 = vadd.f32 %v1823, %v1873
    %v1875 = vpop.f32.mrf.mxu0
    %v1876 = vadd.f32 %v1825, %v1875
    %v1877 = vpop.f32.mrf.mxu0
    %v1878 = vpop.f32.mrf.mxu0
    %1879 = vdwg.mxu0
    %1880 = vmatprep.subr.bf16.mxu0 %v1326
    %1881 = vmatpush1.bf16.msra.mxu0 %v1325
    %1882 = vmatprep.subr.bf16.mxu0 %v1324
    %1883 = vmatpush1.bf16.msra.mxu0 %v1323
    %1884 = vmatprep.subr.bf16.mxu0 %v1322
    %1885 = vmatpush1.bf16.msra.mxu0 %v1321
    %1886 = vmatprep.subr.bf16.mxu0 %v1320
    %1887 = vmatpush1.bf16.msra.mxu0 %v1319
    %1888 = vmatprep.subr.bf16.mxu0 %v1318
    %1889 = vmatpush1.bf16.msra.mxu0 %v1317
    %1890 = vmatprep.subr.bf16.mxu0 %v1316
    %1891 = vmatpush1.bf16.msra.mxu0 %v1315
    %1892 = vmatprep.subr.bf16.mxu0 %v1314
    %1893 = vmatpush1.bf16.msra.mxu0 %v1313
    %1894 = vmatprep.subr.bf16.mxu0 %v1312
    %1895 = vmatpush1.bf16.msra.mxu0 %v1311
    %1896 = vmatprep.subr.bf16.mxu0 %v1342
    %1897 = vmatpush2.bf16.msra.mxu0 %v1341
    %1898 = vmatprep.subr.bf16.mxu0 %v1340
    %1899 = vmatpush2.bf16.msra.mxu0 %v1339
    %1900 = vmatprep.subr.bf16.mxu0 %v1338
    %1901 = vmatpush2.bf16.msra.mxu0 %v1337
    %1902 = vmatprep.subr.bf16.mxu0 %v1336
    %1903 = vmatpush2.bf16.msra.mxu0 %v1335
    %1904 = vmatprep.subr.bf16.mxu0 %v1334
    %1905 = vmatpush2.bf16.msra.mxu0 %v1333
    %1906 = vmatprep.subr.bf16.mxu0 %v1332
    %1907 = vmatpush2.bf16.msra.mxu0 %v1331
    %1908 = vmatprep.subr.bf16.mxu0 %v1330
    %1909 = vmatpush2.bf16.msra.mxu0 %v1329
    %1910 = vmatprep.subr.bf16.mxu0 %v1328
    %1911 = vmatpush2.bf16.msra.mxu0 %v1327
    %1912 = vmatprep.mubr.bf16.mxu0 %v390
    %1913 = vmatmul.mubr.bf16.gmra.mxu0 %v389
    %v1914 = vpop.f32.mrf.mxu0
    %v1915 = vadd.f32 %v1864, %v1914
    %v1916 = vpop.f32.mrf.mxu0
    %v1917 = vadd.f32 %v1866, %v1916
    %v1918 = vpop.f32.mrf.mxu0
    %v1919 = vadd.f32 %v1868, %v1918
    %v1920 = vpop.f32.mrf.mxu0
    %v1921 = vadd.f32 %v1870, %v1920
    %1922 = vmatprep.mubr.bf16.mxu0 %v406
    %1923 = vmatmul.mubr.bf16.gmra.mxu0 %v405
    %v1924 = vpop.f32.mrf.mxu0
    %v1925 = vadd.f32 %v1874, %v1924
    %v1926 = vpop.f32.mrf.mxu0
    %v1927 = vadd.f32 %v1876, %v1926
    %v1928 = vpop.f32.mrf.mxu0
    %v1929 = vpop.f32.mrf.mxu0
    %1930 = vdwg.mxu0
    %1931 = vmatprep.subr.bf16.mxu0 %v1358
    %1932 = vmatpush1.bf16.msra.mxu0 %v1357
    %1933 = vmatprep.subr.bf16.mxu0 %v1356
    %1934 = vmatpush1.bf16.msra.mxu0 %v1355
    %1935 = vmatprep.subr.bf16.mxu0 %v1354
    %1936 = vmatpush1.bf16.msra.mxu0 %v1353
    %1937 = vmatprep.subr.bf16.mxu0 %v1352
    %1938 = vmatpush1.bf16.msra.mxu0 %v1351
    %1939 = vmatprep.subr.bf16.mxu0 %v1350
    %1940 = vmatpush1.bf16.msra.mxu0 %v1349
    %1941 = vmatprep.subr.bf16.mxu0 %v1348
    %1942 = vmatpush1.bf16.msra.mxu0 %v1347
    %1943 = vmatprep.subr.bf16.mxu0 %v1346
    %1944 = vmatpush1.bf16.msra.mxu0 %v1345
    %1945 = vmatprep.subr.bf16.mxu0 %v1344
    %1946 = vmatpush1.bf16.msra.mxu0 %v1343
    %1947 = vmatprep.subr.bf16.mxu0 %v1374
    %1948 = vmatpush2.bf16.msra.mxu0 %v1373
    %1949 = vmatprep.subr.bf16.mxu0 %v1372
    %1950 = vmatpush2.bf16.msra.mxu0 %v1371
    %1951 = vmatprep.subr.bf16.mxu0 %v1370
    %1952 = vmatpush2.bf16.msra.mxu0 %v1369
    %1953 = vmatprep.subr.bf16.mxu0 %v1368
    %1954 = vmatpush2.bf16.msra.mxu0 %v1367
    %1955 = vmatprep.subr.bf16.mxu0 %v1366
    %1956 = vmatpush2.bf16.msra.mxu0 %v1365
    %1957 = vmatprep.subr.bf16.mxu0 %v1364
    %1958 = vmatpush2.bf16.msra.mxu0 %v1363
    %1959 = vmatprep.subr.bf16.mxu0 %v1362
    %1960 = vmatpush2.bf16.msra.mxu0 %v1361
    %1961 = vmatprep.subr.bf16.mxu0 %v1360
    %1962 = vmatpush2.bf16.msra.mxu0 %v1359
    %1963 = vmatprep.mubr.bf16.mxu0 %v392
    %1964 = vmatmul.mubr.bf16.gmra.mxu0 %v391
    %v1965 = vpop.f32.mrf.mxu0
    %v1966 = vadd.f32 %v1915, %v1965
    %v1967 = vpop.f32.mrf.mxu0
    %v1968 = vadd.f32 %v1917, %v1967
    %v1969 = vpop.f32.mrf.mxu0
    %v1970 = vadd.f32 %v1919, %v1969
    %v1971 = vpop.f32.mrf.mxu0
    %v1972 = vadd.f32 %v1921, %v1971
    %1973 = vmatprep.mubr.bf16.mxu0 %v408
    %1974 = vmatmul.mubr.bf16.gmra.mxu0 %v407
    %v1975 = vpop.f32.mrf.mxu0
    %v1976 = vadd.f32 %v1925, %v1975
    %v1977 = vpop.f32.mrf.mxu0
    %v1978 = vadd.f32 %v1927, %v1977
    %v1979 = vpop.f32.mrf.mxu0
    %v1980 = vpop.f32.mrf.mxu0
    %1981 = vdwg.mxu0
    %1982 = vmatprep.subr.bf16.mxu0 %v1390
    %1983 = vmatpush1.bf16.msra.mxu0 %v1389
    %1984 = vmatprep.subr.bf16.mxu0 %v1388
    %1985 = vmatpush1.bf16.msra.mxu0 %v1387
    %1986 = vmatprep.subr.bf16.mxu0 %v1386
    %1987 = vmatpush1.bf16.msra.mxu0 %v1385
    %1988 = vmatprep.subr.bf16.mxu0 %v1384
    %1989 = vmatpush1.bf16.msra.mxu0 %v1383
    %1990 = vmatprep.subr.bf16.mxu0 %v1382
    %1991 = vmatpush1.bf16.msra.mxu0 %v1381
    %1992 = vmatprep.subr.bf16.mxu0 %v1380
    %1993 = vmatpush1.bf16.msra.mxu0 %v1379
    %1994 = vmatprep.subr.bf16.mxu0 %v1378
    %1995 = vmatpush1.bf16.msra.mxu0 %v1377
    %1996 = vmatprep.subr.bf16.mxu0 %v1376
    %1997 = vmatpush1.bf16.msra.mxu0 %v1375
    %1998 = vmatprep.subr.bf16.mxu0 %v1406
    %1999 = vmatpush2.bf16.msra.mxu0 %v1405
    %2000 = vmatprep.subr.bf16.mxu0 %v1404
    %2001 = vmatpush2.bf16.msra.mxu0 %v1403
    %2002 = vmatprep.subr.bf16.mxu0 %v1402
    %2003 = vmatpush2.bf16.msra.mxu0 %v1401
    %2004 = vmatprep.subr.bf16.mxu0 %v1400
    %2005 = vmatpush2.bf16.msra.mxu0 %v1399
    %2006 = vmatprep.subr.bf16.mxu0 %v1398
    %2007 = vmatpush2.bf16.msra.mxu0 %v1397
    %2008 = vmatprep.subr.bf16.mxu0 %v1396
    %2009 = vmatpush2.bf16.msra.mxu0 %v1395
    %2010 = vmatprep.subr.bf16.mxu0 %v1394
    %2011 = vmatpush2.bf16.msra.mxu0 %v1393
    %2012 = vmatprep.subr.bf16.mxu0 %v1392
    %2013 = vmatpush2.bf16.msra.mxu0 %v1391
    %2014 = vmatprep.mubr.bf16.mxu0 %v394
    %2015 = vmatmul.mubr.bf16.gmra.mxu0 %v393
    %v2016 = vpop.f32.mrf.mxu0
    %v2017 = vadd.f32 %v1966, %v2016
    %v2018 = vpop.f32.mrf.mxu0
    %v2019 = vadd.f32 %v1968, %v2018
    %v2020 = vpop.f32.mrf.mxu0
    %v2021 = vadd.f32 %v1970, %v2020
    %v2022 = vpop.f32.mrf.mxu0
    %v2023 = vadd.f32 %v1972, %v2022
    %2024 = vmatprep.mubr.bf16.mxu0 %v410
    %2025 = vmatmul.mubr.bf16.gmra.mxu0 %v409
    %v2026 = vpop.f32.mrf.mxu0
    %v2027 = vadd.f32 %v1976, %v2026
    %v2028 = vpop.f32.mrf.mxu0
    %v2029 = vadd.f32 %v1978, %v2028
    %v2030 = vpop.f32.mrf.mxu0
    %v2031 = vpop.f32.mrf.mxu0
    %2032 = vdwg.mxu0
    %2033 = vmatprep.subr.bf16.mxu0 %v1422
    %2034 = vmatpush1.bf16.msra.mxu0 %v1421
    %2035 = vmatprep.subr.bf16.mxu0 %v1420
    %2036 = vmatpush1.bf16.msra.mxu0 %v1419
    %2037 = vmatprep.subr.bf16.mxu0 %v1418
    %2038 = vmatpush1.bf16.msra.mxu0 %v1417
    %2039 = vmatprep.subr.bf16.mxu0 %v1416
    %2040 = vmatpush1.bf16.msra.mxu0 %v1415
    %2041 = vmatprep.subr.bf16.mxu0 %v1414
    %2042 = vmatpush1.bf16.msra.mxu0 %v1413
    %2043 = vmatprep.subr.bf16.mxu0 %v1412
    %2044 = vmatpush1.bf16.msra.mxu0 %v1411
    %2045 = vmatprep.subr.bf16.mxu0 %v1410
    %2046 = vmatpush1.bf16.msra.mxu0 %v1409
    %2047 = vmatprep.subr.bf16.mxu0 %v1408
    %2048 = vmatpush1.bf16.msra.mxu0 %v1407
    %2049 = vmatprep.subr.bf16.mxu0 %v1438
    %2050 = vmatpush2.bf16.msra.mxu0 %v1437
    %2051 = vmatprep.subr.bf16.mxu0 %v1436
    %2052 = vmatpush2.bf16.msra.mxu0 %v1435
    %2053 = vmatprep.subr.bf16.mxu0 %v1434
    %2054 = vmatpush2.bf16.msra.mxu0 %v1433
    %2055 = vmatprep.subr.bf16.mxu0 %v1432
    %2056 = vmatpush2.bf16.msra.mxu0 %v1431
    %2057 = vmatprep.subr.bf16.mxu0 %v1430
    %2058 = vmatpush2.bf16.msra.mxu0 %v1429
    %2059 = vmatprep.subr.bf16.mxu0 %v1428
    %2060 = vmatpush2.bf16.msra.mxu0 %v1427
    %2061 = vmatprep.subr.bf16.mxu0 %v1426
    %2062 = vmatpush2.bf16.msra.mxu0 %v1425
    %2063 = vmatprep.subr.bf16.mxu0 %v1424
    %2064 = vmatpush2.bf16.msra.mxu0 %v1423
    %2065 = vmatprep.mubr.bf16.mxu0 %v396
    %2066 = vmatmul.mubr.bf16.gmra.mxu0 %v395
    %v2067 = vpop.f32.mrf.mxu0
    %v2068 = vadd.f32 %v2017, %v2067
    %v2069 = vpop.f32.mrf.mxu0
    %v2070 = vadd.f32 %v2019, %v2069
    %v2071 = vpop.f32.mrf.mxu0
    %v2072 = vadd.f32 %v2021, %v2071
    %v2073 = vpop.f32.mrf.mxu0
    %v2074 = vadd.f32 %v2023, %v2073
    %2075 = vmatprep.mubr.bf16.mxu0 %v412
    %2076 = vmatmul.mubr.bf16.gmra.mxu0 %v411
    %v2077 = vpop.f32.mrf.mxu0
    %v2078 = vadd.f32 %v2027, %v2077
    %v2079 = vpop.f32.mrf.mxu0
    %v2080 = vadd.f32 %v2029, %v2079
    %v2081 = vpop.f32.mrf.mxu0
    %v2082 = vpop.f32.mrf.mxu0
    %2083 = vdwg.mxu0
    %2084 = vmatprep.subr.bf16.mxu0 %v1454
    %2085 = vmatpush1.bf16.msra.mxu0 %v1453
    %2086 = vmatprep.subr.bf16.mxu0 %v1452
    %2087 = vmatpush1.bf16.msra.mxu0 %v1451
    %2088 = vmatprep.subr.bf16.mxu0 %v1450
    %2089 = vmatpush1.bf16.msra.mxu0 %v1449
    %2090 = vmatprep.subr.bf16.mxu0 %v1448
    %2091 = vmatpush1.bf16.msra.mxu0 %v1447
    %2092 = vmatprep.subr.bf16.mxu0 %v1446
    %2093 = vmatpush1.bf16.msra.mxu0 %v1445
    %2094 = vmatprep.subr.bf16.mxu0 %v1444
    %2095 = vmatpush1.bf16.msra.mxu0 %v1443
    %2096 = vmatprep.subr.bf16.mxu0 %v1442
    %2097 = vmatpush1.bf16.msra.mxu0 %v1441
    %2098 = vmatprep.subr.bf16.mxu0 %v1440
    %2099 = vmatpush1.bf16.msra.mxu0 %v1439
    %2100 = vmatprep.subr.bf16.mxu0 %v1470
    %2101 = vmatpush2.bf16.msra.mxu0 %v1469
    %2102 = vmatprep.subr.bf16.mxu0 %v1468
    %2103 = vmatpush2.bf16.msra.mxu0 %v1467
    %2104 = vmatprep.subr.bf16.mxu0 %v1466
    %2105 = vmatpush2.bf16.msra.mxu0 %v1465
    %2106 = vmatprep.subr.bf16.mxu0 %v1464
    %2107 = vmatpush2.bf16.msra.mxu0 %v1463
    %2108 = vmatprep.subr.bf16.mxu0 %v1462
    %2109 = vmatpush2.bf16.msra.mxu0 %v1461
    %2110 = vmatprep.subr.bf16.mxu0 %v1460
    %2111 = vmatpush2.bf16.msra.mxu0 %v1459
    %2112 = vmatprep.subr.bf16.mxu0 %v1458
    %2113 = vmatpush2.bf16.msra.mxu0 %v1457
    %2114 = vmatprep.subr.bf16.mxu0 %v1456
    %2115 = vmatpush2.bf16.msra.mxu0 %v1455
    %2116 = vmatprep.mubr.bf16.mxu0 %v398
    %2117 = vmatmul.mubr.bf16.gmra.mxu0 %v397
    %v2118 = vpop.f32.mrf.mxu0
    %v2119 = vadd.f32 %v2068, %v2118
    %v2120 = vpop.f32.mrf.mxu0
    %v2121 = vadd.f32 %v2070, %v2120
    %v2122 = vpop.f32.mrf.mxu0
    %v2123 = vadd.f32 %v2072, %v2122
    %v2124 = vpop.f32.mrf.mxu0
    %v2125 = vadd.f32 %v2074, %v2124
    %2126 = vmatprep.mubr.bf16.mxu0 %v414
    %2127 = vmatmul.mubr.bf16.gmra.mxu0 %v413
    %v2128 = vpop.f32.mrf.mxu0
    %v2129 = vadd.f32 %v2078, %v2128
    %v2130 = vpop.f32.mrf.mxu0
    %v2131 = vadd.f32 %v2080, %v2130
    %v2132 = vpop.f32.mrf.mxu0
    %v2133 = vpop.f32.mrf.mxu0
    %2134 = vdwg.mxu0
    %v2135 = vadd.f32 %v2119, %v2123
    %vm2136 = vcmask 1041408
    %v2137 = vsel %vm2136, %v2129, 0.0
    %v2138 = vadd.f32 %v2135, %v2137
    %v2139 = vrot.slane %v2138, 4
    %v2140 = vadd.f32 %v2138, %v2139
    %v2141 = vrot.slane %v2140, 2
    %v2142 = vadd.f32 %v2140, %v2141
    %v2143 = vrot.slane %v2142, 1
    %v2144 = vadd.f32 %v2142, %v2143
    %v2145 = vadd.f32 %v2121, %v2125
    %v2146 = vsel %vm2136, %v2131, 0.0
    %v2147 = vadd.f32 %v2145, %v2146
    %v2148 = vrot.slane %v2147, 4
    %v2149 = vadd.f32 %v2147, %v2148
    %v2150 = vrot.slane %v2149, 2
    %v2151 = vadd.f32 %v2149, %v2150
    %v2152 = vrot.slane %v2151, 1
    %v2153 = vadd.f32 %v2151, %v2152
    %v2154 = vmul.f32 %v2119, %v2119
    %v2155 = vmul.f32 %v2121, %v2121
    %v2156 = vmul.f32 %v2123, %v2123
    %v2157 = vmul.f32 %v2125, %v2125
    %v2158 = vmul.f32 %v2129, %v2129
    %v2159 = vmul.f32 %v2131, %v2131
    %v2160 = vadd.f32 %v2154, %v2156
    %v2161 = vsel %vm2136, %v2158, 0.0
    %v2162 = vadd.f32 %v2160, %v2161
    %v2163 = vrot.slane %v2162, 4
    %v2164 = vadd.f32 %v2162, %v2163
    %v2165 = vrot.slane %v2164, 2
    %v2166 = vadd.f32 %v2164, %v2165
    %v2167 = vrot.slane %v2166, 1
    %v2168 = vadd.f32 %v2166, %v2167
    %v2169 = vadd.f32 %v2155, %v2157
    %v2170 = vsel %vm2136, %v2159, 0.0
    %v2171 = vadd.f32 %v2169, %v2170
    %v2172 = vrot.slane %v2171, 4
    %v2173 = vadd.f32 %v2171, %v2172
    %v2174 = vrot.slane %v2173, 2
    %v2175 = vadd.f32 %v2173, %v2174
    %v2176 = vrot.slane %v2175, 1
    %v2177 = vadd.f32 %v2175, %v2176
    %v2178 = vmul.f32 %v2144, 0.055555556
    %v2179 = vmul.f32 %v2153, 0.055555556
    %v2180 = vmul.f32 %v2168, 0.055555556
    %v2181 = vmul.f32 %v2177, 0.055555556
    %v2182 = vmul.f32 %v2178, %v2178
    %v2183 = vmul.f32 %v2179, %v2179
    %v2184 = vsub.f32 %v2180, %v2182
    %v2185 = vsub.f32 %v2181, %v2183
    %v2186 = vadd.f32 %v2184, 1e-05
    %v2187 = vadd.f32 %v2185, 1e-05
    %v2188 = vrsqrt.pop %v2186
    %v2189 = vrsqrt.pop %v2187
    %v2190 = vld [vmem:[%s2] sm:$0x3]
    %v2193 = vcombine.low %v2188, %v2189
    %v2195 = vunpack.c.l.s4 1966171168
    %v2196 = vunpack.c.0.s8 %v2195
    %v2197 = vlaneseq
    %v2198 = vshrl.u32 %v2197, 7
    %v2199 = vsub.s32 %v2196, %v2198
    %v2200 = vrot.slane %v2193, %v2199
    %v2202 = vunpack.c.l.s4 1966171168
    %v2203 = vunpack.c.0.s8 %v2202
    %v2204 = vlaneseq
    %v2205 = vshrl.u32 %v2204, 7
    %v2206 = vsub.s32 %v2203, %v2205
    %v2207 = vrot.slane %v2200, %v2206
    %v2209 = vmul.f32 %v2190, %v2207
    %v2210 = vld [vmem:[%s3] sm:$0x3]
    %v2212 = vlaneseq
    %v2213 = vshrl.u32 %v2212, 7
    %v2214 = vsub.s32 0, %v2213
    %v2215 = vrot.slane %v2209, %v2214
    %v2216 = vlaneseq
    %v2217 = vshrl.u32 %v2216, 7
    %v2218 = vsub.s32 1, %v2217
    %v2219 = vrot.slane %v2209, %v2218
    %v2222 = vmul.f32 %v2178, %v2215
    %v2223 = vmul.f32 %v2179, %v2219
    %v2226 = vcombine.low %v2222, %v2223
    %v2228 = vunpack.c.l.s4 1966171168
    %v2229 = vunpack.c.0.s8 %v2228
    %v2230 = vlaneseq
    %v2231 = vshrl.u32 %v2230, 7
    %v2232 = vsub.s32 %v2229, %v2231
    %v2233 = vrot.slane %v2226, %v2232
    %v2235 = vunpack.c.l.s4 1966171168
    %v2236 = vunpack.c.0.s8 %v2235
    %v2237 = vlaneseq
    %v2238 = vshrl.u32 %v2237, 7
    %v2239 = vsub.s32 %v2236, %v2238
    %v2240 = vrot.slane %v2233, %v2239
    %v2242 = vsub.f32 %v2210, %v2240
    %v2243 = vmul.f32 %v2119, %v2215
    %v2244 = vmul.f32 %v2121, %v2219
    %v2245 = vmul.f32 %v2123, %v2215
    %v2246 = vmul.f32 %v2125, %v2219
    %v2247 = vmul.f32 %v2129, %v2215
    %v2248 = vmul.f32 %v2131, %v2219
    %v2250 = vlaneseq
    %v2251 = vshrl.u32 %v2250, 7
    %v2252 = vsub.s32 0, %v2251
    %v2253 = vrot.slane %v2242, %v2252
    %v2254 = vlaneseq
    %v2255 = vshrl.u32 %v2254, 7
    %v2256 = vsub.s32 1, %v2255
    %v2257 = vrot.slane %v2242, %v2256
    %v2260 = vadd.f32 %v2243, %v2253
    %v2261 = vadd.f32 %v2244, %v2257
    %v2262 = vadd.f32 %v2245, %v2253
    %v2263 = vadd.f32 %v2246, %v2257
    %v2264 = vadd.f32 %v2247, %v2253
    %v2265 = vadd.f32 %v2248, %v2257
    %vm2266 = vcmp.gt.f32.partialorder %v2260, 0.0
    %vm2267 = vcmp.gt.f32.partialorder %v2261, 0.0
    %vm2268 = vcmp.gt.f32.partialorder %v2262, 0.0
    %vm2269 = vcmp.gt.f32.partialorder %v2263, 0.0
    %vm2270 = vcmp.gt.f32.partialorder %v2264, 0.0
    %vm2271 = vcmp.gt.f32.partialorder %v2265, 0.0
    %v2272 = vmul.f32 %v2260, 0.2
    %v2273 = vmul.f32 %v2261, 0.2
    %v2274 = vmul.f32 %v2262, 0.2
    %v2275 = vmul.f32 %v2263, 0.2
    %v2276 = vmul.f32 %v2264, 0.2
    %v2277 = vmul.f32 %v2265, 0.2
    %v2278 = vsel %vm2266, %v2260, %v2272
    %v2279 = vsel %vm2267, %v2261, %v2273
    %v2280 = vsel %vm2268, %v2262, %v2274
    %v2281 = vsel %vm2269, %v2263, %v2275
    %v2282 = vsel %vm2270, %v2264, %v2276
    %v2283 = vsel %vm2271, %v2265, %v2277
    %v2284 = vpack.c.bf16 %v2280, %v2278
    %v2285 = vpack.c.bf16 %v2281, %v2279
    %v2286 = vpack.c.bf16 %v2282, %v2282
    %v2287 = vpack.c.bf16 %v2283, %v2283
    %v2292 = vunpack.c.l.b16 %v2284
    %v2293 = vunpack.c.l.b16 %v2285
    %v2294 = vunpack.c.h.b16 %v2284
    %v2295 = vunpack.c.h.b16 %v2285
    %v2296 = vunpack.c.l.b16 %v2286
    %v2297 = vunpack.c.l.b16 %v2287
    %v2298 = vpack.c.b16 %v2293, %v2292
    %v2299 = vpack.c.b16 %v2295, %v2294
    %v2300 = vpack.c.b16 %v2297, %v2296
    %2304 = vst [vmem:[%s4] sm:$0xff] %v2298
    %2305 = vst [vmem:[%s4 + $0x8] sm:$0xff] %v2299
    %2306 = vst [vmem:[%s4 + $0x10] sm:$0x11] %v2300
    // Predicated region
    $region22: #{discriminator_forward.6} parent=1 // pred_check
      _
    $region23: #{discriminator_forward.6} parent=1 // pred_check_branch
      %2308 = sbr.rel (0) target = $region25
    $region24: #{discriminator_forward.6} parent=1 // pred_region
      _
    $region25: #{discriminator_forward.6} parent=1 // pred_fallthru
      _
    // Predicated region
    $region26: #{discriminator_forward.6} parent=1 // pred_check
      _
    $region27: #{discriminator_forward.6} parent=1 // pred_check_branch
      %2310 = sbr.rel (0) target = $region29
    $region28: #{discriminator_forward.6} parent=1 // pred_region
      _
    $region29: #{discriminator_forward.6} parent=1 // pred_fallthru
      _
    %2311 = vsyncpa [#allocation3], 1

// kernel: discriminator_forward.7
$region0: #{discriminator_forward.7}
  #allocation0 [shape = 'u32[]', space=smem, size = 0x4, offset = 0x4, fixed_abs, tag = 'smem constant byte address 0x4 - core index']
  #allocation1 [shape = 'u32[144,128]{1,0:T(1,128)}', space=vmem, size = 0x12000, scoped, tag = 'internal scratch']
  %s0 = inlined_call_operand.vmem [shape: bf16[2,2304], index: 0, kind: input, shape index: {}]
  %s1 = inlined_call_operand.vmem [shape: bf16[2304,1024], index: 1, kind: input, shape index: {}]
  %s2 = inlined_call_operand.vmem [shape: f32[1,1024], index: 2, kind: input, shape index: {}]
  %s3 = inlined_call_operand.vmem [shape: f32[1,1024], index: 3, kind: input, shape index: {}]
  %s4 = inlined_call_operand.vmem [shape: bf16[1024,128], index: 4, kind: input, shape index: {}]
  %s5 = inlined_call_operand.vmem [shape: f32[1,128], index: 5, kind: input, shape index: {}]
  %s6 = inlined_call_operand.hbm [shape: f32[2,128], index: 6, kind: output, shape index: {}]
  %s7 = sld [smem:[#allocation0]]
  $region34: #{discriminator_forward.7} parent=0
    _
  %s9 = ssub.s32 1, %s7
  %s10 = scalar_select 0, %s9, %s7
  $region1: #{discriminator_forward.7} parent=0
    #allocation2 [shape = 'u8[1024]{0}', space=vmem, size = 0x400, scoped, tag = 'output window, operand 0, single buffered']
    #allocation3 [shape = 's32[1]{0}', space=sflag, size = 0x4, scoped, tag = 'scoped memory for discriminator_forward.7']
    %11 = vsyncpa [#allocation3], 0
    // Predicated region
    $region2: #{discriminator_forward.7} parent=1 // pred_check
      _
    $region3: #{discriminator_forward.7} parent=1 // pred_check_branch
      %13 = sbr.rel (0) target = $region5
    $region4: #{discriminator_forward.7} parent=1 // pred_region
      _
    $region5: #{discriminator_forward.7} parent=1 // pred_fallthru
      _
    // Predicated region
    $region6: #{discriminator_forward.7} parent=1 // pred_check
      _
    $region7: #{discriminator_forward.7} parent=1 // pred_check_branch
      %15 = sbr.rel (0) target = $region9
    $region8: #{discriminator_forward.7} parent=1 // pred_region
      _
    $region9: #{discriminator_forward.7} parent=1 // pred_fallthru
      _
    // Predicated region
    $region10: #{discriminator_forward.7} parent=1 // pred_check
      _
    $region11: #{discriminator_forward.7} parent=1 // pred_check_branch
      %17 = sbr.rel (0) target = $region13
    $region12: #{discriminator_forward.7} parent=1 // pred_region
      _
    $region13: #{discriminator_forward.7} parent=1 // pred_fallthru
      _
    // Predicated region
    $region14: #{discriminator_forward.7} parent=1 // pred_check
      _
    $region15: #{discriminator_forward.7} parent=1 // pred_check_branch
      %19 = sbr.rel (0) target = $region17
    $region16: #{discriminator_forward.7} parent=1 // pred_region
      _
    $region17: #{discriminator_forward.7} parent=1 // pred_fallthru
      _
    // Predicated region
    $region18: #{discriminator_forward.7} parent=1 // pred_check
      _
    $region19: #{discriminator_forward.7} parent=1 // pred_check_branch
      %21 = sbr.rel (0) target = $region21
    $region20: #{discriminator_forward.7} parent=1 // pred_region
      _
    $region21: #{discriminator_forward.7} parent=1 // pred_fallthru
      _
    // Predicated region
    $region22: #{discriminator_forward.7} parent=1 // pred_check
      _
    $region23: #{discriminator_forward.7} parent=1 // pred_check_branch
      %23 = sbr.rel (0) target = $region25
    $region24: #{discriminator_forward.7} parent=1 // pred_region
      _
    $region25: #{discriminator_forward.7} parent=1 // pred_fallthru
      _
    %v25 = vld [vmem:[%s0] sm:$0xff]
    %v26 = vld [vmem:[%s0 + $0x8] sm:$0xff]
    %v27 = vld [vmem:[%s0 + $0x10] sm:$0x3]
    %v28 = vld [vmem:[%s1] sm:$0xff]
    %v29 = vld [vmem:[%s1 + $0x8] sm:$0xff]
    %v30 = vld [vmem:[%s1 + $0x10] sm:$0xff]
    %v31 = vld [vmem:[%s1 + $0x18] sm:$0xff]
    %v32 = vld [vmem:[%s1 + $0x20] sm:$0xff]
    %v33 = vld [vmem:[%s1 + $0x28] sm:$0xff]
    %v34 = vld [vmem:[%s1 + $0x30] sm:$0xff]
    %v35 = vld [vmem:[%s1 + $0x38] sm:$0xff]
    %v36 = vld [vmem:[%s1 + $0x40] sm:$0xff]
    %v37 = vld [vmem:[%s1 + $0x48] sm:$0xff]
    %v38 = vld [vmem:[%s1 + $0x50] sm:$0xff]
    %v39 = vld [vmem:[%s1 + $0x58] sm:$0xff]
    %v40 = vld [vmem:[%s1 + $0x60] sm:$0xff]
    %v41 = vld [vmem:[%s1 + $0x68] sm:$0xff]
    %v42 = vld [vmem:[%s1 + $0x70] sm:$0xff]
    %v43 = vld [vmem:[%s1 + $0x78] sm:$0xff]
    %v44 = vld [vmem:[%s1 + $0x80] sm:$0xff]
    %v45 = vld [vmem:[%s1 + $0x88] sm:$0xff]
    %v46 = vld [vmem:[%s1 + $0x90] sm:$0xff]
    %v47 = vld [vmem:[%s1 + $0x98] sm:$0xff]
    %v48 = vld [vmem:[%s1 + $0xa0] sm:$0xff]
    %v49 = vld [vmem:[%s1 + $0xa8] sm:$0xff]
    %v50 = vld [vmem:[%s1 + $0xb0] sm:$0xff]
    %v51 = vld [vmem:[%s1 + $0xb8] sm:$0xff]
    %v52 = vld [vmem:[%s1 + $0xc0] sm:$0xff]
    %v53 = vld [vmem:[%s1 + $0xc8] sm:$0xff]
    %v54 = vld [vmem:[%s1 + $0xd0] sm:$0xff]
    %v55 = vld [vmem:[%s1 + $0xd8] sm:$0xff]
    %v56 = vld [vmem:[%s1 + $0xe0] sm:$0xff]
    %v57 = vld [vmem:[%s1 + $0xe8] sm:$0xff]
    %v58 = vld [vmem:[%s1 + $0xf0] sm:$0xff]
    %v59 = vld [vmem:[%s1 + $0xf8] sm:$0xff]
    %v60 = vld [vmem:[%s1 + $0x100] sm:$0xff]
    %v61 = vld [vmem:[%s1 + $0x108] sm:$0xff]
    %v62 = vld [vmem:[%s1 + $0x110] sm:$0xff]
    %v63 = vld [vmem:[%s1 + $0x118] sm:$0xff]
    %v64 = vld [vmem:[%s1 + $0x120] sm:$0xff]
    %v65 = vld [vmem:[%s1 + $0x128] sm:$0xff]
    %v66 = vld [vmem:[%s1 + $0x130] sm:$0xff]
    %v67 = vld [vmem:[%s1 + $0x138] sm:$0xff]
    %v68 = vld [vmem:[%s1 + $0x140] sm:$0xff]
    %v69 = vld [vmem:[%s1 + $0x148] sm:$0xff]
    %v70 = vld [vmem:[%s1 + $0x150] sm:$0xff]
    %v71 = vld [vmem:[%s1 + $0x158] sm:$0xff]
    %v72 = vld [vmem:[%s1 + $0x160] sm:$0xff]
    %v73 = vld [vmem:[%s1 + $0x168] sm:$0xff]
    %v74 = vld [vmem:[%s1 + $0x170] sm:$0xff]
    %v75 = vld [vmem:[%s1 + $0x178] sm:$0xff]
    %v76 = vld [vmem:[%s1 + $0x180] sm:$0xff]
    %v77 = vld [vmem:[%s1 + $0x188] sm:$0xff]
    %v78 = vld [vmem:[%s1 + $0x190] sm:$0xff]
    %v79 = vld [vmem:[%s1 + $0x198] sm:$0xff]
    %v80 = vld [vmem:[%s1 + $0x1a0] sm:$0xff]
    %v81 = vld [vmem:[%s1 + $0x1a8] sm:$0xff]
    %v82 = vld [vmem:[%s1 + $0x1b0] sm:$0xff]
    %v83 = vld [vmem:[%s1 + $0x1b8] sm:$0xff]
    %v84 = vld [vmem:[%s1 + $0x1c0] sm:$0xff]
    %v85 = vld [vmem:[%s1 + $0x1c8] sm:$0xff]
    %v86 = vld [vmem:[%s1 + $0x1d0] sm:$0xff]
    %v87 = vld [vmem:[%s1 + $0x1d8] sm:$0xff]
    %v88 = vld [vmem:[%s1 + $0x1e0] sm:$0xff]
    %v89 = vld [vmem:[%s1 + $0x1e8] sm:$0xff]
    %v90 = vld [vmem:[%s1 + $0x1f0] sm:$0xff]
    %v91 = vld [vmem:[%s1 + $0x1f8] sm:$0xff]
    %v92 = vld [vmem:[%s1 + $0x200] sm:$0xff]
    %v93 = vld [vmem:[%s1 + $0x208] sm:$0xff]
    %v94 = vld [vmem:[%s1 + $0x210] sm:$0xff]
    %v95 = vld [vmem:[%s1 + $0x218] sm:$0xff]
    %v96 = vld [vmem:[%s1 + $0x220] sm:$0xff]
    %v97 = vld [vmem:[%s1 + $0x228] sm:$0xff]
    %v98 = vld [vmem:[%s1 + $0x230] sm:$0xff]
    %v99 = vld [vmem:[%s1 + $0x238] sm:$0xff]
    %v100 = vld [vmem:[%s1 + $0x240] sm:$0xff]
    %v101 = vld [vmem:[%s1 + $0x248] sm:$0xff]
    %v102 = vld [vmem:[%s1 + $0x250] sm:$0xff]
    %v103 = vld [vmem:[%s1 + $0x258] sm:$0xff]
    %v104 = vld [vmem:[%s1 + $0x260] sm:$0xff]
    %v105 = vld [vmem:[%s1 + $0x268] sm:$0xff]
    %v106 = vld [vmem:[%s1 + $0x270] sm:$0xff]
    %v107 = vld [vmem:[%s1 + $0x278] sm:$0xff]
    %v108 = vld [vmem:[%s1 + $0x280] sm:$0xff]
    %v109 = vld [vmem:[%s1 + $0x288] sm:$0xff]
    %v110 = vld [vmem:[%s1 + $0x290] sm:$0xff]
    %v111 = vld [vmem:[%s1 + $0x298] sm:$0xff]
    %v112 = vld [vmem:[%s1 + $0x2a0] sm:$0xff]
    %v113 = vld [vmem:[%s1 + $0x2a8] sm:$0xff]
    %v114 = vld [vmem:[%s1 + $0x2b0] sm:$0xff]
    %v115 = vld [vmem:[%s1 + $0x2b8] sm:$0xff]
    %v116 = vld [vmem:[%s1 + $0x2c0] sm:$0xff]
    %v117 = vld [vmem:[%s1 + $0x2c8] sm:$0xff]
    %v118 = vld [vmem:[%s1 + $0x2d0] sm:$0xff]
    %v119 = vld [vmem:[%s1 + $0x2d8] sm:$0xff]
    %v120 = vld [vmem:[%s1 + $0x2e0] sm:$0xff]
    %v121 = vld [vmem:[%s1 + $0x2e8] sm:$0xff]
    %v122 = vld [vmem:[%s1 + $0x2f0] sm:$0xff]
    %v123 = vld [vmem:[%s1 + $0x2f8] sm:$0xff]
    %v124 = vld [vmem:[%s1 + $0x300] sm:$0xff]
    %v125 = vld [vmem:[%s1 + $0x308] sm:$0xff]
    %v126 = vld [vmem:[%s1 + $0x310] sm:$0xff]
    %v127 = vld [vmem:[%s1 + $0x318] sm:$0xff]
    %v128 = vld [vmem:[%s1 + $0x320] sm:$0xff]
    %v129 = vld [vmem:[%s1 + $0x328] sm:$0xff]
    %v130 = vld [vmem:[%s1 + $0x330] sm:$0xff]
    %v131 = vld [vmem:[%s1 + $0x338] sm:$0xff]
    %v132 = vld [vmem:[%s1 + $0x340] sm:$0xff]
    %v133 = vld [vmem:[%s1 + $0x348] sm:$0xff]
    %v134 = vld [vmem:[%s1 + $0x350] sm:$0xff]
    %v135 = vld [vmem:[%s1 + $0x358] sm:$0xff]
    %v136 = vld [vmem:[%s1 + $0x360] sm:$0xff]
    %v137 = vld [vmem:[%s1 + $0x368] sm:$0xff]
    %v138 = vld [vmem:[%s1 + $0x370] sm:$0xff]
    %v139 = vld [vmem:[%s1 + $0x378] sm:$0xff]
    %v140 = vld [vmem:[%s1 + $0x380] sm:$0xff]
    %v141 = vld [vmem:[%s1 + $0x388] sm:$0xff]
    %v142 = vld [vmem:[%s1 + $0x390] sm:$0xff]
    %v143 = vld [vmem:[%s1 + $0x398] sm:$0xff]
    %v144 = vld [vmem:[%s1 + $0x3a0] sm:$0xff]
    %v145 = vld [vmem:[%s1 + $0x3a8] sm:$0xff]
    %v146 = vld [vmem:[%s1 + $0x3b0] sm:$0xff]
    %v147 = vld [vmem:[%s1 + $0x3b8] sm:$0xff]
    %v148 = vld [vmem:[%s1 + $0x3c0] sm:$0xff]
    %v149 = vld [vmem:[%s1 + $0x3c8] sm:$0xff]
    %v150 = vld [vmem:[%s1 + $0x3d0] sm:$0xff]
    %v151 = vld [vmem:[%s1 + $0x3d8] sm:$0xff]
    %v152 = vld [vmem:[%s1 + $0x3e0] sm:$0xff]
    %v153 = vld [vmem:[%s1 + $0x3e8] sm:$0xff]
    %v154 = vld [vmem:[%s1 + $0x3f0] sm:$0xff]
    %v155 = vld [vmem:[%s1 + $0x3f8] sm:$0xff]
    %v156 = vld [vmem:[%s1 + $0x400] sm:$0xff]
    %v157 = vld [vmem:[%s1 + $0x408] sm:$0xff]
    %v158 = vld [vmem:[%s1 + $0x410] sm:$0xff]
    %v159 = vld [vmem:[%s1 + $0x418] sm:$0xff]
    %v160 = vld [vmem:[%s1 + $0x420] sm:$0xff]
    %v161 = vld [vmem:[%s1 + $0x428] sm:$0xff]
    %v162 = vld [vmem:[%s1 + $0x430] sm:$0xff]
    %v163 = vld [vmem:[%s1 + $0x438] sm:$0xff]
    %v164 = vld [vmem:[%s1 + $0x440] sm:$0xff]
    %v165 = vld [vmem:[%s1 + $0x448] sm:$0xff]
    %v166 = vld [vmem:[%s1 + $0x450] sm:$0xff]
    %v167 = vld [vmem:[%s1 + $0x458] sm:$0xff]
    %v168 = vld [vmem:[%s1 + $0x460] sm:$0xff]
    %v169 = vld [vmem:[%s1 + $0x468] sm:$0xff]
    %v170 = vld [vmem:[%s1 + $0x470] sm:$0xff]
    %v171 = vld [vmem:[%s1 + $0x478] sm:$0xff]
    %v172 = vld [vmem:[%s1 + $0x480] sm:$0xff]
    %v173 = vld [vmem:[%s1 + $0x488] sm:$0xff]
    %v174 = vld [vmem:[%s1 + $0x490] sm:$0xff]
    %v175 = vld [vmem:[%s1 + $0x498] sm:$0xff]
    %v176 = vld [vmem:[%s1 + $0x4a0] sm:$0xff]
    %v177 = vld [vmem:[%s1 + $0x4a8] sm:$0xff]
    %v178 = vld [vmem:[%s1 + $0x4b0] sm:$0xff]
    %v179 = vld [vmem:[%s1 + $0x4b8] sm:$0xff]
    %v180 = vld [vmem:[%s1 + $0x4c0] sm:$0xff]
    %v181 = vld [vmem:[%s1 + $0x4c8] sm:$0xff]
    %v182 = vld [vmem:[%s1 + $0x4d0] sm:$0xff]
    %v183 = vld [vmem:[%s1 + $0x4d8] sm:$0xff]
    %v184 = vld [vmem:[%s1 + $0x4e0] sm:$0xff]
    %v185 = vld [vmem:[%s1 + $0x4e8] sm:$0xff]
    %v186 = vld [vmem:[%s1 + $0x4f0] sm:$0xff]
    %v187 = vld [vmem:[%s1 + $0x4f8] sm:$0xff]
    %v188 = vld [vmem:[%s1 + $0x500] sm:$0xff]
    %v189 = vld [vmem:[%s1 + $0x508] sm:$0xff]
    %v190 = vld [vmem:[%s1 + $0x510] sm:$0xff]
    %v191 = vld [vmem:[%s1 + $0x518] sm:$0xff]
    %v192 = vld [vmem:[%s1 + $0x520] sm:$0xff]
    %v193 = vld [vmem:[%s1 + $0x528] sm:$0xff]
    %v194 = vld [vmem:[%s1 + $0x530] sm:$0xff]
    %v195 = vld [vmem:[%s1 + $0x538] sm:$0xff]
    %v196 = vld [vmem:[%s1 + $0x540] sm:$0xff]
    %v197 = vld [vmem:[%s1 + $0x548] sm:$0xff]
    %v198 = vld [vmem:[%s1 + $0x550] sm:$0xff]
    %v199 = vld [vmem:[%s1 + $0x558] sm:$0xff]
    %v200 = vld [vmem:[%s1 + $0x560] sm:$0xff]
    %v201 = vld [vmem:[%s1 + $0x568] sm:$0xff]
    %v202 = vld [vmem:[%s1 + $0x570] sm:$0xff]
    %v203 = vld [vmem:[%s1 + $0x578] sm:$0xff]
    %v204 = vld [vmem:[%s1 + $0x580] sm:$0xff]
    %v205 = vld [vmem:[%s1 + $0x588] sm:$0xff]
    %v206 = vld [vmem:[%s1 + $0x590] sm:$0xff]
    %v207 = vld [vmem:[%s1 + $0x598] sm:$0xff]
    %v208 = vld [vmem:[%s1 + $0x5a0] sm:$0xff]
    %v209 = vld [vmem:[%s1 + $0x5a8] sm:$0xff]
    %v210 = vld [vmem:[%s1 + $0x5b0] sm:$0xff]
    %v211 = vld [vmem:[%s1 + $0x5b8] sm:$0xff]
    %v212 = vld [vmem:[%s1 + $0x5c0] sm:$0xff]
    %v213 = vld [vmem:[%s1 + $0x5c8] sm:$0xff]
    %v214 = vld [vmem:[%s1 + $0x5d0] sm:$0xff]
    %v215 = vld [vmem:[%s1 + $0x5d8] sm:$0xff]
    %v216 = vld [vmem:[%s1 + $0x5e0] sm:$0xff]
    %v217 = vld [vmem:[%s1 + $0x5e8] sm:$0xff]
    %v218 = vld [vmem:[%s1 + $0x5f0] sm:$0xff]
    %v219 = vld [vmem:[%s1 + $0x5f8] sm:$0xff]
    %v220 = vld [vmem:[%s1 + $0x600] sm:$0xff]
    %v221 = vld [vmem:[%s1 + $0x608] sm:$0xff]
    %v222 = vld [vmem:[%s1 + $0x610] sm:$0xff]
    %v223 = vld [vmem:[%s1 + $0x618] sm:$0xff]
    %v224 = vld [vmem:[%s1 + $0x620] sm:$0xff]
    %v225 = vld [vmem:[%s1 + $0x628] sm:$0xff]
    %v226 = vld [vmem:[%s1 + $0x630] sm:$0xff]
    %v227 = vld [vmem:[%s1 + $0x638] sm:$0xff]
    %v228 = vld [vmem:[%s1 + $0x640] sm:$0xff]
    %v229 = vld [vmem:[%s1 + $0x648] sm:$0xff]
    %v230 = vld [vmem:[%s1 + $0x650] sm:$0xff]
    %v231 = vld [vmem:[%s1 + $0x658] sm:$0xff]
    %v232 = vld [vmem:[%s1 + $0x660] sm:$0xff]
    %v233 = vld [vmem:[%s1 + $0x668] sm:$0xff]
    %v234 = vld [vmem:[%s1 + $0x670] sm:$0xff]
    %v235 = vld [vmem:[%s1 + $0x678] sm:$0xff]
    %v236 = vld [vmem:[%s1 + $0x680] sm:$0xff]
    %v237 = vld [vmem:[%s1 + $0x688] sm:$0xff]
    %v238 = vld [vmem:[%s1 + $0x690] sm:$0xff]
    %v239 = vld [vmem:[%s1 + $0x698] sm:$0xff]
    %v240 = vld [vmem:[%s1 + $0x6a0] sm:$0xff]
    %v241 = vld [vmem:[%s1 + $0x6a8] sm:$0xff]
    %v242 = vld [vmem:[%s1 + $0x6b0] sm:$0xff]
    %v243 = vld [vmem:[%s1 + $0x6b8] sm:$0xff]
    %v244 = vld [vmem:[%s1 + $0x6c0] sm:$0xff]
    %v245 = vld [vmem:[%s1 + $0x6c8] sm:$0xff]
    %v246 = vld [vmem:[%s1 + $0x6d0] sm:$0xff]
    %v247 = vld [vmem:[%s1 + $0x6d8] sm:$0xff]
    %v248 = vld [vmem:[%s1 + $0x6e0] sm:$0xff]
    %v249 = vld [vmem:[%s1 + $0x6e8] sm:$0xff]
    %v250 = vld [vmem:[%s1 + $0x6f0] sm:$0xff]
    %v251 = vld [vmem:[%s1 + $0x6f8] sm:$0xff]
    %v252 = vld [vmem:[%s1 + $0x700] sm:$0xff]
    %v253 = vld [vmem:[%s1 + $0x708] sm:$0xff]
    %v254 = vld [vmem:[%s1 + $0x710] sm:$0xff]
    %v255 = vld [vmem:[%s1 + $0x718] sm:$0xff]
    %v256 = vld [vmem:[%s1 + $0x720] sm:$0xff]
    %v257 = vld [vmem:[%s1 + $0x728] sm:$0xff]
    %v258 = vld [vmem:[%s1 + $0x730] sm:$0xff]
    %v259 = vld [vmem:[%s1 + $0x738] sm:$0xff]
    %v260 = vld [vmem:[%s1 + $0x740] sm:$0xff]
    %v261 = vld [vmem:[%s1 + $0x748] sm:$0xff]
    %v262 = vld [vmem:[%s1 + $0x750] sm:$0xff]
    %v263 = vld [vmem:[%s1 + $0x758] sm:$0xff]
    %v264 = vld [vmem:[%s1 + $0x760] sm:$0xff]
    %v265 = vld [vmem:[%s1 + $0x768] sm:$0xff]
    %v266 = vld [vmem:[%s1 + $0x770] sm:$0xff]
    %v267 = vld [vmem:[%s1 + $0x778] sm:$0xff]
    %v268 = vld [vmem:[%s1 + $0x780] sm:$0xff]
    %v269 = vld [vmem:[%s1 + $0x788] sm:$0xff]
    %v270 = vld [vmem:[%s1 + $0x790] sm:$0xff]
    %v271 = vld [vmem:[%s1 + $0x798] sm:$0xff]
    %v272 = vld [vmem:[%s1 + $0x7a0] sm:$0xff]
    %v273 = vld [vmem:[%s1 + $0x7a8] sm:$0xff]
    %v274 = vld [vmem:[%s1 + $0x7b0] sm:$0xff]
    %v275 = vld [vmem:[%s1 + $0x7b8] sm:$0xff]
    %v276 = vld [vmem:[%s1 + $0x7c0] sm:$0xff]
    %v277 = vld [vmem:[%s1 + $0x7c8] sm:$0xff]
    %v278 = vld [vmem:[%s1 + $0x7d0] sm:$0xff]
    %v279 = vld [vmem:[%s1 + $0x7d8] sm:$0xff]
    %v280 = vld [vmem:[%s1 + $0x7e0] sm:$0xff]
    %v281 = vld [vmem:[%s1 + $0x7e8] sm:$0xff]
    %v282 = vld [vmem:[%s1 + $0x7f0] sm:$0xff]
    %v283 = vld [vmem:[%s1 + $0x7f8] sm:$0xff]
    %v284 = vld [vmem:[%s1 + $0x800] sm:$0xff]
    %v285 = vld [vmem:[%s1 + $0x808] sm:$0xff]
    %v286 = vld [vmem:[%s1 + $0x810] sm:$0xff]
    %v287 = vld [vmem:[%s1 + $0x818] sm:$0xff]
    %v288 = vld [vmem:[%s1 + $0x820] sm:$0xff]
    %v289 = vld [vmem:[%s1 + $0x828] sm:$0xff]
    %v290 = vld [vmem:[%s1 + $0x830] sm:$0xff]
    %v291 = vld [vmem:[%s1 + $0x838] sm:$0xff]
    %v292 = vld [vmem:[%s1 + $0x840] sm:$0xff]
    %v293 = vld [vmem:[%s1 + $0x848] sm:$0xff]
    %v294 = vld [vmem:[%s1 + $0x850] sm:$0xff]
    %v295 = vld [vmem:[%s1 + $0x858] sm:$0xff]
    %v296 = vld [vmem:[%s1 + $0x860] sm:$0xff]
    %v297 = vld [vmem:[%s1 + $0x868] sm:$0xff]
    %v298 = vld [vmem:[%s1 + $0x870] sm:$0xff]
    %v299 = vld [vmem:[%s1 + $0x878] sm:$0xff]
    %v300 = vld [vmem:[%s1 + $0x880] sm:$0xff]
    %v301 = vld [vmem:[%s1 + $0x888] sm:$0xff]
    %v302 = vld [vmem:[%s1 + $0x890] sm:$0xff]
    %v303 = vld [vmem:[%s1 + $0x898] sm:$0xff]
    %v304 = vld [vmem:[%s1 + $0x8a0] sm:$0xff]
    %v305 = vld [vmem:[%s1 + $0x8a8] sm:$0xff]
    %v306 = vld [vmem:[%s1 + $0x8b0] sm:$0xff]
    %v307 = vld [vmem:[%s1 + $0x8b8] sm:$0xff]
    %v308 = vld [vmem:[%s1 + $0x8c0] sm:$0xff]
    %v309 = vld [vmem:[%s1 + $0x8c8] sm:$0xff]
    %v310 = vld [vmem:[%s1 + $0x8d0] sm:$0xff]
    %v311 = vld [vmem:[%s1 + $0x8d8] sm:$0xff]
    %v312 = vld [vmem:[%s1 + $0x8e0] sm:$0xff]
    %v313 = vld [vmem:[%s1 + $0x8e8] sm:$0xff]
    %v314 = vld [vmem:[%s1 + $0x8f0] sm:$0xff]
    %v315 = vld [vmem:[%s1 + $0x8f8] sm:$0xff]
    %v316 = vld [vmem:[%s1 + $0x900] sm:$0xff]
    %v317 = vld [vmem:[%s1 + $0x908] sm:$0xff]
    %v318 = vld [vmem:[%s1 + $0x910] sm:$0xff]
    %v319 = vld [vmem:[%s1 + $0x918] sm:$0xff]
    %v320 = vld [vmem:[%s1 + $0x920] sm:$0xff]
    %v321 = vld [vmem:[%s1 + $0x928] sm:$0xff]
    %v322 = vld [vmem:[%s1 + $0x930] sm:$0xff]
    %v323 = vld [vmem:[%s1 + $0x938] sm:$0xff]
    %v324 = vld [vmem:[%s1 + $0x940] sm:$0xff]
    %v325 = vld [vmem:[%s1 + $0x948] sm:$0xff]
    %v326 = vld [vmem:[%s1 + $0x950] sm:$0xff]
    %v327 = vld [vmem:[%s1 + $0x958] sm:$0xff]
    %v328 = vld [vmem:[%s1 + $0x960] sm:$0xff]
    %v329 = vld [vmem:[%s1 + $0x968] sm:$0xff]
    %v330 = vld [vmem:[%s1 + $0x970] sm:$0xff]
    %v331 = vld [vmem:[%s1 + $0x978] sm:$0xff]
    %v332 = vld [vmem:[%s1 + $0x980] sm:$0xff]
    %v333 = vld [vmem:[%s1 + $0x988] sm:$0xff]
    %v334 = vld [vmem:[%s1 + $0x990] sm:$0xff]
    %v335 = vld [vmem:[%s1 + $0x998] sm:$0xff]
    %v336 = vld [vmem:[%s1 + $0x9a0] sm:$0xff]
    %v337 = vld [vmem:[%s1 + $0x9a8] sm:$0xff]
    %v338 = vld [vmem:[%s1 + $0x9b0] sm:$0xff]
    %v339 = vld [vmem:[%s1 + $0x9b8] sm:$0xff]
    %v340 = vld [vmem:[%s1 + $0x9c0] sm:$0xff]
    %v341 = vld [vmem:[%s1 + $0x9c8] sm:$0xff]
    %v342 = vld [vmem:[%s1 + $0x9d0] sm:$0xff]
    %v343 = vld [vmem:[%s1 + $0x9d8] sm:$0xff]
    %v344 = vld [vmem:[%s1 + $0x9e0] sm:$0xff]
    %v345 = vld [vmem:[%s1 + $0x9e8] sm:$0xff]
    %v346 = vld [vmem:[%s1 + $0x9f0] sm:$0xff]
    %v347 = vld [vmem:[%s1 + $0x9f8] sm:$0xff]
    %v348 = vld [vmem:[%s1 + $0xa00] sm:$0xff]
    %v349 = vld [vmem:[%s1 + $0xa08] sm:$0xff]
    %v350 = vld [vmem:[%s1 + $0xa10] sm:$0xff]
    %v351 = vld [vmem:[%s1 + $0xa18] sm:$0xff]
    %v352 = vld [vmem:[%s1 + $0xa20] sm:$0xff]
    %v353 = vld [vmem:[%s1 + $0xa28] sm:$0xff]
    %v354 = vld [vmem:[%s1 + $0xa30] sm:$0xff]
    %v355 = vld [vmem:[%s1 + $0xa38] sm:$0xff]
    %v356 = vld [vmem:[%s1 + $0xa40] sm:$0xff]
    %v357 = vld [vmem:[%s1 + $0xa48] sm:$0xff]
    %v358 = vld [vmem:[%s1 + $0xa50] sm:$0xff]
    %v359 = vld [vmem:[%s1 + $0xa58] sm:$0xff]
    %v360 = vld [vmem:[%s1 + $0xa60] sm:$0xff]
    %v361 = vld [vmem:[%s1 + $0xa68] sm:$0xff]
    %v362 = vld [vmem:[%s1 + $0xa70] sm:$0xff]
    %v363 = vld [vmem:[%s1 + $0xa78] sm:$0xff]
    %v364 = vld [vmem:[%s1 + $0xa80] sm:$0xff]
    %v365 = vld [vmem:[%s1 + $0xa88] sm:$0xff]
    %v366 = vld [vmem:[%s1 + $0xa90] sm:$0xff]
    %v367 = vld [vmem:[%s1 + $0xa98] sm:$0xff]
    %v368 = vld [vmem:[%s1 + $0xaa0] sm:$0xff]
    %v369 = vld [vmem:[%s1 + $0xaa8] sm:$0xff]
    %v370 = vld [vmem:[%s1 + $0xab0] sm:$0xff]
    %v371 = vld [vmem:[%s1 + $0xab8] sm:$0xff]
    %v372 = vld [vmem:[%s1 + $0xac0] sm:$0xff]
    %v373 = vld [vmem:[%s1 + $0xac8] sm:$0xff]
    %v374 = vld [vmem:[%s1 + $0xad0] sm:$0xff]
    %v375 = vld [vmem:[%s1 + $0xad8] sm:$0xff]
    %v376 = vld [vmem:[%s1 + $0xae0] sm:$0xff]
    %v377 = vld [vmem:[%s1 + $0xae8] sm:$0xff]
    %v378 = vld [vmem:[%s1 + $0xaf0] sm:$0xff]
    %v379 = vld [vmem:[%s1 + $0xaf8] sm:$0xff]
    %v380 = vld [vmem:[%s1 + $0xb00] sm:$0xff]
    %v381 = vld [vmem:[%s1 + $0xb08] sm:$0xff]
    %v382 = vld [vmem:[%s1 + $0xb10] sm:$0xff]
    %v383 = vld [vmem:[%s1 + $0xb18] sm:$0xff]
    %v384 = vld [vmem:[%s1 + $0xb20] sm:$0xff]
    %v385 = vld [vmem:[%s1 + $0xb28] sm:$0xff]
    %v386 = vld [vmem:[%s1 + $0xb30] sm:$0xff]
    %v387 = vld [vmem:[%s1 + $0xb38] sm:$0xff]
    %v388 = vld [vmem:[%s1 + $0xb40] sm:$0xff]
    %v389 = vld [vmem:[%s1 + $0xb48] sm:$0xff]
    %v390 = vld [vmem:[%s1 + $0xb50] sm:$0xff]
    %v391 = vld [vmem:[%s1 + $0xb58] sm:$0xff]
    %v392 = vld [vmem:[%s1 + $0xb60] sm:$0xff]
    %v393 = vld [vmem:[%s1 + $0xb68] sm:$0xff]
    %v394 = vld [vmem:[%s1 + $0xb70] sm:$0xff]
    %v395 = vld [vmem:[%s1 + $0xb78] sm:$0xff]
    %v396 = vld [vmem:[%s1 + $0xb80] sm:$0xff]
    %v397 = vld [vmem:[%s1 + $0xb88] sm:$0xff]
    %v398 = vld [vmem:[%s1 + $0xb90] sm:$0xff]
    %v399 = vld [vmem:[%s1 + $0xb98] sm:$0xff]
    %v400 = vld [vmem:[%s1 + $0xba0] sm:$0xff]
    %v401 = vld [vmem:[%s1 + $0xba8] sm:$0xff]
    %v402 = vld [vmem:[%s1 + $0xbb0] sm:$0xff]
    %v403 = vld [vmem:[%s1 + $0xbb8] sm:$0xff]
    %v404 = vld [vmem:[%s1 + $0xbc0] sm:$0xff]
    %v405 = vld [vmem:[%s1 + $0xbc8] sm:$0xff]
    %v406 = vld [vmem:[%s1 + $0xbd0] sm:$0xff]
    %v407 = vld [vmem:[%s1 + $0xbd8] sm:$0xff]
    %v408 = vld [vmem:[%s1 + $0xbe0] sm:$0xff]
    %v409 = vld [vmem:[%s1 + $0xbe8] sm:$0xff]
    %v410 = vld [vmem:[%s1 + $0xbf0] sm:$0xff]
    %v411 = vld [vmem:[%s1 + $0xbf8] sm:$0xff]
    %v412 = vld [vmem:[%s1 + $0xc00] sm:$0xff]
    %v413 = vld [vmem:[%s1 + $0xc08] sm:$0xff]
    %v414 = vld [vmem:[%s1 + $0xc10] sm:$0xff]
    %v415 = vld [vmem:[%s1 + $0xc18] sm:$0xff]
    %v416 = vld [vmem:[%s1 + $0xc20] sm:$0xff]
    %v417 = vld [vmem:[%s1 + $0xc28] sm:$0xff]
    %v418 = vld [vmem:[%s1 + $0xc30] sm:$0xff]
    %v419 = vld [vmem:[%s1 + $0xc38] sm:$0xff]
    %v420 = vld [vmem:[%s1 + $0xc40] sm:$0xff]
    %v421 = vld [vmem:[%s1 + $0xc48] sm:$0xff]
    %v422 = vld [vmem:[%s1 + $0xc50] sm:$0xff]
    %v423 = vld [vmem:[%s1 + $0xc58] sm:$0xff]
    %v424 = vld [vmem:[%s1 + $0xc60] sm:$0xff]
    %v425 = vld [vmem:[%s1 + $0xc68] sm:$0xff]
    %v426 = vld [vmem:[%s1 + $0xc70] sm:$0xff]
    %v427 = vld [vmem:[%s1 + $0xc78] sm:$0xff]
    %v428 = vld [vmem:[%s1 + $0xc80] sm:$0xff]
    %v429 = vld [vmem:[%s1 + $0xc88] sm:$0xff]
    %v430 = vld [vmem:[%s1 + $0xc90] sm:$0xff]
    %v431 = vld [vmem:[%s1 + $0xc98] sm:$0xff]
    %v432 = vld [vmem:[%s1 + $0xca0] sm:$0xff]
    %v433 = vld [vmem:[%s1 + $0xca8] sm:$0xff]
    %v434 = vld [vmem:[%s1 + $0xcb0] sm:$0xff]
    %v435 = vld [vmem:[%s1 + $0xcb8] sm:$0xff]
    %v436 = vld [vmem:[%s1 + $0xcc0] sm:$0xff]
    %v437 = vld [vmem:[%s1 + $0xcc8] sm:$0xff]
    %v438 = vld [vmem:[%s1 + $0xcd0] sm:$0xff]
    %v439 = vld [vmem:[%s1 + $0xcd8] sm:$0xff]
    %v440 = vld [vmem:[%s1 + $0xce0] sm:$0xff]
    %v441 = vld [vmem:[%s1 + $0xce8] sm:$0xff]
    %v442 = vld [vmem:[%s1 + $0xcf0] sm:$0xff]
    %v443 = vld [vmem:[%s1 + $0xcf8] sm:$0xff]
    %v444 = vld [vmem:[%s1 + $0xd00] sm:$0xff]
    %v445 = vld [vmem:[%s1 + $0xd08] sm:$0xff]
    %v446 = vld [vmem:[%s1 + $0xd10] sm:$0xff]
    %v447 = vld [vmem:[%s1 + $0xd18] sm:$0xff]
    %v448 = vld [vmem:[%s1 + $0xd20] sm:$0xff]
    %v449 = vld [vmem:[%s1 + $0xd28] sm:$0xff]
    %v450 = vld [vmem:[%s1 + $0xd30] sm:$0xff]
    %v451 = vld [vmem:[%s1 + $0xd38] sm:$0xff]
    %v452 = vld [vmem:[%s1 + $0xd40] sm:$0xff]
    %v453 = vld [vmem:[%s1 + $0xd48] sm:$0xff]
    %v454 = vld [vmem:[%s1 + $0xd50] sm:$0xff]
    %v455 = vld [vmem:[%s1 + $0xd58] sm:$0xff]
    %v456 = vld [vmem:[%s1 + $0xd60] sm:$0xff]
    %v457 = vld [vmem:[%s1 + $0xd68] sm:$0xff]
    %v458 = vld [vmem:[%s1 + $0xd70] sm:$0xff]
    %v459 = vld [vmem:[%s1 + $0xd78] sm:$0xff]
    %v460 = vld [vmem:[%s1 + $0xd80] sm:$0xff]
    %v461 = vld [vmem:[%s1 + $0xd88] sm:$0xff]
    %v462 = vld [vmem:[%s1 + $0xd90] sm:$0xff]
    %v463 = vld [vmem:[%s1 + $0xd98] sm:$0xff]
    %v464 = vld [vmem:[%s1 + $0xda0] sm:$0xff]
    %v465 = vld [vmem:[%s1 + $0xda8] sm:$0xff]
    %v466 = vld [vmem:[%s1 + $0xdb0] sm:$0xff]
    %v467 = vld [vmem:[%s1 + $0xdb8] sm:$0xff]
    %v468 = vld [vmem:[%s1 + $0xdc0] sm:$0xff]
    %v469 = vld [vmem:[%s1 + $0xdc8] sm:$0xff]
    %v470 = vld [vmem:[%s1 + $0xdd0] sm:$0xff]
    %v471 = vld [vmem:[%s1 + $0xdd8] sm:$0xff]
    %v472 = vld [vmem:[%s1 + $0xde0] sm:$0xff]
    %v473 = vld [vmem:[%s1 + $0xde8] sm:$0xff]
    %v474 = vld [vmem:[%s1 + $0xdf0] sm:$0xff]
    %v475 = vld [vmem:[%s1 + $0xdf8] sm:$0xff]
    %v476 = vld [vmem:[%s1 + $0xe00] sm:$0xff]
    %v477 = vld [vmem:[%s1 + $0xe08] sm:$0xff]
    %v478 = vld [vmem:[%s1 + $0xe10] sm:$0xff]
    %v479 = vld [vmem:[%s1 + $0xe18] sm:$0xff]
    %v480 = vld [vmem:[%s1 + $0xe20] sm:$0xff]
    %v481 = vld [vmem:[%s1 + $0xe28] sm:$0xff]
    %v482 = vld [vmem:[%s1 + $0xe30] sm:$0xff]
    %v483 = vld [vmem:[%s1 + $0xe38] sm:$0xff]
    %v484 = vld [vmem:[%s1 + $0xe40] sm:$0xff]
    %v485 = vld [vmem:[%s1 + $0xe48] sm:$0xff]
    %v486 = vld [vmem:[%s1 + $0xe50] sm:$0xff]
    %v487 = vld [vmem:[%s1 + $0xe58] sm:$0xff]
    %v488 = vld [vmem:[%s1 + $0xe60] sm:$0xff]
    %v489 = vld [vmem:[%s1 + $0xe68] sm:$0xff]
    %v490 = vld [vmem:[%s1 + $0xe70] sm:$0xff]
    %v491 = vld [vmem:[%s1 + $0xe78] sm:$0xff]
    %v492 = vld [vmem:[%s1 + $0xe80] sm:$0xff]
    %v493 = vld [vmem:[%s1 + $0xe88] sm:$0xff]
    %v494 = vld [vmem:[%s1 + $0xe90] sm:$0xff]
    %v495 = vld [vmem:[%s1 + $0xe98] sm:$0xff]
    %v496 = vld [vmem:[%s1 + $0xea0] sm:$0xff]
    %v497 = vld [vmem:[%s1 + $0xea8] sm:$0xff]
    %v498 = vld [vmem:[%s1 + $0xeb0] sm:$0xff]
    %v499 = vld [vmem:[%s1 + $0xeb8] sm:$0xff]
    %v500 = vld [vmem:[%s1 + $0xec0] sm:$0xff]
    %v501 = vld [vmem:[%s1 + $0xec8] sm:$0xff]
    %v502 = vld [vmem:[%s1 + $0xed0] sm:$0xff]
    %v503 = vld [vmem:[%s1 + $0xed8] sm:$0xff]
    %v504 = vld [vmem:[%s1 + $0xee0] sm:$0xff]
    %v505 = vld [vmem:[%s1 + $0xee8] sm:$0xff]
    %v506 = vld [vmem:[%s1 + $0xef0] sm:$0xff]
    %v507 = vld [vmem:[%s1 + $0xef8] sm:$0xff]
    %v508 = vld [vmem:[%s1 + $0xf00] sm:$0xff]
    %v509 = vld [vmem:[%s1 + $0xf08] sm:$0xff]
    %v510 = vld [vmem:[%s1 + $0xf10] sm:$0xff]
    %v511 = vld [vmem:[%s1 + $0xf18] sm:$0xff]
    %v512 = vld [vmem:[%s1 + $0xf20] sm:$0xff]
    %v513 = vld [vmem:[%s1 + $0xf28] sm:$0xff]
    %v514 = vld [vmem:[%s1 + $0xf30] sm:$0xff]
    %v515 = vld [vmem:[%s1 + $0xf38] sm:$0xff]
    %v516 = vld [vmem:[%s1 + $0xf40] sm:$0xff]
    %v517 = vld [vmem:[%s1 + $0xf48] sm:$0xff]
    %v518 = vld [vmem:[%s1 + $0xf50] sm:$0xff]
    %v519 = vld [vmem:[%s1 + $0xf58] sm:$0xff]
    %v520 = vld [vmem:[%s1 + $0xf60] sm:$0xff]
    %v521 = vld [vmem:[%s1 + $0xf68] sm:$0xff]
    %v522 = vld [vmem:[%s1 + $0xf70] sm:$0xff]
    %v523 = vld [vmem:[%s1 + $0xf78] sm:$0xff]
    %v524 = vld [vmem:[%s1 + $0xf80] sm:$0xff]
    %v525 = vld [vmem:[%s1 + $0xf88] sm:$0xff]
    %v526 = vld [vmem:[%s1 + $0xf90] sm:$0xff]
    %v527 = vld [vmem:[%s1 + $0xf98] sm:$0xff]
    %v528 = vld [vmem:[%s1 + $0xfa0] sm:$0xff]
    %v529 = vld [vmem:[%s1 + $0xfa8] sm:$0xff]
    %v530 = vld [vmem:[%s1 + $0xfb0] sm:$0xff]
    %v531 = vld [vmem:[%s1 + $0xfb8] sm:$0xff]
    %v532 = vld [vmem:[%s1 + $0xfc0] sm:$0xff]
    %v533 = vld [vmem:[%s1 + $0xfc8] sm:$0xff]
    %v534 = vld [vmem:[%s1 + $0xfd0] sm:$0xff]
    %v535 = vld [vmem:[%s1 + $0xfd8] sm:$0xff]
    %v536 = vld [vmem:[%s1 + $0xfe0] sm:$0xff]
    %v537 = vld [vmem:[%s1 + $0xfe8] sm:$0xff]
    %v538 = vld [vmem:[%s1 + $0xff0] sm:$0xff]
    %v539 = vld [vmem:[%s1 + $0xff8] sm:$0xff]
    %v540 = vld [vmem:[%s1 + $0x1000] sm:$0xff]
    %v541 = vld [vmem:[%s1 + $0x1008] sm:$0xff]
    %v542 = vld [vmem:[%s1 + $0x1010] sm:$0xff]
    %v543 = vld [vmem:[%s1 + $0x1018] sm:$0xff]
    %v544 = vld [vmem:[%s1 + $0x1020] sm:$0xff]
    %v545 = vld [vmem:[%s1 + $0x1028] sm:$0xff]
    %v546 = vld [vmem:[%s1 + $0x1030] sm:$0xff]
    %v547 = vld [vmem:[%s1 + $0x1038] sm:$0xff]
    %v548 = vld [vmem:[%s1 + $0x1040] sm:$0xff]
    %v549 = vld [vmem:[%s1 + $0x1048] sm:$0xff]
    %v550 = vld [vmem:[%s1 + $0x1050] sm:$0xff]
    %v551 = vld [vmem:[%s1 + $0x1058] sm:$0xff]
    %v552 = vld [vmem:[%s1 + $0x1060] sm:$0xff]
    %v553 = vld [vmem:[%s1 + $0x1068] sm:$0xff]
    %v554 = vld [vmem:[%s1 + $0x1070] sm:$0xff]
    %v555 = vld [vmem:[%s1 + $0x1078] sm:$0xff]
    %v556 = vld [vmem:[%s1 + $0x1080] sm:$0xff]
    %v557 = vld [vmem:[%s1 + $0x1088] sm:$0xff]
    %v558 = vld [vmem:[%s1 + $0x1090] sm:$0xff]
    %v559 = vld [vmem:[%s1 + $0x1098] sm:$0xff]
    %v560 = vld [vmem:[%s1 + $0x10a0] sm:$0xff]
    %v561 = vld [vmem:[%s1 + $0x10a8] sm:$0xff]
    %v562 = vld [vmem:[%s1 + $0x10b0] sm:$0xff]
    %v563 = vld [vmem:[%s1 + $0x10b8] sm:$0xff]
    %v564 = vld [vmem:[%s1 + $0x10c0] sm:$0xff]
    %v565 = vld [vmem:[%s1 + $0x10c8] sm:$0xff]
    %v566 = vld [vmem:[%s1 + $0x10d0] sm:$0xff]
    %v567 = vld [vmem:[%s1 + $0x10d8] sm:$0xff]
    %v568 = vld [vmem:[%s1 + $0x10e0] sm:$0xff]
    %v569 = vld [vmem:[%s1 + $0x10e8] sm:$0xff]
    %v570 = vld [vmem:[%s1 + $0x10f0] sm:$0xff]
    %v571 = vld [vmem:[%s1 + $0x10f8] sm:$0xff]
    %v572 = vld [vmem:[%s1 + $0x1100] sm:$0xff]
    %v573 = vld [vmem:[%s1 + $0x1108] sm:$0xff]
    %v574 = vld [vmem:[%s1 + $0x1110] sm:$0xff]
    %v575 = vld [vmem:[%s1 + $0x1118] sm:$0xff]
    %v576 = vld [vmem:[%s1 + $0x1120] sm:$0xff]
    %v577 = vld [vmem:[%s1 + $0x1128] sm:$0xff]
    %v578 = vld [vmem:[%s1 + $0x1130] sm:$0xff]
    %v579 = vld [vmem:[%s1 + $0x1138] sm:$0xff]
    %v580 = vld [vmem:[%s1 + $0x1140] sm:$0xff]
    %v581 = vld [vmem:[%s1 + $0x1148] sm:$0xff]
    %v582 = vld [vmem:[%s1 + $0x1150] sm:$0xff]
    %v583 = vld [vmem:[%s1 + $0x1158] sm:$0xff]
    %v584 = vld [vmem:[%s1 + $0x1160] sm:$0xff]
    %v585 = vld [vmem:[%s1 + $0x1168] sm:$0xff]
    %v586 = vld [vmem:[%s1 + $0x1170] sm:$0xff]
    %v587 = vld [vmem:[%s1 + $0x1178] sm:$0xff]
    %v588 = vld [vmem:[%s1 + $0x1180] sm:$0xff]
    %v589 = vld [vmem:[%s1 + $0x1188] sm:$0xff]
    %v590 = vld [vmem:[%s1 + $0x1190] sm:$0xff]
    %v591 = vld [vmem:[%s1 + $0x1198] sm:$0xff]
    %v592 = vld [vmem:[%s1 + $0x11a0] sm:$0xff]
    %v593 = vld [vmem:[%s1 + $0x11a8] sm:$0xff]
    %v594 = vld [vmem:[%s1 + $0x11b0] sm:$0xff]
    %v595 = vld [vmem:[%s1 + $0x11b8] sm:$0xff]
    %v596 = vld [vmem:[%s1 + $0x11c0] sm:$0xff]
    %v597 = vld [vmem:[%s1 + $0x11c8] sm:$0xff]
    %v598 = vld [vmem:[%s1 + $0x11d0] sm:$0xff]
    %v599 = vld [vmem:[%s1 + $0x11d8] sm:$0xff]
    %v600 = vld [vmem:[%s1 + $0x11e0] sm:$0xff]
    %v601 = vld [vmem:[%s1 + $0x11e8] sm:$0xff]
    %v602 = vld [vmem:[%s1 + $0x11f0] sm:$0xff]
    %v603 = vld [vmem:[%s1 + $0x11f8] sm:$0xff]
    %v604 = vld [vmem:[%s1 + $0x1200] sm:$0xff]
    %v605 = vld [vmem:[%s1 + $0x1208] sm:$0xff]
    %v606 = vld [vmem:[%s1 + $0x1210] sm:$0xff]
    %v607 = vld [vmem:[%s1 + $0x1218] sm:$0xff]
    %v608 = vld [vmem:[%s1 + $0x1220] sm:$0xff]
    %v609 = vld [vmem:[%s1 + $0x1228] sm:$0xff]
    %v610 = vld [vmem:[%s1 + $0x1230] sm:$0xff]
    %v611 = vld [vmem:[%s1 + $0x1238] sm:$0xff]
    %v612 = vld [vmem:[%s1 + $0x1240] sm:$0xff]
    %v613 = vld [vmem:[%s1 + $0x1248] sm:$0xff]
    %v614 = vld [vmem:[%s1 + $0x1250] sm:$0xff]
    %v615 = vld [vmem:[%s1 + $0x1258] sm:$0xff]
    %v616 = vld [vmem:[%s1 + $0x1260] sm:$0xff]
    %v617 = vld [vmem:[%s1 + $0x1268] sm:$0xff]
    %v618 = vld [vmem:[%s1 + $0x1270] sm:$0xff]
    %v619 = vld [vmem:[%s1 + $0x1278] sm:$0xff]
    %v620 = vld [vmem:[%s1 + $0x1280] sm:$0xff]
    %v621 = vld [vmem:[%s1 + $0x1288] sm:$0xff]
    %v622 = vld [vmem:[%s1 + $0x1290] sm:$0xff]
    %v623 = vld [vmem:[%s1 + $0x1298] sm:$0xff]
    %v624 = vld [vmem:[%s1 + $0x12a0] sm:$0xff]
    %v625 = vld [vmem:[%s1 + $0x12a8] sm:$0xff]
    %v626 = vld [vmem:[%s1 + $0x12b0] sm:$0xff]
    %v627 = vld [vmem:[%s1 + $0x12b8] sm:$0xff]
    %v628 = vld [vmem:[%s1 + $0x12c0] sm:$0xff]
    %v629 = vld [vmem:[%s1 + $0x12c8] sm:$0xff]
    %v630 = vld [vmem:[%s1 + $0x12d0] sm:$0xff]
    %v631 = vld [vmem:[%s1 + $0x12d8] sm:$0xff]
    %v632 = vld [vmem:[%s1 + $0x12e0] sm:$0xff]
    %v633 = vld [vmem:[%s1 + $0x12e8] sm:$0xff]
    %v634 = vld [vmem:[%s1 + $0x12f0] sm:$0xff]
    %v635 = vld [vmem:[%s1 + $0x12f8] sm:$0xff]
    %v636 = vld [vmem:[%s1 + $0x1300] sm:$0xff]
    %v637 = vld [vmem:[%s1 + $0x1308] sm:$0xff]
    %v638 = vld [vmem:[%s1 + $0x1310] sm:$0xff]
    %v639 = vld [vmem:[%s1 + $0x1318] sm:$0xff]
    %v640 = vld [vmem:[%s1 + $0x1320] sm:$0xff]
    %v641 = vld [vmem:[%s1 + $0x1328] sm:$0xff]
    %v642 = vld [vmem:[%s1 + $0x1330] sm:$0xff]
    %v643 = vld [vmem:[%s1 + $0x1338] sm:$0xff]
    %v644 = vld [vmem:[%s1 + $0x1340] sm:$0xff]
    %v645 = vld [vmem:[%s1 + $0x1348] sm:$0xff]
    %v646 = vld [vmem:[%s1 + $0x1350] sm:$0xff]
    %v647 = vld [vmem:[%s1 + $0x1358] sm:$0xff]
    %v648 = vld [vmem:[%s1 + $0x1360] sm:$0xff]
    %v649 = vld [vmem:[%s1 + $0x1368] sm:$0xff]
    %v650 = vld [vmem:[%s1 + $0x1370] sm:$0xff]
    %v651 = vld [vmem:[%s1 + $0x1378] sm:$0xff]
    %v652 = vld [vmem:[%s1 + $0x1380] sm:$0xff]
    %v653 = vld [vmem:[%s1 + $0x1388] sm:$0xff]
    %v654 = vld [vmem:[%s1 + $0x1390] sm:$0xff]
    %v655 = vld [vmem:[%s1 + $0x1398] sm:$0xff]
    %v656 = vld [vmem:[%s1 + $0x13a0] sm:$0xff]
    %v657 = vld [vmem:[%s1 + $0x13a8] sm:$0xff]
    %v658 = vld [vmem:[%s1 + $0x13b0] sm:$0xff]
    %v659 = vld [vmem:[%s1 + $0x13b8] sm:$0xff]
    %v660 = vld [vmem:[%s1 + $0x13c0] sm:$0xff]
    %v661 = vld [vmem:[%s1 + $0x13c8] sm:$0xff]
    %v662 = vld [vmem:[%s1 + $0x13d0] sm:$0xff]
    %v663 = vld [vmem:[%s1 + $0x13d8] sm:$0xff]
    %v664 = vld [vmem:[%s1 + $0x13e0] sm:$0xff]
    %v665 = vld [vmem:[%s1 + $0x13e8] sm:$0xff]
    %v666 = vld [vmem:[%s1 + $0x13f0] sm:$0xff]
    %v667 = vld [vmem:[%s1 + $0x13f8] sm:$0xff]
    %v668 = vld [vmem:[%s1 + $0x1400] sm:$0xff]
    %v669 = vld [vmem:[%s1 + $0x1408] sm:$0xff]
    %v670 = vld [vmem:[%s1 + $0x1410] sm:$0xff]
    %v671 = vld [vmem:[%s1 + $0x1418] sm:$0xff]
    %v672 = vld [vmem:[%s1 + $0x1420] sm:$0xff]
    %v673 = vld [vmem:[%s1 + $0x1428] sm:$0xff]
    %v674 = vld [vmem:[%s1 + $0x1430] sm:$0xff]
    %v675 = vld [vmem:[%s1 + $0x1438] sm:$0xff]
    %v676 = vld [vmem:[%s1 + $0x1440] sm:$0xff]
    %v677 = vld [vmem:[%s1 + $0x1448] sm:$0xff]
    %v678 = vld [vmem:[%s1 + $0x1450] sm:$0xff]
    %v679 = vld [vmem:[%s1 + $0x1458] sm:$0xff]
    %v680 = vld [vmem:[%s1 + $0x1460] sm:$0xff]
    %v681 = vld [vmem:[%s1 + $0x1468] sm:$0xff]
    %v682 = vld [vmem:[%s1 + $0x1470] sm:$0xff]
    %v683 = vld [vmem:[%s1 + $0x1478] sm:$0xff]
    %v684 = vld [vmem:[%s1 + $0x1480] sm:$0xff]
    %v685 = vld [vmem:[%s1 + $0x1488] sm:$0xff]
    %v686 = vld [vmem:[%s1 + $0x1490] sm:$0xff]
    %v687 = vld [vmem:[%s1 + $0x1498] sm:$0xff]
    %v688 = vld [vmem:[%s1 + $0x14a0] sm:$0xff]
    %v689 = vld [vmem:[%s1 + $0x14a8] sm:$0xff]
    %v690 = vld [vmem:[%s1 + $0x14b0] sm:$0xff]
    %v691 = vld [vmem:[%s1 + $0x14b8] sm:$0xff]
    %v692 = vld [vmem:[%s1 + $0x14c0] sm:$0xff]
    %v693 = vld [vmem:[%s1 + $0x14c8] sm:$0xff]
    %v694 = vld [vmem:[%s1 + $0x14d0] sm:$0xff]
    %v695 = vld [vmem:[%s1 + $0x14d8] sm:$0xff]
    %v696 = vld [vmem:[%s1 + $0x14e0] sm:$0xff]
    %v697 = vld [vmem:[%s1 + $0x14e8] sm:$0xff]
    %v698 = vld [vmem:[%s1 + $0x14f0] sm:$0xff]
    %v699 = vld [vmem:[%s1 + $0x14f8] sm:$0xff]
    %v700 = vld [vmem:[%s1 + $0x1500] sm:$0xff]
    %v701 = vld [vmem:[%s1 + $0x1508] sm:$0xff]
    %v702 = vld [vmem:[%s1 + $0x1510] sm:$0xff]
    %v703 = vld [vmem:[%s1 + $0x1518] sm:$0xff]
    %v704 = vld [vmem:[%s1 + $0x1520] sm:$0xff]
    %v705 = vld [vmem:[%s1 + $0x1528] sm:$0xff]
    %v706 = vld [vmem:[%s1 + $0x1530] sm:$0xff]
    %v707 = vld [vmem:[%s1 + $0x1538] sm:$0xff]
    %v708 = vld [vmem:[%s1 + $0x1540] sm:$0xff]
    %v709 = vld [vmem:[%s1 + $0x1548] sm:$0xff]
    %v710 = vld [vmem:[%s1 + $0x1550] sm:$0xff]
    %v711 = vld [vmem:[%s1 + $0x1558] sm:$0xff]
    %v712 = vld [vmem:[%s1 + $0x1560] sm:$0xff]
    %v713 = vld [vmem:[%s1 + $0x1568] sm:$0xff]
    %v714 = vld [vmem:[%s1 + $0x1570] sm:$0xff]
    %v715 = vld [vmem:[%s1 + $0x1578] sm:$0xff]
    %v716 = vld [vmem:[%s1 + $0x1580] sm:$0xff]
    %v717 = vld [vmem:[%s1 + $0x1588] sm:$0xff]
    %v718 = vld [vmem:[%s1 + $0x1590] sm:$0xff]
    %v719 = vld [vmem:[%s1 + $0x1598] sm:$0xff]
    %v720 = vld [vmem:[%s1 + $0x15a0] sm:$0xff]
    %v721 = vld [vmem:[%s1 + $0x15a8] sm:$0xff]
    %v722 = vld [vmem:[%s1 + $0x15b0] sm:$0xff]
    %v723 = vld [vmem:[%s1 + $0x15b8] sm:$0xff]
    %v724 = vld [vmem:[%s1 + $0x15c0] sm:$0xff]
    %v725 = vld [vmem:[%s1 + $0x15c8] sm:$0xff]
    %v726 = vld [vmem:[%s1 + $0x15d0] sm:$0xff]
    %v727 = vld [vmem:[%s1 + $0x15d8] sm:$0xff]
    %v728 = vld [vmem:[%s1 + $0x15e0] sm:$0xff]
    %v729 = vld [vmem:[%s1 + $0x15e8] sm:$0xff]
    %v730 = vld [vmem:[%s1 + $0x15f0] sm:$0xff]
    %v731 = vld [vmem:[%s1 + $0x15f8] sm:$0xff]
    %v732 = vld [vmem:[%s1 + $0x1600] sm:$0xff]
    %v733 = vld [vmem:[%s1 + $0x1608] sm:$0xff]
    %v734 = vld [vmem:[%s1 + $0x1610] sm:$0xff]
    %v735 = vld [vmem:[%s1 + $0x1618] sm:$0xff]
    %v736 = vld [vmem:[%s1 + $0x1620] sm:$0xff]
    %v737 = vld [vmem:[%s1 + $0x1628] sm:$0xff]
    %v738 = vld [vmem:[%s1 + $0x1630] sm:$0xff]
    %v739 = vld [vmem:[%s1 + $0x1638] sm:$0xff]
    %v740 = vld [vmem:[%s1 + $0x1640] sm:$0xff]
    %v741 = vld [vmem:[%s1 + $0x1648] sm:$0xff]
    %v742 = vld [vmem:[%s1 + $0x1650] sm:$0xff]
    %v743 = vld [vmem:[%s1 + $0x1658] sm:$0xff]
    %v744 = vld [vmem:[%s1 + $0x1660] sm:$0xff]
    %v745 = vld [vmem:[%s1 + $0x1668] sm:$0xff]
    %v746 = vld [vmem:[%s1 + $0x1670] sm:$0xff]
    %v747 = vld [vmem:[%s1 + $0x1678] sm:$0xff]
    %v748 = vld [vmem:[%s1 + $0x1680] sm:$0xff]
    %v749 = vld [vmem:[%s1 + $0x1688] sm:$0xff]
    %v750 = vld [vmem:[%s1 + $0x1690] sm:$0xff]
    %v751 = vld [vmem:[%s1 + $0x1698] sm:$0xff]
    %v752 = vld [vmem:[%s1 + $0x16a0] sm:$0xff]
    %v753 = vld [vmem:[%s1 + $0x16a8] sm:$0xff]
    %v754 = vld [vmem:[%s1 + $0x16b0] sm:$0xff]
    %v755 = vld [vmem:[%s1 + $0x16b8] sm:$0xff]
    %v756 = vld [vmem:[%s1 + $0x16c0] sm:$0xff]
    %v757 = vld [vmem:[%s1 + $0x16c8] sm:$0xff]
    %v758 = vld [vmem:[%s1 + $0x16d0] sm:$0xff]
    %v759 = vld [vmem:[%s1 + $0x16d8] sm:$0xff]
    %v760 = vld [vmem:[%s1 + $0x16e0] sm:$0xff]
    %v761 = vld [vmem:[%s1 + $0x16e8] sm:$0xff]
    %v762 = vld [vmem:[%s1 + $0x16f0] sm:$0xff]
    %v763 = vld [vmem:[%s1 + $0x16f8] sm:$0xff]
    %v764 = vld [vmem:[%s1 + $0x1700] sm:$0xff]
    %v765 = vld [vmem:[%s1 + $0x1708] sm:$0xff]
    %v766 = vld [vmem:[%s1 + $0x1710] sm:$0xff]
    %v767 = vld [vmem:[%s1 + $0x1718] sm:$0xff]
    %v768 = vld [vmem:[%s1 + $0x1720] sm:$0xff]
    %v769 = vld [vmem:[%s1 + $0x1728] sm:$0xff]
    %v770 = vld [vmem:[%s1 + $0x1730] sm:$0xff]
    %v771 = vld [vmem:[%s1 + $0x1738] sm:$0xff]
    %v772 = vld [vmem:[%s1 + $0x1740] sm:$0xff]
    %v773 = vld [vmem:[%s1 + $0x1748] sm:$0xff]
    %v774 = vld [vmem:[%s1 + $0x1750] sm:$0xff]
    %v775 = vld [vmem:[%s1 + $0x1758] sm:$0xff]
    %v776 = vld [vmem:[%s1 + $0x1760] sm:$0xff]
    %v777 = vld [vmem:[%s1 + $0x1768] sm:$0xff]
    %v778 = vld [vmem:[%s1 + $0x1770] sm:$0xff]
    %v779 = vld [vmem:[%s1 + $0x1778] sm:$0xff]
    %v780 = vld [vmem:[%s1 + $0x1780] sm:$0xff]
    %v781 = vld [vmem:[%s1 + $0x1788] sm:$0xff]
    %v782 = vld [vmem:[%s1 + $0x1790] sm:$0xff]
    %v783 = vld [vmem:[%s1 + $0x1798] sm:$0xff]
    %v784 = vld [vmem:[%s1 + $0x17a0] sm:$0xff]
    %v785 = vld [vmem:[%s1 + $0x17a8] sm:$0xff]
    %v786 = vld [vmem:[%s1 + $0x17b0] sm:$0xff]
    %v787 = vld [vmem:[%s1 + $0x17b8] sm:$0xff]
    %v788 = vld [vmem:[%s1 + $0x17c0] sm:$0xff]
    %v789 = vld [vmem:[%s1 + $0x17c8] sm:$0xff]
    %v790 = vld [vmem:[%s1 + $0x17d0] sm:$0xff]
    %v791 = vld [vmem:[%s1 + $0x17d8] sm:$0xff]
    %v792 = vld [vmem:[%s1 + $0x17e0] sm:$0xff]
    %v793 = vld [vmem:[%s1 + $0x17e8] sm:$0xff]
    %v794 = vld [vmem:[%s1 + $0x17f0] sm:$0xff]
    %v795 = vld [vmem:[%s1 + $0x17f8] sm:$0xff]
    %v796 = vld [vmem:[%s1 + $0x1800] sm:$0xff]
    %v797 = vld [vmem:[%s1 + $0x1808] sm:$0xff]
    %v798 = vld [vmem:[%s1 + $0x1810] sm:$0xff]
    %v799 = vld [vmem:[%s1 + $0x1818] sm:$0xff]
    %v800 = vld [vmem:[%s1 + $0x1820] sm:$0xff]
    %v801 = vld [vmem:[%s1 + $0x1828] sm:$0xff]
    %v802 = vld [vmem:[%s1 + $0x1830] sm:$0xff]
    %v803 = vld [vmem:[%s1 + $0x1838] sm:$0xff]
    %v804 = vld [vmem:[%s1 + $0x1840] sm:$0xff]
    %v805 = vld [vmem:[%s1 + $0x1848] sm:$0xff]
    %v806 = vld [vmem:[%s1 + $0x1850] sm:$0xff]
    %v807 = vld [vmem:[%s1 + $0x1858] sm:$0xff]
    %v808 = vld [vmem:[%s1 + $0x1860] sm:$0xff]
    %v809 = vld [vmem:[%s1 + $0x1868] sm:$0xff]
    %v810 = vld [vmem:[%s1 + $0x1870] sm:$0xff]
    %v811 = vld [vmem:[%s1 + $0x1878] sm:$0xff]
    %v812 = vld [vmem:[%s1 + $0x1880] sm:$0xff]
    %v813 = vld [vmem:[%s1 + $0x1888] sm:$0xff]
    %v814 = vld [vmem:[%s1 + $0x1890] sm:$0xff]
    %v815 = vld [vmem:[%s1 + $0x1898] sm:$0xff]
    %v816 = vld [vmem:[%s1 + $0x18a0] sm:$0xff]
    %v817 = vld [vmem:[%s1 + $0x18a8] sm:$0xff]
    %v818 = vld [vmem:[%s1 + $0x18b0] sm:$0xff]
    %v819 = vld [vmem:[%s1 + $0x18b8] sm:$0xff]
    %v820 = vld [vmem:[%s1 + $0x18c0] sm:$0xff]
    %v821 = vld [vmem:[%s1 + $0x18c8] sm:$0xff]
    %v822 = vld [vmem:[%s1 + $0x18d0] sm:$0xff]
    %v823 = vld [vmem:[%s1 + $0x18d8] sm:$0xff]
    %v824 = vld [vmem:[%s1 + $0x18e0] sm:$0xff]
    %v825 = vld [vmem:[%s1 + $0x18e8] sm:$0xff]
    %v826 = vld [vmem:[%s1 + $0x18f0] sm:$0xff]
    %v827 = vld [vmem:[%s1 + $0x18f8] sm:$0xff]
    %v828 = vld [vmem:[%s1 + $0x1900] sm:$0xff]
    %v829 = vld [vmem:[%s1 + $0x1908] sm:$0xff]
    %v830 = vld [vmem:[%s1 + $0x1910] sm:$0xff]
    %v831 = vld [vmem:[%s1 + $0x1918] sm:$0xff]
    %v832 = vld [vmem:[%s1 + $0x1920] sm:$0xff]
    %v833 = vld [vmem:[%s1 + $0x1928] sm:$0xff]
    %v834 = vld [vmem:[%s1 + $0x1930] sm:$0xff]
    %v835 = vld [vmem:[%s1 + $0x1938] sm:$0xff]
    %v836 = vld [vmem:[%s1 + $0x1940] sm:$0xff]
    %v837 = vld [vmem:[%s1 + $0x1948] sm:$0xff]
    %v838 = vld [vmem:[%s1 + $0x1950] sm:$0xff]
    %v839 = vld [vmem:[%s1 + $0x1958] sm:$0xff]
    %v840 = vld [vmem:[%s1 + $0x1960] sm:$0xff]
    %v841 = vld [vmem:[%s1 + $0x1968] sm:$0xff]
    %v842 = vld [vmem:[%s1 + $0x1970] sm:$0xff]
    %v843 = vld [vmem:[%s1 + $0x1978] sm:$0xff]
    %v844 = vld [vmem:[%s1 + $0x1980] sm:$0xff]
    %v845 = vld [vmem:[%s1 + $0x1988] sm:$0xff]
    %v846 = vld [vmem:[%s1 + $0x1990] sm:$0xff]
    %v847 = vld [vmem:[%s1 + $0x1998] sm:$0xff]
    %v848 = vld [vmem:[%s1 + $0x19a0] sm:$0xff]
    %v849 = vld [vmem:[%s1 + $0x19a8] sm:$0xff]
    %v850 = vld [vmem:[%s1 + $0x19b0] sm:$0xff]
    %v851 = vld [vmem:[%s1 + $0x19b8] sm:$0xff]
    %v852 = vld [vmem:[%s1 + $0x19c0] sm:$0xff]
    %v853 = vld [vmem:[%s1 + $0x19c8] sm:$0xff]
    %v854 = vld [vmem:[%s1 + $0x19d0] sm:$0xff]
    %v855 = vld [vmem:[%s1 + $0x19d8] sm:$0xff]
    %v856 = vld [vmem:[%s1 + $0x19e0] sm:$0xff]
    %v857 = vld [vmem:[%s1 + $0x19e8] sm:$0xff]
    %v858 = vld [vmem:[%s1 + $0x19f0] sm:$0xff]
    %v859 = vld [vmem:[%s1 + $0x19f8] sm:$0xff]
    %v860 = vld [vmem:[%s1 + $0x1a00] sm:$0xff]
    %v861 = vld [vmem:[%s1 + $0x1a08] sm:$0xff]
    %v862 = vld [vmem:[%s1 + $0x1a10] sm:$0xff]
    %v863 = vld [vmem:[%s1 + $0x1a18] sm:$0xff]
    %v864 = vld [vmem:[%s1 + $0x1a20] sm:$0xff]
    %v865 = vld [vmem:[%s1 + $0x1a28] sm:$0xff]
    %v866 = vld [vmem:[%s1 + $0x1a30] sm:$0xff]
    %v867 = vld [vmem:[%s1 + $0x1a38] sm:$0xff]
    %v868 = vld [vmem:[%s1 + $0x1a40] sm:$0xff]
    %v869 = vld [vmem:[%s1 + $0x1a48] sm:$0xff]
    %v870 = vld [vmem:[%s1 + $0x1a50] sm:$0xff]
    %v871 = vld [vmem:[%s1 + $0x1a58] sm:$0xff]
    %v872 = vld [vmem:[%s1 + $0x1a60] sm:$0xff]
    %v873 = vld [vmem:[%s1 + $0x1a68] sm:$0xff]
    %v874 = vld [vmem:[%s1 + $0x1a70] sm:$0xff]
    %v875 = vld [vmem:[%s1 + $0x1a78] sm:$0xff]
    %v876 = vld [vmem:[%s1 + $0x1a80] sm:$0xff]
    %v877 = vld [vmem:[%s1 + $0x1a88] sm:$0xff]
    %v878 = vld [vmem:[%s1 + $0x1a90] sm:$0xff]
    %v879 = vld [vmem:[%s1 + $0x1a98] sm:$0xff]
    %v880 = vld [vmem:[%s1 + $0x1aa0] sm:$0xff]
    %v881 = vld [vmem:[%s1 + $0x1aa8] sm:$0xff]
    %v882 = vld [vmem:[%s1 + $0x1ab0] sm:$0xff]
    %v883 = vld [vmem:[%s1 + $0x1ab8] sm:$0xff]
    %v884 = vld [vmem:[%s1 + $0x1ac0] sm:$0xff]
    %v885 = vld [vmem:[%s1 + $0x1ac8] sm:$0xff]
    %v886 = vld [vmem:[%s1 + $0x1ad0] sm:$0xff]
    %v887 = vld [vmem:[%s1 + $0x1ad8] sm:$0xff]
    %v888 = vld [vmem:[%s1 + $0x1ae0] sm:$0xff]
    %v889 = vld [vmem:[%s1 + $0x1ae8] sm:$0xff]
    %v890 = vld [vmem:[%s1 + $0x1af0] sm:$0xff]
    %v891 = vld [vmem:[%s1 + $0x1af8] sm:$0xff]
    %v892 = vld [vmem:[%s1 + $0x1b00] sm:$0xff]
    %v893 = vld [vmem:[%s1 + $0x1b08] sm:$0xff]
    %v894 = vld [vmem:[%s1 + $0x1b10] sm:$0xff]
    %v895 = vld [vmem:[%s1 + $0x1b18] sm:$0xff]
    %v896 = vld [vmem:[%s1 + $0x1b20] sm:$0xff]
    %v897 = vld [vmem:[%s1 + $0x1b28] sm:$0xff]
    %v898 = vld [vmem:[%s1 + $0x1b30] sm:$0xff]
    %v899 = vld [vmem:[%s1 + $0x1b38] sm:$0xff]
    %v900 = vld [vmem:[%s1 + $0x1b40] sm:$0xff]
    %v901 = vld [vmem:[%s1 + $0x1b48] sm:$0xff]
    %v902 = vld [vmem:[%s1 + $0x1b50] sm:$0xff]
    %v903 = vld [vmem:[%s1 + $0x1b58] sm:$0xff]
    %v904 = vld [vmem:[%s1 + $0x1b60] sm:$0xff]
    %v905 = vld [vmem:[%s1 + $0x1b68] sm:$0xff]
    %v906 = vld [vmem:[%s1 + $0x1b70] sm:$0xff]
    %v907 = vld [vmem:[%s1 + $0x1b78] sm:$0xff]
    %v908 = vld [vmem:[%s1 + $0x1b80] sm:$0xff]
    %v909 = vld [vmem:[%s1 + $0x1b88] sm:$0xff]
    %v910 = vld [vmem:[%s1 + $0x1b90] sm:$0xff]
    %v911 = vld [vmem:[%s1 + $0x1b98] sm:$0xff]
    %v912 = vld [vmem:[%s1 + $0x1ba0] sm:$0xff]
    %v913 = vld [vmem:[%s1 + $0x1ba8] sm:$0xff]
    %v914 = vld [vmem:[%s1 + $0x1bb0] sm:$0xff]
    %v915 = vld [vmem:[%s1 + $0x1bb8] sm:$0xff]
    %v916 = vld [vmem:[%s1 + $0x1bc0] sm:$0xff]
    %v917 = vld [vmem:[%s1 + $0x1bc8] sm:$0xff]
    %v918 = vld [vmem:[%s1 + $0x1bd0] sm:$0xff]
    %v919 = vld [vmem:[%s1 + $0x1bd8] sm:$0xff]
    %v920 = vld [vmem:[%s1 + $0x1be0] sm:$0xff]
    %v921 = vld [vmem:[%s1 + $0x1be8] sm:$0xff]
    %v922 = vld [vmem:[%s1 + $0x1bf0] sm:$0xff]
    %v923 = vld [vmem:[%s1 + $0x1bf8] sm:$0xff]
    %v924 = vld [vmem:[%s1 + $0x1c00] sm:$0xff]
    %v925 = vld [vmem:[%s1 + $0x1c08] sm:$0xff]
    %v926 = vld [vmem:[%s1 + $0x1c10] sm:$0xff]
    %v927 = vld [vmem:[%s1 + $0x1c18] sm:$0xff]
    %v928 = vld [vmem:[%s1 + $0x1c20] sm:$0xff]
    %v929 = vld [vmem:[%s1 + $0x1c28] sm:$0xff]
    %v930 = vld [vmem:[%s1 + $0x1c30] sm:$0xff]
    %v931 = vld [vmem:[%s1 + $0x1c38] sm:$0xff]
    %v932 = vld [vmem:[%s1 + $0x1c40] sm:$0xff]
    %v933 = vld [vmem:[%s1 + $0x1c48] sm:$0xff]
    %v934 = vld [vmem:[%s1 + $0x1c50] sm:$0xff]
    %v935 = vld [vmem:[%s1 + $0x1c58] sm:$0xff]
    %v936 = vld [vmem:[%s1 + $0x1c60] sm:$0xff]
    %v937 = vld [vmem:[%s1 + $0x1c68] sm:$0xff]
    %v938 = vld [vmem:[%s1 + $0x1c70] sm:$0xff]
    %v939 = vld [vmem:[%s1 + $0x1c78] sm:$0xff]
    %v940 = vld [vmem:[%s1 + $0x1c80] sm:$0xff]
    %v941 = vld [vmem:[%s1 + $0x1c88] sm:$0xff]
    %v942 = vld [vmem:[%s1 + $0x1c90] sm:$0xff]
    %v943 = vld [vmem:[%s1 + $0x1c98] sm:$0xff]
    %v944 = vld [vmem:[%s1 + $0x1ca0] sm:$0xff]
    %v945 = vld [vmem:[%s1 + $0x1ca8] sm:$0xff]
    %v946 = vld [vmem:[%s1 + $0x1cb0] sm:$0xff]
    %v947 = vld [vmem:[%s1 + $0x1cb8] sm:$0xff]
    %v948 = vld [vmem:[%s1 + $0x1cc0] sm:$0xff]
    %v949 = vld [vmem:[%s1 + $0x1cc8] sm:$0xff]
    %v950 = vld [vmem:[%s1 + $0x1cd0] sm:$0xff]
    %v951 = vld [vmem:[%s1 + $0x1cd8] sm:$0xff]
    %v952 = vld [vmem:[%s1 + $0x1ce0] sm:$0xff]
    %v953 = vld [vmem:[%s1 + $0x1ce8] sm:$0xff]
    %v954 = vld [vmem:[%s1 + $0x1cf0] sm:$0xff]
    %v955 = vld [vmem:[%s1 + $0x1cf8] sm:$0xff]
    %v956 = vld [vmem:[%s1 + $0x1d00] sm:$0xff]
    %v957 = vld [vmem:[%s1 + $0x1d08] sm:$0xff]
    %v958 = vld [vmem:[%s1 + $0x1d10] sm:$0xff]
    %v959 = vld [vmem:[%s1 + $0x1d18] sm:$0xff]
    %v960 = vld [vmem:[%s1 + $0x1d20] sm:$0xff]
    %v961 = vld [vmem:[%s1 + $0x1d28] sm:$0xff]
    %v962 = vld [vmem:[%s1 + $0x1d30] sm:$0xff]
    %v963 = vld [vmem:[%s1 + $0x1d38] sm:$0xff]
    %v964 = vld [vmem:[%s1 + $0x1d40] sm:$0xff]
    %v965 = vld [vmem:[%s1 + $0x1d48] sm:$0xff]
    %v966 = vld [vmem:[%s1 + $0x1d50] sm:$0xff]
    %v967 = vld [vmem:[%s1 + $0x1d58] sm:$0xff]
    %v968 = vld [vmem:[%s1 + $0x1d60] sm:$0xff]
    %v969 = vld [vmem:[%s1 + $0x1d68] sm:$0xff]
    %v970 = vld [vmem:[%s1 + $0x1d70] sm:$0xff]
    %v971 = vld [vmem:[%s1 + $0x1d78] sm:$0xff]
    %v972 = vld [vmem:[%s1 + $0x1d80] sm:$0xff]
    %v973 = vld [vmem:[%s1 + $0x1d88] sm:$0xff]
    %v974 = vld [vmem:[%s1 + $0x1d90] sm:$0xff]
    %v975 = vld [vmem:[%s1 + $0x1d98] sm:$0xff]
    %v976 = vld [vmem:[%s1 + $0x1da0] sm:$0xff]
    %v977 = vld [vmem:[%s1 + $0x1da8] sm:$0xff]
    %v978 = vld [vmem:[%s1 + $0x1db0] sm:$0xff]
    %v979 = vld [vmem:[%s1 + $0x1db8] sm:$0xff]
    %v980 = vld [vmem:[%s1 + $0x1dc0] sm:$0xff]
    %v981 = vld [vmem:[%s1 + $0x1dc8] sm:$0xff]
    %v982 = vld [vmem:[%s1 + $0x1dd0] sm:$0xff]
    %v983 = vld [vmem:[%s1 + $0x1dd8] sm:$0xff]
    %v984 = vld [vmem:[%s1 + $0x1de0] sm:$0xff]
    %v985 = vld [vmem:[%s1 + $0x1de8] sm:$0xff]
    %v986 = vld [vmem:[%s1 + $0x1df0] sm:$0xff]
    %v987 = vld [vmem:[%s1 + $0x1df8] sm:$0xff]
    %v988 = vld [vmem:[%s1 + $0x1e00] sm:$0xff]
    %v989 = vld [vmem:[%s1 + $0x1e08] sm:$0xff]
    %v990 = vld [vmem:[%s1 + $0x1e10] sm:$0xff]
    %v991 = vld [vmem:[%s1 + $0x1e18] sm:$0xff]
    %v992 = vld [vmem:[%s1 + $0x1e20] sm:$0xff]
    %v993 = vld [vmem:[%s1 + $0x1e28] sm:$0xff]
    %v994 = vld [vmem:[%s1 + $0x1e30] sm:$0xff]
    %v995 = vld [vmem:[%s1 + $0x1e38] sm:$0xff]
    %v996 = vld [vmem:[%s1 + $0x1e40] sm:$0xff]
    %v997 = vld [vmem:[%s1 + $0x1e48] sm:$0xff]
    %v998 = vld [vmem:[%s1 + $0x1e50] sm:$0xff]
    %v999 = vld [vmem:[%s1 + $0x1e58] sm:$0xff]
    %v1000 = vld [vmem:[%s1 + $0x1e60] sm:$0xff]
    %v1001 = vld [vmem:[%s1 + $0x1e68] sm:$0xff]
    %v1002 = vld [vmem:[%s1 + $0x1e70] sm:$0xff]
    %v1003 = vld [vmem:[%s1 + $0x1e78] sm:$0xff]
    %v1004 = vld [vmem:[%s1 + $0x1e80] sm:$0xff]
    %v1005 = vld [vmem:[%s1 + $0x1e88] sm:$0xff]
    %v1006 = vld [vmem:[%s1 + $0x1e90] sm:$0xff]
    %v1007 = vld [vmem:[%s1 + $0x1e98] sm:$0xff]
    %v1008 = vld [vmem:[%s1 + $0x1ea0] sm:$0xff]
    %v1009 = vld [vmem:[%s1 + $0x1ea8] sm:$0xff]
    %v1010 = vld [vmem:[%s1 + $0x1eb0] sm:$0xff]
    %v1011 = vld [vmem:[%s1 + $0x1eb8] sm:$0xff]
    %v1012 = vld [vmem:[%s1 + $0x1ec0] sm:$0xff]
    %v1013 = vld [vmem:[%s1 + $0x1ec8] sm:$0xff]
    %v1014 = vld [vmem:[%s1 + $0x1ed0] sm:$0xff]
    %v1015 = vld [vmem:[%s1 + $0x1ed8] sm:$0xff]
    %v1016 = vld [vmem:[%s1 + $0x1ee0] sm:$0xff]
    %v1017 = vld [vmem:[%s1 + $0x1ee8] sm:$0xff]
    %v1018 = vld [vmem:[%s1 + $0x1ef0] sm:$0xff]
    %v1019 = vld [vmem:[%s1 + $0x1ef8] sm:$0xff]
    %v1020 = vld [vmem:[%s1 + $0x1f00] sm:$0xff]
    %v1021 = vld [vmem:[%s1 + $0x1f08] sm:$0xff]
    %v1022 = vld [vmem:[%s1 + $0x1f10] sm:$0xff]
    %v1023 = vld [vmem:[%s1 + $0x1f18] sm:$0xff]
    %v1024 = vld [vmem:[%s1 + $0x1f20] sm:$0xff]
    %v1025 = vld [vmem:[%s1 + $0x1f28] sm:$0xff]
    %v1026 = vld [vmem:[%s1 + $0x1f30] sm:$0xff]
    %v1027 = vld [vmem:[%s1 + $0x1f38] sm:$0xff]
    %v1028 = vld [vmem:[%s1 + $0x1f40] sm:$0xff]
    %v1029 = vld [vmem:[%s1 + $0x1f48] sm:$0xff]
    %v1030 = vld [vmem:[%s1 + $0x1f50] sm:$0xff]
    %v1031 = vld [vmem:[%s1 + $0x1f58] sm:$0xff]
    %v1032 = vld [vmem:[%s1 + $0x1f60] sm:$0xff]
    %v1033 = vld [vmem:[%s1 + $0x1f68] sm:$0xff]
    %v1034 = vld [vmem:[%s1 + $0x1f70] sm:$0xff]
    %v1035 = vld [vmem:[%s1 + $0x1f78] sm:$0xff]
    %v1036 = vld [vmem:[%s1 + $0x1f80] sm:$0xff]
    %v1037 = vld [vmem:[%s1 + $0x1f88] sm:$0xff]
    %v1038 = vld [vmem:[%s1 + $0x1f90] sm:$0xff]
    %v1039 = vld [vmem:[%s1 + $0x1f98] sm:$0xff]
    %v1040 = vld [vmem:[%s1 + $0x1fa0] sm:$0xff]
    %v1041 = vld [vmem:[%s1 + $0x1fa8] sm:$0xff]
    %v1042 = vld [vmem:[%s1 + $0x1fb0] sm:$0xff]
    %v1043 = vld [vmem:[%s1 + $0x1fb8] sm:$0xff]
    %v1044 = vld [vmem:[%s1 + $0x1fc0] sm:$0xff]
    %v1045 = vld [vmem:[%s1 + $0x1fc8] sm:$0xff]
    %v1046 = vld [vmem:[%s1 + $0x1fd0] sm:$0xff]
    %v1047 = vld [vmem:[%s1 + $0x1fd8] sm:$0xff]
    %v1048 = vld [vmem:[%s1 + $0x1fe0] sm:$0xff]
    %v1049 = vld [vmem:[%s1 + $0x1fe8] sm:$0xff]
    %v1050 = vld [vmem:[%s1 + $0x1ff0] sm:$0xff]
    %v1051 = vld [vmem:[%s1 + $0x1ff8] sm:$0xff]
    %v1052 = vld [vmem:[%s1 + $0x2000] sm:$0xff]
    %v1053 = vld [vmem:[%s1 + $0x2008] sm:$0xff]
    %v1054 = vld [vmem:[%s1 + $0x2010] sm:$0xff]
    %v1055 = vld [vmem:[%s1 + $0x2018] sm:$0xff]
    %v1056 = vld [vmem:[%s1 + $0x2020] sm:$0xff]
    %v1057 = vld [vmem:[%s1 + $0x2028] sm:$0xff]
    %v1058 = vld [vmem:[%s1 + $0x2030] sm:$0xff]
    %v1059 = vld [vmem:[%s1 + $0x2038] sm:$0xff]
    %v1060 = vld [vmem:[%s1 + $0x2040] sm:$0xff]
    %v1061 = vld [vmem:[%s1 + $0x2048] sm:$0xff]
    %v1062 = vld [vmem:[%s1 + $0x2050] sm:$0xff]
    %v1063 = vld [vmem:[%s1 + $0x2058] sm:$0xff]
    %v1064 = vld [vmem:[%s1 + $0x2060] sm:$0xff]
    %v1065 = vld [vmem:[%s1 + $0x2068] sm:$0xff]
    %v1066 = vld [vmem:[%s1 + $0x2070] sm:$0xff]
    %v1067 = vld [vmem:[%s1 + $0x2078] sm:$0xff]
    %v1068 = vld [vmem:[%s1 + $0x2080] sm:$0xff]
    %v1069 = vld [vmem:[%s1 + $0x2088] sm:$0xff]
    %v1070 = vld [vmem:[%s1 + $0x2090] sm:$0xff]
    %v1071 = vld [vmem:[%s1 + $0x2098] sm:$0xff]
    %v1072 = vld [vmem:[%s1 + $0x20a0] sm:$0xff]
    %v1073 = vld [vmem:[%s1 + $0x20a8] sm:$0xff]
    %v1074 = vld [vmem:[%s1 + $0x20b0] sm:$0xff]
    %v1075 = vld [vmem:[%s1 + $0x20b8] sm:$0xff]
    %v1076 = vld [vmem:[%s1 + $0x20c0] sm:$0xff]
    %v1077 = vld [vmem:[%s1 + $0x20c8] sm:$0xff]
    %v1078 = vld [vmem:[%s1 + $0x20d0] sm:$0xff]
    %v1079 = vld [vmem:[%s1 + $0x20d8] sm:$0xff]
    %v1080 = vld [vmem:[%s1 + $0x20e0] sm:$0xff]
    %v1081 = vld [vmem:[%s1 + $0x20e8] sm:$0xff]
    %v1082 = vld [vmem:[%s1 + $0x20f0] sm:$0xff]
    %v1083 = vld [vmem:[%s1 + $0x20f8] sm:$0xff]
    %v1084 = vld [vmem:[%s1 + $0x2100] sm:$0xff]
    %v1085 = vld [vmem:[%s1 + $0x2108] sm:$0xff]
    %v1086 = vld [vmem:[%s1 + $0x2110] sm:$0xff]
    %v1087 = vld [vmem:[%s1 + $0x2118] sm:$0xff]
    %v1088 = vld [vmem:[%s1 + $0x2120] sm:$0xff]
    %v1089 = vld [vmem:[%s1 + $0x2128] sm:$0xff]
    %v1090 = vld [vmem:[%s1 + $0x2130] sm:$0xff]
    %v1091 = vld [vmem:[%s1 + $0x2138] sm:$0xff]
    %v1092 = vld [vmem:[%s1 + $0x2140] sm:$0xff]
    %v1093 = vld [vmem:[%s1 + $0x2148] sm:$0xff]
    %v1094 = vld [vmem:[%s1 + $0x2150] sm:$0xff]
    %v1095 = vld [vmem:[%s1 + $0x2158] sm:$0xff]
    %v1096 = vld [vmem:[%s1 + $0x2160] sm:$0xff]
    %v1097 = vld [vmem:[%s1 + $0x2168] sm:$0xff]
    %v1098 = vld [vmem:[%s1 + $0x2170] sm:$0xff]
    %v1099 = vld [vmem:[%s1 + $0x2178] sm:$0xff]
    %v1100 = vld [vmem:[%s1 + $0x2180] sm:$0xff]
    %v1101 = vld [vmem:[%s1 + $0x2188] sm:$0xff]
    %v1102 = vld [vmem:[%s1 + $0x2190] sm:$0xff]
    %v1103 = vld [vmem:[%s1 + $0x2198] sm:$0xff]
    %v1104 = vld [vmem:[%s1 + $0x21a0] sm:$0xff]
    %v1105 = vld [vmem:[%s1 + $0x21a8] sm:$0xff]
    %v1106 = vld [vmem:[%s1 + $0x21b0] sm:$0xff]
    %v1107 = vld [vmem:[%s1 + $0x21b8] sm:$0xff]
    %v1108 = vld [vmem:[%s1 + $0x21c0] sm:$0xff]
    %v1109 = vld [vmem:[%s1 + $0x21c8] sm:$0xff]
    %v1110 = vld [vmem:[%s1 + $0x21d0] sm:$0xff]
    %v1111 = vld [vmem:[%s1 + $0x21d8] sm:$0xff]
    %v1112 = vld [vmem:[%s1 + $0x21e0] sm:$0xff]
    %v1113 = vld [vmem:[%s1 + $0x21e8] sm:$0xff]
    %v1114 = vld [vmem:[%s1 + $0x21f0] sm:$0xff]
    %v1115 = vld [vmem:[%s1 + $0x21f8] sm:$0xff]
    %v1116 = vld [vmem:[%s1 + $0x2200] sm:$0xff]
    %v1117 = vld [vmem:[%s1 + $0x2208] sm:$0xff]
    %v1118 = vld [vmem:[%s1 + $0x2210] sm:$0xff]
    %v1119 = vld [vmem:[%s1 + $0x2218] sm:$0xff]
    %v1120 = vld [vmem:[%s1 + $0x2220] sm:$0xff]
    %v1121 = vld [vmem:[%s1 + $0x2228] sm:$0xff]
    %v1122 = vld [vmem:[%s1 + $0x2230] sm:$0xff]
    %v1123 = vld [vmem:[%s1 + $0x2238] sm:$0xff]
    %v1124 = vld [vmem:[%s1 + $0x2240] sm:$0xff]
    %v1125 = vld [vmem:[%s1 + $0x2248] sm:$0xff]
    %v1126 = vld [vmem:[%s1 + $0x2250] sm:$0xff]
    %v1127 = vld [vmem:[%s1 + $0x2258] sm:$0xff]
    %v1128 = vld [vmem:[%s1 + $0x2260] sm:$0xff]
    %v1129 = vld [vmem:[%s1 + $0x2268] sm:$0xff]
    %v1130 = vld [vmem:[%s1 + $0x2270] sm:$0xff]
    %v1131 = vld [vmem:[%s1 + $0x2278] sm:$0xff]
    %v1132 = vld [vmem:[%s1 + $0x2280] sm:$0xff]
    %v1133 = vld [vmem:[%s1 + $0x2288] sm:$0xff]
    %v1134 = vld [vmem:[%s1 + $0x2290] sm:$0xff]
    %v1135 = vld [vmem:[%s1 + $0x2298] sm:$0xff]
    %v1136 = vld [vmem:[%s1 + $0x22a0] sm:$0xff]
    %v1137 = vld [vmem:[%s1 + $0x22a8] sm:$0xff]
    %v1138 = vld [vmem:[%s1 + $0x22b0] sm:$0xff]
    %v1139 = vld [vmem:[%s1 + $0x22b8] sm:$0xff]
    %v1140 = vld [vmem:[%s1 + $0x22c0] sm:$0xff]
    %v1141 = vld [vmem:[%s1 + $0x22c8] sm:$0xff]
    %v1142 = vld [vmem:[%s1 + $0x22d0] sm:$0xff]
    %v1143 = vld [vmem:[%s1 + $0x22d8] sm:$0xff]
    %v1144 = vld [vmem:[%s1 + $0x22e0] sm:$0xff]
    %v1145 = vld [vmem:[%s1 + $0x22e8] sm:$0xff]
    %v1146 = vld [vmem:[%s1 + $0x22f0] sm:$0xff]
    %v1147 = vld [vmem:[%s1 + $0x22f8] sm:$0xff]
    %v1148 = vld [vmem:[%s1 + $0x2300] sm:$0xff]
    %v1149 = vld [vmem:[%s1 + $0x2308] sm:$0xff]
    %v1150 = vld [vmem:[%s1 + $0x2310] sm:$0xff]
    %v1151 = vld [vmem:[%s1 + $0x2318] sm:$0xff]
    %v1152 = vld [vmem:[%s1 + $0x2320] sm:$0xff]
    %v1153 = vld [vmem:[%s1 + $0x2328] sm:$0xff]
    %v1154 = vld [vmem:[%s1 + $0x2330] sm:$0xff]
    %v1155 = vld [vmem:[%s1 + $0x2338] sm:$0xff]
    %v1156 = vld [vmem:[%s1 + $0x2340] sm:$0xff]
    %v1157 = vld [vmem:[%s1 + $0x2348] sm:$0xff]
    %v1158 = vld [vmem:[%s1 + $0x2350] sm:$0xff]
    %v1159 = vld [vmem:[%s1 + $0x2358] sm:$0xff]
    %v1160 = vld [vmem:[%s1 + $0x2360] sm:$0xff]
    %v1161 = vld [vmem:[%s1 + $0x2368] sm:$0xff]
    %v1162 = vld [vmem:[%s1 + $0x2370] sm:$0xff]
    %v1163 = vld [vmem:[%s1 + $0x2378] sm:$0xff]
    %v1164 = vld [vmem:[%s1 + $0x2380] sm:$0xff]
    %v1165 = vld [vmem:[%s1 + $0x2388] sm:$0xff]
    %v1166 = vld [vmem:[%s1 + $0x2390] sm:$0xff]
    %v1167 = vld [vmem:[%s1 + $0x2398] sm:$0xff]
    %v1168 = vld [vmem:[%s1 + $0x23a0] sm:$0xff]
    %v1169 = vld [vmem:[%s1 + $0x23a8] sm:$0xff]
    %v1170 = vld [vmem:[%s1 + $0x23b0] sm:$0xff]
    %v1171 = vld [vmem:[%s1 + $0x23b8] sm:$0xff]
    %v1172 = vld [vmem:[%s1 + $0x23c0] sm:$0xff]
    %v1173 = vld [vmem:[%s1 + $0x23c8] sm:$0xff]
    %v1174 = vld [vmem:[%s1 + $0x23d0] sm:$0xff]
    %v1175 = vld [vmem:[%s1 + $0x23d8] sm:$0xff]
    %v1176 = vld [vmem:[%s1 + $0x23e0] sm:$0xff]
    %v1177 = vld [vmem:[%s1 + $0x23e8] sm:$0xff]
    %v1178 = vld [vmem:[%s1 + $0x23f0] sm:$0xff]
    %v1179 = vld [vmem:[%s1 + $0x23f8] sm:$0xff]
    %v1183 = vcombine.high %v25, %v25
    %v1185 = vunpack.c.l.s4 1966171168
    %v1186 = vunpack.c.0.s8 %v1185
    %v1187 = vlaneseq
    %v1188 = vshrl.u32 %v1187, 7
    %v1189 = vsub.s32 %v1186, %v1188
    %v1190 = vrot.slane %v25, %v1189
    %v1192 = vunpack.c.l.s4 1966171168
    %v1193 = vunpack.c.0.s8 %v1192
    %v1194 = vlaneseq
    %v1195 = vshrl.u32 %v1194, 7
    %v1196 = vsub.s32 %v1193, %v1195
    %v1197 = vrot.slane %v1183, %v1196
    %v1198 = vcombine.high %v1190, %v1190
    %v1199 = vcombine.high %v1197, %v1197
    %v1201 = vunpack.c.l.s4 1966171168
    %v1202 = vunpack.c.0.s8 %v1201
    %v1203 = vlaneseq
    %v1204 = vshrl.u32 %v1203, 7
    %v1205 = vsub.s32 %v1202, %v1204
    %v1206 = vrot.slane %v1190, %v1205
    %v1208 = vunpack.c.l.s4 1966171168
    %v1209 = vunpack.c.0.s8 %v1208
    %v1210 = vlaneseq
    %v1211 = vshrl.u32 %v1210, 7
    %v1212 = vsub.s32 %v1209, %v1211
    %v1213 = vrot.slane %v1197, %v1212
    %v1215 = vunpack.c.l.s4 1966171168
    %v1216 = vunpack.c.0.s8 %v1215
    %v1217 = vlaneseq
    %v1218 = vshrl.u32 %v1217, 7
    %v1219 = vsub.s32 %v1216, %v1218
    %v1220 = vrot.slane %v1198, %v1219
    %v1222 = vunpack.c.l.s4 1966171168
    %v1223 = vunpack.c.0.s8 %v1222
    %v1224 = vlaneseq
    %v1225 = vshrl.u32 %v1224, 7
    %v1226 = vsub.s32 %v1223, %v1225
    %v1227 = vrot.slane %v1199, %v1226
    %v1228 = vcombine.high %v1206, %v1206
    %v1229 = vcombine.high %v1213, %v1213
    %v1230 = vcombine.high %v1220, %v1220
    %v1231 = vcombine.high %v1227, %v1227
    %v1232 = vcombine.high %v26, %v26
    %v1234 = vunpack.c.l.s4 1966171168
    %v1235 = vunpack.c.0.s8 %v1234
    %v1236 = vlaneseq
    %v1237 = vshrl.u32 %v1236, 7
    %v1238 = vsub.s32 %v1235, %v1237
    %v1239 = vrot.slane %v26, %v1238
    %v1241 = vunpack.c.l.s4 1966171168
    %v1242 = vunpack.c.0.s8 %v1241
    %v1243 = vlaneseq
    %v1244 = vshrl.u32 %v1243, 7
    %v1245 = vsub.s32 %v1242, %v1244
    %v1246 = vrot.slane %v1232, %v1245
    %v1247 = vcombine.high %v1239, %v1239
    %v1248 = vcombine.high %v1246, %v1246
    %v1250 = vunpack.c.l.s4 1966171168
    %v1251 = vunpack.c.0.s8 %v1250
    %v1252 = vlaneseq
    %v1253 = vshrl.u32 %v1252, 7
    %v1254 = vsub.s32 %v1251, %v1253
    %v1255 = vrot.slane %v1239, %v1254
    %v1257 = vunpack.c.l.s4 1966171168
    %v1258 = vunpack.c.0.s8 %v1257
    %v1259 = vlaneseq
    %v1260 = vshrl.u32 %v1259, 7
    %v1261 = vsub.s32 %v1258, %v1260
    %v1262 = vrot.slane %v1246, %v1261
    %v1264 = vunpack.c.l.s4 1966171168
    %v1265 = vunpack.c.0.s8 %v1264
    %v1266 = vlaneseq
    %v1267 = vshrl.u32 %v1266, 7
    %v1268 = vsub.s32 %v1265, %v1267
    %v1269 = vrot.slane %v1247, %v1268
    %v1271 = vunpack.c.l.s4 1966171168
    %v1272 = vunpack.c.0.s8 %v1271
    %v1273 = vlaneseq
    %v1274 = vshrl.u32 %v1273, 7
    %v1275 = vsub.s32 %v1272, %v1274
    %v1276 = vrot.slane %v1248, %v1275
    %v1277 = vcombine.high %v1255, %v1255
    %v1278 = vcombine.high %v1262, %v1262
    %v1279 = vcombine.high %v1269, %v1269
    %v1280 = vcombine.high %v1276, %v1276
    %v1282 = vunpack.c.l.s4 1966171168
    %v1283 = vunpack.c.0.s8 %v1282
    %v1284 = vlaneseq
    %v1285 = vshrl.u32 %v1284, 7
    %v1286 = vsub.s32 %v1283, %v1285
    %v1287 = vrot.slane %v27, %v1286
    %v1288 = vcombine.high %v1287, %v1287
    %v1290 = vunpack.c.l.s4 1966171168
    %v1291 = vunpack.c.0.s8 %v1290
    %v1292 = vlaneseq
    %v1293 = vshrl.u32 %v1292, 7
    %v1294 = vsub.s32 %v1291, %v1293
    %v1295 = vrot.slane %v1287, %v1294
    %v1297 = vunpack.c.l.s4 1966171168
    %v1298 = vunpack.c.0.s8 %v1297
    %v1299 = vlaneseq
    %v1300 = vshrl.u32 %v1299, 7
    %v1301 = vsub.s32 %v1298, %v1300
    %v1302 = vrot.slane %v1288, %v1301
    %v2473 = vunpack.c.l.b16 %v28
    %v2474 = vunpack.c.h.b16 %v28
    %v2475 = vunpack.c.l.b16 %v29
    %v2476 = vunpack.c.h.b16 %v29
    %v2477 = vunpack.c.l.b16 %v30
    %v2478 = vunpack.c.h.b16 %v30
    %v2479 = vunpack.c.l.b16 %v31
    %v2480 = vunpack.c.h.b16 %v31
    %v2481 = vunpack.c.l.b16 %v32
    %v2482 = vunpack.c.h.b16 %v32
    %v2483 = vunpack.c.l.b16 %v33
    %v2484 = vunpack.c.h.b16 %v33
    %v2485 = vunpack.c.l.b16 %v34
    %v2486 = vunpack.c.h.b16 %v34
    %v2487 = vunpack.c.l.b16 %v35
    %v2488 = vunpack.c.h.b16 %v35
    %v2489 = vunpack.c.l.b16 %v36
    %v2490 = vunpack.c.h.b16 %v36
    %v2491 = vunpack.c.l.b16 %v37
    %v2492 = vunpack.c.h.b16 %v37
    %v2493 = vunpack.c.l.b16 %v38
    %v2494 = vunpack.c.h.b16 %v38
    %v2495 = vunpack.c.l.b16 %v39
    %v2496 = vunpack.c.h.b16 %v39
    %v2497 = vunpack.c.l.b16 %v40
    %v2498 = vunpack.c.h.b16 %v40
    %v2499 = vunpack.c.l.b16 %v41
    %v2500 = vunpack.c.h.b16 %v41
    %v2501 = vunpack.c.l.b16 %v42
    %v2502 = vunpack.c.h.b16 %v42
    %v2503 = vunpack.c.l.b16 %v43
    %v2504 = vunpack.c.h.b16 %v43
    %v2505 = vunpack.c.l.b16 %v44
    %v2506 = vunpack.c.h.b16 %v44
    %v2507 = vunpack.c.l.b16 %v45
    %v2508 = vunpack.c.h.b16 %v45
    %v2509 = vunpack.c.l.b16 %v46
    %v2510 = vunpack.c.h.b16 %v46
    %v2511 = vunpack.c.l.b16 %v47
    %v2512 = vunpack.c.h.b16 %v47
    %v2513 = vunpack.c.l.b16 %v48
    %v2514 = vunpack.c.h.b16 %v48
    %v2515 = vunpack.c.l.b16 %v49
    %v2516 = vunpack.c.h.b16 %v49
    %v2517 = vunpack.c.l.b16 %v50
    %v2518 = vunpack.c.h.b16 %v50
    %v2519 = vunpack.c.l.b16 %v51
    %v2520 = vunpack.c.h.b16 %v51
    %v2521 = vunpack.c.l.b16 %v52
    %v2522 = vunpack.c.h.b16 %v52
    %v2523 = vunpack.c.l.b16 %v53
    %v2524 = vunpack.c.h.b16 %v53
    %v2525 = vunpack.c.l.b16 %v54
    %v2526 = vunpack.c.h.b16 %v54
    %v2527 = vunpack.c.l.b16 %v55
    %v2528 = vunpack.c.h.b16 %v55
    %v2529 = vunpack.c.l.b16 %v56
    %v2530 = vunpack.c.h.b16 %v56
    %v2531 = vunpack.c.l.b16 %v57
    %v2532 = vunpack.c.h.b16 %v57
    %v2533 = vunpack.c.l.b16 %v58
    %v2534 = vunpack.c.h.b16 %v58
    %v2535 = vunpack.c.l.b16 %v59
    %v2536 = vunpack.c.h.b16 %v59
    %v2537 = vunpack.c.l.b16 %v60
    %v2538 = vunpack.c.h.b16 %v60
    %v2539 = vunpack.c.l.b16 %v61
    %v2540 = vunpack.c.h.b16 %v61
    %v2541 = vunpack.c.l.b16 %v62
    %v2542 = vunpack.c.h.b16 %v62
    %v2543 = vunpack.c.l.b16 %v63
    %v2544 = vunpack.c.h.b16 %v63
    %v2545 = vunpack.c.l.b16 %v64
    %v2546 = vunpack.c.h.b16 %v64
    %v2547 = vunpack.c.l.b16 %v65
    %v2548 = vunpack.c.h.b16 %v65
    %v2549 = vunpack.c.l.b16 %v66
    %v2550 = vunpack.c.h.b16 %v66
    %v2551 = vunpack.c.l.b16 %v67
    %v2552 = vunpack.c.h.b16 %v67
    %v2553 = vunpack.c.l.b16 %v68
    %v2554 = vunpack.c.h.b16 %v68
    %v2555 = vunpack.c.l.b16 %v69
    %v2556 = vunpack.c.h.b16 %v69
    %v2557 = vunpack.c.l.b16 %v70
    %v2558 = vunpack.c.h.b16 %v70
    %v2559 = vunpack.c.l.b16 %v71
    %v2560 = vunpack.c.h.b16 %v71
    %v2561 = vunpack.c.l.b16 %v72
    %v2562 = vunpack.c.h.b16 %v72
    %v2563 = vunpack.c.l.b16 %v73
    %v2564 = vunpack.c.h.b16 %v73
    %v2565 = vunpack.c.l.b16 %v74
    %v2566 = vunpack.c.h.b16 %v74
    %v2567 = vunpack.c.l.b16 %v75
    %v2568 = vunpack.c.h.b16 %v75
    %v2569 = vunpack.c.l.b16 %v76
    %v2570 = vunpack.c.h.b16 %v76
    %v2571 = vunpack.c.l.b16 %v77
    %v2572 = vunpack.c.h.b16 %v77
    %v2573 = vunpack.c.l.b16 %v78
    %v2574 = vunpack.c.h.b16 %v78
    %v2575 = vunpack.c.l.b16 %v79
    %v2576 = vunpack.c.h.b16 %v79
    %v2577 = vunpack.c.l.b16 %v80
    %v2578 = vunpack.c.h.b16 %v80
    %v2579 = vunpack.c.l.b16 %v81
    %v2580 = vunpack.c.h.b16 %v81
    %v2581 = vunpack.c.l.b16 %v82
    %v2582 = vunpack.c.h.b16 %v82
    %v2583 = vunpack.c.l.b16 %v83
    %v2584 = vunpack.c.h.b16 %v83
    %v2585 = vunpack.c.l.b16 %v84
    %v2586 = vunpack.c.h.b16 %v84
    %v2587 = vunpack.c.l.b16 %v85
    %v2588 = vunpack.c.h.b16 %v85
    %v2589 = vunpack.c.l.b16 %v86
    %v2590 = vunpack.c.h.b16 %v86
    %v2591 = vunpack.c.l.b16 %v87
    %v2592 = vunpack.c.h.b16 %v87
    %v2593 = vunpack.c.l.b16 %v88
    %v2594 = vunpack.c.h.b16 %v88
    %v2595 = vunpack.c.l.b16 %v89
    %v2596 = vunpack.c.h.b16 %v89
    %v2597 = vunpack.c.l.b16 %v90
    %v2598 = vunpack.c.h.b16 %v90
    %v2599 = vunpack.c.l.b16 %v91
    %v2600 = vunpack.c.h.b16 %v91
    %v2601 = vunpack.c.l.b16 %v92
    %v2602 = vunpack.c.h.b16 %v92
    %v2603 = vunpack.c.l.b16 %v93
    %v2604 = vunpack.c.h.b16 %v93
    %v2605 = vunpack.c.l.b16 %v94
    %v2606 = vunpack.c.h.b16 %v94
    %v2607 = vunpack.c.l.b16 %v95
    %v2608 = vunpack.c.h.b16 %v95
    %v2609 = vunpack.c.l.b16 %v96
    %v2610 = vunpack.c.h.b16 %v96
    %v2611 = vunpack.c.l.b16 %v97
    %v2612 = vunpack.c.h.b16 %v97
    %v2613 = vunpack.c.l.b16 %v98
    %v2614 = vunpack.c.h.b16 %v98
    %v2615 = vunpack.c.l.b16 %v99
    %v2616 = vunpack.c.h.b16 %v99
    %v2617 = vunpack.c.l.b16 %v100
    %v2618 = vunpack.c.h.b16 %v100
    %v2619 = vunpack.c.l.b16 %v101
    %v2620 = vunpack.c.h.b16 %v101
    %v2621 = vunpack.c.l.b16 %v102
    %v2622 = vunpack.c.h.b16 %v102
    %v2623 = vunpack.c.l.b16 %v103
    %v2624 = vunpack.c.h.b16 %v103
    %v2625 = vunpack.c.l.b16 %v104
    %v2626 = vunpack.c.h.b16 %v104
    %v2627 = vunpack.c.l.b16 %v105
    %v2628 = vunpack.c.h.b16 %v105
    %v2629 = vunpack.c.l.b16 %v106
    %v2630 = vunpack.c.h.b16 %v106
    %v2631 = vunpack.c.l.b16 %v107
    %v2632 = vunpack.c.h.b16 %v107
    %v2633 = vunpack.c.l.b16 %v108
    %v2634 = vunpack.c.h.b16 %v108
    %v2635 = vunpack.c.l.b16 %v109
    %v2636 = vunpack.c.h.b16 %v109
    %v2637 = vunpack.c.l.b16 %v110
    %v2638 = vunpack.c.h.b16 %v110
    %v2639 = vunpack.c.l.b16 %v111
    %v2640 = vunpack.c.h.b16 %v111
    %v2641 = vunpack.c.l.b16 %v112
    %v2642 = vunpack.c.h.b16 %v112
    %v2643 = vunpack.c.l.b16 %v113
    %v2644 = vunpack.c.h.b16 %v113
    %v2645 = vunpack.c.l.b16 %v114
    %v2646 = vunpack.c.h.b16 %v114
    %v2647 = vunpack.c.l.b16 %v115
    %v2648 = vunpack.c.h.b16 %v115
    %v2649 = vunpack.c.l.b16 %v116
    %v2650 = vunpack.c.h.b16 %v116
    %v2651 = vunpack.c.l.b16 %v117
    %v2652 = vunpack.c.h.b16 %v117
    %v2653 = vunpack.c.l.b16 %v118
    %v2654 = vunpack.c.h.b16 %v118
    %v2655 = vunpack.c.l.b16 %v119
    %v2656 = vunpack.c.h.b16 %v119
    %v2657 = vunpack.c.l.b16 %v120
    %v2658 = vunpack.c.h.b16 %v120
    %v2659 = vunpack.c.l.b16 %v121
    %v2660 = vunpack.c.h.b16 %v121
    %v2661 = vunpack.c.l.b16 %v122
    %v2662 = vunpack.c.h.b16 %v122
    %v2663 = vunpack.c.l.b16 %v123
    %v2664 = vunpack.c.h.b16 %v123
    %v2665 = vunpack.c.l.b16 %v124
    %v2666 = vunpack.c.h.b16 %v124
    %v2667 = vunpack.c.l.b16 %v125
    %v2668 = vunpack.c.h.b16 %v125
    %v2669 = vunpack.c.l.b16 %v126
    %v2670 = vunpack.c.h.b16 %v126
    %v2671 = vunpack.c.l.b16 %v127
    %v2672 = vunpack.c.h.b16 %v127
    %v2673 = vunpack.c.l.b16 %v128
    %v2674 = vunpack.c.h.b16 %v128
    %v2675 = vunpack.c.l.b16 %v129
    %v2676 = vunpack.c.h.b16 %v129
    %v2677 = vunpack.c.l.b16 %v130
    %v2678 = vunpack.c.h.b16 %v130
    %v2679 = vunpack.c.l.b16 %v131
    %v2680 = vunpack.c.h.b16 %v131
    %v2681 = vunpack.c.l.b16 %v132
    %v2682 = vunpack.c.h.b16 %v132
    %v2683 = vunpack.c.l.b16 %v133
    %v2684 = vunpack.c.h.b16 %v133
    %v2685 = vunpack.c.l.b16 %v134
    %v2686 = vunpack.c.h.b16 %v134
    %v2687 = vunpack.c.l.b16 %v135
    %v2688 = vunpack.c.h.b16 %v135
    %v2689 = vunpack.c.l.b16 %v136
    %v2690 = vunpack.c.h.b16 %v136
    %v2691 = vunpack.c.l.b16 %v137
    %v2692 = vunpack.c.h.b16 %v137
    %v2693 = vunpack.c.l.b16 %v138
    %v2694 = vunpack.c.h.b16 %v138
    %v2695 = vunpack.c.l.b16 %v139
    %v2696 = vunpack.c.h.b16 %v139
    %v2697 = vunpack.c.l.b16 %v140
    %v2698 = vunpack.c.h.b16 %v140
    %v2699 = vunpack.c.l.b16 %v141
    %v2700 = vunpack.c.h.b16 %v141
    %v2701 = vunpack.c.l.b16 %v142
    %v2702 = vunpack.c.h.b16 %v142
    %v2703 = vunpack.c.l.b16 %v143
    %v2704 = vunpack.c.h.b16 %v143
    %v2705 = vunpack.c.l.b16 %v144
    %v2706 = vunpack.c.h.b16 %v144
    %v2707 = vunpack.c.l.b16 %v145
    %v2708 = vunpack.c.h.b16 %v145
    %v2709 = vunpack.c.l.b16 %v146
    %v2710 = vunpack.c.h.b16 %v146
    %v2711 = vunpack.c.l.b16 %v147
    %v2712 = vunpack.c.h.b16 %v147
    %v2713 = vunpack.c.l.b16 %v148
    %v2714 = vunpack.c.h.b16 %v148
    %v2715 = vunpack.c.l.b16 %v149
    %v2716 = vunpack.c.h.b16 %v149
    %v2717 = vunpack.c.l.b16 %v150
    %v2718 = vunpack.c.h.b16 %v150
    %v2719 = vunpack.c.l.b16 %v151
    %v2720 = vunpack.c.h.b16 %v151
    %v2721 = vunpack.c.l.b16 %v152
    %v2722 = vunpack.c.h.b16 %v152
    %v2723 = vunpack.c.l.b16 %v153
    %v2724 = vunpack.c.h.b16 %v153
    %v2725 = vunpack.c.l.b16 %v154
    %v2726 = vunpack.c.h.b16 %v154
    %v2727 = vunpack.c.l.b16 %v155
    %v2728 = vunpack.c.h.b16 %v155
    %v2729 = vunpack.c.l.b16 %v156
    %v2730 = vunpack.c.h.b16 %v156
    %v2731 = vunpack.c.l.b16 %v157
    %v2732 = vunpack.c.h.b16 %v157
    %v2733 = vunpack.c.l.b16 %v158
    %v2734 = vunpack.c.h.b16 %v158
    %v2735 = vunpack.c.l.b16 %v159
    %v2736 = vunpack.c.h.b16 %v159
    %v2737 = vunpack.c.l.b16 %v160
    %v2738 = vunpack.c.h.b16 %v160
    %v2739 = vunpack.c.l.b16 %v161
    %v2740 = vunpack.c.h.b16 %v161
    %v2741 = vunpack.c.l.b16 %v162
    %v2742 = vunpack.c.h.b16 %v162
    %v2743 = vunpack.c.l.b16 %v163
    %v2744 = vunpack.c.h.b16 %v163
    %v2745 = vunpack.c.l.b16 %v164
    %v2746 = vunpack.c.h.b16 %v164
    %v2747 = vunpack.c.l.b16 %v165
    %v2748 = vunpack.c.h.b16 %v165
    %v2749 = vunpack.c.l.b16 %v166
    %v2750 = vunpack.c.h.b16 %v166
    %v2751 = vunpack.c.l.b16 %v167
    %v2752 = vunpack.c.h.b16 %v167
    %v2753 = vunpack.c.l.b16 %v168
    %v2754 = vunpack.c.h.b16 %v168
    %v2755 = vunpack.c.l.b16 %v169
    %v2756 = vunpack.c.h.b16 %v169
    %v2757 = vunpack.c.l.b16 %v170
    %v2758 = vunpack.c.h.b16 %v170
    %v2759 = vunpack.c.l.b16 %v171
    %v2760 = vunpack.c.h.b16 %v171
    %v2761 = vunpack.c.l.b16 %v172
    %v2762 = vunpack.c.h.b16 %v172
    %v2763 = vunpack.c.l.b16 %v173
    %v2764 = vunpack.c.h.b16 %v173
    %v2765 = vunpack.c.l.b16 %v174
    %v2766 = vunpack.c.h.b16 %v174
    %v2767 = vunpack.c.l.b16 %v175
    %v2768 = vunpack.c.h.b16 %v175
    %v2769 = vunpack.c.l.b16 %v176
    %v2770 = vunpack.c.h.b16 %v176
    %v2771 = vunpack.c.l.b16 %v177
    %v2772 = vunpack.c.h.b16 %v177
    %v2773 = vunpack.c.l.b16 %v178
    %v2774 = vunpack.c.h.b16 %v178
    %v2775 = vunpack.c.l.b16 %v179
    %v2776 = vunpack.c.h.b16 %v179
    %v2777 = vunpack.c.l.b16 %v180
    %v2778 = vunpack.c.h.b16 %v180
    %v2779 = vunpack.c.l.b16 %v181
    %v2780 = vunpack.c.h.b16 %v181
    %v2781 = vunpack.c.l.b16 %v182
    %v2782 = vunpack.c.h.b16 %v182
    %v2783 = vunpack.c.l.b16 %v183
    %v2784 = vunpack.c.h.b16 %v183
    %v2785 = vunpack.c.l.b16 %v184
    %v2786 = vunpack.c.h.b16 %v184
    %v2787 = vunpack.c.l.b16 %v185
    %v2788 = vunpack.c.h.b16 %v185
    %v2789 = vunpack.c.l.b16 %v186
    %v2790 = vunpack.c.h.b16 %v186
    %v2791 = vunpack.c.l.b16 %v187
    %v2792 = vunpack.c.h.b16 %v187
    %v2793 = vunpack.c.l.b16 %v188
    %v2794 = vunpack.c.h.b16 %v188
    %v2795 = vunpack.c.l.b16 %v189
    %v2796 = vunpack.c.h.b16 %v189
    %v2797 = vunpack.c.l.b16 %v190
    %v2798 = vunpack.c.h.b16 %v190
    %v2799 = vunpack.c.l.b16 %v191
    %v2800 = vunpack.c.h.b16 %v191
    %v2801 = vunpack.c.l.b16 %v192
    %v2802 = vunpack.c.h.b16 %v192
    %v2803 = vunpack.c.l.b16 %v193
    %v2804 = vunpack.c.h.b16 %v193
    %v2805 = vunpack.c.l.b16 %v194
    %v2806 = vunpack.c.h.b16 %v194
    %v2807 = vunpack.c.l.b16 %v195
    %v2808 = vunpack.c.h.b16 %v195
    %v2809 = vunpack.c.l.b16 %v196
    %v2810 = vunpack.c.h.b16 %v196
    %v2811 = vunpack.c.l.b16 %v197
    %v2812 = vunpack.c.h.b16 %v197
    %v2813 = vunpack.c.l.b16 %v198
    %v2814 = vunpack.c.h.b16 %v198
    %v2815 = vunpack.c.l.b16 %v199
    %v2816 = vunpack.c.h.b16 %v199
    %v2817 = vunpack.c.l.b16 %v200
    %v2818 = vunpack.c.h.b16 %v200
    %v2819 = vunpack.c.l.b16 %v201
    %v2820 = vunpack.c.h.b16 %v201
    %v2821 = vunpack.c.l.b16 %v202
    %v2822 = vunpack.c.h.b16 %v202
    %v2823 = vunpack.c.l.b16 %v203
    %v2824 = vunpack.c.h.b16 %v203
    %v2825 = vunpack.c.l.b16 %v204
    %v2826 = vunpack.c.h.b16 %v204
    %v2827 = vunpack.c.l.b16 %v205
    %v2828 = vunpack.c.h.b16 %v205
    %v2829 = vunpack.c.l.b16 %v206
    %v2830 = vunpack.c.h.b16 %v206
    %v2831 = vunpack.c.l.b16 %v207
    %v2832 = vunpack.c.h.b16 %v207
    %v2833 = vunpack.c.l.b16 %v208
    %v2834 = vunpack.c.h.b16 %v208
    %v2835 = vunpack.c.l.b16 %v209
    %v2836 = vunpack.c.h.b16 %v209
    %v2837 = vunpack.c.l.b16 %v210
    %v2838 = vunpack.c.h.b16 %v210
    %v2839 = vunpack.c.l.b16 %v211
    %v2840 = vunpack.c.h.b16 %v211
    %v2841 = vunpack.c.l.b16 %v212
    %v2842 = vunpack.c.h.b16 %v212
    %v2843 = vunpack.c.l.b16 %v213
    %v2844 = vunpack.c.h.b16 %v213
    %v2845 = vunpack.c.l.b16 %v214
    %v2846 = vunpack.c.h.b16 %v214
    %v2847 = vunpack.c.l.b16 %v215
    %v2848 = vunpack.c.h.b16 %v215
    %v2849 = vunpack.c.l.b16 %v216
    %v2850 = vunpack.c.h.b16 %v216
    %v2851 = vunpack.c.l.b16 %v217
    %v2852 = vunpack.c.h.b16 %v217
    %v2853 = vunpack.c.l.b16 %v218
    %v2854 = vunpack.c.h.b16 %v218
    %v2855 = vunpack.c.l.b16 %v219
    %v2856 = vunpack.c.h.b16 %v219
    %v2857 = vunpack.c.l.b16 %v220
    %v2858 = vunpack.c.h.b16 %v220
    %v2859 = vunpack.c.l.b16 %v221
    %v2860 = vunpack.c.h.b16 %v221
    %v2861 = vunpack.c.l.b16 %v222
    %v2862 = vunpack.c.h.b16 %v222
    %v2863 = vunpack.c.l.b16 %v223
    %v2864 = vunpack.c.h.b16 %v223
    %v2865 = vunpack.c.l.b16 %v224
    %v2866 = vunpack.c.h.b16 %v224
    %v2867 = vunpack.c.l.b16 %v225
    %v2868 = vunpack.c.h.b16 %v225
    %v2869 = vunpack.c.l.b16 %v226
    %v2870 = vunpack.c.h.b16 %v226
    %v2871 = vunpack.c.l.b16 %v227
    %v2872 = vunpack.c.h.b16 %v227
    %v2873 = vunpack.c.l.b16 %v228
    %v2874 = vunpack.c.h.b16 %v228
    %v2875 = vunpack.c.l.b16 %v229
    %v2876 = vunpack.c.h.b16 %v229
    %v2877 = vunpack.c.l.b16 %v230
    %v2878 = vunpack.c.h.b16 %v230
    %v2879 = vunpack.c.l.b16 %v231
    %v2880 = vunpack.c.h.b16 %v231
    %v2881 = vunpack.c.l.b16 %v232
    %v2882 = vunpack.c.h.b16 %v232
    %v2883 = vunpack.c.l.b16 %v233
    %v2884 = vunpack.c.h.b16 %v233
    %v2885 = vunpack.c.l.b16 %v234
    %v2886 = vunpack.c.h.b16 %v234
    %v2887 = vunpack.c.l.b16 %v235
    %v2888 = vunpack.c.h.b16 %v235
    %v2889 = vunpack.c.l.b16 %v236
    %v2890 = vunpack.c.h.b16 %v236
    %v2891 = vunpack.c.l.b16 %v237
    %v2892 = vunpack.c.h.b16 %v237
    %v2893 = vunpack.c.l.b16 %v238
    %v2894 = vunpack.c.h.b16 %v238
    %v2895 = vunpack.c.l.b16 %v239
    %v2896 = vunpack.c.h.b16 %v239
    %v2897 = vunpack.c.l.b16 %v240
    %v2898 = vunpack.c.h.b16 %v240
    %v2899 = vunpack.c.l.b16 %v241
    %v2900 = vunpack.c.h.b16 %v241
    %v2901 = vunpack.c.l.b16 %v242
    %v2902 = vunpack.c.h.b16 %v242
    %v2903 = vunpack.c.l.b16 %v243
    %v2904 = vunpack.c.h.b16 %v243
    %v2905 = vunpack.c.l.b16 %v244
    %v2906 = vunpack.c.h.b16 %v244
    %v2907 = vunpack.c.l.b16 %v245
    %v2908 = vunpack.c.h.b16 %v245
    %v2909 = vunpack.c.l.b16 %v246
    %v2910 = vunpack.c.h.b16 %v246
    %v2911 = vunpack.c.l.b16 %v247
    %v2912 = vunpack.c.h.b16 %v247
    %v2913 = vunpack.c.l.b16 %v248
    %v2914 = vunpack.c.h.b16 %v248
    %v2915 = vunpack.c.l.b16 %v249
    %v2916 = vunpack.c.h.b16 %v249
    %v2917 = vunpack.c.l.b16 %v250
    %v2918 = vunpack.c.h.b16 %v250
    %v2919 = vunpack.c.l.b16 %v251
    %v2920 = vunpack.c.h.b16 %v251
    %v2921 = vunpack.c.l.b16 %v252
    %v2922 = vunpack.c.h.b16 %v252
    %v2923 = vunpack.c.l.b16 %v253
    %v2924 = vunpack.c.h.b16 %v253
    %v2925 = vunpack.c.l.b16 %v254
    %v2926 = vunpack.c.h.b16 %v254
    %v2927 = vunpack.c.l.b16 %v255
    %v2928 = vunpack.c.h.b16 %v255
    %v2929 = vunpack.c.l.b16 %v256
    %v2930 = vunpack.c.h.b16 %v256
    %v2931 = vunpack.c.l.b16 %v257
    %v2932 = vunpack.c.h.b16 %v257
    %v2933 = vunpack.c.l.b16 %v258
    %v2934 = vunpack.c.h.b16 %v258
    %v2935 = vunpack.c.l.b16 %v259
    %v2936 = vunpack.c.h.b16 %v259
    %v2937 = vunpack.c.l.b16 %v260
    %v2938 = vunpack.c.h.b16 %v260
    %v2939 = vunpack.c.l.b16 %v261
    %v2940 = vunpack.c.h.b16 %v261
    %v2941 = vunpack.c.l.b16 %v262
    %v2942 = vunpack.c.h.b16 %v262
    %v2943 = vunpack.c.l.b16 %v263
    %v2944 = vunpack.c.h.b16 %v263
    %v2945 = vunpack.c.l.b16 %v264
    %v2946 = vunpack.c.h.b16 %v264
    %v2947 = vunpack.c.l.b16 %v265
    %v2948 = vunpack.c.h.b16 %v265
    %v2949 = vunpack.c.l.b16 %v266
    %v2950 = vunpack.c.h.b16 %v266
    %v2951 = vunpack.c.l.b16 %v267
    %v2952 = vunpack.c.h.b16 %v267
    %v2953 = vunpack.c.l.b16 %v268
    %v2954 = vunpack.c.h.b16 %v268
    %v2955 = vunpack.c.l.b16 %v269
    %v2956 = vunpack.c.h.b16 %v269
    %v2957 = vunpack.c.l.b16 %v270
    %v2958 = vunpack.c.h.b16 %v270
    %v2959 = vunpack.c.l.b16 %v271
    %v2960 = vunpack.c.h.b16 %v271
    %v2961 = vunpack.c.l.b16 %v272
    %v2962 = vunpack.c.h.b16 %v272
    %v2963 = vunpack.c.l.b16 %v273
    %v2964 = vunpack.c.h.b16 %v273
    %v2965 = vunpack.c.l.b16 %v274
    %v2966 = vunpack.c.h.b16 %v274
    %v2967 = vunpack.c.l.b16 %v275
    %v2968 = vunpack.c.h.b16 %v275
    %v2969 = vunpack.c.l.b16 %v276
    %v2970 = vunpack.c.h.b16 %v276
    %v2971 = vunpack.c.l.b16 %v277
    %v2972 = vunpack.c.h.b16 %v277
    %v2973 = vunpack.c.l.b16 %v278
    %v2974 = vunpack.c.h.b16 %v278
    %v2975 = vunpack.c.l.b16 %v279
    %v2976 = vunpack.c.h.b16 %v279
    %v2977 = vunpack.c.l.b16 %v280
    %v2978 = vunpack.c.h.b16 %v280
    %v2979 = vunpack.c.l.b16 %v281
    %v2980 = vunpack.c.h.b16 %v281
    %v2981 = vunpack.c.l.b16 %v282
    %v2982 = vunpack.c.h.b16 %v282
    %v2983 = vunpack.c.l.b16 %v283
    %v2984 = vunpack.c.h.b16 %v283
    %v2985 = vunpack.c.l.b16 %v284
    %v2986 = vunpack.c.h.b16 %v284
    %v2987 = vunpack.c.l.b16 %v285
    %v2988 = vunpack.c.h.b16 %v285
    %v2989 = vunpack.c.l.b16 %v286
    %v2990 = vunpack.c.h.b16 %v286
    %v2991 = vunpack.c.l.b16 %v287
    %v2992 = vunpack.c.h.b16 %v287
    %v2993 = vunpack.c.l.b16 %v288
    %v2994 = vunpack.c.h.b16 %v288
    %v2995 = vunpack.c.l.b16 %v289
    %v2996 = vunpack.c.h.b16 %v289
    %v2997 = vunpack.c.l.b16 %v290
    %v2998 = vunpack.c.h.b16 %v290
    %v2999 = vunpack.c.l.b16 %v291
    %v3000 = vunpack.c.h.b16 %v291
    %v3001 = vunpack.c.l.b16 %v292
    %v3002 = vunpack.c.h.b16 %v292
    %v3003 = vunpack.c.l.b16 %v293
    %v3004 = vunpack.c.h.b16 %v293
    %v3005 = vunpack.c.l.b16 %v294
    %v3006 = vunpack.c.h.b16 %v294
    %v3007 = vunpack.c.l.b16 %v295
    %v3008 = vunpack.c.h.b16 %v295
    %v3009 = vunpack.c.l.b16 %v296
    %v3010 = vunpack.c.h.b16 %v296
    %v3011 = vunpack.c.l.b16 %v297
    %v3012 = vunpack.c.h.b16 %v297
    %v3013 = vunpack.c.l.b16 %v298
    %v3014 = vunpack.c.h.b16 %v298
    %v3015 = vunpack.c.l.b16 %v299
    %v3016 = vunpack.c.h.b16 %v299
    %v3017 = vunpack.c.l.b16 %v300
    %v3018 = vunpack.c.h.b16 %v300
    %v3019 = vunpack.c.l.b16 %v301
    %v3020 = vunpack.c.h.b16 %v301
    %v3021 = vunpack.c.l.b16 %v302
    %v3022 = vunpack.c.h.b16 %v302
    %v3023 = vunpack.c.l.b16 %v303
    %v3024 = vunpack.c.h.b16 %v303
    %v3025 = vunpack.c.l.b16 %v304
    %v3026 = vunpack.c.h.b16 %v304
    %v3027 = vunpack.c.l.b16 %v305
    %v3028 = vunpack.c.h.b16 %v305
    %v3029 = vunpack.c.l.b16 %v306
    %v3030 = vunpack.c.h.b16 %v306
    %v3031 = vunpack.c.l.b16 %v307
    %v3032 = vunpack.c.h.b16 %v307
    %v3033 = vunpack.c.l.b16 %v308
    %v3034 = vunpack.c.h.b16 %v308
    %v3035 = vunpack.c.l.b16 %v309
    %v3036 = vunpack.c.h.b16 %v309
    %v3037 = vunpack.c.l.b16 %v310
    %v3038 = vunpack.c.h.b16 %v310
    %v3039 = vunpack.c.l.b16 %v311
    %v3040 = vunpack.c.h.b16 %v311
    %v3041 = vunpack.c.l.b16 %v312
    %v3042 = vunpack.c.h.b16 %v312
    %v3043 = vunpack.c.l.b16 %v313
    %v3044 = vunpack.c.h.b16 %v313
    %v3045 = vunpack.c.l.b16 %v314
    %v3046 = vunpack.c.h.b16 %v314
    %v3047 = vunpack.c.l.b16 %v315
    %v3048 = vunpack.c.h.b16 %v315
    %v3049 = vunpack.c.l.b16 %v316
    %v3050 = vunpack.c.h.b16 %v316
    %v3051 = vunpack.c.l.b16 %v317
    %v3052 = vunpack.c.h.b16 %v317
    %v3053 = vunpack.c.l.b16 %v318
    %v3054 = vunpack.c.h.b16 %v318
    %v3055 = vunpack.c.l.b16 %v319
    %v3056 = vunpack.c.h.b16 %v319
    %v3057 = vunpack.c.l.b16 %v320
    %v3058 = vunpack.c.h.b16 %v320
    %v3059 = vunpack.c.l.b16 %v321
    %v3060 = vunpack.c.h.b16 %v321
    %v3061 = vunpack.c.l.b16 %v322
    %v3062 = vunpack.c.h.b16 %v322
    %v3063 = vunpack.c.l.b16 %v323
    %v3064 = vunpack.c.h.b16 %v323
    %v3065 = vunpack.c.l.b16 %v324
    %v3066 = vunpack.c.h.b16 %v324
    %v3067 = vunpack.c.l.b16 %v325
    %v3068 = vunpack.c.h.b16 %v325
    %v3069 = vunpack.c.l.b16 %v326
    %v3070 = vunpack.c.h.b16 %v326
    %v3071 = vunpack.c.l.b16 %v327
    %v3072 = vunpack.c.h.b16 %v327
    %v3073 = vunpack.c.l.b16 %v328
    %v3074 = vunpack.c.h.b16 %v328
    %v3075 = vunpack.c.l.b16 %v329
    %v3076 = vunpack.c.h.b16 %v329
    %v3077 = vunpack.c.l.b16 %v330
    %v3078 = vunpack.c.h.b16 %v330
    %v3079 = vunpack.c.l.b16 %v331
    %v3080 = vunpack.c.h.b16 %v331
    %v3081 = vunpack.c.l.b16 %v332
    %v3082 = vunpack.c.h.b16 %v332
    %v3083 = vunpack.c.l.b16 %v333
    %v3084 = vunpack.c.h.b16 %v333
    %v3085 = vunpack.c.l.b16 %v334
    %v3086 = vunpack.c.h.b16 %v334
    %v3087 = vunpack.c.l.b16 %v335
    %v3088 = vunpack.c.h.b16 %v335
    %v3089 = vunpack.c.l.b16 %v336
    %v3090 = vunpack.c.h.b16 %v336
    %v3091 = vunpack.c.l.b16 %v337
    %v3092 = vunpack.c.h.b16 %v337
    %v3093 = vunpack.c.l.b16 %v338
    %v3094 = vunpack.c.h.b16 %v338
    %v3095 = vunpack.c.l.b16 %v339
    %v3096 = vunpack.c.h.b16 %v339
    %v3097 = vunpack.c.l.b16 %v340
    %v3098 = vunpack.c.h.b16 %v340
    %v3099 = vunpack.c.l.b16 %v341
    %v3100 = vunpack.c.h.b16 %v341
    %v3101 = vunpack.c.l.b16 %v342
    %v3102 = vunpack.c.h.b16 %v342
    %v3103 = vunpack.c.l.b16 %v343
    %v3104 = vunpack.c.h.b16 %v343
    %v3105 = vunpack.c.l.b16 %v344
    %v3106 = vunpack.c.h.b16 %v344
    %v3107 = vunpack.c.l.b16 %v345
    %v3108 = vunpack.c.h.b16 %v345
    %v3109 = vunpack.c.l.b16 %v346
    %v3110 = vunpack.c.h.b16 %v346
    %v3111 = vunpack.c.l.b16 %v347
    %v3112 = vunpack.c.h.b16 %v347
    %v3113 = vunpack.c.l.b16 %v348
    %v3114 = vunpack.c.h.b16 %v348
    %v3115 = vunpack.c.l.b16 %v349
    %v3116 = vunpack.c.h.b16 %v349
    %v3117 = vunpack.c.l.b16 %v350
    %v3118 = vunpack.c.h.b16 %v350
    %v3119 = vunpack.c.l.b16 %v351
    %v3120 = vunpack.c.h.b16 %v351
    %v3121 = vunpack.c.l.b16 %v352
    %v3122 = vunpack.c.h.b16 %v352
    %v3123 = vunpack.c.l.b16 %v353
    %v3124 = vunpack.c.h.b16 %v353
    %v3125 = vunpack.c.l.b16 %v354
    %v3126 = vunpack.c.h.b16 %v354
    %v3127 = vunpack.c.l.b16 %v355
    %v3128 = vunpack.c.h.b16 %v355
    %v3129 = vunpack.c.l.b16 %v356
    %v3130 = vunpack.c.h.b16 %v356
    %v3131 = vunpack.c.l.b16 %v357
    %v3132 = vunpack.c.h.b16 %v357
    %v3133 = vunpack.c.l.b16 %v358
    %v3134 = vunpack.c.h.b16 %v358
    %v3135 = vunpack.c.l.b16 %v359
    %v3136 = vunpack.c.h.b16 %v359
    %v3137 = vunpack.c.l.b16 %v360
    %v3138 = vunpack.c.h.b16 %v360
    %v3139 = vunpack.c.l.b16 %v361
    %v3140 = vunpack.c.h.b16 %v361
    %v3141 = vunpack.c.l.b16 %v362
    %v3142 = vunpack.c.h.b16 %v362
    %v3143 = vunpack.c.l.b16 %v363
    %v3144 = vunpack.c.h.b16 %v363
    %v3145 = vunpack.c.l.b16 %v364
    %v3146 = vunpack.c.h.b16 %v364
    %v3147 = vunpack.c.l.b16 %v365
    %v3148 = vunpack.c.h.b16 %v365
    %v3149 = vunpack.c.l.b16 %v366
    %v3150 = vunpack.c.h.b16 %v366
    %v3151 = vunpack.c.l.b16 %v367
    %v3152 = vunpack.c.h.b16 %v367
    %v3153 = vunpack.c.l.b16 %v368
    %v3154 = vunpack.c.h.b16 %v368
    %v3155 = vunpack.c.l.b16 %v369
    %v3156 = vunpack.c.h.b16 %v369
    %v3157 = vunpack.c.l.b16 %v370
    %v3158 = vunpack.c.h.b16 %v370
    %v3159 = vunpack.c.l.b16 %v371
    %v3160 = vunpack.c.h.b16 %v371
    %v3161 = vunpack.c.l.b16 %v372
    %v3162 = vunpack.c.h.b16 %v372
    %v3163 = vunpack.c.l.b16 %v373
    %v3164 = vunpack.c.h.b16 %v373
    %v3165 = vunpack.c.l.b16 %v374
    %v3166 = vunpack.c.h.b16 %v374
    %v3167 = vunpack.c.l.b16 %v375
    %v3168 = vunpack.c.h.b16 %v375
    %v3169 = vunpack.c.l.b16 %v376
    %v3170 = vunpack.c.h.b16 %v376
    %v3171 = vunpack.c.l.b16 %v377
    %v3172 = vunpack.c.h.b16 %v377
    %v3173 = vunpack.c.l.b16 %v378
    %v3174 = vunpack.c.h.b16 %v378
    %v3175 = vunpack.c.l.b16 %v379
    %v3176 = vunpack.c.h.b16 %v379
    %v3177 = vunpack.c.l.b16 %v380
    %v3178 = vunpack.c.h.b16 %v380
    %v3179 = vunpack.c.l.b16 %v381
    %v3180 = vunpack.c.h.b16 %v381
    %v3181 = vunpack.c.l.b16 %v382
    %v3182 = vunpack.c.h.b16 %v382
    %v3183 = vunpack.c.l.b16 %v383
    %v3184 = vunpack.c.h.b16 %v383
    %v3185 = vunpack.c.l.b16 %v384
    %v3186 = vunpack.c.h.b16 %v384
    %v3187 = vunpack.c.l.b16 %v385
    %v3188 = vunpack.c.h.b16 %v385
    %v3189 = vunpack.c.l.b16 %v386
    %v3190 = vunpack.c.h.b16 %v386
    %v3191 = vunpack.c.l.b16 %v387
    %v3192 = vunpack.c.h.b16 %v387
    %v3193 = vunpack.c.l.b16 %v388
    %v3194 = vunpack.c.h.b16 %v388
    %v3195 = vunpack.c.l.b16 %v389
    %v3196 = vunpack.c.h.b16 %v389
    %v3197 = vunpack.c.l.b16 %v390
    %v3198 = vunpack.c.h.b16 %v390
    %v3199 = vunpack.c.l.b16 %v391
    %v3200 = vunpack.c.h.b16 %v391
    %v3201 = vunpack.c.l.b16 %v392
    %v3202 = vunpack.c.h.b16 %v392
    %v3203 = vunpack.c.l.b16 %v393
    %v3204 = vunpack.c.h.b16 %v393
    %v3205 = vunpack.c.l.b16 %v394
    %v3206 = vunpack.c.h.b16 %v394
    %v3207 = vunpack.c.l.b16 %v395
    %v3208 = vunpack.c.h.b16 %v395
    %v3209 = vunpack.c.l.b16 %v396
    %v3210 = vunpack.c.h.b16 %v396
    %v3211 = vunpack.c.l.b16 %v397
    %v3212 = vunpack.c.h.b16 %v397
    %v3213 = vunpack.c.l.b16 %v398
    %v3214 = vunpack.c.h.b16 %v398
    %v3215 = vunpack.c.l.b16 %v399
    %v3216 = vunpack.c.h.b16 %v399
    %v3217 = vunpack.c.l.b16 %v400
    %v3218 = vunpack.c.h.b16 %v400
    %v3219 = vunpack.c.l.b16 %v401
    %v3220 = vunpack.c.h.b16 %v401
    %v3221 = vunpack.c.l.b16 %v402
    %v3222 = vunpack.c.h.b16 %v402
    %v3223 = vunpack.c.l.b16 %v403
    %v3224 = vunpack.c.h.b16 %v403
    %v3225 = vunpack.c.l.b16 %v404
    %v3226 = vunpack.c.h.b16 %v404
    %v3227 = vunpack.c.l.b16 %v405
    %v3228 = vunpack.c.h.b16 %v405
    %v3229 = vunpack.c.l.b16 %v406
    %v3230 = vunpack.c.h.b16 %v406
    %v3231 = vunpack.c.l.b16 %v407
    %v3232 = vunpack.c.h.b16 %v407
    %v3233 = vunpack.c.l.b16 %v408
    %v3234 = vunpack.c.h.b16 %v408
    %v3235 = vunpack.c.l.b16 %v409
    %v3236 = vunpack.c.h.b16 %v409
    %v3237 = vunpack.c.l.b16 %v410
    %v3238 = vunpack.c.h.b16 %v410
    %v3239 = vunpack.c.l.b16 %v411
    %v3240 = vunpack.c.h.b16 %v411
    %v3241 = vunpack.c.l.b16 %v412
    %v3242 = vunpack.c.h.b16 %v412
    %v3243 = vunpack.c.l.b16 %v413
    %v3244 = vunpack.c.h.b16 %v413
    %v3245 = vunpack.c.l.b16 %v414
    %v3246 = vunpack.c.h.b16 %v414
    %v3247 = vunpack.c.l.b16 %v415
    %v3248 = vunpack.c.h.b16 %v415
    %v3249 = vunpack.c.l.b16 %v416
    %v3250 = vunpack.c.h.b16 %v416
    %v3251 = vunpack.c.l.b16 %v417
    %v3252 = vunpack.c.h.b16 %v417
    %v3253 = vunpack.c.l.b16 %v418
    %v3254 = vunpack.c.h.b16 %v418
    %v3255 = vunpack.c.l.b16 %v419
    %v3256 = vunpack.c.h.b16 %v419
    %v3257 = vunpack.c.l.b16 %v420
    %v3258 = vunpack.c.h.b16 %v420
    %v3259 = vunpack.c.l.b16 %v421
    %v3260 = vunpack.c.h.b16 %v421
    %v3261 = vunpack.c.l.b16 %v422
    %v3262 = vunpack.c.h.b16 %v422
    %v3263 = vunpack.c.l.b16 %v423
    %v3264 = vunpack.c.h.b16 %v423
    %v3265 = vunpack.c.l.b16 %v424
    %v3266 = vunpack.c.h.b16 %v424
    %v3267 = vunpack.c.l.b16 %v425
    %v3268 = vunpack.c.h.b16 %v425
    %v3269 = vunpack.c.l.b16 %v426
    %v3270 = vunpack.c.h.b16 %v426
    %v3271 = vunpack.c.l.b16 %v427
    %v3272 = vunpack.c.h.b16 %v427
    %v3273 = vunpack.c.l.b16 %v428
    %v3274 = vunpack.c.h.b16 %v428
    %v3275 = vunpack.c.l.b16 %v429
    %v3276 = vunpack.c.h.b16 %v429
    %v3277 = vunpack.c.l.b16 %v430
    %v3278 = vunpack.c.h.b16 %v430
    %v3279 = vunpack.c.l.b16 %v431
    %v3280 = vunpack.c.h.b16 %v431
    %v3281 = vunpack.c.l.b16 %v432
    %v3282 = vunpack.c.h.b16 %v432
    %v3283 = vunpack.c.l.b16 %v433
    %v3284 = vunpack.c.h.b16 %v433
    %v3285 = vunpack.c.l.b16 %v434
    %v3286 = vunpack.c.h.b16 %v434
    %v3287 = vunpack.c.l.b16 %v435
    %v3288 = vunpack.c.h.b16 %v435
    %v3289 = vunpack.c.l.b16 %v436
    %v3290 = vunpack.c.h.b16 %v436
    %v3291 = vunpack.c.l.b16 %v437
    %v3292 = vunpack.c.h.b16 %v437
    %v3293 = vunpack.c.l.b16 %v438
    %v3294 = vunpack.c.h.b16 %v438
    %v3295 = vunpack.c.l.b16 %v439
    %v3296 = vunpack.c.h.b16 %v439
    %v3297 = vunpack.c.l.b16 %v440
    %v3298 = vunpack.c.h.b16 %v440
    %v3299 = vunpack.c.l.b16 %v441
    %v3300 = vunpack.c.h.b16 %v441
    %v3301 = vunpack.c.l.b16 %v442
    %v3302 = vunpack.c.h.b16 %v442
    %v3303 = vunpack.c.l.b16 %v443
    %v3304 = vunpack.c.h.b16 %v443
    %v3305 = vunpack.c.l.b16 %v444
    %v3306 = vunpack.c.h.b16 %v444
    %v3307 = vunpack.c.l.b16 %v445
    %v3308 = vunpack.c.h.b16 %v445
    %v3309 = vunpack.c.l.b16 %v446
    %v3310 = vunpack.c.h.b16 %v446
    %v3311 = vunpack.c.l.b16 %v447
    %v3312 = vunpack.c.h.b16 %v447
    %v3313 = vunpack.c.l.b16 %v448
    %v3314 = vunpack.c.h.b16 %v448
    %v3315 = vunpack.c.l.b16 %v449
    %v3316 = vunpack.c.h.b16 %v449
    %v3317 = vunpack.c.l.b16 %v450
    %v3318 = vunpack.c.h.b16 %v450
    %v3319 = vunpack.c.l.b16 %v451
    %v3320 = vunpack.c.h.b16 %v451
    %v3321 = vunpack.c.l.b16 %v452
    %v3322 = vunpack.c.h.b16 %v452
    %v3323 = vunpack.c.l.b16 %v453
    %v3324 = vunpack.c.h.b16 %v453
    %v3325 = vunpack.c.l.b16 %v454
    %v3326 = vunpack.c.h.b16 %v454
    %v3327 = vunpack.c.l.b16 %v455
    %v3328 = vunpack.c.h.b16 %v455
    %v3329 = vunpack.c.l.b16 %v456
    %v3330 = vunpack.c.h.b16 %v456
    %v3331 = vunpack.c.l.b16 %v457
    %v3332 = vunpack.c.h.b16 %v457
    %v3333 = vunpack.c.l.b16 %v458
    %v3334 = vunpack.c.h.b16 %v458
    %v3335 = vunpack.c.l.b16 %v459
    %v3336 = vunpack.c.h.b16 %v459
    %v3337 = vunpack.c.l.b16 %v460
    %v3338 = vunpack.c.h.b16 %v460
    %v3339 = vunpack.c.l.b16 %v461
    %v3340 = vunpack.c.h.b16 %v461
    %v3341 = vunpack.c.l.b16 %v462
    %v3342 = vunpack.c.h.b16 %v462
    %v3343 = vunpack.c.l.b16 %v463
    %v3344 = vunpack.c.h.b16 %v463
    %v3345 = vunpack.c.l.b16 %v464
    %v3346 = vunpack.c.h.b16 %v464
    %v3347 = vunpack.c.l.b16 %v465
    %v3348 = vunpack.c.h.b16 %v465
    %v3349 = vunpack.c.l.b16 %v466
    %v3350 = vunpack.c.h.b16 %v466
    %v3351 = vunpack.c.l.b16 %v467
    %v3352 = vunpack.c.h.b16 %v467
    %v3353 = vunpack.c.l.b16 %v468
    %v3354 = vunpack.c.h.b16 %v468
    %v3355 = vunpack.c.l.b16 %v469
    %v3356 = vunpack.c.h.b16 %v469
    %v3357 = vunpack.c.l.b16 %v470
    %v3358 = vunpack.c.h.b16 %v470
    %v3359 = vunpack.c.l.b16 %v471
    %v3360 = vunpack.c.h.b16 %v471
    %v3361 = vunpack.c.l.b16 %v472
    %v3362 = vunpack.c.h.b16 %v472
    %v3363 = vunpack.c.l.b16 %v473
    %v3364 = vunpack.c.h.b16 %v473
    %v3365 = vunpack.c.l.b16 %v474
    %v3366 = vunpack.c.h.b16 %v474
    %v3367 = vunpack.c.l.b16 %v475
    %v3368 = vunpack.c.h.b16 %v475
    %v3369 = vunpack.c.l.b16 %v476
    %v3370 = vunpack.c.h.b16 %v476
    %v3371 = vunpack.c.l.b16 %v477
    %v3372 = vunpack.c.h.b16 %v477
    %v3373 = vunpack.c.l.b16 %v478
    %v3374 = vunpack.c.h.b16 %v478
    %v3375 = vunpack.c.l.b16 %v479
    %v3376 = vunpack.c.h.b16 %v479
    %v3377 = vunpack.c.l.b16 %v480
    %v3378 = vunpack.c.h.b16 %v480
    %v3379 = vunpack.c.l.b16 %v481
    %v3380 = vunpack.c.h.b16 %v481
    %v3381 = vunpack.c.l.b16 %v482
    %v3382 = vunpack.c.h.b16 %v482
    %v3383 = vunpack.c.l.b16 %v483
    %v3384 = vunpack.c.h.b16 %v483
    %v3385 = vunpack.c.l.b16 %v484
    %v3386 = vunpack.c.h.b16 %v484
    %v3387 = vunpack.c.l.b16 %v485
    %v3388 = vunpack.c.h.b16 %v485
    %v3389 = vunpack.c.l.b16 %v486
    %v3390 = vunpack.c.h.b16 %v486
    %v3391 = vunpack.c.l.b16 %v487
    %v3392 = vunpack.c.h.b16 %v487
    %v3393 = vunpack.c.l.b16 %v488
    %v3394 = vunpack.c.h.b16 %v488
    %v3395 = vunpack.c.l.b16 %v489
    %v3396 = vunpack.c.h.b16 %v489
    %v3397 = vunpack.c.l.b16 %v490
    %v3398 = vunpack.c.h.b16 %v490
    %v3399 = vunpack.c.l.b16 %v491
    %v3400 = vunpack.c.h.b16 %v491
    %v3401 = vunpack.c.l.b16 %v492
    %v3402 = vunpack.c.h.b16 %v492
    %v3403 = vunpack.c.l.b16 %v493
    %v3404 = vunpack.c.h.b16 %v493
    %v3405 = vunpack.c.l.b16 %v494
    %v3406 = vunpack.c.h.b16 %v494
    %v3407 = vunpack.c.l.b16 %v495
    %v3408 = vunpack.c.h.b16 %v495
    %v3409 = vunpack.c.l.b16 %v496
    %v3410 = vunpack.c.h.b16 %v496
    %v3411 = vunpack.c.l.b16 %v497
    %v3412 = vunpack.c.h.b16 %v497
    %v3413 = vunpack.c.l.b16 %v498
    %v3414 = vunpack.c.h.b16 %v498
    %v3415 = vunpack.c.l.b16 %v499
    %v3416 = vunpack.c.h.b16 %v499
    %v3417 = vunpack.c.l.b16 %v500
    %v3418 = vunpack.c.h.b16 %v500
    %v3419 = vunpack.c.l.b16 %v501
    %v3420 = vunpack.c.h.b16 %v501
    %v3421 = vunpack.c.l.b16 %v502
    %v3422 = vunpack.c.h.b16 %v502
    %v3423 = vunpack.c.l.b16 %v503
    %v3424 = vunpack.c.h.b16 %v503
    %v3425 = vunpack.c.l.b16 %v504
    %v3426 = vunpack.c.h.b16 %v504
    %v3427 = vunpack.c.l.b16 %v505
    %v3428 = vunpack.c.h.b16 %v505
    %v3429 = vunpack.c.l.b16 %v506
    %v3430 = vunpack.c.h.b16 %v506
    %v3431 = vunpack.c.l.b16 %v507
    %v3432 = vunpack.c.h.b16 %v507
    %v3433 = vunpack.c.l.b16 %v508
    %v3434 = vunpack.c.h.b16 %v508
    %v3435 = vunpack.c.l.b16 %v509
    %v3436 = vunpack.c.h.b16 %v509
    %v3437 = vunpack.c.l.b16 %v510
    %v3438 = vunpack.c.h.b16 %v510
    %v3439 = vunpack.c.l.b16 %v511
    %v3440 = vunpack.c.h.b16 %v511
    %v3441 = vunpack.c.l.b16 %v512
    %v3442 = vunpack.c.h.b16 %v512
    %v3443 = vunpack.c.l.b16 %v513
    %v3444 = vunpack.c.h.b16 %v513
    %v3445 = vunpack.c.l.b16 %v514
    %v3446 = vunpack.c.h.b16 %v514
    %v3447 = vunpack.c.l.b16 %v515
    %v3448 = vunpack.c.h.b16 %v515
    %v3449 = vunpack.c.l.b16 %v516
    %v3450 = vunpack.c.h.b16 %v516
    %v3451 = vunpack.c.l.b16 %v517
    %v3452 = vunpack.c.h.b16 %v517
    %v3453 = vunpack.c.l.b16 %v518
    %v3454 = vunpack.c.h.b16 %v518
    %v3455 = vunpack.c.l.b16 %v519
    %v3456 = vunpack.c.h.b16 %v519
    %v3457 = vunpack.c.l.b16 %v520
    %v3458 = vunpack.c.h.b16 %v520
    %v3459 = vunpack.c.l.b16 %v521
    %v3460 = vunpack.c.h.b16 %v521
    %v3461 = vunpack.c.l.b16 %v522
    %v3462 = vunpack.c.h.b16 %v522
    %v3463 = vunpack.c.l.b16 %v523
    %v3464 = vunpack.c.h.b16 %v523
    %v3465 = vunpack.c.l.b16 %v524
    %v3466 = vunpack.c.h.b16 %v524
    %v3467 = vunpack.c.l.b16 %v525
    %v3468 = vunpack.c.h.b16 %v525
    %v3469 = vunpack.c.l.b16 %v526
    %v3470 = vunpack.c.h.b16 %v526
    %v3471 = vunpack.c.l.b16 %v527
    %v3472 = vunpack.c.h.b16 %v527
    %v3473 = vunpack.c.l.b16 %v528
    %v3474 = vunpack.c.h.b16 %v528
    %v3475 = vunpack.c.l.b16 %v529
    %v3476 = vunpack.c.h.b16 %v529
    %v3477 = vunpack.c.l.b16 %v530
    %v3478 = vunpack.c.h.b16 %v530
    %v3479 = vunpack.c.l.b16 %v531
    %v3480 = vunpack.c.h.b16 %v531
    %v3481 = vunpack.c.l.b16 %v532
    %v3482 = vunpack.c.h.b16 %v532
    %v3483 = vunpack.c.l.b16 %v533
    %v3484 = vunpack.c.h.b16 %v533
    %v3485 = vunpack.c.l.b16 %v534
    %v3486 = vunpack.c.h.b16 %v534
    %v3487 = vunpack.c.l.b16 %v535
    %v3488 = vunpack.c.h.b16 %v535
    %v3489 = vunpack.c.l.b16 %v536
    %v3490 = vunpack.c.h.b16 %v536
    %v3491 = vunpack.c.l.b16 %v537
    %v3492 = vunpack.c.h.b16 %v537
    %v3493 = vunpack.c.l.b16 %v538
    %v3494 = vunpack.c.h.b16 %v538
    %v3495 = vunpack.c.l.b16 %v539
    %v3496 = vunpack.c.h.b16 %v539
    %v3497 = vunpack.c.l.b16 %v540
    %v3498 = vunpack.c.h.b16 %v540
    %v3499 = vunpack.c.l.b16 %v541
    %v3500 = vunpack.c.h.b16 %v541
    %v3501 = vunpack.c.l.b16 %v542
    %v3502 = vunpack.c.h.b16 %v542
    %v3503 = vunpack.c.l.b16 %v543
    %v3504 = vunpack.c.h.b16 %v543
    %v3505 = vunpack.c.l.b16 %v544
    %v3506 = vunpack.c.h.b16 %v544
    %v3507 = vunpack.c.l.b16 %v545
    %v3508 = vunpack.c.h.b16 %v545
    %v3509 = vunpack.c.l.b16 %v546
    %v3510 = vunpack.c.h.b16 %v546
    %v3511 = vunpack.c.l.b16 %v547
    %v3512 = vunpack.c.h.b16 %v547
    %v3513 = vunpack.c.l.b16 %v548
    %v3514 = vunpack.c.h.b16 %v548
    %v3515 = vunpack.c.l.b16 %v549
    %v3516 = vunpack.c.h.b16 %v549
    %v3517 = vunpack.c.l.b16 %v550
    %v3518 = vunpack.c.h.b16 %v550
    %v3519 = vunpack.c.l.b16 %v551
    %v3520 = vunpack.c.h.b16 %v551
    %v3521 = vunpack.c.l.b16 %v552
    %v3522 = vunpack.c.h.b16 %v552
    %v3523 = vunpack.c.l.b16 %v553
    %v3524 = vunpack.c.h.b16 %v553
    %v3525 = vunpack.c.l.b16 %v554
    %v3526 = vunpack.c.h.b16 %v554
    %v3527 = vunpack.c.l.b16 %v555
    %v3528 = vunpack.c.h.b16 %v555
    %v3529 = vunpack.c.l.b16 %v556
    %v3530 = vunpack.c.h.b16 %v556
    %v3531 = vunpack.c.l.b16 %v557
    %v3532 = vunpack.c.h.b16 %v557
    %v3533 = vunpack.c.l.b16 %v558
    %v3534 = vunpack.c.h.b16 %v558
    %v3535 = vunpack.c.l.b16 %v559
    %v3536 = vunpack.c.h.b16 %v559
    %v3537 = vunpack.c.l.b16 %v560
    %v3538 = vunpack.c.h.b16 %v560
    %v3539 = vunpack.c.l.b16 %v561
    %v3540 = vunpack.c.h.b16 %v561
    %v3541 = vunpack.c.l.b16 %v562
    %v3542 = vunpack.c.h.b16 %v562
    %v3543 = vunpack.c.l.b16 %v563
    %v3544 = vunpack.c.h.b16 %v563
    %v3545 = vunpack.c.l.b16 %v564
    %v3546 = vunpack.c.h.b16 %v564
    %v3547 = vunpack.c.l.b16 %v565
    %v3548 = vunpack.c.h.b16 %v565
    %v3549 = vunpack.c.l.b16 %v566
    %v3550 = vunpack.c.h.b16 %v566
    %v3551 = vunpack.c.l.b16 %v567
    %v3552 = vunpack.c.h.b16 %v567
    %v3553 = vunpack.c.l.b16 %v568
    %v3554 = vunpack.c.h.b16 %v568
    %v3555 = vunpack.c.l.b16 %v569
    %v3556 = vunpack.c.h.b16 %v569
    %v3557 = vunpack.c.l.b16 %v570
    %v3558 = vunpack.c.h.b16 %v570
    %v3559 = vunpack.c.l.b16 %v571
    %v3560 = vunpack.c.h.b16 %v571
    %v3561 = vunpack.c.l.b16 %v572
    %v3562 = vunpack.c.h.b16 %v572
    %v3563 = vunpack.c.l.b16 %v573
    %v3564 = vunpack.c.h.b16 %v573
    %v3565 = vunpack.c.l.b16 %v574
    %v3566 = vunpack.c.h.b16 %v574
    %v3567 = vunpack.c.l.b16 %v575
    %v3568 = vunpack.c.h.b16 %v575
    %v3569 = vunpack.c.l.b16 %v576
    %v3570 = vunpack.c.h.b16 %v576
    %v3571 = vunpack.c.l.b16 %v577
    %v3572 = vunpack.c.h.b16 %v577
    %v3573 = vunpack.c.l.b16 %v578
    %v3574 = vunpack.c.h.b16 %v578
    %v3575 = vunpack.c.l.b16 %v579
    %v3576 = vunpack.c.h.b16 %v579
    %v3577 = vunpack.c.l.b16 %v580
    %v3578 = vunpack.c.h.b16 %v580
    %v3579 = vunpack.c.l.b16 %v581
    %v3580 = vunpack.c.h.b16 %v581
    %v3581 = vunpack.c.l.b16 %v582
    %v3582 = vunpack.c.h.b16 %v582
    %v3583 = vunpack.c.l.b16 %v583
    %v3584 = vunpack.c.h.b16 %v583
    %v3585 = vunpack.c.l.b16 %v584
    %v3586 = vunpack.c.h.b16 %v584
    %v3587 = vunpack.c.l.b16 %v585
    %v3588 = vunpack.c.h.b16 %v585
    %v3589 = vunpack.c.l.b16 %v586
    %v3590 = vunpack.c.h.b16 %v586
    %v3591 = vunpack.c.l.b16 %v587
    %v3592 = vunpack.c.h.b16 %v587
    %v3593 = vunpack.c.l.b16 %v588
    %v3594 = vunpack.c.h.b16 %v588
    %v3595 = vunpack.c.l.b16 %v589
    %v3596 = vunpack.c.h.b16 %v589
    %v3597 = vunpack.c.l.b16 %v590
    %v3598 = vunpack.c.h.b16 %v590
    %v3599 = vunpack.c.l.b16 %v591
    %v3600 = vunpack.c.h.b16 %v591
    %v3601 = vunpack.c.l.b16 %v592
    %v3602 = vunpack.c.h.b16 %v592
    %v3603 = vunpack.c.l.b16 %v593
    %v3604 = vunpack.c.h.b16 %v593
    %v3605 = vunpack.c.l.b16 %v594
    %v3606 = vunpack.c.h.b16 %v594
    %v3607 = vunpack.c.l.b16 %v595
    %v3608 = vunpack.c.h.b16 %v595
    %v3609 = vunpack.c.l.b16 %v596
    %v3610 = vunpack.c.h.b16 %v596
    %v3611 = vunpack.c.l.b16 %v597
    %v3612 = vunpack.c.h.b16 %v597
    %v3613 = vunpack.c.l.b16 %v598
    %v3614 = vunpack.c.h.b16 %v598
    %v3615 = vunpack.c.l.b16 %v599
    %v3616 = vunpack.c.h.b16 %v599
    %v3617 = vunpack.c.l.b16 %v600
    %v3618 = vunpack.c.h.b16 %v600
    %v3619 = vunpack.c.l.b16 %v601
    %v3620 = vunpack.c.h.b16 %v601
    %v3621 = vunpack.c.l.b16 %v602
    %v3622 = vunpack.c.h.b16 %v602
    %v3623 = vunpack.c.l.b16 %v603
    %v3624 = vunpack.c.h.b16 %v603
    %v3625 = vunpack.c.l.b16 %v604
    %v3626 = vunpack.c.h.b16 %v604
    %v3627 = vunpack.c.l.b16 %v605
    %v3628 = vunpack.c.h.b16 %v605
    %v3629 = vunpack.c.l.b16 %v606
    %v3630 = vunpack.c.h.b16 %v606
    %v3631 = vunpack.c.l.b16 %v607
    %v3632 = vunpack.c.h.b16 %v607
    %v3633 = vunpack.c.l.b16 %v608
    %v3634 = vunpack.c.h.b16 %v608
    %v3635 = vunpack.c.l.b16 %v609
    %v3636 = vunpack.c.h.b16 %v609
    %v3637 = vunpack.c.l.b16 %v610
    %v3638 = vunpack.c.h.b16 %v610
    %v3639 = vunpack.c.l.b16 %v611
    %v3640 = vunpack.c.h.b16 %v611
    %v3641 = vunpack.c.l.b16 %v612
    %v3642 = vunpack.c.h.b16 %v612
    %v3643 = vunpack.c.l.b16 %v613
    %v3644 = vunpack.c.h.b16 %v613
    %v3645 = vunpack.c.l.b16 %v614
    %v3646 = vunpack.c.h.b16 %v614
    %v3647 = vunpack.c.l.b16 %v615
    %v3648 = vunpack.c.h.b16 %v615
    %v3649 = vunpack.c.l.b16 %v616
    %v3650 = vunpack.c.h.b16 %v616
    %v3651 = vunpack.c.l.b16 %v617
    %v3652 = vunpack.c.h.b16 %v617
    %v3653 = vunpack.c.l.b16 %v618
    %v3654 = vunpack.c.h.b16 %v618
    %v3655 = vunpack.c.l.b16 %v619
    %v3656 = vunpack.c.h.b16 %v619
    %v3657 = vunpack.c.l.b16 %v620
    %v3658 = vunpack.c.h.b16 %v620
    %v3659 = vunpack.c.l.b16 %v621
    %v3660 = vunpack.c.h.b16 %v621
    %v3661 = vunpack.c.l.b16 %v622
    %v3662 = vunpack.c.h.b16 %v622
    %v3663 = vunpack.c.l.b16 %v623
    %v3664 = vunpack.c.h.b16 %v623
    %v3665 = vunpack.c.l.b16 %v624
    %v3666 = vunpack.c.h.b16 %v624
    %v3667 = vunpack.c.l.b16 %v625
    %v3668 = vunpack.c.h.b16 %v625
    %v3669 = vunpack.c.l.b16 %v626
    %v3670 = vunpack.c.h.b16 %v626
    %v3671 = vunpack.c.l.b16 %v627
    %v3672 = vunpack.c.h.b16 %v627
    %v3673 = vunpack.c.l.b16 %v628
    %v3674 = vunpack.c.h.b16 %v628
    %v3675 = vunpack.c.l.b16 %v629
    %v3676 = vunpack.c.h.b16 %v629
    %v3677 = vunpack.c.l.b16 %v630
    %v3678 = vunpack.c.h.b16 %v630
    %v3679 = vunpack.c.l.b16 %v631
    %v3680 = vunpack.c.h.b16 %v631
    %v3681 = vunpack.c.l.b16 %v632
    %v3682 = vunpack.c.h.b16 %v632
    %v3683 = vunpack.c.l.b16 %v633
    %v3684 = vunpack.c.h.b16 %v633
    %v3685 = vunpack.c.l.b16 %v634
    %v3686 = vunpack.c.h.b16 %v634
    %v3687 = vunpack.c.l.b16 %v635
    %v3688 = vunpack.c.h.b16 %v635
    %v3689 = vunpack.c.l.b16 %v636
    %v3690 = vunpack.c.h.b16 %v636
    %v3691 = vunpack.c.l.b16 %v637
    %v3692 = vunpack.c.h.b16 %v637
    %v3693 = vunpack.c.l.b16 %v638
    %v3694 = vunpack.c.h.b16 %v638
    %v3695 = vunpack.c.l.b16 %v639
    %v3696 = vunpack.c.h.b16 %v639
    %v3697 = vunpack.c.l.b16 %v640
    %v3698 = vunpack.c.h.b16 %v640
    %v3699 = vunpack.c.l.b16 %v641
    %v3700 = vunpack.c.h.b16 %v641
    %v3701 = vunpack.c.l.b16 %v642
    %v3702 = vunpack.c.h.b16 %v642
    %v3703 = vunpack.c.l.b16 %v643
    %v3704 = vunpack.c.h.b16 %v643
    %v3705 = vunpack.c.l.b16 %v644
    %v3706 = vunpack.c.h.b16 %v644
    %v3707 = vunpack.c.l.b16 %v645
    %v3708 = vunpack.c.h.b16 %v645
    %v3709 = vunpack.c.l.b16 %v646
    %v3710 = vunpack.c.h.b16 %v646
    %v3711 = vunpack.c.l.b16 %v647
    %v3712 = vunpack.c.h.b16 %v647
    %v3713 = vunpack.c.l.b16 %v648
    %v3714 = vunpack.c.h.b16 %v648
    %v3715 = vunpack.c.l.b16 %v649
    %v3716 = vunpack.c.h.b16 %v649
    %v3717 = vunpack.c.l.b16 %v650
    %v3718 = vunpack.c.h.b16 %v650
    %v3719 = vunpack.c.l.b16 %v651
    %v3720 = vunpack.c.h.b16 %v651
    %v3721 = vunpack.c.l.b16 %v652
    %v3722 = vunpack.c.h.b16 %v652
    %v3723 = vunpack.c.l.b16 %v653
    %v3724 = vunpack.c.h.b16 %v653
    %v3725 = vunpack.c.l.b16 %v654
    %v3726 = vunpack.c.h.b16 %v654
    %v3727 = vunpack.c.l.b16 %v655
    %v3728 = vunpack.c.h.b16 %v655
    %v3729 = vunpack.c.l.b16 %v656
    %v3730 = vunpack.c.h.b16 %v656
    %v3731 = vunpack.c.l.b16 %v657
    %v3732 = vunpack.c.h.b16 %v657
    %v3733 = vunpack.c.l.b16 %v658
    %v3734 = vunpack.c.h.b16 %v658
    %v3735 = vunpack.c.l.b16 %v659
    %v3736 = vunpack.c.h.b16 %v659
    %v3737 = vunpack.c.l.b16 %v660
    %v3738 = vunpack.c.h.b16 %v660
    %v3739 = vunpack.c.l.b16 %v661
    %v3740 = vunpack.c.h.b16 %v661
    %v3741 = vunpack.c.l.b16 %v662
    %v3742 = vunpack.c.h.b16 %v662
    %v3743 = vunpack.c.l.b16 %v663
    %v3744 = vunpack.c.h.b16 %v663
    %v3745 = vunpack.c.l.b16 %v664
    %v3746 = vunpack.c.h.b16 %v664
    %v3747 = vunpack.c.l.b16 %v665
    %v3748 = vunpack.c.h.b16 %v665
    %v3749 = vunpack.c.l.b16 %v666
    %v3750 = vunpack.c.h.b16 %v666
    %v3751 = vunpack.c.l.b16 %v667
    %v3752 = vunpack.c.h.b16 %v667
    %v3753 = vunpack.c.l.b16 %v668
    %v3754 = vunpack.c.h.b16 %v668
    %v3755 = vunpack.c.l.b16 %v669
    %v3756 = vunpack.c.h.b16 %v669
    %v3757 = vunpack.c.l.b16 %v670
    %v3758 = vunpack.c.h.b16 %v670
    %v3759 = vunpack.c.l.b16 %v671
    %v3760 = vunpack.c.h.b16 %v671
    %v3761 = vunpack.c.l.b16 %v672
    %v3762 = vunpack.c.h.b16 %v672
    %v3763 = vunpack.c.l.b16 %v673
    %v3764 = vunpack.c.h.b16 %v673
    %v3765 = vunpack.c.l.b16 %v674
    %v3766 = vunpack.c.h.b16 %v674
    %v3767 = vunpack.c.l.b16 %v675
    %v3768 = vunpack.c.h.b16 %v675
    %v3769 = vunpack.c.l.b16 %v676
    %v3770 = vunpack.c.h.b16 %v676
    %v3771 = vunpack.c.l.b16 %v677
    %v3772 = vunpack.c.h.b16 %v677
    %v3773 = vunpack.c.l.b16 %v678
    %v3774 = vunpack.c.h.b16 %v678
    %v3775 = vunpack.c.l.b16 %v679
    %v3776 = vunpack.c.h.b16 %v679
    %v3777 = vunpack.c.l.b16 %v680
    %v3778 = vunpack.c.h.b16 %v680
    %v3779 = vunpack.c.l.b16 %v681
    %v3780 = vunpack.c.h.b16 %v681
    %v3781 = vunpack.c.l.b16 %v682
    %v3782 = vunpack.c.h.b16 %v682
    %v3783 = vunpack.c.l.b16 %v683
    %v3784 = vunpack.c.h.b16 %v683
    %v3785 = vunpack.c.l.b16 %v684
    %v3786 = vunpack.c.h.b16 %v684
    %v3787 = vunpack.c.l.b16 %v685
    %v3788 = vunpack.c.h.b16 %v685
    %v3789 = vunpack.c.l.b16 %v686
    %v3790 = vunpack.c.h.b16 %v686
    %v3791 = vunpack.c.l.b16 %v687
    %v3792 = vunpack.c.h.b16 %v687
    %v3793 = vunpack.c.l.b16 %v688
    %v3794 = vunpack.c.h.b16 %v688
    %v3795 = vunpack.c.l.b16 %v689
    %v3796 = vunpack.c.h.b16 %v689
    %v3797 = vunpack.c.l.b16 %v690
    %v3798 = vunpack.c.h.b16 %v690
    %v3799 = vunpack.c.l.b16 %v691
    %v3800 = vunpack.c.h.b16 %v691
    %v3801 = vunpack.c.l.b16 %v692
    %v3802 = vunpack.c.h.b16 %v692
    %v3803 = vunpack.c.l.b16 %v693
    %v3804 = vunpack.c.h.b16 %v693
    %v3805 = vunpack.c.l.b16 %v694
    %v3806 = vunpack.c.h.b16 %v694
    %v3807 = vunpack.c.l.b16 %v695
    %v3808 = vunpack.c.h.b16 %v695
    %v3809 = vunpack.c.l.b16 %v696
    %v3810 = vunpack.c.h.b16 %v696
    %v3811 = vunpack.c.l.b16 %v697
    %v3812 = vunpack.c.h.b16 %v697
    %v3813 = vunpack.c.l.b16 %v698
    %v3814 = vunpack.c.h.b16 %v698
    %v3815 = vunpack.c.l.b16 %v699
    %v3816 = vunpack.c.h.b16 %v699
    %v3817 = vunpack.c.l.b16 %v700
    %v3818 = vunpack.c.h.b16 %v700
    %v3819 = vunpack.c.l.b16 %v701
    %v3820 = vunpack.c.h.b16 %v701
    %v3821 = vunpack.c.l.b16 %v702
    %v3822 = vunpack.c.h.b16 %v702
    %v3823 = vunpack.c.l.b16 %v703
    %v3824 = vunpack.c.h.b16 %v703
    %v3825 = vunpack.c.l.b16 %v704
    %v3826 = vunpack.c.h.b16 %v704
    %v3827 = vunpack.c.l.b16 %v705
    %v3828 = vunpack.c.h.b16 %v705
    %v3829 = vunpack.c.l.b16 %v706
    %v3830 = vunpack.c.h.b16 %v706
    %v3831 = vunpack.c.l.b16 %v707
    %v3832 = vunpack.c.h.b16 %v707
    %v3833 = vunpack.c.l.b16 %v708
    %v3834 = vunpack.c.h.b16 %v708
    %v3835 = vunpack.c.l.b16 %v709
    %v3836 = vunpack.c.h.b16 %v709
    %v3837 = vunpack.c.l.b16 %v710
    %v3838 = vunpack.c.h.b16 %v710
    %v3839 = vunpack.c.l.b16 %v711
    %v3840 = vunpack.c.h.b16 %v711
    %v3841 = vunpack.c.l.b16 %v712
    %v3842 = vunpack.c.h.b16 %v712
    %v3843 = vunpack.c.l.b16 %v713
    %v3844 = vunpack.c.h.b16 %v713
    %v3845 = vunpack.c.l.b16 %v714
    %v3846 = vunpack.c.h.b16 %v714
    %v3847 = vunpack.c.l.b16 %v715
    %v3848 = vunpack.c.h.b16 %v715
    %v3849 = vunpack.c.l.b16 %v716
    %v3850 = vunpack.c.h.b16 %v716
    %v3851 = vunpack.c.l.b16 %v717
    %v3852 = vunpack.c.h.b16 %v717
    %v3853 = vunpack.c.l.b16 %v718
    %v3854 = vunpack.c.h.b16 %v718
    %v3855 = vunpack.c.l.b16 %v719
    %v3856 = vunpack.c.h.b16 %v719
    %v3857 = vunpack.c.l.b16 %v720
    %v3858 = vunpack.c.h.b16 %v720
    %v3859 = vunpack.c.l.b16 %v721
    %v3860 = vunpack.c.h.b16 %v721
    %v3861 = vunpack.c.l.b16 %v722
    %v3862 = vunpack.c.h.b16 %v722
    %v3863 = vunpack.c.l.b16 %v723
    %v3864 = vunpack.c.h.b16 %v723
    %v3865 = vunpack.c.l.b16 %v724
    %v3866 = vunpack.c.h.b16 %v724
    %v3867 = vunpack.c.l.b16 %v725
    %v3868 = vunpack.c.h.b16 %v725
    %v3869 = vunpack.c.l.b16 %v726
    %v3870 = vunpack.c.h.b16 %v726
    %v3871 = vunpack.c.l.b16 %v727
    %v3872 = vunpack.c.h.b16 %v727
    %v3873 = vunpack.c.l.b16 %v728
    %v3874 = vunpack.c.h.b16 %v728
    %v3875 = vunpack.c.l.b16 %v729
    %v3876 = vunpack.c.h.b16 %v729
    %v3877 = vunpack.c.l.b16 %v730
    %v3878 = vunpack.c.h.b16 %v730
    %v3879 = vunpack.c.l.b16 %v731
    %v3880 = vunpack.c.h.b16 %v731
    %v3881 = vunpack.c.l.b16 %v732
    %v3882 = vunpack.c.h.b16 %v732
    %v3883 = vunpack.c.l.b16 %v733
    %v3884 = vunpack.c.h.b16 %v733
    %v3885 = vunpack.c.l.b16 %v734
    %v3886 = vunpack.c.h.b16 %v734
    %v3887 = vunpack.c.l.b16 %v735
    %v3888 = vunpack.c.h.b16 %v735
    %v3889 = vunpack.c.l.b16 %v736
    %v3890 = vunpack.c.h.b16 %v736
    %v3891 = vunpack.c.l.b16 %v737
    %v3892 = vunpack.c.h.b16 %v737
    %v3893 = vunpack.c.l.b16 %v738
    %v3894 = vunpack.c.h.b16 %v738
    %v3895 = vunpack.c.l.b16 %v739
    %v3896 = vunpack.c.h.b16 %v739
    %v3897 = vunpack.c.l.b16 %v740
    %v3898 = vunpack.c.h.b16 %v740
    %v3899 = vunpack.c.l.b16 %v741
    %v3900 = vunpack.c.h.b16 %v741
    %v3901 = vunpack.c.l.b16 %v742
    %v3902 = vunpack.c.h.b16 %v742
    %v3903 = vunpack.c.l.b16 %v743
    %v3904 = vunpack.c.h.b16 %v743
    %v3905 = vunpack.c.l.b16 %v744
    %v3906 = vunpack.c.h.b16 %v744
    %v3907 = vunpack.c.l.b16 %v745
    %v3908 = vunpack.c.h.b16 %v745
    %v3909 = vunpack.c.l.b16 %v746
    %v3910 = vunpack.c.h.b16 %v746
    %v3911 = vunpack.c.l.b16 %v747
    %v3912 = vunpack.c.h.b16 %v747
    %v3913 = vunpack.c.l.b16 %v748
    %v3914 = vunpack.c.h.b16 %v748
    %v3915 = vunpack.c.l.b16 %v749
    %v3916 = vunpack.c.h.b16 %v749
    %v3917 = vunpack.c.l.b16 %v750
    %v3918 = vunpack.c.h.b16 %v750
    %v3919 = vunpack.c.l.b16 %v751
    %v3920 = vunpack.c.h.b16 %v751
    %v3921 = vunpack.c.l.b16 %v752
    %v3922 = vunpack.c.h.b16 %v752
    %v3923 = vunpack.c.l.b16 %v753
    %v3924 = vunpack.c.h.b16 %v753
    %v3925 = vunpack.c.l.b16 %v754
    %v3926 = vunpack.c.h.b16 %v754
    %v3927 = vunpack.c.l.b16 %v755
    %v3928 = vunpack.c.h.b16 %v755
    %v3929 = vunpack.c.l.b16 %v756
    %v3930 = vunpack.c.h.b16 %v756
    %v3931 = vunpack.c.l.b16 %v757
    %v3932 = vunpack.c.h.b16 %v757
    %v3933 = vunpack.c.l.b16 %v758
    %v3934 = vunpack.c.h.b16 %v758
    %v3935 = vunpack.c.l.b16 %v759
    %v3936 = vunpack.c.h.b16 %v759
    %v3937 = vunpack.c.l.b16 %v760
    %v3938 = vunpack.c.h.b16 %v760
    %v3939 = vunpack.c.l.b16 %v761
    %v3940 = vunpack.c.h.b16 %v761
    %v3941 = vunpack.c.l.b16 %v762
    %v3942 = vunpack.c.h.b16 %v762
    %v3943 = vunpack.c.l.b16 %v763
    %v3944 = vunpack.c.h.b16 %v763
    %v3945 = vunpack.c.l.b16 %v764
    %v3946 = vunpack.c.h.b16 %v764
    %v3947 = vunpack.c.l.b16 %v765
    %v3948 = vunpack.c.h.b16 %v765
    %v3949 = vunpack.c.l.b16 %v766
    %v3950 = vunpack.c.h.b16 %v766
    %v3951 = vunpack.c.l.b16 %v767
    %v3952 = vunpack.c.h.b16 %v767
    %v3953 = vunpack.c.l.b16 %v768
    %v3954 = vunpack.c.h.b16 %v768
    %v3955 = vunpack.c.l.b16 %v769
    %v3956 = vunpack.c.h.b16 %v769
    %v3957 = vunpack.c.l.b16 %v770
    %v3958 = vunpack.c.h.b16 %v770
    %v3959 = vunpack.c.l.b16 %v771
    %v3960 = vunpack.c.h.b16 %v771
    %v3961 = vunpack.c.l.b16 %v772
    %v3962 = vunpack.c.h.b16 %v772
    %v3963 = vunpack.c.l.b16 %v773
    %v3964 = vunpack.c.h.b16 %v773
    %v3965 = vunpack.c.l.b16 %v774
    %v3966 = vunpack.c.h.b16 %v774
    %v3967 = vunpack.c.l.b16 %v775
    %v3968 = vunpack.c.h.b16 %v775
    %v3969 = vunpack.c.l.b16 %v776
    %v3970 = vunpack.c.h.b16 %v776
    %v3971 = vunpack.c.l.b16 %v777
    %v3972 = vunpack.c.h.b16 %v777
    %v3973 = vunpack.c.l.b16 %v778
    %v3974 = vunpack.c.h.b16 %v778
    %v3975 = vunpack.c.l.b16 %v779
    %v3976 = vunpack.c.h.b16 %v779
    %v3977 = vunpack.c.l.b16 %v780
    %v3978 = vunpack.c.h.b16 %v780
    %v3979 = vunpack.c.l.b16 %v781
    %v3980 = vunpack.c.h.b16 %v781
    %v3981 = vunpack.c.l.b16 %v782
    %v3982 = vunpack.c.h.b16 %v782
    %v3983 = vunpack.c.l.b16 %v783
    %v3984 = vunpack.c.h.b16 %v783
    %v3985 = vunpack.c.l.b16 %v784
    %v3986 = vunpack.c.h.b16 %v784
    %v3987 = vunpack.c.l.b16 %v785
    %v3988 = vunpack.c.h.b16 %v785
    %v3989 = vunpack.c.l.b16 %v786
    %v3990 = vunpack.c.h.b16 %v786
    %v3991 = vunpack.c.l.b16 %v787
    %v3992 = vunpack.c.h.b16 %v787
    %v3993 = vunpack.c.l.b16 %v788
    %v3994 = vunpack.c.h.b16 %v788
    %v3995 = vunpack.c.l.b16 %v789
    %v3996 = vunpack.c.h.b16 %v789
    %v3997 = vunpack.c.l.b16 %v790
    %v3998 = vunpack.c.h.b16 %v790
    %v3999 = vunpack.c.l.b16 %v791
    %v4000 = vunpack.c.h.b16 %v791
    %v4001 = vunpack.c.l.b16 %v792
    %v4002 = vunpack.c.h.b16 %v792
    %v4003 = vunpack.c.l.b16 %v793
    %v4004 = vunpack.c.h.b16 %v793
    %v4005 = vunpack.c.l.b16 %v794
    %v4006 = vunpack.c.h.b16 %v794
    %v4007 = vunpack.c.l.b16 %v795
    %v4008 = vunpack.c.h.b16 %v795
    %v4009 = vunpack.c.l.b16 %v796
    %v4010 = vunpack.c.h.b16 %v796
    %v4011 = vunpack.c.l.b16 %v797
    %v4012 = vunpack.c.h.b16 %v797
    %v4013 = vunpack.c.l.b16 %v798
    %v4014 = vunpack.c.h.b16 %v798
    %v4015 = vunpack.c.l.b16 %v799
    %v4016 = vunpack.c.h.b16 %v799
    %v4017 = vunpack.c.l.b16 %v800
    %v4018 = vunpack.c.h.b16 %v800
    %v4019 = vunpack.c.l.b16 %v801
    %v4020 = vunpack.c.h.b16 %v801
    %v4021 = vunpack.c.l.b16 %v802
    %v4022 = vunpack.c.h.b16 %v802
    %v4023 = vunpack.c.l.b16 %v803
    %v4024 = vunpack.c.h.b16 %v803
    %v4025 = vunpack.c.l.b16 %v804
    %v4026 = vunpack.c.h.b16 %v804
    %v4027 = vunpack.c.l.b16 %v805
    %v4028 = vunpack.c.h.b16 %v805
    %v4029 = vunpack.c.l.b16 %v806
    %v4030 = vunpack.c.h.b16 %v806
    %v4031 = vunpack.c.l.b16 %v807
    %v4032 = vunpack.c.h.b16 %v807
    %v4033 = vunpack.c.l.b16 %v808
    %v4034 = vunpack.c.h.b16 %v808
    %v4035 = vunpack.c.l.b16 %v809
    %v4036 = vunpack.c.h.b16 %v809
    %v4037 = vunpack.c.l.b16 %v810
    %v4038 = vunpack.c.h.b16 %v810
    %v4039 = vunpack.c.l.b16 %v811
    %v4040 = vunpack.c.h.b16 %v811
    %v4041 = vunpack.c.l.b16 %v812
    %v4042 = vunpack.c.h.b16 %v812
    %v4043 = vunpack.c.l.b16 %v813
    %v4044 = vunpack.c.h.b16 %v813
    %v4045 = vunpack.c.l.b16 %v814
    %v4046 = vunpack.c.h.b16 %v814
    %v4047 = vunpack.c.l.b16 %v815
    %v4048 = vunpack.c.h.b16 %v815
    %v4049 = vunpack.c.l.b16 %v816
    %v4050 = vunpack.c.h.b16 %v816
    %v4051 = vunpack.c.l.b16 %v817
    %v4052 = vunpack.c.h.b16 %v817
    %v4053 = vunpack.c.l.b16 %v818
    %v4054 = vunpack.c.h.b16 %v818
    %v4055 = vunpack.c.l.b16 %v819
    %v4056 = vunpack.c.h.b16 %v819
    %v4057 = vunpack.c.l.b16 %v820
    %v4058 = vunpack.c.h.b16 %v820
    %v4059 = vunpack.c.l.b16 %v821
    %v4060 = vunpack.c.h.b16 %v821
    %v4061 = vunpack.c.l.b16 %v822
    %v4062 = vunpack.c.h.b16 %v822
    %v4063 = vunpack.c.l.b16 %v823
    %v4064 = vunpack.c.h.b16 %v823
    %v4065 = vunpack.c.l.b16 %v824
    %v4066 = vunpack.c.h.b16 %v824
    %v4067 = vunpack.c.l.b16 %v825
    %v4068 = vunpack.c.h.b16 %v825
    %v4069 = vunpack.c.l.b16 %v826
    %v4070 = vunpack.c.h.b16 %v826
    %v4071 = vunpack.c.l.b16 %v827
    %v4072 = vunpack.c.h.b16 %v827
    %v4073 = vunpack.c.l.b16 %v828
    %v4074 = vunpack.c.h.b16 %v828
    %v4075 = vunpack.c.l.b16 %v829
    %v4076 = vunpack.c.h.b16 %v829
    %v4077 = vunpack.c.l.b16 %v830
    %v4078 = vunpack.c.h.b16 %v830
    %v4079 = vunpack.c.l.b16 %v831
    %v4080 = vunpack.c.h.b16 %v831
    %v4081 = vunpack.c.l.b16 %v832
    %v4082 = vunpack.c.h.b16 %v832
    %v4083 = vunpack.c.l.b16 %v833
    %v4084 = vunpack.c.h.b16 %v833
    %v4085 = vunpack.c.l.b16 %v834
    %v4086 = vunpack.c.h.b16 %v834
    %v4087 = vunpack.c.l.b16 %v835
    %v4088 = vunpack.c.h.b16 %v835
    %v4089 = vunpack.c.l.b16 %v836
    %v4090 = vunpack.c.h.b16 %v836
    %v4091 = vunpack.c.l.b16 %v837
    %v4092 = vunpack.c.h.b16 %v837
    %v4093 = vunpack.c.l.b16 %v838
    %v4094 = vunpack.c.h.b16 %v838
    %v4095 = vunpack.c.l.b16 %v839
    %v4096 = vunpack.c.h.b16 %v839
    %v4097 = vunpack.c.l.b16 %v840
    %v4098 = vunpack.c.h.b16 %v840
    %v4099 = vunpack.c.l.b16 %v841
    %v4100 = vunpack.c.h.b16 %v841
    %v4101 = vunpack.c.l.b16 %v842
    %v4102 = vunpack.c.h.b16 %v842
    %v4103 = vunpack.c.l.b16 %v843
    %v4104 = vunpack.c.h.b16 %v843
    %v4105 = vunpack.c.l.b16 %v844
    %v4106 = vunpack.c.h.b16 %v844
    %v4107 = vunpack.c.l.b16 %v845
    %v4108 = vunpack.c.h.b16 %v845
    %v4109 = vunpack.c.l.b16 %v846
    %v4110 = vunpack.c.h.b16 %v846
    %v4111 = vunpack.c.l.b16 %v847
    %v4112 = vunpack.c.h.b16 %v847
    %v4113 = vunpack.c.l.b16 %v848
    %v4114 = vunpack.c.h.b16 %v848
    %v4115 = vunpack.c.l.b16 %v849
    %v4116 = vunpack.c.h.b16 %v849
    %v4117 = vunpack.c.l.b16 %v850
    %v4118 = vunpack.c.h.b16 %v850
    %v4119 = vunpack.c.l.b16 %v851
    %v4120 = vunpack.c.h.b16 %v851
    %v4121 = vunpack.c.l.b16 %v852
    %v4122 = vunpack.c.h.b16 %v852
    %v4123 = vunpack.c.l.b16 %v853
    %v4124 = vunpack.c.h.b16 %v853
    %v4125 = vunpack.c.l.b16 %v854
    %v4126 = vunpack.c.h.b16 %v854
    %v4127 = vunpack.c.l.b16 %v855
    %v4128 = vunpack.c.h.b16 %v855
    %v4129 = vunpack.c.l.b16 %v856
    %v4130 = vunpack.c.h.b16 %v856
    %v4131 = vunpack.c.l.b16 %v857
    %v4132 = vunpack.c.h.b16 %v857
    %v4133 = vunpack.c.l.b16 %v858
    %v4134 = vunpack.c.h.b16 %v858
    %v4135 = vunpack.c.l.b16 %v859
    %v4136 = vunpack.c.h.b16 %v859
    %v4137 = vunpack.c.l.b16 %v860
    %v4138 = vunpack.c.h.b16 %v860
    %v4139 = vunpack.c.l.b16 %v861
    %v4140 = vunpack.c.h.b16 %v861
    %v4141 = vunpack.c.l.b16 %v862
    %v4142 = vunpack.c.h.b16 %v862
    %v4143 = vunpack.c.l.b16 %v863
    %v4144 = vunpack.c.h.b16 %v863
    %v4145 = vunpack.c.l.b16 %v864
    %v4146 = vunpack.c.h.b16 %v864
    %v4147 = vunpack.c.l.b16 %v865
    %v4148 = vunpack.c.h.b16 %v865
    %v4149 = vunpack.c.l.b16 %v866
    %v4150 = vunpack.c.h.b16 %v866
    %v4151 = vunpack.c.l.b16 %v867
    %v4152 = vunpack.c.h.b16 %v867
    %v4153 = vunpack.c.l.b16 %v868
    %v4154 = vunpack.c.h.b16 %v868
    %v4155 = vunpack.c.l.b16 %v869
    %v4156 = vunpack.c.h.b16 %v869
    %v4157 = vunpack.c.l.b16 %v870
    %v4158 = vunpack.c.h.b16 %v870
    %v4159 = vunpack.c.l.b16 %v871
    %v4160 = vunpack.c.h.b16 %v871
    %v4161 = vunpack.c.l.b16 %v872
    %v4162 = vunpack.c.h.b16 %v872
    %v4163 = vunpack.c.l.b16 %v873
    %v4164 = vunpack.c.h.b16 %v873
    %v4165 = vunpack.c.l.b16 %v874
    %v4166 = vunpack.c.h.b16 %v874
    %v4167 = vunpack.c.l.b16 %v875
    %v4168 = vunpack.c.h.b16 %v875
    %v4169 = vunpack.c.l.b16 %v876
    %v4170 = vunpack.c.h.b16 %v876
    %v4171 = vunpack.c.l.b16 %v877
    %v4172 = vunpack.c.h.b16 %v877
    %v4173 = vunpack.c.l.b16 %v878
    %v4174 = vunpack.c.h.b16 %v878
    %v4175 = vunpack.c.l.b16 %v879
    %v4176 = vunpack.c.h.b16 %v879
    %v4177 = vunpack.c.l.b16 %v880
    %v4178 = vunpack.c.h.b16 %v880
    %v4179 = vunpack.c.l.b16 %v881
    %v4180 = vunpack.c.h.b16 %v881
    %v4181 = vunpack.c.l.b16 %v882
    %v4182 = vunpack.c.h.b16 %v882
    %v4183 = vunpack.c.l.b16 %v883
    %v4184 = vunpack.c.h.b16 %v883
    %v4185 = vunpack.c.l.b16 %v884
    %v4186 = vunpack.c.h.b16 %v884
    %v4187 = vunpack.c.l.b16 %v885
    %v4188 = vunpack.c.h.b16 %v885
    %v4189 = vunpack.c.l.b16 %v886
    %v4190 = vunpack.c.h.b16 %v886
    %v4191 = vunpack.c.l.b16 %v887
    %v4192 = vunpack.c.h.b16 %v887
    %v4193 = vunpack.c.l.b16 %v888
    %v4194 = vunpack.c.h.b16 %v888
    %v4195 = vunpack.c.l.b16 %v889
    %v4196 = vunpack.c.h.b16 %v889
    %v4197 = vunpack.c.l.b16 %v890
    %v4198 = vunpack.c.h.b16 %v890
    %v4199 = vunpack.c.l.b16 %v891
    %v4200 = vunpack.c.h.b16 %v891
    %v4201 = vunpack.c.l.b16 %v892
    %v4202 = vunpack.c.h.b16 %v892
    %v4203 = vunpack.c.l.b16 %v893
    %v4204 = vunpack.c.h.b16 %v893
    %v4205 = vunpack.c.l.b16 %v894
    %v4206 = vunpack.c.h.b16 %v894
    %v4207 = vunpack.c.l.b16 %v895
    %v4208 = vunpack.c.h.b16 %v895
    %v4209 = vunpack.c.l.b16 %v896
    %v4210 = vunpack.c.h.b16 %v896
    %v4211 = vunpack.c.l.b16 %v897
    %v4212 = vunpack.c.h.b16 %v897
    %v4213 = vunpack.c.l.b16 %v898
    %v4214 = vunpack.c.h.b16 %v898
    %v4215 = vunpack.c.l.b16 %v899
    %v4216 = vunpack.c.h.b16 %v899
    %v4217 = vunpack.c.l.b16 %v900
    %v4218 = vunpack.c.h.b16 %v900
    %v4219 = vunpack.c.l.b16 %v901
    %v4220 = vunpack.c.h.b16 %v901
    %v4221 = vunpack.c.l.b16 %v902
    %v4222 = vunpack.c.h.b16 %v902
    %v4223 = vunpack.c.l.b16 %v903
    %v4224 = vunpack.c.h.b16 %v903
    %v4225 = vunpack.c.l.b16 %v904
    %v4226 = vunpack.c.h.b16 %v904
    %v4227 = vunpack.c.l.b16 %v905
    %v4228 = vunpack.c.h.b16 %v905
    %v4229 = vunpack.c.l.b16 %v906
    %v4230 = vunpack.c.h.b16 %v906
    %v4231 = vunpack.c.l.b16 %v907
    %v4232 = vunpack.c.h.b16 %v907
    %v4233 = vunpack.c.l.b16 %v908
    %v4234 = vunpack.c.h.b16 %v908
    %v4235 = vunpack.c.l.b16 %v909
    %v4236 = vunpack.c.h.b16 %v909
    %v4237 = vunpack.c.l.b16 %v910
    %v4238 = vunpack.c.h.b16 %v910
    %v4239 = vunpack.c.l.b16 %v911
    %v4240 = vunpack.c.h.b16 %v911
    %v4241 = vunpack.c.l.b16 %v912
    %v4242 = vunpack.c.h.b16 %v912
    %v4243 = vunpack.c.l.b16 %v913
    %v4244 = vunpack.c.h.b16 %v913
    %v4245 = vunpack.c.l.b16 %v914
    %v4246 = vunpack.c.h.b16 %v914
    %v4247 = vunpack.c.l.b16 %v915
    %v4248 = vunpack.c.h.b16 %v915
    %v4249 = vunpack.c.l.b16 %v916
    %v4250 = vunpack.c.h.b16 %v916
    %v4251 = vunpack.c.l.b16 %v917
    %v4252 = vunpack.c.h.b16 %v917
    %v4253 = vunpack.c.l.b16 %v918
    %v4254 = vunpack.c.h.b16 %v918
    %v4255 = vunpack.c.l.b16 %v919
    %v4256 = vunpack.c.h.b16 %v919
    %v4257 = vunpack.c.l.b16 %v920
    %v4258 = vunpack.c.h.b16 %v920
    %v4259 = vunpack.c.l.b16 %v921
    %v4260 = vunpack.c.h.b16 %v921
    %v4261 = vunpack.c.l.b16 %v922
    %v4262 = vunpack.c.h.b16 %v922
    %v4263 = vunpack.c.l.b16 %v923
    %v4264 = vunpack.c.h.b16 %v923
    %v4265 = vunpack.c.l.b16 %v924
    %v4266 = vunpack.c.h.b16 %v924
    %v4267 = vunpack.c.l.b16 %v925
    %v4268 = vunpack.c.h.b16 %v925
    %v4269 = vunpack.c.l.b16 %v926
    %v4270 = vunpack.c.h.b16 %v926
    %v4271 = vunpack.c.l.b16 %v927
    %v4272 = vunpack.c.h.b16 %v927
    %v4273 = vunpack.c.l.b16 %v928
    %v4274 = vunpack.c.h.b16 %v928
    %v4275 = vunpack.c.l.b16 %v929
    %v4276 = vunpack.c.h.b16 %v929
    %v4277 = vunpack.c.l.b16 %v930
    %v4278 = vunpack.c.h.b16 %v930
    %v4279 = vunpack.c.l.b16 %v931
    %v4280 = vunpack.c.h.b16 %v931
    %v4281 = vunpack.c.l.b16 %v932
    %v4282 = vunpack.c.h.b16 %v932
    %v4283 = vunpack.c.l.b16 %v933
    %v4284 = vunpack.c.h.b16 %v933
    %v4285 = vunpack.c.l.b16 %v934
    %v4286 = vunpack.c.h.b16 %v934
    %v4287 = vunpack.c.l.b16 %v935
    %v4288 = vunpack.c.h.b16 %v935
    %v4289 = vunpack.c.l.b16 %v936
    %v4290 = vunpack.c.h.b16 %v936
    %v4291 = vunpack.c.l.b16 %v937
    %v4292 = vunpack.c.h.b16 %v937
    %v4293 = vunpack.c.l.b16 %v938
    %v4294 = vunpack.c.h.b16 %v938
    %v4295 = vunpack.c.l.b16 %v939
    %v4296 = vunpack.c.h.b16 %v939
    %v4297 = vunpack.c.l.b16 %v940
    %v4298 = vunpack.c.h.b16 %v940
    %v4299 = vunpack.c.l.b16 %v941
    %v4300 = vunpack.c.h.b16 %v941
    %v4301 = vunpack.c.l.b16 %v942
    %v4302 = vunpack.c.h.b16 %v942
    %v4303 = vunpack.c.l.b16 %v943
    %v4304 = vunpack.c.h.b16 %v943
    %v4305 = vunpack.c.l.b16 %v944
    %v4306 = vunpack.c.h.b16 %v944
    %v4307 = vunpack.c.l.b16 %v945
    %v4308 = vunpack.c.h.b16 %v945
    %v4309 = vunpack.c.l.b16 %v946
    %v4310 = vunpack.c.h.b16 %v946
    %v4311 = vunpack.c.l.b16 %v947
    %v4312 = vunpack.c.h.b16 %v947
    %v4313 = vunpack.c.l.b16 %v948
    %v4314 = vunpack.c.h.b16 %v948
    %v4315 = vunpack.c.l.b16 %v949
    %v4316 = vunpack.c.h.b16 %v949
    %v4317 = vunpack.c.l.b16 %v950
    %v4318 = vunpack.c.h.b16 %v950
    %v4319 = vunpack.c.l.b16 %v951
    %v4320 = vunpack.c.h.b16 %v951
    %v4321 = vunpack.c.l.b16 %v952
    %v4322 = vunpack.c.h.b16 %v952
    %v4323 = vunpack.c.l.b16 %v953
    %v4324 = vunpack.c.h.b16 %v953
    %v4325 = vunpack.c.l.b16 %v954
    %v4326 = vunpack.c.h.b16 %v954
    %v4327 = vunpack.c.l.b16 %v955
    %v4328 = vunpack.c.h.b16 %v955
    %v4329 = vunpack.c.l.b16 %v956
    %v4330 = vunpack.c.h.b16 %v956
    %v4331 = vunpack.c.l.b16 %v957
    %v4332 = vunpack.c.h.b16 %v957
    %v4333 = vunpack.c.l.b16 %v958
    %v4334 = vunpack.c.h.b16 %v958
    %v4335 = vunpack.c.l.b16 %v959
    %v4336 = vunpack.c.h.b16 %v959
    %v4337 = vunpack.c.l.b16 %v960
    %v4338 = vunpack.c.h.b16 %v960
    %v4339 = vunpack.c.l.b16 %v961
    %v4340 = vunpack.c.h.b16 %v961
    %v4341 = vunpack.c.l.b16 %v962
    %v4342 = vunpack.c.h.b16 %v962
    %v4343 = vunpack.c.l.b16 %v963
    %v4344 = vunpack.c.h.b16 %v963
    %v4345 = vunpack.c.l.b16 %v964
    %v4346 = vunpack.c.h.b16 %v964
    %v4347 = vunpack.c.l.b16 %v965
    %v4348 = vunpack.c.h.b16 %v965
    %v4349 = vunpack.c.l.b16 %v966
    %v4350 = vunpack.c.h.b16 %v966
    %v4351 = vunpack.c.l.b16 %v967
    %v4352 = vunpack.c.h.b16 %v967
    %v4353 = vunpack.c.l.b16 %v968
    %v4354 = vunpack.c.h.b16 %v968
    %v4355 = vunpack.c.l.b16 %v969
    %v4356 = vunpack.c.h.b16 %v969
    %v4357 = vunpack.c.l.b16 %v970
    %v4358 = vunpack.c.h.b16 %v970
    %v4359 = vunpack.c.l.b16 %v971
    %v4360 = vunpack.c.h.b16 %v971
    %v4361 = vunpack.c.l.b16 %v972
    %v4362 = vunpack.c.h.b16 %v972
    %v4363 = vunpack.c.l.b16 %v973
    %v4364 = vunpack.c.h.b16 %v973
    %v4365 = vunpack.c.l.b16 %v974
    %v4366 = vunpack.c.h.b16 %v974
    %v4367 = vunpack.c.l.b16 %v975
    %v4368 = vunpack.c.h.b16 %v975
    %v4369 = vunpack.c.l.b16 %v976
    %v4370 = vunpack.c.h.b16 %v976
    %v4371 = vunpack.c.l.b16 %v977
    %v4372 = vunpack.c.h.b16 %v977
    %v4373 = vunpack.c.l.b16 %v978
    %v4374 = vunpack.c.h.b16 %v978
    %v4375 = vunpack.c.l.b16 %v979
    %v4376 = vunpack.c.h.b16 %v979
    %v4377 = vunpack.c.l.b16 %v980
    %v4378 = vunpack.c.h.b16 %v980
    %v4379 = vunpack.c.l.b16 %v981
    %v4380 = vunpack.c.h.b16 %v981
    %v4381 = vunpack.c.l.b16 %v982
    %v4382 = vunpack.c.h.b16 %v982
    %v4383 = vunpack.c.l.b16 %v983
    %v4384 = vunpack.c.h.b16 %v983
    %v4385 = vunpack.c.l.b16 %v984
    %v4386 = vunpack.c.h.b16 %v984
    %v4387 = vunpack.c.l.b16 %v985
    %v4388 = vunpack.c.h.b16 %v985
    %v4389 = vunpack.c.l.b16 %v986
    %v4390 = vunpack.c.h.b16 %v986
    %v4391 = vunpack.c.l.b16 %v987
    %v4392 = vunpack.c.h.b16 %v987
    %v4393 = vunpack.c.l.b16 %v988
    %v4394 = vunpack.c.h.b16 %v988
    %v4395 = vunpack.c.l.b16 %v989
    %v4396 = vunpack.c.h.b16 %v989
    %v4397 = vunpack.c.l.b16 %v990
    %v4398 = vunpack.c.h.b16 %v990
    %v4399 = vunpack.c.l.b16 %v991
    %v4400 = vunpack.c.h.b16 %v991
    %v4401 = vunpack.c.l.b16 %v992
    %v4402 = vunpack.c.h.b16 %v992
    %v4403 = vunpack.c.l.b16 %v993
    %v4404 = vunpack.c.h.b16 %v993
    %v4405 = vunpack.c.l.b16 %v994
    %v4406 = vunpack.c.h.b16 %v994
    %v4407 = vunpack.c.l.b16 %v995
    %v4408 = vunpack.c.h.b16 %v995
    %v4409 = vunpack.c.l.b16 %v996
    %v4410 = vunpack.c.h.b16 %v996
    %v4411 = vunpack.c.l.b16 %v997
    %v4412 = vunpack.c.h.b16 %v997
    %v4413 = vunpack.c.l.b16 %v998
    %v4414 = vunpack.c.h.b16 %v998
    %v4415 = vunpack.c.l.b16 %v999
    %v4416 = vunpack.c.h.b16 %v999
    %v4417 = vunpack.c.l.b16 %v1000
    %v4418 = vunpack.c.h.b16 %v1000
    %v4419 = vunpack.c.l.b16 %v1001
    %v4420 = vunpack.c.h.b16 %v1001
    %v4421 = vunpack.c.l.b16 %v1002
    %v4422 = vunpack.c.h.b16 %v1002
    %v4423 = vunpack.c.l.b16 %v1003
    %v4424 = vunpack.c.h.b16 %v1003
    %v4425 = vunpack.c.l.b16 %v1004
    %v4426 = vunpack.c.h.b16 %v1004
    %v4427 = vunpack.c.l.b16 %v1005
    %v4428 = vunpack.c.h.b16 %v1005
    %v4429 = vunpack.c.l.b16 %v1006
    %v4430 = vunpack.c.h.b16 %v1006
    %v4431 = vunpack.c.l.b16 %v1007
    %v4432 = vunpack.c.h.b16 %v1007
    %v4433 = vunpack.c.l.b16 %v1008
    %v4434 = vunpack.c.h.b16 %v1008
    %v4435 = vunpack.c.l.b16 %v1009
    %v4436 = vunpack.c.h.b16 %v1009
    %v4437 = vunpack.c.l.b16 %v1010
    %v4438 = vunpack.c.h.b16 %v1010
    %v4439 = vunpack.c.l.b16 %v1011
    %v4440 = vunpack.c.h.b16 %v1011
    %v4441 = vunpack.c.l.b16 %v1012
    %v4442 = vunpack.c.h.b16 %v1012
    %v4443 = vunpack.c.l.b16 %v1013
    %v4444 = vunpack.c.h.b16 %v1013
    %v4445 = vunpack.c.l.b16 %v1014
    %v4446 = vunpack.c.h.b16 %v1014
    %v4447 = vunpack.c.l.b16 %v1015
    %v4448 = vunpack.c.h.b16 %v1015
    %v4449 = vunpack.c.l.b16 %v1016
    %v4450 = vunpack.c.h.b16 %v1016
    %v4451 = vunpack.c.l.b16 %v1017
    %v4452 = vunpack.c.h.b16 %v1017
    %v4453 = vunpack.c.l.b16 %v1018
    %v4454 = vunpack.c.h.b16 %v1018
    %v4455 = vunpack.c.l.b16 %v1019
    %v4456 = vunpack.c.h.b16 %v1019
    %v4457 = vunpack.c.l.b16 %v1020
    %v4458 = vunpack.c.h.b16 %v1020
    %v4459 = vunpack.c.l.b16 %v1021
    %v4460 = vunpack.c.h.b16 %v1021
    %v4461 = vunpack.c.l.b16 %v1022
    %v4462 = vunpack.c.h.b16 %v1022
    %v4463 = vunpack.c.l.b16 %v1023
    %v4464 = vunpack.c.h.b16 %v1023
    %v4465 = vunpack.c.l.b16 %v1024
    %v4466 = vunpack.c.h.b16 %v1024
    %v4467 = vunpack.c.l.b16 %v1025
    %v4468 = vunpack.c.h.b16 %v1025
    %v4469 = vunpack.c.l.b16 %v1026
    %v4470 = vunpack.c.h.b16 %v1026
    %v4471 = vunpack.c.l.b16 %v1027
    %v4472 = vunpack.c.h.b16 %v1027
    %v4473 = vunpack.c.l.b16 %v1028
    %v4474 = vunpack.c.h.b16 %v1028
    %v4475 = vunpack.c.l.b16 %v1029
    %v4476 = vunpack.c.h.b16 %v1029
    %v4477 = vunpack.c.l.b16 %v1030
    %v4478 = vunpack.c.h.b16 %v1030
    %v4479 = vunpack.c.l.b16 %v1031
    %v4480 = vunpack.c.h.b16 %v1031
    %v4481 = vunpack.c.l.b16 %v1032
    %v4482 = vunpack.c.h.b16 %v1032
    %v4483 = vunpack.c.l.b16 %v1033
    %v4484 = vunpack.c.h.b16 %v1033
    %v4485 = vunpack.c.l.b16 %v1034
    %v4486 = vunpack.c.h.b16 %v1034
    %v4487 = vunpack.c.l.b16 %v1035
    %v4488 = vunpack.c.h.b16 %v1035
    %v4489 = vunpack.c.l.b16 %v1036
    %v4490 = vunpack.c.h.b16 %v1036
    %v4491 = vunpack.c.l.b16 %v1037
    %v4492 = vunpack.c.h.b16 %v1037
    %v4493 = vunpack.c.l.b16 %v1038
    %v4494 = vunpack.c.h.b16 %v1038
    %v4495 = vunpack.c.l.b16 %v1039
    %v4496 = vunpack.c.h.b16 %v1039
    %v4497 = vunpack.c.l.b16 %v1040
    %v4498 = vunpack.c.h.b16 %v1040
    %v4499 = vunpack.c.l.b16 %v1041
    %v4500 = vunpack.c.h.b16 %v1041
    %v4501 = vunpack.c.l.b16 %v1042
    %v4502 = vunpack.c.h.b16 %v1042
    %v4503 = vunpack.c.l.b16 %v1043
    %v4504 = vunpack.c.h.b16 %v1043
    %v4505 = vunpack.c.l.b16 %v1044
    %v4506 = vunpack.c.h.b16 %v1044
    %v4507 = vunpack.c.l.b16 %v1045
    %v4508 = vunpack.c.h.b16 %v1045
    %v4509 = vunpack.c.l.b16 %v1046
    %v4510 = vunpack.c.h.b16 %v1046
    %v4511 = vunpack.c.l.b16 %v1047
    %v4512 = vunpack.c.h.b16 %v1047
    %v4513 = vunpack.c.l.b16 %v1048
    %v4514 = vunpack.c.h.b16 %v1048
    %v4515 = vunpack.c.l.b16 %v1049
    %v4516 = vunpack.c.h.b16 %v1049
    %v4517 = vunpack.c.l.b16 %v1050
    %v4518 = vunpack.c.h.b16 %v1050
    %v4519 = vunpack.c.l.b16 %v1051
    %v4520 = vunpack.c.h.b16 %v1051
    %v4521 = vunpack.c.l.b16 %v1052
    %v4522 = vunpack.c.h.b16 %v1052
    %v4523 = vunpack.c.l.b16 %v1053
    %v4524 = vunpack.c.h.b16 %v1053
    %v4525 = vunpack.c.l.b16 %v1054
    %v4526 = vunpack.c.h.b16 %v1054
    %v4527 = vunpack.c.l.b16 %v1055
    %v4528 = vunpack.c.h.b16 %v1055
    %v4529 = vunpack.c.l.b16 %v1056
    %v4530 = vunpack.c.h.b16 %v1056
    %v4531 = vunpack.c.l.b16 %v1057
    %v4532 = vunpack.c.h.b16 %v1057
    %v4533 = vunpack.c.l.b16 %v1058
    %v4534 = vunpack.c.h.b16 %v1058
    %v4535 = vunpack.c.l.b16 %v1059
    %v4536 = vunpack.c.h.b16 %v1059
    %v4537 = vunpack.c.l.b16 %v1060
    %v4538 = vunpack.c.h.b16 %v1060
    %v4539 = vunpack.c.l.b16 %v1061
    %v4540 = vunpack.c.h.b16 %v1061
    %v4541 = vunpack.c.l.b16 %v1062
    %v4542 = vunpack.c.h.b16 %v1062
    %v4543 = vunpack.c.l.b16 %v1063
    %v4544 = vunpack.c.h.b16 %v1063
    %v4545 = vunpack.c.l.b16 %v1064
    %v4546 = vunpack.c.h.b16 %v1064
    %v4547 = vunpack.c.l.b16 %v1065
    %v4548 = vunpack.c.h.b16 %v1065
    %v4549 = vunpack.c.l.b16 %v1066
    %v4550 = vunpack.c.h.b16 %v1066
    %v4551 = vunpack.c.l.b16 %v1067
    %v4552 = vunpack.c.h.b16 %v1067
    %v4553 = vunpack.c.l.b16 %v1068
    %v4554 = vunpack.c.h.b16 %v1068
    %v4555 = vunpack.c.l.b16 %v1069
    %v4556 = vunpack.c.h.b16 %v1069
    %v4557 = vunpack.c.l.b16 %v1070
    %v4558 = vunpack.c.h.b16 %v1070
    %v4559 = vunpack.c.l.b16 %v1071
    %v4560 = vunpack.c.h.b16 %v1071
    %v4561 = vunpack.c.l.b16 %v1072
    %v4562 = vunpack.c.h.b16 %v1072
    %v4563 = vunpack.c.l.b16 %v1073
    %v4564 = vunpack.c.h.b16 %v1073
    %v4565 = vunpack.c.l.b16 %v1074
    %v4566 = vunpack.c.h.b16 %v1074
    %v4567 = vunpack.c.l.b16 %v1075
    %v4568 = vunpack.c.h.b16 %v1075
    %v4569 = vunpack.c.l.b16 %v1076
    %v4570 = vunpack.c.h.b16 %v1076
    %v4571 = vunpack.c.l.b16 %v1077
    %v4572 = vunpack.c.h.b16 %v1077
    %v4573 = vunpack.c.l.b16 %v1078
    %v4574 = vunpack.c.h.b16 %v1078
    %v4575 = vunpack.c.l.b16 %v1079
    %v4576 = vunpack.c.h.b16 %v1079
    %v4577 = vunpack.c.l.b16 %v1080
    %v4578 = vunpack.c.h.b16 %v1080
    %v4579 = vunpack.c.l.b16 %v1081
    %v4580 = vunpack.c.h.b16 %v1081
    %v4581 = vunpack.c.l.b16 %v1082
    %v4582 = vunpack.c.h.b16 %v1082
    %v4583 = vunpack.c.l.b16 %v1083
    %v4584 = vunpack.c.h.b16 %v1083
    %v4585 = vunpack.c.l.b16 %v1084
    %v4586 = vunpack.c.h.b16 %v1084
    %v4587 = vunpack.c.l.b16 %v1085
    %v4588 = vunpack.c.h.b16 %v1085
    %v4589 = vunpack.c.l.b16 %v1086
    %v4590 = vunpack.c.h.b16 %v1086
    %v4591 = vunpack.c.l.b16 %v1087
    %v4592 = vunpack.c.h.b16 %v1087
    %v4593 = vunpack.c.l.b16 %v1088
    %v4594 = vunpack.c.h.b16 %v1088
    %v4595 = vunpack.c.l.b16 %v1089
    %v4596 = vunpack.c.h.b16 %v1089
    %v4597 = vunpack.c.l.b16 %v1090
    %v4598 = vunpack.c.h.b16 %v1090
    %v4599 = vunpack.c.l.b16 %v1091
    %v4600 = vunpack.c.h.b16 %v1091
    %v4601 = vunpack.c.l.b16 %v1092
    %v4602 = vunpack.c.h.b16 %v1092
    %v4603 = vunpack.c.l.b16 %v1093
    %v4604 = vunpack.c.h.b16 %v1093
    %v4605 = vunpack.c.l.b16 %v1094
    %v4606 = vunpack.c.h.b16 %v1094
    %v4607 = vunpack.c.l.b16 %v1095
    %v4608 = vunpack.c.h.b16 %v1095
    %v4609 = vunpack.c.l.b16 %v1096
    %v4610 = vunpack.c.h.b16 %v1096
    %v4611 = vunpack.c.l.b16 %v1097
    %v4612 = vunpack.c.h.b16 %v1097
    %v4613 = vunpack.c.l.b16 %v1098
    %v4614 = vunpack.c.h.b16 %v1098
    %v4615 = vunpack.c.l.b16 %v1099
    %v4616 = vunpack.c.h.b16 %v1099
    %v4617 = vunpack.c.l.b16 %v1100
    %v4618 = vunpack.c.h.b16 %v1100
    %v4619 = vunpack.c.l.b16 %v1101
    %v4620 = vunpack.c.h.b16 %v1101
    %v4621 = vunpack.c.l.b16 %v1102
    %v4622 = vunpack.c.h.b16 %v1102
    %v4623 = vunpack.c.l.b16 %v1103
    %v4624 = vunpack.c.h.b16 %v1103
    %v4625 = vunpack.c.l.b16 %v1104
    %v4626 = vunpack.c.h.b16 %v1104
    %v4627 = vunpack.c.l.b16 %v1105
    %v4628 = vunpack.c.h.b16 %v1105
    %v4629 = vunpack.c.l.b16 %v1106
    %v4630 = vunpack.c.h.b16 %v1106
    %v4631 = vunpack.c.l.b16 %v1107
    %v4632 = vunpack.c.h.b16 %v1107
    %v4633 = vunpack.c.l.b16 %v1108
    %v4634 = vunpack.c.h.b16 %v1108
    %v4635 = vunpack.c.l.b16 %v1109
    %v4636 = vunpack.c.h.b16 %v1109
    %v4637 = vunpack.c.l.b16 %v1110
    %v4638 = vunpack.c.h.b16 %v1110
    %v4639 = vunpack.c.l.b16 %v1111
    %v4640 = vunpack.c.h.b16 %v1111
    %v4641 = vunpack.c.l.b16 %v1112
    %v4642 = vunpack.c.h.b16 %v1112
    %v4643 = vunpack.c.l.b16 %v1113
    %v4644 = vunpack.c.h.b16 %v1113
    %v4645 = vunpack.c.l.b16 %v1114
    %v4646 = vunpack.c.h.b16 %v1114
    %v4647 = vunpack.c.l.b16 %v1115
    %v4648 = vunpack.c.h.b16 %v1115
    %v4649 = vunpack.c.l.b16 %v1116
    %v4650 = vunpack.c.h.b16 %v1116
    %v4651 = vunpack.c.l.b16 %v1117
    %v4652 = vunpack.c.h.b16 %v1117
    %v4653 = vunpack.c.l.b16 %v1118
    %v4654 = vunpack.c.h.b16 %v1118
    %v4655 = vunpack.c.l.b16 %v1119
    %v4656 = vunpack.c.h.b16 %v1119
    %v4657 = vunpack.c.l.b16 %v1120
    %v4658 = vunpack.c.h.b16 %v1120
    %v4659 = vunpack.c.l.b16 %v1121
    %v4660 = vunpack.c.h.b16 %v1121
    %v4661 = vunpack.c.l.b16 %v1122
    %v4662 = vunpack.c.h.b16 %v1122
    %v4663 = vunpack.c.l.b16 %v1123
    %v4664 = vunpack.c.h.b16 %v1123
    %v4665 = vunpack.c.l.b16 %v1124
    %v4666 = vunpack.c.h.b16 %v1124
    %v4667 = vunpack.c.l.b16 %v1125
    %v4668 = vunpack.c.h.b16 %v1125
    %v4669 = vunpack.c.l.b16 %v1126
    %v4670 = vunpack.c.h.b16 %v1126
    %v4671 = vunpack.c.l.b16 %v1127
    %v4672 = vunpack.c.h.b16 %v1127
    %v4673 = vunpack.c.l.b16 %v1128
    %v4674 = vunpack.c.h.b16 %v1128
    %v4675 = vunpack.c.l.b16 %v1129
    %v4676 = vunpack.c.h.b16 %v1129
    %v4677 = vunpack.c.l.b16 %v1130
    %v4678 = vunpack.c.h.b16 %v1130
    %v4679 = vunpack.c.l.b16 %v1131
    %v4680 = vunpack.c.h.b16 %v1131
    %v4681 = vunpack.c.l.b16 %v1132
    %v4682 = vunpack.c.h.b16 %v1132
    %v4683 = vunpack.c.l.b16 %v1133
    %v4684 = vunpack.c.h.b16 %v1133
    %v4685 = vunpack.c.l.b16 %v1134
    %v4686 = vunpack.c.h.b16 %v1134
    %v4687 = vunpack.c.l.b16 %v1135
    %v4688 = vunpack.c.h.b16 %v1135
    %v4689 = vunpack.c.l.b16 %v1136
    %v4690 = vunpack.c.h.b16 %v1136
    %v4691 = vunpack.c.l.b16 %v1137
    %v4692 = vunpack.c.h.b16 %v1137
    %v4693 = vunpack.c.l.b16 %v1138
    %v4694 = vunpack.c.h.b16 %v1138
    %v4695 = vunpack.c.l.b16 %v1139
    %v4696 = vunpack.c.h.b16 %v1139
    %v4697 = vunpack.c.l.b16 %v1140
    %v4698 = vunpack.c.h.b16 %v1140
    %v4699 = vunpack.c.l.b16 %v1141
    %v4700 = vunpack.c.h.b16 %v1141
    %v4701 = vunpack.c.l.b16 %v1142
    %v4702 = vunpack.c.h.b16 %v1142
    %v4703 = vunpack.c.l.b16 %v1143
    %v4704 = vunpack.c.h.b16 %v1143
    %v4705 = vunpack.c.l.b16 %v1144
    %v4706 = vunpack.c.h.b16 %v1144
    %v4707 = vunpack.c.l.b16 %v1145
    %v4708 = vunpack.c.h.b16 %v1145
    %v4709 = vunpack.c.l.b16 %v1146
    %v4710 = vunpack.c.h.b16 %v1146
    %v4711 = vunpack.c.l.b16 %v1147
    %v4712 = vunpack.c.h.b16 %v1147
    %v4713 = vunpack.c.l.b16 %v1148
    %v4714 = vunpack.c.h.b16 %v1148
    %v4715 = vunpack.c.l.b16 %v1149
    %v4716 = vunpack.c.h.b16 %v1149
    %v4717 = vunpack.c.l.b16 %v1150
    %v4718 = vunpack.c.h.b16 %v1150
    %v4719 = vunpack.c.l.b16 %v1151
    %v4720 = vunpack.c.h.b16 %v1151
    %v4721 = vunpack.c.l.b16 %v1152
    %v4722 = vunpack.c.h.b16 %v1152
    %v4723 = vunpack.c.l.b16 %v1153
    %v4724 = vunpack.c.h.b16 %v1153
    %v4725 = vunpack.c.l.b16 %v1154
    %v4726 = vunpack.c.h.b16 %v1154
    %v4727 = vunpack.c.l.b16 %v1155
    %v4728 = vunpack.c.h.b16 %v1155
    %v4729 = vunpack.c.l.b16 %v1156
    %v4730 = vunpack.c.h.b16 %v1156
    %v4731 = vunpack.c.l.b16 %v1157
    %v4732 = vunpack.c.h.b16 %v1157
    %v4733 = vunpack.c.l.b16 %v1158
    %v4734 = vunpack.c.h.b16 %v1158
    %v4735 = vunpack.c.l.b16 %v1159
    %v4736 = vunpack.c.h.b16 %v1159
    %v4737 = vunpack.c.l.b16 %v1160
    %v4738 = vunpack.c.h.b16 %v1160
    %v4739 = vunpack.c.l.b16 %v1161
    %v4740 = vunpack.c.h.b16 %v1161
    %v4741 = vunpack.c.l.b16 %v1162
    %v4742 = vunpack.c.h.b16 %v1162
    %v4743 = vunpack.c.l.b16 %v1163
    %v4744 = vunpack.c.h.b16 %v1163
    %v4745 = vunpack.c.l.b16 %v1164
    %v4746 = vunpack.c.h.b16 %v1164
    %v4747 = vunpack.c.l.b16 %v1165
    %v4748 = vunpack.c.h.b16 %v1165
    %v4749 = vunpack.c.l.b16 %v1166
    %v4750 = vunpack.c.h.b16 %v1166
    %v4751 = vunpack.c.l.b16 %v1167
    %v4752 = vunpack.c.h.b16 %v1167
    %v4753 = vunpack.c.l.b16 %v1168
    %v4754 = vunpack.c.h.b16 %v1168
    %v4755 = vunpack.c.l.b16 %v1169
    %v4756 = vunpack.c.h.b16 %v1169
    %v4757 = vunpack.c.l.b16 %v1170
    %v4758 = vunpack.c.h.b16 %v1170
    %v4759 = vunpack.c.l.b16 %v1171
    %v4760 = vunpack.c.h.b16 %v1171
    %v4761 = vunpack.c.l.b16 %v1172
    %v4762 = vunpack.c.h.b16 %v1172
    %v4763 = vunpack.c.l.b16 %v1173
    %v4764 = vunpack.c.h.b16 %v1173
    %v4765 = vunpack.c.l.b16 %v1174
    %v4766 = vunpack.c.h.b16 %v1174
    %v4767 = vunpack.c.l.b16 %v1175
    %v4768 = vunpack.c.h.b16 %v1175
    %v4769 = vunpack.c.l.b16 %v1176
    %v4770 = vunpack.c.h.b16 %v1176
    %v4771 = vunpack.c.l.b16 %v1177
    %v4772 = vunpack.c.h.b16 %v1177
    %v4773 = vunpack.c.l.b16 %v1178
    %v4774 = vunpack.c.h.b16 %v1178
    %v4775 = vunpack.c.l.b16 %v1179
    %v4776 = vunpack.c.h.b16 %v1179
    %v4777 = vpack.c.b16 %v2481, %v2473
    %v4778 = vpack.c.b16 %v2482, %v2474
    %v4779 = vpack.c.b16 %v2483, %v2475
    %v4780 = vpack.c.b16 %v2484, %v2476
    %v4781 = vpack.c.b16 %v2485, %v2477
    %v4782 = vpack.c.b16 %v2486, %v2478
    %v4783 = vpack.c.b16 %v2487, %v2479
    %v4784 = vpack.c.b16 %v2488, %v2480
    %v4785 = vpack.c.b16 %v2497, %v2489
    %v4786 = vpack.c.b16 %v2498, %v2490
    %v4787 = vpack.c.b16 %v2499, %v2491
    %v4788 = vpack.c.b16 %v2500, %v2492
    %v4789 = vpack.c.b16 %v2501, %v2493
    %v4790 = vpack.c.b16 %v2502, %v2494
    %v4791 = vpack.c.b16 %v2503, %v2495
    %v4792 = vpack.c.b16 %v2504, %v2496
    %v4793 = vpack.c.b16 %v2513, %v2505
    %v4794 = vpack.c.b16 %v2514, %v2506
    %v4795 = vpack.c.b16 %v2515, %v2507
    %v4796 = vpack.c.b16 %v2516, %v2508
    %v4797 = vpack.c.b16 %v2517, %v2509
    %v4798 = vpack.c.b16 %v2518, %v2510
    %v4799 = vpack.c.b16 %v2519, %v2511
    %v4800 = vpack.c.b16 %v2520, %v2512
    %v4801 = vpack.c.b16 %v2529, %v2521
    %v4802 = vpack.c.b16 %v2530, %v2522
    %v4803 = vpack.c.b16 %v2531, %v2523
    %v4804 = vpack.c.b16 %v2532, %v2524
    %v4805 = vpack.c.b16 %v2533, %v2525
    %v4806 = vpack.c.b16 %v2534, %v2526
    %v4807 = vpack.c.b16 %v2535, %v2527
    %v4808 = vpack.c.b16 %v2536, %v2528
    %v4809 = vpack.c.b16 %v2545, %v2537
    %v4810 = vpack.c.b16 %v2546, %v2538
    %v4811 = vpack.c.b16 %v2547, %v2539
    %v4812 = vpack.c.b16 %v2548, %v2540
    %v4813 = vpack.c.b16 %v2549, %v2541
    %v4814 = vpack.c.b16 %v2550, %v2542
    %v4815 = vpack.c.b16 %v2551, %v2543
    %v4816 = vpack.c.b16 %v2552, %v2544
    %v4817 = vpack.c.b16 %v2561, %v2553
    %v4818 = vpack.c.b16 %v2562, %v2554
    %v4819 = vpack.c.b16 %v2563, %v2555
    %v4820 = vpack.c.b16 %v2564, %v2556
    %v4821 = vpack.c.b16 %v2565, %v2557
    %v4822 = vpack.c.b16 %v2566, %v2558
    %v4823 = vpack.c.b16 %v2567, %v2559
    %v4824 = vpack.c.b16 %v2568, %v2560
    %v4825 = vpack.c.b16 %v2577, %v2569
    %v4826 = vpack.c.b16 %v2578, %v2570
    %v4827 = vpack.c.b16 %v2579, %v2571
    %v4828 = vpack.c.b16 %v2580, %v2572
    %v4829 = vpack.c.b16 %v2581, %v2573
    %v4830 = vpack.c.b16 %v2582, %v2574
    %v4831 = vpack.c.b16 %v2583, %v2575
    %v4832 = vpack.c.b16 %v2584, %v2576
    %v4833 = vpack.c.b16 %v2593, %v2585
    %v4834 = vpack.c.b16 %v2594, %v2586
    %v4835 = vpack.c.b16 %v2595, %v2587
    %v4836 = vpack.c.b16 %v2596, %v2588
    %v4837 = vpack.c.b16 %v2597, %v2589
    %v4838 = vpack.c.b16 %v2598, %v2590
    %v4839 = vpack.c.b16 %v2599, %v2591
    %v4840 = vpack.c.b16 %v2600, %v2592
    %v4841 = vpack.c.b16 %v2609, %v2601
    %v4842 = vpack.c.b16 %v2610, %v2602
    %v4843 = vpack.c.b16 %v2611, %v2603
    %v4844 = vpack.c.b16 %v2612, %v2604
    %v4845 = vpack.c.b16 %v2613, %v2605
    %v4846 = vpack.c.b16 %v2614, %v2606
    %v4847 = vpack.c.b16 %v2615, %v2607
    %v4848 = vpack.c.b16 %v2616, %v2608
    %v4849 = vpack.c.b16 %v2625, %v2617
    %v4850 = vpack.c.b16 %v2626, %v2618
    %v4851 = vpack.c.b16 %v2627, %v2619
    %v4852 = vpack.c.b16 %v2628, %v2620
    %v4853 = vpack.c.b16 %v2629, %v2621
    %v4854 = vpack.c.b16 %v2630, %v2622
    %v4855 = vpack.c.b16 %v2631, %v2623
    %v4856 = vpack.c.b16 %v2632, %v2624
    %v4857 = vpack.c.b16 %v2641, %v2633
    %v4858 = vpack.c.b16 %v2642, %v2634
    %v4859 = vpack.c.b16 %v2643, %v2635
    %v4860 = vpack.c.b16 %v2644, %v2636
    %v4861 = vpack.c.b16 %v2645, %v2637
    %v4862 = vpack.c.b16 %v2646, %v2638
    %v4863 = vpack.c.b16 %v2647, %v2639
    %v4864 = vpack.c.b16 %v2648, %v2640
    %v4865 = vpack.c.b16 %v2657, %v2649
    %v4866 = vpack.c.b16 %v2658, %v2650
    %v4867 = vpack.c.b16 %v2659, %v2651
    %v4868 = vpack.c.b16 %v2660, %v2652
    %v4869 = vpack.c.b16 %v2661, %v2653
    %v4870 = vpack.c.b16 %v2662, %v2654
    %v4871 = vpack.c.b16 %v2663, %v2655
    %v4872 = vpack.c.b16 %v2664, %v2656
    %v4873 = vpack.c.b16 %v2673, %v2665
    %v4874 = vpack.c.b16 %v2674, %v2666
    %v4875 = vpack.c.b16 %v2675, %v2667
    %v4876 = vpack.c.b16 %v2676, %v2668
    %v4877 = vpack.c.b16 %v2677, %v2669
    %v4878 = vpack.c.b16 %v2678, %v2670
    %v4879 = vpack.c.b16 %v2679, %v2671
    %v4880 = vpack.c.b16 %v2680, %v2672
    %v4881 = vpack.c.b16 %v2689, %v2681
    %v4882 = vpack.c.b16 %v2690, %v2682
    %v4883 = vpack.c.b16 %v2691, %v2683
    %v4884 = vpack.c.b16 %v2692, %v2684
    %v4885 = vpack.c.b16 %v2693, %v2685
    %v4886 = vpack.c.b16 %v2694, %v2686
    %v4887 = vpack.c.b16 %v2695, %v2687
    %v4888 = vpack.c.b16 %v2696, %v2688
    %v4889 = vpack.c.b16 %v2705, %v2697
    %v4890 = vpack.c.b16 %v2706, %v2698
    %v4891 = vpack.c.b16 %v2707, %v2699
    %v4892 = vpack.c.b16 %v2708, %v2700
    %v4893 = vpack.c.b16 %v2709, %v2701
    %v4894 = vpack.c.b16 %v2710, %v2702
    %v4895 = vpack.c.b16 %v2711, %v2703
    %v4896 = vpack.c.b16 %v2712, %v2704
    %v4897 = vpack.c.b16 %v2721, %v2713
    %v4898 = vpack.c.b16 %v2722, %v2714
    %v4899 = vpack.c.b16 %v2723, %v2715
    %v4900 = vpack.c.b16 %v2724, %v2716
    %v4901 = vpack.c.b16 %v2725, %v2717
    %v4902 = vpack.c.b16 %v2726, %v2718
    %v4903 = vpack.c.b16 %v2727, %v2719
    %v4904 = vpack.c.b16 %v2728, %v2720
    %v4905 = vpack.c.b16 %v2737, %v2729
    %v4906 = vpack.c.b16 %v2738, %v2730
    %v4907 = vpack.c.b16 %v2739, %v2731
    %v4908 = vpack.c.b16 %v2740, %v2732
    %v4909 = vpack.c.b16 %v2741, %v2733
    %v4910 = vpack.c.b16 %v2742, %v2734
    %v4911 = vpack.c.b16 %v2743, %v2735
    %v4912 = vpack.c.b16 %v2744, %v2736
    %v4913 = vpack.c.b16 %v2753, %v2745
    %v4914 = vpack.c.b16 %v2754, %v2746
    %v4915 = vpack.c.b16 %v2755, %v2747
    %v4916 = vpack.c.b16 %v2756, %v2748
    %v4917 = vpack.c.b16 %v2757, %v2749
    %v4918 = vpack.c.b16 %v2758, %v2750
    %v4919 = vpack.c.b16 %v2759, %v2751
    %v4920 = vpack.c.b16 %v2760, %v2752
    %v4921 = vpack.c.b16 %v2769, %v2761
    %v4922 = vpack.c.b16 %v2770, %v2762
    %v4923 = vpack.c.b16 %v2771, %v2763
    %v4924 = vpack.c.b16 %v2772, %v2764
    %v4925 = vpack.c.b16 %v2773, %v2765
    %v4926 = vpack.c.b16 %v2774, %v2766
    %v4927 = vpack.c.b16 %v2775, %v2767
    %v4928 = vpack.c.b16 %v2776, %v2768
    %v4929 = vpack.c.b16 %v2785, %v2777
    %v4930 = vpack.c.b16 %v2786, %v2778
    %v4931 = vpack.c.b16 %v2787, %v2779
    %v4932 = vpack.c.b16 %v2788, %v2780
    %v4933 = vpack.c.b16 %v2789, %v2781
    %v4934 = vpack.c.b16 %v2790, %v2782
    %v4935 = vpack.c.b16 %v2791, %v2783
    %v4936 = vpack.c.b16 %v2792, %v2784
    %v4937 = vpack.c.b16 %v2801, %v2793
    %v4938 = vpack.c.b16 %v2802, %v2794
    %v4939 = vpack.c.b16 %v2803, %v2795
    %v4940 = vpack.c.b16 %v2804, %v2796
    %v4941 = vpack.c.b16 %v2805, %v2797
    %v4942 = vpack.c.b16 %v2806, %v2798
    %v4943 = vpack.c.b16 %v2807, %v2799
    %v4944 = vpack.c.b16 %v2808, %v2800
    %v4945 = vpack.c.b16 %v2817, %v2809
    %v4946 = vpack.c.b16 %v2818, %v2810
    %v4947 = vpack.c.b16 %v2819, %v2811
    %v4948 = vpack.c.b16 %v2820, %v2812
    %v4949 = vpack.c.b16 %v2821, %v2813
    %v4950 = vpack.c.b16 %v2822, %v2814
    %v4951 = vpack.c.b16 %v2823, %v2815
    %v4952 = vpack.c.b16 %v2824, %v2816
    %v4953 = vpack.c.b16 %v2833, %v2825
    %v4954 = vpack.c.b16 %v2834, %v2826
    %v4955 = vpack.c.b16 %v2835, %v2827
    %v4956 = vpack.c.b16 %v2836, %v2828
    %v4957 = vpack.c.b16 %v2837, %v2829
    %v4958 = vpack.c.b16 %v2838, %v2830
    %v4959 = vpack.c.b16 %v2839, %v2831
    %v4960 = vpack.c.b16 %v2840, %v2832
    %v4961 = vpack.c.b16 %v2849, %v2841
    %v4962 = vpack.c.b16 %v2850, %v2842
    %v4963 = vpack.c.b16 %v2851, %v2843
    %v4964 = vpack.c.b16 %v2852, %v2844
    %v4965 = vpack.c.b16 %v2853, %v2845
    %v4966 = vpack.c.b16 %v2854, %v2846
    %v4967 = vpack.c.b16 %v2855, %v2847
    %v4968 = vpack.c.b16 %v2856, %v2848
    %v4969 = vpack.c.b16 %v2865, %v2857
    %v4970 = vpack.c.b16 %v2866, %v2858
    %v4971 = vpack.c.b16 %v2867, %v2859
    %v4972 = vpack.c.b16 %v2868, %v2860
    %v4973 = vpack.c.b16 %v2869, %v2861
    %v4974 = vpack.c.b16 %v2870, %v2862
    %v4975 = vpack.c.b16 %v2871, %v2863
    %v4976 = vpack.c.b16 %v2872, %v2864
    %v4977 = vpack.c.b16 %v2881, %v2873
    %v4978 = vpack.c.b16 %v2882, %v2874
    %v4979 = vpack.c.b16 %v2883, %v2875
    %v4980 = vpack.c.b16 %v2884, %v2876
    %v4981 = vpack.c.b16 %v2885, %v2877
    %v4982 = vpack.c.b16 %v2886, %v2878
    %v4983 = vpack.c.b16 %v2887, %v2879
    %v4984 = vpack.c.b16 %v2888, %v2880
    %v4985 = vpack.c.b16 %v2897, %v2889
    %v4986 = vpack.c.b16 %v2898, %v2890
    %v4987 = vpack.c.b16 %v2899, %v2891
    %v4988 = vpack.c.b16 %v2900, %v2892
    %v4989 = vpack.c.b16 %v2901, %v2893
    %v4990 = vpack.c.b16 %v2902, %v2894
    %v4991 = vpack.c.b16 %v2903, %v2895
    %v4992 = vpack.c.b16 %v2904, %v2896
    %v4993 = vpack.c.b16 %v2913, %v2905
    %v4994 = vpack.c.b16 %v2914, %v2906
    %v4995 = vpack.c.b16 %v2915, %v2907
    %v4996 = vpack.c.b16 %v2916, %v2908
    %v4997 = vpack.c.b16 %v2917, %v2909
    %v4998 = vpack.c.b16 %v2918, %v2910
    %v4999 = vpack.c.b16 %v2919, %v2911
    %v5000 = vpack.c.b16 %v2920, %v2912
    %v5001 = vpack.c.b16 %v2929, %v2921
    %v5002 = vpack.c.b16 %v2930, %v2922
    %v5003 = vpack.c.b16 %v2931, %v2923
    %v5004 = vpack.c.b16 %v2932, %v2924
    %v5005 = vpack.c.b16 %v2933, %v2925
    %v5006 = vpack.c.b16 %v2934, %v2926
    %v5007 = vpack.c.b16 %v2935, %v2927
    %v5008 = vpack.c.b16 %v2936, %v2928
    %v5009 = vpack.c.b16 %v2945, %v2937
    %v5010 = vpack.c.b16 %v2946, %v2938
    %v5011 = vpack.c.b16 %v2947, %v2939
    %v5012 = vpack.c.b16 %v2948, %v2940
    %v5013 = vpack.c.b16 %v2949, %v2941
    %v5014 = vpack.c.b16 %v2950, %v2942
    %v5015 = vpack.c.b16 %v2951, %v2943
    %v5016 = vpack.c.b16 %v2952, %v2944
    %v5017 = vpack.c.b16 %v2961, %v2953
    %v5018 = vpack.c.b16 %v2962, %v2954
    %v5019 = vpack.c.b16 %v2963, %v2955
    %v5020 = vpack.c.b16 %v2964, %v2956
    %v5021 = vpack.c.b16 %v2965, %v2957
    %v5022 = vpack.c.b16 %v2966, %v2958
    %v5023 = vpack.c.b16 %v2967, %v2959
    %v5024 = vpack.c.b16 %v2968, %v2960
    %v5025 = vpack.c.b16 %v2977, %v2969
    %v5026 = vpack.c.b16 %v2978, %v2970
    %v5027 = vpack.c.b16 %v2979, %v2971
    %v5028 = vpack.c.b16 %v2980, %v2972
    %v5029 = vpack.c.b16 %v2981, %v2973
    %v5030 = vpack.c.b16 %v2982, %v2974
    %v5031 = vpack.c.b16 %v2983, %v2975
    %v5032 = vpack.c.b16 %v2984, %v2976
    %v5033 = vpack.c.b16 %v2993, %v2985
    %v5034 = vpack.c.b16 %v2994, %v2986
    %v5035 = vpack.c.b16 %v2995, %v2987
    %v5036 = vpack.c.b16 %v2996, %v2988
    %v5037 = vpack.c.b16 %v2997, %v2989
    %v5038 = vpack.c.b16 %v2998, %v2990
    %v5039 = vpack.c.b16 %v2999, %v2991
    %v5040 = vpack.c.b16 %v3000, %v2992
    %v5041 = vpack.c.b16 %v3009, %v3001
    %v5042 = vpack.c.b16 %v3010, %v3002
    %v5043 = vpack.c.b16 %v3011, %v3003
    %v5044 = vpack.c.b16 %v3012, %v3004
    %v5045 = vpack.c.b16 %v3013, %v3005
    %v5046 = vpack.c.b16 %v3014, %v3006
    %v5047 = vpack.c.b16 %v3015, %v3007
    %v5048 = vpack.c.b16 %v3016, %v3008
    %v5049 = vpack.c.b16 %v3025, %v3017
    %v5050 = vpack.c.b16 %v3026, %v3018
    %v5051 = vpack.c.b16 %v3027, %v3019
    %v5052 = vpack.c.b16 %v3028, %v3020
    %v5053 = vpack.c.b16 %v3029, %v3021
    %v5054 = vpack.c.b16 %v3030, %v3022
    %v5055 = vpack.c.b16 %v3031, %v3023
    %v5056 = vpack.c.b16 %v3032, %v3024
    %v5057 = vpack.c.b16 %v3041, %v3033
    %v5058 = vpack.c.b16 %v3042, %v3034
    %v5059 = vpack.c.b16 %v3043, %v3035
    %v5060 = vpack.c.b16 %v3044, %v3036
    %v5061 = vpack.c.b16 %v3045, %v3037
    %v5062 = vpack.c.b16 %v3046, %v3038
    %v5063 = vpack.c.b16 %v3047, %v3039
    %v5064 = vpack.c.b16 %v3048, %v3040
    %v5065 = vpack.c.b16 %v3057, %v3049
    %v5066 = vpack.c.b16 %v3058, %v3050
    %v5067 = vpack.c.b16 %v3059, %v3051
    %v5068 = vpack.c.b16 %v3060, %v3052
    %v5069 = vpack.c.b16 %v3061, %v3053
    %v5070 = vpack.c.b16 %v3062, %v3054
    %v5071 = vpack.c.b16 %v3063, %v3055
    %v5072 = vpack.c.b16 %v3064, %v3056
    %v5073 = vpack.c.b16 %v3073, %v3065
    %v5074 = vpack.c.b16 %v3074, %v3066
    %v5075 = vpack.c.b16 %v3075, %v3067
    %v5076 = vpack.c.b16 %v3076, %v3068
    %v5077 = vpack.c.b16 %v3077, %v3069
    %v5078 = vpack.c.b16 %v3078, %v3070
    %v5079 = vpack.c.b16 %v3079, %v3071
    %v5080 = vpack.c.b16 %v3080, %v3072
    %v5081 = vpack.c.b16 %v3089, %v3081
    %v5082 = vpack.c.b16 %v3090, %v3082
    %v5083 = vpack.c.b16 %v3091, %v3083
    %v5084 = vpack.c.b16 %v3092, %v3084
    %v5085 = vpack.c.b16 %v3093, %v3085
    %v5086 = vpack.c.b16 %v3094, %v3086
    %v5087 = vpack.c.b16 %v3095, %v3087
    %v5088 = vpack.c.b16 %v3096, %v3088
    %v5089 = vpack.c.b16 %v3105, %v3097
    %v5090 = vpack.c.b16 %v3106, %v3098
    %v5091 = vpack.c.b16 %v3107, %v3099
    %v5092 = vpack.c.b16 %v3108, %v3100
    %v5093 = vpack.c.b16 %v3109, %v3101
    %v5094 = vpack.c.b16 %v3110, %v3102
    %v5095 = vpack.c.b16 %v3111, %v3103
    %v5096 = vpack.c.b16 %v3112, %v3104
    %v5097 = vpack.c.b16 %v3121, %v3113
    %v5098 = vpack.c.b16 %v3122, %v3114
    %v5099 = vpack.c.b16 %v3123, %v3115
    %v5100 = vpack.c.b16 %v3124, %v3116
    %v5101 = vpack.c.b16 %v3125, %v3117
    %v5102 = vpack.c.b16 %v3126, %v3118
    %v5103 = vpack.c.b16 %v3127, %v3119
    %v5104 = vpack.c.b16 %v3128, %v3120
    %v5105 = vpack.c.b16 %v3137, %v3129
    %v5106 = vpack.c.b16 %v3138, %v3130
    %v5107 = vpack.c.b16 %v3139, %v3131
    %v5108 = vpack.c.b16 %v3140, %v3132
    %v5109 = vpack.c.b16 %v3141, %v3133
    %v5110 = vpack.c.b16 %v3142, %v3134
    %v5111 = vpack.c.b16 %v3143, %v3135
    %v5112 = vpack.c.b16 %v3144, %v3136
    %v5113 = vpack.c.b16 %v3153, %v3145
    %v5114 = vpack.c.b16 %v3154, %v3146
    %v5115 = vpack.c.b16 %v3155, %v3147
    %v5116 = vpack.c.b16 %v3156, %v3148
    %v5117 = vpack.c.b16 %v3157, %v3149
    %v5118 = vpack.c.b16 %v3158, %v3150
    %v5119 = vpack.c.b16 %v3159, %v3151
    %v5120 = vpack.c.b16 %v3160, %v3152
    %v5121 = vpack.c.b16 %v3169, %v3161
    %v5122 = vpack.c.b16 %v3170, %v3162
    %v5123 = vpack.c.b16 %v3171, %v3163
    %v5124 = vpack.c.b16 %v3172, %v3164
    %v5125 = vpack.c.b16 %v3173, %v3165
    %v5126 = vpack.c.b16 %v3174, %v3166
    %v5127 = vpack.c.b16 %v3175, %v3167
    %v5128 = vpack.c.b16 %v3176, %v3168
    %v5129 = vpack.c.b16 %v3185, %v3177
    %v5130 = vpack.c.b16 %v3186, %v3178
    %v5131 = vpack.c.b16 %v3187, %v3179
    %v5132 = vpack.c.b16 %v3188, %v3180
    %v5133 = vpack.c.b16 %v3189, %v3181
    %v5134 = vpack.c.b16 %v3190, %v3182
    %v5135 = vpack.c.b16 %v3191, %v3183
    %v5136 = vpack.c.b16 %v3192, %v3184
    %v5137 = vpack.c.b16 %v3201, %v3193
    %v5138 = vpack.c.b16 %v3202, %v3194
    %v5139 = vpack.c.b16 %v3203, %v3195
    %v5140 = vpack.c.b16 %v3204, %v3196
    %v5141 = vpack.c.b16 %v3205, %v3197
    %v5142 = vpack.c.b16 %v3206, %v3198
    %v5143 = vpack.c.b16 %v3207, %v3199
    %v5144 = vpack.c.b16 %v3208, %v3200
    %v5145 = vpack.c.b16 %v3217, %v3209
    %v5146 = vpack.c.b16 %v3218, %v3210
    %v5147 = vpack.c.b16 %v3219, %v3211
    %v5148 = vpack.c.b16 %v3220, %v3212
    %v5149 = vpack.c.b16 %v3221, %v3213
    %v5150 = vpack.c.b16 %v3222, %v3214
    %v5151 = vpack.c.b16 %v3223, %v3215
    %v5152 = vpack.c.b16 %v3224, %v3216
    %v5153 = vpack.c.b16 %v3233, %v3225
    %v5154 = vpack.c.b16 %v3234, %v3226
    %v5155 = vpack.c.b16 %v3235, %v3227
    %v5156 = vpack.c.b16 %v3236, %v3228
    %v5157 = vpack.c.b16 %v3237, %v3229
    %v5158 = vpack.c.b16 %v3238, %v3230
    %v5159 = vpack.c.b16 %v3239, %v3231
    %v5160 = vpack.c.b16 %v3240, %v3232
    %v5161 = vpack.c.b16 %v3249, %v3241
    %v5162 = vpack.c.b16 %v3250, %v3242
    %v5163 = vpack.c.b16 %v3251, %v3243
    %v5164 = vpack.c.b16 %v3252, %v3244
    %v5165 = vpack.c.b16 %v3253, %v3245
    %v5166 = vpack.c.b16 %v3254, %v3246
    %v5167 = vpack.c.b16 %v3255, %v3247
    %v5168 = vpack.c.b16 %v3256, %v3248
    %v5169 = vpack.c.b16 %v3265, %v3257
    %v5170 = vpack.c.b16 %v3266, %v3258
    %v5171 = vpack.c.b16 %v3267, %v3259
    %v5172 = vpack.c.b16 %v3268, %v3260
    %v5173 = vpack.c.b16 %v3269, %v3261
    %v5174 = vpack.c.b16 %v3270, %v3262
    %v5175 = vpack.c.b16 %v3271, %v3263
    %v5176 = vpack.c.b16 %v3272, %v3264
    %v5177 = vpack.c.b16 %v3281, %v3273
    %v5178 = vpack.c.b16 %v3282, %v3274
    %v5179 = vpack.c.b16 %v3283, %v3275
    %v5180 = vpack.c.b16 %v3284, %v3276
    %v5181 = vpack.c.b16 %v3285, %v3277
    %v5182 = vpack.c.b16 %v3286, %v3278
    %v5183 = vpack.c.b16 %v3287, %v3279
    %v5184 = vpack.c.b16 %v3288, %v3280
    %v5185 = vpack.c.b16 %v3297, %v3289
    %v5186 = vpack.c.b16 %v3298, %v3290
    %v5187 = vpack.c.b16 %v3299, %v3291
    %v5188 = vpack.c.b16 %v3300, %v3292
    %v5189 = vpack.c.b16 %v3301, %v3293
    %v5190 = vpack.c.b16 %v3302, %v3294
    %v5191 = vpack.c.b16 %v3303, %v3295
    %v5192 = vpack.c.b16 %v3304, %v3296
    %v5193 = vpack.c.b16 %v3313, %v3305
    %v5194 = vpack.c.b16 %v3314, %v3306
    %v5195 = vpack.c.b16 %v3315, %v3307
    %v5196 = vpack.c.b16 %v3316, %v3308
    %v5197 = vpack.c.b16 %v3317, %v3309
    %v5198 = vpack.c.b16 %v3318, %v3310
    %v5199 = vpack.c.b16 %v3319, %v3311
    %v5200 = vpack.c.b16 %v3320, %v3312
    %v5201 = vpack.c.b16 %v3329, %v3321
    %v5202 = vpack.c.b16 %v3330, %v3322
    %v5203 = vpack.c.b16 %v3331, %v3323
    %v5204 = vpack.c.b16 %v3332, %v3324
    %v5205 = vpack.c.b16 %v3333, %v3325
    %v5206 = vpack.c.b16 %v3334, %v3326
    %v5207 = vpack.c.b16 %v3335, %v3327
    %v5208 = vpack.c.b16 %v3336, %v3328
    %v5209 = vpack.c.b16 %v3345, %v3337
    %v5210 = vpack.c.b16 %v3346, %v3338
    %v5211 = vpack.c.b16 %v3347, %v3339
    %v5212 = vpack.c.b16 %v3348, %v3340
    %v5213 = vpack.c.b16 %v3349, %v3341
    %v5214 = vpack.c.b16 %v3350, %v3342
    %v5215 = vpack.c.b16 %v3351, %v3343
    %v5216 = vpack.c.b16 %v3352, %v3344
    %v5217 = vpack.c.b16 %v3361, %v3353
    %v5218 = vpack.c.b16 %v3362, %v3354
    %v5219 = vpack.c.b16 %v3363, %v3355
    %v5220 = vpack.c.b16 %v3364, %v3356
    %v5221 = vpack.c.b16 %v3365, %v3357
    %v5222 = vpack.c.b16 %v3366, %v3358
    %v5223 = vpack.c.b16 %v3367, %v3359
    %v5224 = vpack.c.b16 %v3368, %v3360
    %v5225 = vpack.c.b16 %v3377, %v3369
    %v5226 = vpack.c.b16 %v3378, %v3370
    %v5227 = vpack.c.b16 %v3379, %v3371
    %v5228 = vpack.c.b16 %v3380, %v3372
    %v5229 = vpack.c.b16 %v3381, %v3373
    %v5230 = vpack.c.b16 %v3382, %v3374
    %v5231 = vpack.c.b16 %v3383, %v3375
    %v5232 = vpack.c.b16 %v3384, %v3376
    %v5233 = vpack.c.b16 %v3393, %v3385
    %v5234 = vpack.c.b16 %v3394, %v3386
    %v5235 = vpack.c.b16 %v3395, %v3387
    %v5236 = vpack.c.b16 %v3396, %v3388
    %v5237 = vpack.c.b16 %v3397, %v3389
    %v5238 = vpack.c.b16 %v3398, %v3390
    %v5239 = vpack.c.b16 %v3399, %v3391
    %v5240 = vpack.c.b16 %v3400, %v3392
    %v5241 = vpack.c.b16 %v3409, %v3401
    %v5242 = vpack.c.b16 %v3410, %v3402
    %v5243 = vpack.c.b16 %v3411, %v3403
    %v5244 = vpack.c.b16 %v3412, %v3404
    %v5245 = vpack.c.b16 %v3413, %v3405
    %v5246 = vpack.c.b16 %v3414, %v3406
    %v5247 = vpack.c.b16 %v3415, %v3407
    %v5248 = vpack.c.b16 %v3416, %v3408
    %v5249 = vpack.c.b16 %v3425, %v3417
    %v5250 = vpack.c.b16 %v3426, %v3418
    %v5251 = vpack.c.b16 %v3427, %v3419
    %v5252 = vpack.c.b16 %v3428, %v3420
    %v5253 = vpack.c.b16 %v3429, %v3421
    %v5254 = vpack.c.b16 %v3430, %v3422
    %v5255 = vpack.c.b16 %v3431, %v3423
    %v5256 = vpack.c.b16 %v3432, %v3424
    %v5257 = vpack.c.b16 %v3441, %v3433
    %v5258 = vpack.c.b16 %v3442, %v3434
    %v5259 = vpack.c.b16 %v3443, %v3435
    %v5260 = vpack.c.b16 %v3444, %v3436
    %v5261 = vpack.c.b16 %v3445, %v3437
    %v5262 = vpack.c.b16 %v3446, %v3438
    %v5263 = vpack.c.b16 %v3447, %v3439
    %v5264 = vpack.c.b16 %v3448, %v3440
    %v5265 = vpack.c.b16 %v3457, %v3449
    %v5266 = vpack.c.b16 %v3458, %v3450
    %v5267 = vpack.c.b16 %v3459, %v3451
    %v5268 = vpack.c.b16 %v3460, %v3452
    %v5269 = vpack.c.b16 %v3461, %v3453
    %v5270 = vpack.c.b16 %v3462, %v3454
    %v5271 = vpack.c.b16 %v3463, %v3455
    %v5272 = vpack.c.b16 %v3464, %v3456
    %v5273 = vpack.c.b16 %v3473, %v3465
    %v5274 = vpack.c.b16 %v3474, %v3466
    %v5275 = vpack.c.b16 %v3475, %v3467
    %v5276 = vpack.c.b16 %v3476, %v3468
    %v5277 = vpack.c.b16 %v3477, %v3469
    %v5278 = vpack.c.b16 %v3478, %v3470
    %v5279 = vpack.c.b16 %v3479, %v3471
    %v5280 = vpack.c.b16 %v3480, %v3472
    %v5281 = vpack.c.b16 %v3489, %v3481
    %v5282 = vpack.c.b16 %v3490, %v3482
    %v5283 = vpack.c.b16 %v3491, %v3483
    %v5284 = vpack.c.b16 %v3492, %v3484
    %v5285 = vpack.c.b16 %v3493, %v3485
    %v5286 = vpack.c.b16 %v3494, %v3486
    %v5287 = vpack.c.b16 %v3495, %v3487
    %v5288 = vpack.c.b16 %v3496, %v3488
    %v5289 = vpack.c.b16 %v3505, %v3497
    %v5290 = vpack.c.b16 %v3506, %v3498
    %v5291 = vpack.c.b16 %v3507, %v3499
    %v5292 = vpack.c.b16 %v3508, %v3500
    %v5293 = vpack.c.b16 %v3509, %v3501
    %v5294 = vpack.c.b16 %v3510, %v3502
    %v5295 = vpack.c.b16 %v3511, %v3503
    %v5296 = vpack.c.b16 %v3512, %v3504
    %v5297 = vpack.c.b16 %v3521, %v3513
    %v5298 = vpack.c.b16 %v3522, %v3514
    %v5299 = vpack.c.b16 %v3523, %v3515
    %v5300 = vpack.c.b16 %v3524, %v3516
    %v5301 = vpack.c.b16 %v3525, %v3517
    %v5302 = vpack.c.b16 %v3526, %v3518
    %v5303 = vpack.c.b16 %v3527, %v3519
    %v5304 = vpack.c.b16 %v3528, %v3520
    %v5305 = vpack.c.b16 %v3537, %v3529
    %v5306 = vpack.c.b16 %v3538, %v3530
    %v5307 = vpack.c.b16 %v3539, %v3531
    %v5308 = vpack.c.b16 %v3540, %v3532
    %v5309 = vpack.c.b16 %v3541, %v3533
    %v5310 = vpack.c.b16 %v3542, %v3534
    %v5311 = vpack.c.b16 %v3543, %v3535
    %v5312 = vpack.c.b16 %v3544, %v3536
    %v5313 = vpack.c.b16 %v3553, %v3545
    %v5314 = vpack.c.b16 %v3554, %v3546
    %v5315 = vpack.c.b16 %v3555, %v3547
    %v5316 = vpack.c.b16 %v3556, %v3548
    %v5317 = vpack.c.b16 %v3557, %v3549
    %v5318 = vpack.c.b16 %v3558, %v3550
    %v5319 = vpack.c.b16 %v3559, %v3551
    %v5320 = vpack.c.b16 %v3560, %v3552
    %v5321 = vpack.c.b16 %v3569, %v3561
    %v5322 = vpack.c.b16 %v3570, %v3562
    %v5323 = vpack.c.b16 %v3571, %v3563
    %v5324 = vpack.c.b16 %v3572, %v3564
    %v5325 = vpack.c.b16 %v3573, %v3565
    %v5326 = vpack.c.b16 %v3574, %v3566
    %v5327 = vpack.c.b16 %v3575, %v3567
    %v5328 = vpack.c.b16 %v3576, %v3568
    %v5329 = vpack.c.b16 %v3585, %v3577
    %v5330 = vpack.c.b16 %v3586, %v3578
    %v5331 = vpack.c.b16 %v3587, %v3579
    %v5332 = vpack.c.b16 %v3588, %v3580
    %v5333 = vpack.c.b16 %v3589, %v3581
    %v5334 = vpack.c.b16 %v3590, %v3582
    %v5335 = vpack.c.b16 %v3591, %v3583
    %v5336 = vpack.c.b16 %v3592, %v3584
    %v5337 = vpack.c.b16 %v3601, %v3593
    %v5338 = vpack.c.b16 %v3602, %v3594
    %v5339 = vpack.c.b16 %v3603, %v3595
    %v5340 = vpack.c.b16 %v3604, %v3596
    %v5341 = vpack.c.b16 %v3605, %v3597
    %v5342 = vpack.c.b16 %v3606, %v3598
    %v5343 = vpack.c.b16 %v3607, %v3599
    %v5344 = vpack.c.b16 %v3608, %v3600
    %v5345 = vpack.c.b16 %v3617, %v3609
    %v5346 = vpack.c.b16 %v3618, %v3610
    %v5347 = vpack.c.b16 %v3619, %v3611
    %v5348 = vpack.c.b16 %v3620, %v3612
    %v5349 = vpack.c.b16 %v3621, %v3613
    %v5350 = vpack.c.b16 %v3622, %v3614
    %v5351 = vpack.c.b16 %v3623, %v3615
    %v5352 = vpack.c.b16 %v3624, %v3616
    %v5353 = vpack.c.b16 %v3633, %v3625
    %v5354 = vpack.c.b16 %v3634, %v3626
    %v5355 = vpack.c.b16 %v3635, %v3627
    %v5356 = vpack.c.b16 %v3636, %v3628
    %v5357 = vpack.c.b16 %v3637, %v3629
    %v5358 = vpack.c.b16 %v3638, %v3630
    %v5359 = vpack.c.b16 %v3639, %v3631
    %v5360 = vpack.c.b16 %v3640, %v3632
    %v5361 = vpack.c.b16 %v3649, %v3641
    %v5362 = vpack.c.b16 %v3650, %v3642
    %v5363 = vpack.c.b16 %v3651, %v3643
    %v5364 = vpack.c.b16 %v3652, %v3644
    %v5365 = vpack.c.b16 %v3653, %v3645
    %v5366 = vpack.c.b16 %v3654, %v3646
    %v5367 = vpack.c.b16 %v3655, %v3647
    %v5368 = vpack.c.b16 %v3656, %v3648
    %v5369 = vpack.c.b16 %v3665, %v3657
    %v5370 = vpack.c.b16 %v3666, %v3658
    %v5371 = vpack.c.b16 %v3667, %v3659
    %v5372 = vpack.c.b16 %v3668, %v3660
    %v5373 = vpack.c.b16 %v3669, %v3661
    %v5374 = vpack.c.b16 %v3670, %v3662
    %v5375 = vpack.c.b16 %v3671, %v3663
    %v5376 = vpack.c.b16 %v3672, %v3664
    %v5377 = vpack.c.b16 %v3681, %v3673
    %v5378 = vpack.c.b16 %v3682, %v3674
    %v5379 = vpack.c.b16 %v3683, %v3675
    %v5380 = vpack.c.b16 %v3684, %v3676
    %v5381 = vpack.c.b16 %v3685, %v3677
    %v5382 = vpack.c.b16 %v3686, %v3678
    %v5383 = vpack.c.b16 %v3687, %v3679
    %v5384 = vpack.c.b16 %v3688, %v3680
    %v5385 = vpack.c.b16 %v3697, %v3689
    %v5386 = vpack.c.b16 %v3698, %v3690
    %v5387 = vpack.c.b16 %v3699, %v3691
    %v5388 = vpack.c.b16 %v3700, %v3692
    %v5389 = vpack.c.b16 %v3701, %v3693
    %v5390 = vpack.c.b16 %v3702, %v3694
    %v5391 = vpack.c.b16 %v3703, %v3695
    %v5392 = vpack.c.b16 %v3704, %v3696
    %v5393 = vpack.c.b16 %v3713, %v3705
    %v5394 = vpack.c.b16 %v3714, %v3706
    %v5395 = vpack.c.b16 %v3715, %v3707
    %v5396 = vpack.c.b16 %v3716, %v3708
    %v5397 = vpack.c.b16 %v3717, %v3709
    %v5398 = vpack.c.b16 %v3718, %v3710
    %v5399 = vpack.c.b16 %v3719, %v3711
    %v5400 = vpack.c.b16 %v3720, %v3712
    %v5401 = vpack.c.b16 %v3729, %v3721
    %v5402 = vpack.c.b16 %v3730, %v3722
    %v5403 = vpack.c.b16 %v3731, %v3723
    %v5404 = vpack.c.b16 %v3732, %v3724
    %v5405 = vpack.c.b16 %v3733, %v3725
    %v5406 = vpack.c.b16 %v3734, %v3726
    %v5407 = vpack.c.b16 %v3735, %v3727
    %v5408 = vpack.c.b16 %v3736, %v3728
    %v5409 = vpack.c.b16 %v3745, %v3737
    %v5410 = vpack.c.b16 %v3746, %v3738
    %v5411 = vpack.c.b16 %v3747, %v3739
    %v5412 = vpack.c.b16 %v3748, %v3740
    %v5413 = vpack.c.b16 %v3749, %v3741
    %v5414 = vpack.c.b16 %v3750, %v3742
    %v5415 = vpack.c.b16 %v3751, %v3743
    %v5416 = vpack.c.b16 %v3752, %v3744
    %v5417 = vpack.c.b16 %v3761, %v3753
    %v5418 = vpack.c.b16 %v3762, %v3754
    %v5419 = vpack.c.b16 %v3763, %v3755
    %v5420 = vpack.c.b16 %v3764, %v3756
    %v5421 = vpack.c.b16 %v3765, %v3757
    %v5422 = vpack.c.b16 %v3766, %v3758
    %v5423 = vpack.c.b16 %v3767, %v3759
    %v5424 = vpack.c.b16 %v3768, %v3760
    %v5425 = vpack.c.b16 %v3777, %v3769
    %v5426 = vpack.c.b16 %v3778, %v3770
    %v5427 = vpack.c.b16 %v3779, %v3771
    %v5428 = vpack.c.b16 %v3780, %v3772
    %v5429 = vpack.c.b16 %v3781, %v3773
    %v5430 = vpack.c.b16 %v3782, %v3774
    %v5431 = vpack.c.b16 %v3783, %v3775
    %v5432 = vpack.c.b16 %v3784, %v3776
    %v5433 = vpack.c.b16 %v3793, %v3785
    %v5434 = vpack.c.b16 %v3794, %v3786
    %v5435 = vpack.c.b16 %v3795, %v3787
    %v5436 = vpack.c.b16 %v3796, %v3788
    %v5437 = vpack.c.b16 %v3797, %v3789
    %v5438 = vpack.c.b16 %v3798, %v3790
    %v5439 = vpack.c.b16 %v3799, %v3791
    %v5440 = vpack.c.b16 %v3800, %v3792
    %v5441 = vpack.c.b16 %v3809, %v3801
    %v5442 = vpack.c.b16 %v3810, %v3802
    %v5443 = vpack.c.b16 %v3811, %v3803
    %v5444 = vpack.c.b16 %v3812, %v3804
    %v5445 = vpack.c.b16 %v3813, %v3805
    %v5446 = vpack.c.b16 %v3814, %v3806
    %v5447 = vpack.c.b16 %v3815, %v3807
    %v5448 = vpack.c.b16 %v3816, %v3808
    %v5449 = vpack.c.b16 %v3825, %v3817
    %v5450 = vpack.c.b16 %v3826, %v3818
    %v5451 = vpack.c.b16 %v3827, %v3819
    %v5452 = vpack.c.b16 %v3828, %v3820
    %v5453 = vpack.c.b16 %v3829, %v3821
    %v5454 = vpack.c.b16 %v3830, %v3822
    %v5455 = vpack.c.b16 %v3831, %v3823
    %v5456 = vpack.c.b16 %v3832, %v3824
    %v5457 = vpack.c.b16 %v3841, %v3833
    %v5458 = vpack.c.b16 %v3842, %v3834
    %v5459 = vpack.c.b16 %v3843, %v3835
    %v5460 = vpack.c.b16 %v3844, %v3836
    %v5461 = vpack.c.b16 %v3845, %v3837
    %v5462 = vpack.c.b16 %v3846, %v3838
    %v5463 = vpack.c.b16 %v3847, %v3839
    %v5464 = vpack.c.b16 %v3848, %v3840
    %v5465 = vpack.c.b16 %v3857, %v3849
    %v5466 = vpack.c.b16 %v3858, %v3850
    %v5467 = vpack.c.b16 %v3859, %v3851
    %v5468 = vpack.c.b16 %v3860, %v3852
    %v5469 = vpack.c.b16 %v3861, %v3853
    %v5470 = vpack.c.b16 %v3862, %v3854
    %v5471 = vpack.c.b16 %v3863, %v3855
    %v5472 = vpack.c.b16 %v3864, %v3856
    %v5473 = vpack.c.b16 %v3873, %v3865
    %v5474 = vpack.c.b16 %v3874, %v3866
    %v5475 = vpack.c.b16 %v3875, %v3867
    %v5476 = vpack.c.b16 %v3876, %v3868
    %v5477 = vpack.c.b16 %v3877, %v3869
    %v5478 = vpack.c.b16 %v3878, %v3870
    %v5479 = vpack.c.b16 %v3879, %v3871
    %v5480 = vpack.c.b16 %v3880, %v3872
    %v5481 = vpack.c.b16 %v3889, %v3881
    %v5482 = vpack.c.b16 %v3890, %v3882
    %v5483 = vpack.c.b16 %v3891, %v3883
    %v5484 = vpack.c.b16 %v3892, %v3884
    %v5485 = vpack.c.b16 %v3893, %v3885
    %v5486 = vpack.c.b16 %v3894, %v3886
    %v5487 = vpack.c.b16 %v3895, %v3887
    %v5488 = vpack.c.b16 %v3896, %v3888
    %v5489 = vpack.c.b16 %v3905, %v3897
    %v5490 = vpack.c.b16 %v3906, %v3898
    %v5491 = vpack.c.b16 %v3907, %v3899
    %v5492 = vpack.c.b16 %v3908, %v3900
    %v5493 = vpack.c.b16 %v3909, %v3901
    %v5494 = vpack.c.b16 %v3910, %v3902
    %v5495 = vpack.c.b16 %v3911, %v3903
    %v5496 = vpack.c.b16 %v3912, %v3904
    %v5497 = vpack.c.b16 %v3921, %v3913
    %v5498 = vpack.c.b16 %v3922, %v3914
    %v5499 = vpack.c.b16 %v3923, %v3915
    %v5500 = vpack.c.b16 %v3924, %v3916
    %v5501 = vpack.c.b16 %v3925, %v3917
    %v5502 = vpack.c.b16 %v3926, %v3918
    %v5503 = vpack.c.b16 %v3927, %v3919
    %v5504 = vpack.c.b16 %v3928, %v3920
    %v5505 = vpack.c.b16 %v3937, %v3929
    %v5506 = vpack.c.b16 %v3938, %v3930
    %v5507 = vpack.c.b16 %v3939, %v3931
    %v5508 = vpack.c.b16 %v3940, %v3932
    %v5509 = vpack.c.b16 %v3941, %v3933
    %v5510 = vpack.c.b16 %v3942, %v3934
    %v5511 = vpack.c.b16 %v3943, %v3935
    %v5512 = vpack.c.b16 %v3944, %v3936
    %v5513 = vpack.c.b16 %v3953, %v3945
    %v5514 = vpack.c.b16 %v3954, %v3946
    %v5515 = vpack.c.b16 %v3955, %v3947
    %v5516 = vpack.c.b16 %v3956, %v3948
    %v5517 = vpack.c.b16 %v3957, %v3949
    %v5518 = vpack.c.b16 %v3958, %v3950
    %v5519 = vpack.c.b16 %v3959, %v3951
    %v5520 = vpack.c.b16 %v3960, %v3952
    %v5521 = vpack.c.b16 %v3969, %v3961
    %v5522 = vpack.c.b16 %v3970, %v3962
    %v5523 = vpack.c.b16 %v3971, %v3963
    %v5524 = vpack.c.b16 %v3972, %v3964
    %v5525 = vpack.c.b16 %v3973, %v3965
    %v5526 = vpack.c.b16 %v3974, %v3966
    %v5527 = vpack.c.b16 %v3975, %v3967
    %v5528 = vpack.c.b16 %v3976, %v3968
    %v5529 = vpack.c.b16 %v3985, %v3977
    %v5530 = vpack.c.b16 %v3986, %v3978
    %v5531 = vpack.c.b16 %v3987, %v3979
    %v5532 = vpack.c.b16 %v3988, %v3980
    %v5533 = vpack.c.b16 %v3989, %v3981
    %v5534 = vpack.c.b16 %v3990, %v3982
    %v5535 = vpack.c.b16 %v3991, %v3983
    %v5536 = vpack.c.b16 %v3992, %v3984
    %v5537 = vpack.c.b16 %v4001, %v3993
    %v5538 = vpack.c.b16 %v4002, %v3994
    %v5539 = vpack.c.b16 %v4003, %v3995
    %v5540 = vpack.c.b16 %v4004, %v3996
    %v5541 = vpack.c.b16 %v4005, %v3997
    %v5542 = vpack.c.b16 %v4006, %v3998
    %v5543 = vpack.c.b16 %v4007, %v3999
    %v5544 = vpack.c.b16 %v4008, %v4000
    %v5545 = vpack.c.b16 %v4017, %v4009
    %v5546 = vpack.c.b16 %v4018, %v4010
    %v5547 = vpack.c.b16 %v4019, %v4011
    %v5548 = vpack.c.b16 %v4020, %v4012
    %v5549 = vpack.c.b16 %v4021, %v4013
    %v5550 = vpack.c.b16 %v4022, %v4014
    %v5551 = vpack.c.b16 %v4023, %v4015
    %v5552 = vpack.c.b16 %v4024, %v4016
    %v5553 = vpack.c.b16 %v4033, %v4025
    %v5554 = vpack.c.b16 %v4034, %v4026
    %v5555 = vpack.c.b16 %v4035, %v4027
    %v5556 = vpack.c.b16 %v4036, %v4028
    %v5557 = vpack.c.b16 %v4037, %v4029
    %v5558 = vpack.c.b16 %v4038, %v4030
    %v5559 = vpack.c.b16 %v4039, %v4031
    %v5560 = vpack.c.b16 %v4040, %v4032
    %v5561 = vpack.c.b16 %v4049, %v4041
    %v5562 = vpack.c.b16 %v4050, %v4042
    %v5563 = vpack.c.b16 %v4051, %v4043
    %v5564 = vpack.c.b16 %v4052, %v4044
    %v5565 = vpack.c.b16 %v4053, %v4045
    %v5566 = vpack.c.b16 %v4054, %v4046
    %v5567 = vpack.c.b16 %v4055, %v4047
    %v5568 = vpack.c.b16 %v4056, %v4048
    %v5569 = vpack.c.b16 %v4065, %v4057
    %v5570 = vpack.c.b16 %v4066, %v4058
    %v5571 = vpack.c.b16 %v4067, %v4059
    %v5572 = vpack.c.b16 %v4068, %v4060
    %v5573 = vpack.c.b16 %v4069, %v4061
    %v5574 = vpack.c.b16 %v4070, %v4062
    %v5575 = vpack.c.b16 %v4071, %v4063
    %v5576 = vpack.c.b16 %v4072, %v4064
    %v5577 = vpack.c.b16 %v4081, %v4073
    %v5578 = vpack.c.b16 %v4082, %v4074
    %v5579 = vpack.c.b16 %v4083, %v4075
    %v5580 = vpack.c.b16 %v4084, %v4076
    %v5581 = vpack.c.b16 %v4085, %v4077
    %v5582 = vpack.c.b16 %v4086, %v4078
    %v5583 = vpack.c.b16 %v4087, %v4079
    %v5584 = vpack.c.b16 %v4088, %v4080
    %v5585 = vpack.c.b16 %v4097, %v4089
    %v5586 = vpack.c.b16 %v4098, %v4090
    %v5587 = vpack.c.b16 %v4099, %v4091
    %v5588 = vpack.c.b16 %v4100, %v4092
    %v5589 = vpack.c.b16 %v4101, %v4093
    %v5590 = vpack.c.b16 %v4102, %v4094
    %v5591 = vpack.c.b16 %v4103, %v4095
    %v5592 = vpack.c.b16 %v4104, %v4096
    %v5593 = vpack.c.b16 %v4113, %v4105
    %v5594 = vpack.c.b16 %v4114, %v4106
    %v5595 = vpack.c.b16 %v4115, %v4107
    %v5596 = vpack.c.b16 %v4116, %v4108
    %v5597 = vpack.c.b16 %v4117, %v4109
    %v5598 = vpack.c.b16 %v4118, %v4110
    %v5599 = vpack.c.b16 %v4119, %v4111
    %v5600 = vpack.c.b16 %v4120, %v4112
    %v5601 = vpack.c.b16 %v4129, %v4121
    %v5602 = vpack.c.b16 %v4130, %v4122
    %v5603 = vpack.c.b16 %v4131, %v4123
    %v5604 = vpack.c.b16 %v4132, %v4124
    %v5605 = vpack.c.b16 %v4133, %v4125
    %v5606 = vpack.c.b16 %v4134, %v4126
    %v5607 = vpack.c.b16 %v4135, %v4127
    %v5608 = vpack.c.b16 %v4136, %v4128
    %v5609 = vpack.c.b16 %v4145, %v4137
    %v5610 = vpack.c.b16 %v4146, %v4138
    %v5611 = vpack.c.b16 %v4147, %v4139
    %v5612 = vpack.c.b16 %v4148, %v4140
    %v5613 = vpack.c.b16 %v4149, %v4141
    %v5614 = vpack.c.b16 %v4150, %v4142
    %v5615 = vpack.c.b16 %v4151, %v4143
    %v5616 = vpack.c.b16 %v4152, %v4144
    %v5617 = vpack.c.b16 %v4161, %v4153
    %v5618 = vpack.c.b16 %v4162, %v4154
    %v5619 = vpack.c.b16 %v4163, %v4155
    %v5620 = vpack.c.b16 %v4164, %v4156
    %v5621 = vpack.c.b16 %v4165, %v4157
    %v5622 = vpack.c.b16 %v4166, %v4158
    %v5623 = vpack.c.b16 %v4167, %v4159
    %v5624 = vpack.c.b16 %v4168, %v4160
    %v5625 = vpack.c.b16 %v4177, %v4169
    %v5626 = vpack.c.b16 %v4178, %v4170
    %v5627 = vpack.c.b16 %v4179, %v4171
    %v5628 = vpack.c.b16 %v4180, %v4172
    %v5629 = vpack.c.b16 %v4181, %v4173
    %v5630 = vpack.c.b16 %v4182, %v4174
    %v5631 = vpack.c.b16 %v4183, %v4175
    %v5632 = vpack.c.b16 %v4184, %v4176
    %v5633 = vpack.c.b16 %v4193, %v4185
    %v5634 = vpack.c.b16 %v4194, %v4186
    %v5635 = vpack.c.b16 %v4195, %v4187
    %v5636 = vpack.c.b16 %v4196, %v4188
    %v5637 = vpack.c.b16 %v4197, %v4189
    %v5638 = vpack.c.b16 %v4198, %v4190
    %v5639 = vpack.c.b16 %v4199, %v4191
    %v5640 = vpack.c.b16 %v4200, %v4192
    %v5641 = vpack.c.b16 %v4209, %v4201
    %v5642 = vpack.c.b16 %v4210, %v4202
    %v5643 = vpack.c.b16 %v4211, %v4203
    %v5644 = vpack.c.b16 %v4212, %v4204
    %v5645 = vpack.c.b16 %v4213, %v4205
    %v5646 = vpack.c.b16 %v4214, %v4206
    %v5647 = vpack.c.b16 %v4215, %v4207
    %v5648 = vpack.c.b16 %v4216, %v4208
    %v5649 = vpack.c.b16 %v4225, %v4217
    %v5650 = vpack.c.b16 %v4226, %v4218
    %v5651 = vpack.c.b16 %v4227, %v4219
    %v5652 = vpack.c.b16 %v4228, %v4220
    %v5653 = vpack.c.b16 %v4229, %v4221
    %v5654 = vpack.c.b16 %v4230, %v4222
    %v5655 = vpack.c.b16 %v4231, %v4223
    %v5656 = vpack.c.b16 %v4232, %v4224
    %v5657 = vpack.c.b16 %v4241, %v4233
    %v5658 = vpack.c.b16 %v4242, %v4234
    %v5659 = vpack.c.b16 %v4243, %v4235
    %v5660 = vpack.c.b16 %v4244, %v4236
    %v5661 = vpack.c.b16 %v4245, %v4237
    %v5662 = vpack.c.b16 %v4246, %v4238
    %v5663 = vpack.c.b16 %v4247, %v4239
    %v5664 = vpack.c.b16 %v4248, %v4240
    %v5665 = vpack.c.b16 %v4257, %v4249
    %v5666 = vpack.c.b16 %v4258, %v4250
    %v5667 = vpack.c.b16 %v4259, %v4251
    %v5668 = vpack.c.b16 %v4260, %v4252
    %v5669 = vpack.c.b16 %v4261, %v4253
    %v5670 = vpack.c.b16 %v4262, %v4254
    %v5671 = vpack.c.b16 %v4263, %v4255
    %v5672 = vpack.c.b16 %v4264, %v4256
    %v5673 = vpack.c.b16 %v4273, %v4265
    %v5674 = vpack.c.b16 %v4274, %v4266
    %v5675 = vpack.c.b16 %v4275, %v4267
    %v5676 = vpack.c.b16 %v4276, %v4268
    %v5677 = vpack.c.b16 %v4277, %v4269
    %v5678 = vpack.c.b16 %v4278, %v4270
    %v5679 = vpack.c.b16 %v4279, %v4271
    %v5680 = vpack.c.b16 %v4280, %v4272
    %v5681 = vpack.c.b16 %v4289, %v4281
    %v5682 = vpack.c.b16 %v4290, %v4282
    %v5683 = vpack.c.b16 %v4291, %v4283
    %v5684 = vpack.c.b16 %v4292, %v4284
    %v5685 = vpack.c.b16 %v4293, %v4285
    %v5686 = vpack.c.b16 %v4294, %v4286
    %v5687 = vpack.c.b16 %v4295, %v4287
    %v5688 = vpack.c.b16 %v4296, %v4288
    %v5689 = vpack.c.b16 %v4305, %v4297
    %v5690 = vpack.c.b16 %v4306, %v4298
    %v5691 = vpack.c.b16 %v4307, %v4299
    %v5692 = vpack.c.b16 %v4308, %v4300
    %v5693 = vpack.c.b16 %v4309, %v4301
    %v5694 = vpack.c.b16 %v4310, %v4302
    %v5695 = vpack.c.b16 %v4311, %v4303
    %v5696 = vpack.c.b16 %v4312, %v4304
    %v5697 = vpack.c.b16 %v4321, %v4313
    %v5698 = vpack.c.b16 %v4322, %v4314
    %v5699 = vpack.c.b16 %v4323, %v4315
    %v5700 = vpack.c.b16 %v4324, %v4316
    %v5701 = vpack.c.b16 %v4325, %v4317
    %v5702 = vpack.c.b16 %v4326, %v4318
    %v5703 = vpack.c.b16 %v4327, %v4319
    %v5704 = vpack.c.b16 %v4328, %v4320
    %v5705 = vpack.c.b16 %v4337, %v4329
    %v5706 = vpack.c.b16 %v4338, %v4330
    %v5707 = vpack.c.b16 %v4339, %v4331
    %v5708 = vpack.c.b16 %v4340, %v4332
    %v5709 = vpack.c.b16 %v4341, %v4333
    %v5710 = vpack.c.b16 %v4342, %v4334
    %v5711 = vpack.c.b16 %v4343, %v4335
    %v5712 = vpack.c.b16 %v4344, %v4336
    %v5713 = vpack.c.b16 %v4353, %v4345
    %v5714 = vpack.c.b16 %v4354, %v4346
    %v5715 = vpack.c.b16 %v4355, %v4347
    %v5716 = vpack.c.b16 %v4356, %v4348
    %v5717 = vpack.c.b16 %v4357, %v4349
    %v5718 = vpack.c.b16 %v4358, %v4350
    %v5719 = vpack.c.b16 %v4359, %v4351
    %v5720 = vpack.c.b16 %v4360, %v4352
    %v5721 = vpack.c.b16 %v4369, %v4361
    %v5722 = vpack.c.b16 %v4370, %v4362
    %v5723 = vpack.c.b16 %v4371, %v4363
    %v5724 = vpack.c.b16 %v4372, %v4364
    %v5725 = vpack.c.b16 %v4373, %v4365
    %v5726 = vpack.c.b16 %v4374, %v4366
    %v5727 = vpack.c.b16 %v4375, %v4367
    %v5728 = vpack.c.b16 %v4376, %v4368
    %v5729 = vpack.c.b16 %v4385, %v4377
    %v5730 = vpack.c.b16 %v4386, %v4378
    %v5731 = vpack.c.b16 %v4387, %v4379
    %v5732 = vpack.c.b16 %v4388, %v4380
    %v5733 = vpack.c.b16 %v4389, %v4381
    %v5734 = vpack.c.b16 %v4390, %v4382
    %v5735 = vpack.c.b16 %v4391, %v4383
    %v5736 = vpack.c.b16 %v4392, %v4384
    %v5737 = vpack.c.b16 %v4401, %v4393
    %v5738 = vpack.c.b16 %v4402, %v4394
    %v5739 = vpack.c.b16 %v4403, %v4395
    %v5740 = vpack.c.b16 %v4404, %v4396
    %v5741 = vpack.c.b16 %v4405, %v4397
    %v5742 = vpack.c.b16 %v4406, %v4398
    %v5743 = vpack.c.b16 %v4407, %v4399
    %v5744 = vpack.c.b16 %v4408, %v4400
    %v5745 = vpack.c.b16 %v4417, %v4409
    %v5746 = vpack.c.b16 %v4418, %v4410
    %v5747 = vpack.c.b16 %v4419, %v4411
    %v5748 = vpack.c.b16 %v4420, %v4412
    %v5749 = vpack.c.b16 %v4421, %v4413
    %v5750 = vpack.c.b16 %v4422, %v4414
    %v5751 = vpack.c.b16 %v4423, %v4415
    %v5752 = vpack.c.b16 %v4424, %v4416
    %v5753 = vpack.c.b16 %v4433, %v4425
    %v5754 = vpack.c.b16 %v4434, %v4426
    %v5755 = vpack.c.b16 %v4435, %v4427
    %v5756 = vpack.c.b16 %v4436, %v4428
    %v5757 = vpack.c.b16 %v4437, %v4429
    %v5758 = vpack.c.b16 %v4438, %v4430
    %v5759 = vpack.c.b16 %v4439, %v4431
    %v5760 = vpack.c.b16 %v4440, %v4432
    %v5761 = vpack.c.b16 %v4449, %v4441
    %v5762 = vpack.c.b16 %v4450, %v4442
    %v5763 = vpack.c.b16 %v4451, %v4443
    %v5764 = vpack.c.b16 %v4452, %v4444
    %v5765 = vpack.c.b16 %v4453, %v4445
    %v5766 = vpack.c.b16 %v4454, %v4446
    %v5767 = vpack.c.b16 %v4455, %v4447
    %v5768 = vpack.c.b16 %v4456, %v4448
    %v5769 = vpack.c.b16 %v4465, %v4457
    %v5770 = vpack.c.b16 %v4466, %v4458
    %v5771 = vpack.c.b16 %v4467, %v4459
    %v5772 = vpack.c.b16 %v4468, %v4460
    %v5773 = vpack.c.b16 %v4469, %v4461
    %v5774 = vpack.c.b16 %v4470, %v4462
    %v5775 = vpack.c.b16 %v4471, %v4463
    %v5776 = vpack.c.b16 %v4472, %v4464
    %v5777 = vpack.c.b16 %v4481, %v4473
    %v5778 = vpack.c.b16 %v4482, %v4474
    %v5779 = vpack.c.b16 %v4483, %v4475
    %v5780 = vpack.c.b16 %v4484, %v4476
    %v5781 = vpack.c.b16 %v4485, %v4477
    %v5782 = vpack.c.b16 %v4486, %v4478
    %v5783 = vpack.c.b16 %v4487, %v4479
    %v5784 = vpack.c.b16 %v4488, %v4480
    %v5785 = vpack.c.b16 %v4497, %v4489
    %v5786 = vpack.c.b16 %v4498, %v4490
    %v5787 = vpack.c.b16 %v4499, %v4491
    %v5788 = vpack.c.b16 %v4500, %v4492
    %v5789 = vpack.c.b16 %v4501, %v4493
    %v5790 = vpack.c.b16 %v4502, %v4494
    %v5791 = vpack.c.b16 %v4503, %v4495
    %v5792 = vpack.c.b16 %v4504, %v4496
    %v5793 = vpack.c.b16 %v4513, %v4505
    %v5794 = vpack.c.b16 %v4514, %v4506
    %v5795 = vpack.c.b16 %v4515, %v4507
    %v5796 = vpack.c.b16 %v4516, %v4508
    %v5797 = vpack.c.b16 %v4517, %v4509
    %v5798 = vpack.c.b16 %v4518, %v4510
    %v5799 = vpack.c.b16 %v4519, %v4511
    %v5800 = vpack.c.b16 %v4520, %v4512
    %v5801 = vpack.c.b16 %v4529, %v4521
    %v5802 = vpack.c.b16 %v4530, %v4522
    %v5803 = vpack.c.b16 %v4531, %v4523
    %v5804 = vpack.c.b16 %v4532, %v4524
    %v5805 = vpack.c.b16 %v4533, %v4525
    %v5806 = vpack.c.b16 %v4534, %v4526
    %v5807 = vpack.c.b16 %v4535, %v4527
    %v5808 = vpack.c.b16 %v4536, %v4528
    %v5809 = vpack.c.b16 %v4545, %v4537
    %v5810 = vpack.c.b16 %v4546, %v4538
    %v5811 = vpack.c.b16 %v4547, %v4539
    %v5812 = vpack.c.b16 %v4548, %v4540
    %v5813 = vpack.c.b16 %v4549, %v4541
    %v5814 = vpack.c.b16 %v4550, %v4542
    %v5815 = vpack.c.b16 %v4551, %v4543
    %v5816 = vpack.c.b16 %v4552, %v4544
    %v5817 = vpack.c.b16 %v4561, %v4553
    %v5818 = vpack.c.b16 %v4562, %v4554
    %v5819 = vpack.c.b16 %v4563, %v4555
    %v5820 = vpack.c.b16 %v4564, %v4556
    %v5821 = vpack.c.b16 %v4565, %v4557
    %v5822 = vpack.c.b16 %v4566, %v4558
    %v5823 = vpack.c.b16 %v4567, %v4559
    %v5824 = vpack.c.b16 %v4568, %v4560
    %v5825 = vpack.c.b16 %v4577, %v4569
    %v5826 = vpack.c.b16 %v4578, %v4570
    %v5827 = vpack.c.b16 %v4579, %v4571
    %v5828 = vpack.c.b16 %v4580, %v4572
    %v5829 = vpack.c.b16 %v4581, %v4573
    %v5830 = vpack.c.b16 %v4582, %v4574
    %v5831 = vpack.c.b16 %v4583, %v4575
    %v5832 = vpack.c.b16 %v4584, %v4576
    %v5833 = vpack.c.b16 %v4593, %v4585
    %v5834 = vpack.c.b16 %v4594, %v4586
    %v5835 = vpack.c.b16 %v4595, %v4587
    %v5836 = vpack.c.b16 %v4596, %v4588
    %v5837 = vpack.c.b16 %v4597, %v4589
    %v5838 = vpack.c.b16 %v4598, %v4590
    %v5839 = vpack.c.b16 %v4599, %v4591
    %v5840 = vpack.c.b16 %v4600, %v4592
    %v5841 = vpack.c.b16 %v4609, %v4601
    %v5842 = vpack.c.b16 %v4610, %v4602
    %v5843 = vpack.c.b16 %v4611, %v4603
    %v5844 = vpack.c.b16 %v4612, %v4604
    %v5845 = vpack.c.b16 %v4613, %v4605
    %v5846 = vpack.c.b16 %v4614, %v4606
    %v5847 = vpack.c.b16 %v4615, %v4607
    %v5848 = vpack.c.b16 %v4616, %v4608
    %v5849 = vpack.c.b16 %v4625, %v4617
    %v5850 = vpack.c.b16 %v4626, %v4618
    %v5851 = vpack.c.b16 %v4627, %v4619
    %v5852 = vpack.c.b16 %v4628, %v4620
    %v5853 = vpack.c.b16 %v4629, %v4621
    %v5854 = vpack.c.b16 %v4630, %v4622
    %v5855 = vpack.c.b16 %v4631, %v4623
    %v5856 = vpack.c.b16 %v4632, %v4624
    %v5857 = vpack.c.b16 %v4641, %v4633
    %v5858 = vpack.c.b16 %v4642, %v4634
    %v5859 = vpack.c.b16 %v4643, %v4635
    %v5860 = vpack.c.b16 %v4644, %v4636
    %v5861 = vpack.c.b16 %v4645, %v4637
    %v5862 = vpack.c.b16 %v4646, %v4638
    %v5863 = vpack.c.b16 %v4647, %v4639
    %v5864 = vpack.c.b16 %v4648, %v4640
    %v5865 = vpack.c.b16 %v4657, %v4649
    %v5866 = vpack.c.b16 %v4658, %v4650
    %v5867 = vpack.c.b16 %v4659, %v4651
    %v5868 = vpack.c.b16 %v4660, %v4652
    %v5869 = vpack.c.b16 %v4661, %v4653
    %v5870 = vpack.c.b16 %v4662, %v4654
    %v5871 = vpack.c.b16 %v4663, %v4655
    %v5872 = vpack.c.b16 %v4664, %v4656
    %v5873 = vpack.c.b16 %v4673, %v4665
    %v5874 = vpack.c.b16 %v4674, %v4666
    %v5875 = vpack.c.b16 %v4675, %v4667
    %v5876 = vpack.c.b16 %v4676, %v4668
    %v5877 = vpack.c.b16 %v4677, %v4669
    %v5878 = vpack.c.b16 %v4678, %v4670
    %v5879 = vpack.c.b16 %v4679, %v4671
    %v5880 = vpack.c.b16 %v4680, %v4672
    %v5881 = vpack.c.b16 %v4689, %v4681
    %v5882 = vpack.c.b16 %v4690, %v4682
    %v5883 = vpack.c.b16 %v4691, %v4683
    %v5884 = vpack.c.b16 %v4692, %v4684
    %v5885 = vpack.c.b16 %v4693, %v4685
    %v5886 = vpack.c.b16 %v4694, %v4686
    %v5887 = vpack.c.b16 %v4695, %v4687
    %v5888 = vpack.c.b16 %v4696, %v4688
    %v5889 = vpack.c.b16 %v4705, %v4697
    %v5890 = vpack.c.b16 %v4706, %v4698
    %v5891 = vpack.c.b16 %v4707, %v4699
    %v5892 = vpack.c.b16 %v4708, %v4700
    %v5893 = vpack.c.b16 %v4709, %v4701
    %v5894 = vpack.c.b16 %v4710, %v4702
    %v5895 = vpack.c.b16 %v4711, %v4703
    %v5896 = vpack.c.b16 %v4712, %v4704
    %v5897 = vpack.c.b16 %v4721, %v4713
    %v5898 = vpack.c.b16 %v4722, %v4714
    %v5899 = vpack.c.b16 %v4723, %v4715
    %v5900 = vpack.c.b16 %v4724, %v4716
    %v5901 = vpack.c.b16 %v4725, %v4717
    %v5902 = vpack.c.b16 %v4726, %v4718
    %v5903 = vpack.c.b16 %v4727, %v4719
    %v5904 = vpack.c.b16 %v4728, %v4720
    %v5905 = vpack.c.b16 %v4737, %v4729
    %v5906 = vpack.c.b16 %v4738, %v4730
    %v5907 = vpack.c.b16 %v4739, %v4731
    %v5908 = vpack.c.b16 %v4740, %v4732
    %v5909 = vpack.c.b16 %v4741, %v4733
    %v5910 = vpack.c.b16 %v4742, %v4734
    %v5911 = vpack.c.b16 %v4743, %v4735
    %v5912 = vpack.c.b16 %v4744, %v4736
    %v5913 = vpack.c.b16 %v4753, %v4745
    %v5914 = vpack.c.b16 %v4754, %v4746
    %v5915 = vpack.c.b16 %v4755, %v4747
    %v5916 = vpack.c.b16 %v4756, %v4748
    %v5917 = vpack.c.b16 %v4757, %v4749
    %v5918 = vpack.c.b16 %v4758, %v4750
    %v5919 = vpack.c.b16 %v4759, %v4751
    %v5920 = vpack.c.b16 %v4760, %v4752
    %v5921 = vpack.c.b16 %v4769, %v4761
    %v5922 = vpack.c.b16 %v4770, %v4762
    %v5923 = vpack.c.b16 %v4771, %v4763
    %v5924 = vpack.c.b16 %v4772, %v4764
    %v5925 = vpack.c.b16 %v4773, %v4765
    %v5926 = vpack.c.b16 %v4774, %v4766
    %v5927 = vpack.c.b16 %v4775, %v4767
    %v5928 = vpack.c.b16 %v4776, %v4768
    %7081 = vmatprep.subr.bf16.mxu0 %v4834
    %7082 = vmatpush1.bf16.msra.mxu0 %v4833
    %7083 = vmatprep.subr.bf16.mxu0 %v4826
    %7084 = vmatpush1.bf16.msra.mxu0 %v4825
    %7085 = vmatprep.subr.bf16.mxu0 %v4818
    %7086 = vmatpush1.bf16.msra.mxu0 %v4817
    %7087 = vmatprep.subr.bf16.mxu0 %v4810
    %7088 = vmatpush1.bf16.msra.mxu0 %v4809
    %7089 = vmatprep.subr.bf16.mxu0 %v4802
    %7090 = vmatpush1.bf16.msra.mxu0 %v4801
    %7091 = vmatprep.subr.bf16.mxu0 %v4794
    %7092 = vmatpush1.bf16.msra.mxu0 %v4793
    %7093 = vmatprep.subr.bf16.mxu0 %v4786
    %7094 = vmatpush1.bf16.msra.mxu0 %v4785
    %7095 = vmatprep.subr.bf16.mxu0 %v4778
    %7096 = vmatpush1.bf16.msra.mxu0 %v4777
    %7097 = vmatprep.subr.bf16.mxu0 %v4898
    %7098 = vmatpush2.bf16.msra.mxu0 %v4897
    %7099 = vmatprep.subr.bf16.mxu0 %v4890
    %7100 = vmatpush2.bf16.msra.mxu0 %v4889
    %7101 = vmatprep.subr.bf16.mxu0 %v4882
    %7102 = vmatpush2.bf16.msra.mxu0 %v4881
    %7103 = vmatprep.subr.bf16.mxu0 %v4874
    %7104 = vmatpush2.bf16.msra.mxu0 %v4873
    %7105 = vmatprep.subr.bf16.mxu0 %v4866
    %7106 = vmatpush2.bf16.msra.mxu0 %v4865
    %7107 = vmatprep.subr.bf16.mxu0 %v4858
    %7108 = vmatpush2.bf16.msra.mxu0 %v4857
    %7109 = vmatprep.subr.bf16.mxu0 %v4850
    %7110 = vmatpush2.bf16.msra.mxu0 %v4849
    %7111 = vmatprep.subr.bf16.mxu0 %v4842
    %7112 = vmatpush2.bf16.msra.mxu0 %v4841
    %7113 = vmatprep.mubr.bf16.mxu0 %v1220
    %7114 = vmatmul.mubr.bf16.gmra.mxu0 %v1206
    %v7115 = vpop.f32.mrf.mxu0
    %v7116 = vadd.f32 0.0, %v7115
    %v7117 = vpop.f32.mrf.mxu0
    %v7118 = vadd.f32 0.0, %v7117
    %v7119 = vpop.f32.mrf.mxu0
    %v7120 = vpop.f32.mrf.mxu0
    %7121 = vdwg.mxu0
    %7122 = vmatprep.subr.bf16.mxu0 %v4962
    %7123 = vmatpush1.bf16.msra.mxu0 %v4961
    %7124 = vmatprep.subr.bf16.mxu0 %v4954
    %7125 = vmatpush1.bf16.msra.mxu0 %v4953
    %7126 = vmatprep.subr.bf16.mxu0 %v4946
    %7127 = vmatpush1.bf16.msra.mxu0 %v4945
    %7128 = vmatprep.subr.bf16.mxu0 %v4938
    %7129 = vmatpush1.bf16.msra.mxu0 %v4937
    %7130 = vmatprep.subr.bf16.mxu0 %v4930
    %7131 = vmatpush1.bf16.msra.mxu0 %v4929
    %7132 = vmatprep.subr.bf16.mxu0 %v4922
    %7133 = vmatpush1.bf16.msra.mxu0 %v4921
    %7134 = vmatprep.subr.bf16.mxu0 %v4914
    %7135 = vmatpush1.bf16.msra.mxu0 %v4913
    %7136 = vmatprep.subr.bf16.mxu0 %v4906
    %7137 = vmatpush1.bf16.msra.mxu0 %v4905
    %7138 = vmatprep.subr.bf16.mxu0 %v5026
    %7139 = vmatpush2.bf16.msra.mxu0 %v5025
    %7140 = vmatprep.subr.bf16.mxu0 %v5018
    %7141 = vmatpush2.bf16.msra.mxu0 %v5017
    %7142 = vmatprep.subr.bf16.mxu0 %v5010
    %7143 = vmatpush2.bf16.msra.mxu0 %v5009
    %7144 = vmatprep.subr.bf16.mxu0 %v5002
    %7145 = vmatpush2.bf16.msra.mxu0 %v5001
    %7146 = vmatprep.subr.bf16.mxu0 %v4994
    %7147 = vmatpush2.bf16.msra.mxu0 %v4993
    %7148 = vmatprep.subr.bf16.mxu0 %v4986
    %7149 = vmatpush2.bf16.msra.mxu0 %v4985
    %7150 = vmatprep.subr.bf16.mxu0 %v4978
    %7151 = vmatpush2.bf16.msra.mxu0 %v4977
    %7152 = vmatprep.subr.bf16.mxu0 %v4970
    %7153 = vmatpush2.bf16.msra.mxu0 %v4969
    %7154 = vmatprep.mubr.bf16.mxu0 %v1230
    %7155 = vmatmul.mubr.bf16.gmra.mxu0 %v1228
    %v7156 = vpop.f32.mrf.mxu0
    %v7157 = vadd.f32 %v7116, %v7156
    %v7158 = vpop.f32.mrf.mxu0
    %v7159 = vadd.f32 %v7118, %v7158
    %v7160 = vpop.f32.mrf.mxu0
    %v7161 = vpop.f32.mrf.mxu0
    %7162 = vdwg.mxu0
    %7163 = vmatprep.subr.bf16.mxu0 %v5090
    %7164 = vmatpush1.bf16.msra.mxu0 %v5089
    %7165 = vmatprep.subr.bf16.mxu0 %v5082
    %7166 = vmatpush1.bf16.msra.mxu0 %v5081
    %7167 = vmatprep.subr.bf16.mxu0 %v5074
    %7168 = vmatpush1.bf16.msra.mxu0 %v5073
    %7169 = vmatprep.subr.bf16.mxu0 %v5066
    %7170 = vmatpush1.bf16.msra.mxu0 %v5065
    %7171 = vmatprep.subr.bf16.mxu0 %v5058
    %7172 = vmatpush1.bf16.msra.mxu0 %v5057
    %7173 = vmatprep.subr.bf16.mxu0 %v5050
    %7174 = vmatpush1.bf16.msra.mxu0 %v5049
    %7175 = vmatprep.subr.bf16.mxu0 %v5042
    %7176 = vmatpush1.bf16.msra.mxu0 %v5041
    %7177 = vmatprep.subr.bf16.mxu0 %v5034
    %7178 = vmatpush1.bf16.msra.mxu0 %v5033
    %7179 = vmatprep.subr.bf16.mxu0 %v5154
    %7180 = vmatpush2.bf16.msra.mxu0 %v5153
    %7181 = vmatprep.subr.bf16.mxu0 %v5146
    %7182 = vmatpush2.bf16.msra.mxu0 %v5145
    %7183 = vmatprep.subr.bf16.mxu0 %v5138
    %7184 = vmatpush2.bf16.msra.mxu0 %v5137
    %7185 = vmatprep.subr.bf16.mxu0 %v5130
    %7186 = vmatpush2.bf16.msra.mxu0 %v5129
    %7187 = vmatprep.subr.bf16.mxu0 %v5122
    %7188 = vmatpush2.bf16.msra.mxu0 %v5121
    %7189 = vmatprep.subr.bf16.mxu0 %v5114
    %7190 = vmatpush2.bf16.msra.mxu0 %v5113
    %7191 = vmatprep.subr.bf16.mxu0 %v5106
    %7192 = vmatpush2.bf16.msra.mxu0 %v5105
    %7193 = vmatprep.subr.bf16.mxu0 %v5098
    %7194 = vmatpush2.bf16.msra.mxu0 %v5097
    %7195 = vmatprep.mubr.bf16.mxu0 %v1227
    %7196 = vmatmul.mubr.bf16.gmra.mxu0 %v1213
    %v7197 = vpop.f32.mrf.mxu0
    %v7198 = vadd.f32 %v7157, %v7197
    %v7199 = vpop.f32.mrf.mxu0
    %v7200 = vadd.f32 %v7159, %v7199
    %v7201 = vpop.f32.mrf.mxu0
    %v7202 = vpop.f32.mrf.mxu0
    %7203 = vdwg.mxu0
    %7204 = vmatprep.subr.bf16.mxu0 %v5218
    %7205 = vmatpush1.bf16.msra.mxu0 %v5217
    %7206 = vmatprep.subr.bf16.mxu0 %v5210
    %7207 = vmatpush1.bf16.msra.mxu0 %v5209
    %7208 = vmatprep.subr.bf16.mxu0 %v5202
    %7209 = vmatpush1.bf16.msra.mxu0 %v5201
    %7210 = vmatprep.subr.bf16.mxu0 %v5194
    %7211 = vmatpush1.bf16.msra.mxu0 %v5193
    %7212 = vmatprep.subr.bf16.mxu0 %v5186
    %7213 = vmatpush1.bf16.msra.mxu0 %v5185
    %7214 = vmatprep.subr.bf16.mxu0 %v5178
    %7215 = vmatpush1.bf16.msra.mxu0 %v5177
    %7216 = vmatprep.subr.bf16.mxu0 %v5170
    %7217 = vmatpush1.bf16.msra.mxu0 %v5169
    %7218 = vmatprep.subr.bf16.mxu0 %v5162
    %7219 = vmatpush1.bf16.msra.mxu0 %v5161
    %7220 = vmatprep.subr.bf16.mxu0 %v5282
    %7221 = vmatpush2.bf16.msra.mxu0 %v5281
    %7222 = vmatprep.subr.bf16.mxu0 %v5274
    %7223 = vmatpush2.bf16.msra.mxu0 %v5273
    %7224 = vmatprep.subr.bf16.mxu0 %v5266
    %7225 = vmatpush2.bf16.msra.mxu0 %v5265
    %7226 = vmatprep.subr.bf16.mxu0 %v5258
    %7227 = vmatpush2.bf16.msra.mxu0 %v5257
    %7228 = vmatprep.subr.bf16.mxu0 %v5250
    %7229 = vmatpush2.bf16.msra.mxu0 %v5249
    %7230 = vmatprep.subr.bf16.mxu0 %v5242
    %7231 = vmatpush2.bf16.msra.mxu0 %v5241
    %7232 = vmatprep.subr.bf16.mxu0 %v5234
    %7233 = vmatpush2.bf16.msra.mxu0 %v5233
    %7234 = vmatprep.subr.bf16.mxu0 %v5226
    %7235 = vmatpush2.bf16.msra.mxu0 %v5225
    %7236 = vmatprep.mubr.bf16.mxu0 %v1231
    %7237 = vmatmul.mubr.bf16.gmra.mxu0 %v1229
    %v7238 = vpop.f32.mrf.mxu0
    %v7239 = vadd.f32 %v7198, %v7238
    %v7240 = vpop.f32.mrf.mxu0
    %v7241 = vadd.f32 %v7200, %v7240
    %v7242 = vpop.f32.mrf.mxu0
    %v7243 = vpop.f32.mrf.mxu0
    %7244 = vdwg.mxu0
    %7245 = vmatprep.subr.bf16.mxu0 %v5346
    %7246 = vmatpush1.bf16.msra.mxu0 %v5345
    %7247 = vmatprep.subr.bf16.mxu0 %v5338
    %7248 = vmatpush1.bf16.msra.mxu0 %v5337
    %7249 = vmatprep.subr.bf16.mxu0 %v5330
    %7250 = vmatpush1.bf16.msra.mxu0 %v5329
    %7251 = vmatprep.subr.bf16.mxu0 %v5322
    %7252 = vmatpush1.bf16.msra.mxu0 %v5321
    %7253 = vmatprep.subr.bf16.mxu0 %v5314
    %7254 = vmatpush1.bf16.msra.mxu0 %v5313
    %7255 = vmatprep.subr.bf16.mxu0 %v5306
    %7256 = vmatpush1.bf16.msra.mxu0 %v5305
    %7257 = vmatprep.subr.bf16.mxu0 %v5298
    %7258 = vmatpush1.bf16.msra.mxu0 %v5297
    %7259 = vmatprep.subr.bf16.mxu0 %v5290
    %7260 = vmatpush1.bf16.msra.mxu0 %v5289
    %7261 = vmatprep.subr.bf16.mxu0 %v5410
    %7262 = vmatpush2.bf16.msra.mxu0 %v5409
    %7263 = vmatprep.subr.bf16.mxu0 %v5402
    %7264 = vmatpush2.bf16.msra.mxu0 %v5401
    %7265 = vmatprep.subr.bf16.mxu0 %v5394
    %7266 = vmatpush2.bf16.msra.mxu0 %v5393
    %7267 = vmatprep.subr.bf16.mxu0 %v5386
    %7268 = vmatpush2.bf16.msra.mxu0 %v5385
    %7269 = vmatprep.subr.bf16.mxu0 %v5378
    %7270 = vmatpush2.bf16.msra.mxu0 %v5377
    %7271 = vmatprep.subr.bf16.mxu0 %v5370
    %7272 = vmatpush2.bf16.msra.mxu0 %v5369
    %7273 = vmatprep.subr.bf16.mxu0 %v5362
    %7274 = vmatpush2.bf16.msra.mxu0 %v5361
    %7275 = vmatprep.subr.bf16.mxu0 %v5354
    %7276 = vmatpush2.bf16.msra.mxu0 %v5353
    %7277 = vmatprep.mubr.bf16.mxu0 %v1269
    %7278 = vmatmul.mubr.bf16.gmra.mxu0 %v1255
    %v7279 = vpop.f32.mrf.mxu0
    %v7280 = vadd.f32 %v7239, %v7279
    %v7281 = vpop.f32.mrf.mxu0
    %v7282 = vadd.f32 %v7241, %v7281
    %v7283 = vpop.f32.mrf.mxu0
    %v7284 = vpop.f32.mrf.mxu0
    %7285 = vdwg.mxu0
    %7286 = vmatprep.subr.bf16.mxu0 %v5474
    %7287 = vmatpush1.bf16.msra.mxu0 %v5473
    %7288 = vmatprep.subr.bf16.mxu0 %v5466
    %7289 = vmatpush1.bf16.msra.mxu0 %v5465
    %7290 = vmatprep.subr.bf16.mxu0 %v5458
    %7291 = vmatpush1.bf16.msra.mxu0 %v5457
    %7292 = vmatprep.subr.bf16.mxu0 %v5450
    %7293 = vmatpush1.bf16.msra.mxu0 %v5449
    %7294 = vmatprep.subr.bf16.mxu0 %v5442
    %7295 = vmatpush1.bf16.msra.mxu0 %v5441
    %7296 = vmatprep.subr.bf16.mxu0 %v5434
    %7297 = vmatpush1.bf16.msra.mxu0 %v5433
    %7298 = vmatprep.subr.bf16.mxu0 %v5426
    %7299 = vmatpush1.bf16.msra.mxu0 %v5425
    %7300 = vmatprep.subr.bf16.mxu0 %v5418
    %7301 = vmatpush1.bf16.msra.mxu0 %v5417
    %7302 = vmatprep.subr.bf16.mxu0 %v5538
    %7303 = vmatpush2.bf16.msra.mxu0 %v5537
    %7304 = vmatprep.subr.bf16.mxu0 %v5530
    %7305 = vmatpush2.bf16.msra.mxu0 %v5529
    %7306 = vmatprep.subr.bf16.mxu0 %v5522
    %7307 = vmatpush2.bf16.msra.mxu0 %v5521
    %7308 = vmatprep.subr.bf16.mxu0 %v5514
    %7309 = vmatpush2.bf16.msra.mxu0 %v5513
    %7310 = vmatprep.subr.bf16.mxu0 %v5506
    %7311 = vmatpush2.bf16.msra.mxu0 %v5505
    %7312 = vmatprep.subr.bf16.mxu0 %v5498
    %7313 = vmatpush2.bf16.msra.mxu0 %v5497
    %7314 = vmatprep.subr.bf16.mxu0 %v5490
    %7315 = vmatpush2.bf16.msra.mxu0 %v5489
    %7316 = vmatprep.subr.bf16.mxu0 %v5482
    %7317 = vmatpush2.bf16.msra.mxu0 %v5481
    %7318 = vmatprep.mubr.bf16.mxu0 %v1279
    %7319 = vmatmul.mubr.bf16.gmra.mxu0 %v1277
    %v7320 = vpop.f32.mrf.mxu0
    %v7321 = vadd.f32 %v7280, %v7320
    %v7322 = vpop.f32.mrf.mxu0
    %v7323 = vadd.f32 %v7282, %v7322
    %v7324 = vpop.f32.mrf.mxu0
    %v7325 = vpop.f32.mrf.mxu0
    %7326 = vdwg.mxu0
    %7327 = vmatprep.subr.bf16.mxu0 %v5602
    %7328 = vmatpush1.bf16.msra.mxu0 %v5601
    %7329 = vmatprep.subr.bf16.mxu0 %v5594
    %7330 = vmatpush1.bf16.msra.mxu0 %v5593
    %7331 = vmatprep.subr.bf16.mxu0 %v5586
    %7332 = vmatpush1.bf16.msra.mxu0 %v5585
    %7333 = vmatprep.subr.bf16.mxu0 %v5578
    %7334 = vmatpush1.bf16.msra.mxu0 %v5577
    %7335 = vmatprep.subr.bf16.mxu0 %v5570
    %7336 = vmatpush1.bf16.msra.mxu0 %v5569
    %7337 = vmatprep.subr.bf16.mxu0 %v5562
    %7338 = vmatpush1.bf16.msra.mxu0 %v5561
    %7339 = vmatprep.subr.bf16.mxu0 %v5554
    %7340 = vmatpush1.bf16.msra.mxu0 %v5553
    %7341 = vmatprep.subr.bf16.mxu0 %v5546
    %7342 = vmatpush1.bf16.msra.mxu0 %v5545
    %7343 = vmatprep.subr.bf16.mxu0 %v5666
    %7344 = vmatpush2.bf16.msra.mxu0 %v5665
    %7345 = vmatprep.subr.bf16.mxu0 %v5658
    %7346 = vmatpush2.bf16.msra.mxu0 %v5657
    %7347 = vmatprep.subr.bf16.mxu0 %v5650
    %7348 = vmatpush2.bf16.msra.mxu0 %v5649
    %7349 = vmatprep.subr.bf16.mxu0 %v5642
    %7350 = vmatpush2.bf16.msra.mxu0 %v5641
    %7351 = vmatprep.subr.bf16.mxu0 %v5634
    %7352 = vmatpush2.bf16.msra.mxu0 %v5633
    %7353 = vmatprep.subr.bf16.mxu0 %v5626
    %7354 = vmatpush2.bf16.msra.mxu0 %v5625
    %7355 = vmatprep.subr.bf16.mxu0 %v5618
    %7356 = vmatpush2.bf16.msra.mxu0 %v5617
    %7357 = vmatprep.subr.bf16.mxu0 %v5610
    %7358 = vmatpush2.bf16.msra.mxu0 %v5609
    %7359 = vmatprep.mubr.bf16.mxu0 %v1276
    %7360 = vmatmul.mubr.bf16.gmra.mxu0 %v1262
    %v7361 = vpop.f32.mrf.mxu0
    %v7362 = vadd.f32 %v7321, %v7361
    %v7363 = vpop.f32.mrf.mxu0
    %v7364 = vadd.f32 %v7323, %v7363
    %v7365 = vpop.f32.mrf.mxu0
    %v7366 = vpop.f32.mrf.mxu0
    %7367 = vdwg.mxu0
    %7368 = vmatprep.subr.bf16.mxu0 %v5730
    %7369 = vmatpush1.bf16.msra.mxu0 %v5729
    %7370 = vmatprep.subr.bf16.mxu0 %v5722
    %7371 = vmatpush1.bf16.msra.mxu0 %v5721
    %7372 = vmatprep.subr.bf16.mxu0 %v5714
    %7373 = vmatpush1.bf16.msra.mxu0 %v5713
    %7374 = vmatprep.subr.bf16.mxu0 %v5706
    %7375 = vmatpush1.bf16.msra.mxu0 %v5705
    %7376 = vmatprep.subr.bf16.mxu0 %v5698
    %7377 = vmatpush1.bf16.msra.mxu0 %v5697
    %7378 = vmatprep.subr.bf16.mxu0 %v5690
    %7379 = vmatpush1.bf16.msra.mxu0 %v5689
    %7380 = vmatprep.subr.bf16.mxu0 %v5682
    %7381 = vmatpush1.bf16.msra.mxu0 %v5681
    %7382 = vmatprep.subr.bf16.mxu0 %v5674
    %7383 = vmatpush1.bf16.msra.mxu0 %v5673
    %7384 = vmatprep.subr.bf16.mxu0 %v5794
    %7385 = vmatpush2.bf16.msra.mxu0 %v5793
    %7386 = vmatprep.subr.bf16.mxu0 %v5786
    %7387 = vmatpush2.bf16.msra.mxu0 %v5785
    %7388 = vmatprep.subr.bf16.mxu0 %v5778
    %7389 = vmatpush2.bf16.msra.mxu0 %v5777
    %7390 = vmatprep.subr.bf16.mxu0 %v5770
    %7391 = vmatpush2.bf16.msra.mxu0 %v5769
    %7392 = vmatprep.subr.bf16.mxu0 %v5762
    %7393 = vmatpush2.bf16.msra.mxu0 %v5761
    %7394 = vmatprep.subr.bf16.mxu0 %v5754
    %7395 = vmatpush2.bf16.msra.mxu0 %v5753
    %7396 = vmatprep.subr.bf16.mxu0 %v5746
    %7397 = vmatpush2.bf16.msra.mxu0 %v5745
    %7398 = vmatprep.subr.bf16.mxu0 %v5738
    %7399 = vmatpush2.bf16.msra.mxu0 %v5737
    %7400 = vmatprep.mubr.bf16.mxu0 %v1280
    %7401 = vmatmul.mubr.bf16.gmra.mxu0 %v1278
    %v7402 = vpop.f32.mrf.mxu0
    %v7403 = vadd.f32 %v7362, %v7402
    %v7404 = vpop.f32.mrf.mxu0
    %v7405 = vadd.f32 %v7364, %v7404
    %v7406 = vpop.f32.mrf.mxu0
    %v7407 = vpop.f32.mrf.mxu0
    %7408 = vdwg.mxu0
    %7409 = vmatprep.subr.bf16.mxu0 %v5858
    %7410 = vmatpush1.bf16.msra.mxu0 %v5857
    %7411 = vmatprep.subr.bf16.mxu0 %v5850
    %7412 = vmatpush1.bf16.msra.mxu0 %v5849
    %7413 = vmatprep.subr.bf16.mxu0 %v5842
    %7414 = vmatpush1.bf16.msra.mxu0 %v5841
    %7415 = vmatprep.subr.bf16.mxu0 %v5834
    %7416 = vmatpush1.bf16.msra.mxu0 %v5833
    %7417 = vmatprep.subr.bf16.mxu0 %v5826
    %7418 = vmatpush1.bf16.msra.mxu0 %v5825
    %7419 = vmatprep.subr.bf16.mxu0 %v5818
    %7420 = vmatpush1.bf16.msra.mxu0 %v5817
    %7421 = vmatprep.subr.bf16.mxu0 %v5810
    %7422 = vmatpush1.bf16.msra.mxu0 %v5809
    %7423 = vmatprep.subr.bf16.mxu0 %v5802
    %7424 = vmatpush1.bf16.msra.mxu0 %v5801
    %7425 = vmatprep.subr.bf16.mxu0 %v5922
    %7426 = vmatpush2.bf16.msra.mxu0 %v5921
    %7427 = vmatprep.subr.bf16.mxu0 %v5914
    %7428 = vmatpush2.bf16.msra.mxu0 %v5913
    %7429 = vmatprep.subr.bf16.mxu0 %v5906
    %7430 = vmatpush2.bf16.msra.mxu0 %v5905
    %7431 = vmatprep.subr.bf16.mxu0 %v5898
    %7432 = vmatpush2.bf16.msra.mxu0 %v5897
    %7433 = vmatprep.subr.bf16.mxu0 %v5890
    %7434 = vmatpush2.bf16.msra.mxu0 %v5889
    %7435 = vmatprep.subr.bf16.mxu0 %v5882
    %7436 = vmatpush2.bf16.msra.mxu0 %v5881
    %7437 = vmatprep.subr.bf16.mxu0 %v5874
    %7438 = vmatpush2.bf16.msra.mxu0 %v5873
    %7439 = vmatprep.subr.bf16.mxu0 %v5866
    %7440 = vmatpush2.bf16.msra.mxu0 %v5865
    %7441 = vmatprep.mubr.bf16.mxu0 %v1302
    %7442 = vmatmul.mubr.bf16.gmra.mxu0 %v1295
    %v7443 = vpop.f32.mrf.mxu0
    %v7444 = vadd.f32 %v7403, %v7443
    %v7445 = vpop.f32.mrf.mxu0
    %v7446 = vadd.f32 %v7405, %v7445
    %v7447 = vpop.f32.mrf.mxu0
    %v7448 = vpop.f32.mrf.mxu0
    %7449 = vdwg.mxu0
    %7450 = vmatprep.subr.bf16.mxu0 %v4836
    %7451 = vmatpush1.bf16.msra.mxu0 %v4835
    %7452 = vmatprep.subr.bf16.mxu0 %v4828
    %7453 = vmatpush1.bf16.msra.mxu0 %v4827
    %7454 = vmatprep.subr.bf16.mxu0 %v4820
    %7455 = vmatpush1.bf16.msra.mxu0 %v4819
    %7456 = vmatprep.subr.bf16.mxu0 %v4812
    %7457 = vmatpush1.bf16.msra.mxu0 %v4811
    %7458 = vmatprep.subr.bf16.mxu0 %v4804
    %7459 = vmatpush1.bf16.msra.mxu0 %v4803
    %7460 = vmatprep.subr.bf16.mxu0 %v4796
    %7461 = vmatpush1.bf16.msra.mxu0 %v4795
    %7462 = vmatprep.subr.bf16.mxu0 %v4788
    %7463 = vmatpush1.bf16.msra.mxu0 %v4787
    %7464 = vmatprep.subr.bf16.mxu0 %v4780
    %7465 = vmatpush1.bf16.msra.mxu0 %v4779
    %7466 = vmatprep.subr.bf16.mxu0 %v4900
    %7467 = vmatpush2.bf16.msra.mxu0 %v4899
    %7468 = vmatprep.subr.bf16.mxu0 %v4892
    %7469 = vmatpush2.bf16.msra.mxu0 %v4891
    %7470 = vmatprep.subr.bf16.mxu0 %v4884
    %7471 = vmatpush2.bf16.msra.mxu0 %v4883
    %7472 = vmatprep.subr.bf16.mxu0 %v4876
    %7473 = vmatpush2.bf16.msra.mxu0 %v4875
    %7474 = vmatprep.subr.bf16.mxu0 %v4868
    %7475 = vmatpush2.bf16.msra.mxu0 %v4867
    %7476 = vmatprep.subr.bf16.mxu0 %v4860
    %7477 = vmatpush2.bf16.msra.mxu0 %v4859
    %7478 = vmatprep.subr.bf16.mxu0 %v4852
    %7479 = vmatpush2.bf16.msra.mxu0 %v4851
    %7480 = vmatprep.subr.bf16.mxu0 %v4844
    %7481 = vmatpush2.bf16.msra.mxu0 %v4843
    %7482 = vmatprep.mubr.bf16.mxu0 %v1220
    %7483 = vmatmul.mubr.bf16.gmra.mxu0 %v1206
    %v7484 = vpop.f32.mrf.mxu0
    %v7485 = vadd.f32 0.0, %v7484
    %v7486 = vpop.f32.mrf.mxu0
    %v7487 = vadd.f32 0.0, %v7486
    %v7488 = vpop.f32.mrf.mxu0
    %v7489 = vpop.f32.mrf.mxu0
    %7490 = vdwg.mxu0
    %7491 = vmatprep.subr.bf16.mxu0 %v4964
    %7492 = vmatpush1.bf16.msra.mxu0 %v4963
    %7493 = vmatprep.subr.bf16.mxu0 %v4956
    %7494 = vmatpush1.bf16.msra.mxu0 %v4955
    %7495 = vmatprep.subr.bf16.mxu0 %v4948
    %7496 = vmatpush1.bf16.msra.mxu0 %v4947
    %7497 = vmatprep.subr.bf16.mxu0 %v4940
    %7498 = vmatpush1.bf16.msra.mxu0 %v4939
    %7499 = vmatprep.subr.bf16.mxu0 %v4932
    %7500 = vmatpush1.bf16.msra.mxu0 %v4931
    %7501 = vmatprep.subr.bf16.mxu0 %v4924
    %7502 = vmatpush1.bf16.msra.mxu0 %v4923
    %7503 = vmatprep.subr.bf16.mxu0 %v4916
    %7504 = vmatpush1.bf16.msra.mxu0 %v4915
    %7505 = vmatprep.subr.bf16.mxu0 %v4908
    %7506 = vmatpush1.bf16.msra.mxu0 %v4907
    %7507 = vmatprep.subr.bf16.mxu0 %v5028
    %7508 = vmatpush2.bf16.msra.mxu0 %v5027
    %7509 = vmatprep.subr.bf16.mxu0 %v5020
    %7510 = vmatpush2.bf16.msra.mxu0 %v5019
    %7511 = vmatprep.subr.bf16.mxu0 %v5012
    %7512 = vmatpush2.bf16.msra.mxu0 %v5011
    %7513 = vmatprep.subr.bf16.mxu0 %v5004
    %7514 = vmatpush2.bf16.msra.mxu0 %v5003
    %7515 = vmatprep.subr.bf16.mxu0 %v4996
    %7516 = vmatpush2.bf16.msra.mxu0 %v4995
    %7517 = vmatprep.subr.bf16.mxu0 %v4988
    %7518 = vmatpush2.bf16.msra.mxu0 %v4987
    %7519 = vmatprep.subr.bf16.mxu0 %v4980
    %7520 = vmatpush2.bf16.msra.mxu0 %v4979
    %7521 = vmatprep.subr.bf16.mxu0 %v4972
    %7522 = vmatpush2.bf16.msra.mxu0 %v4971
    %7523 = vmatprep.mubr.bf16.mxu0 %v1230
    %7524 = vmatmul.mubr.bf16.gmra.mxu0 %v1228
    %v7525 = vpop.f32.mrf.mxu0
    %v7526 = vadd.f32 %v7485, %v7525
    %v7527 = vpop.f32.mrf.mxu0
    %v7528 = vadd.f32 %v7487, %v7527
    %v7529 = vpop.f32.mrf.mxu0
    %v7530 = vpop.f32.mrf.mxu0
    %7531 = vdwg.mxu0
    %7532 = vmatprep.subr.bf16.mxu0 %v5092
    %7533 = vmatpush1.bf16.msra.mxu0 %v5091
    %7534 = vmatprep.subr.bf16.mxu0 %v5084
    %7535 = vmatpush1.bf16.msra.mxu0 %v5083
    %7536 = vmatprep.subr.bf16.mxu0 %v5076
    %7537 = vmatpush1.bf16.msra.mxu0 %v5075
    %7538 = vmatprep.subr.bf16.mxu0 %v5068
    %7539 = vmatpush1.bf16.msra.mxu0 %v5067
    %7540 = vmatprep.subr.bf16.mxu0 %v5060
    %7541 = vmatpush1.bf16.msra.mxu0 %v5059
    %7542 = vmatprep.subr.bf16.mxu0 %v5052
    %7543 = vmatpush1.bf16.msra.mxu0 %v5051
    %7544 = vmatprep.subr.bf16.mxu0 %v5044
    %7545 = vmatpush1.bf16.msra.mxu0 %v5043
    %7546 = vmatprep.subr.bf16.mxu0 %v5036
    %7547 = vmatpush1.bf16.msra.mxu0 %v5035
    %7548 = vmatprep.subr.bf16.mxu0 %v5156
    %7549 = vmatpush2.bf16.msra.mxu0 %v5155
    %7550 = vmatprep.subr.bf16.mxu0 %v5148
    %7551 = vmatpush2.bf16.msra.mxu0 %v5147
    %7552 = vmatprep.subr.bf16.mxu0 %v5140
    %7553 = vmatpush2.bf16.msra.mxu0 %v5139
    %7554 = vmatprep.subr.bf16.mxu0 %v5132
    %7555 = vmatpush2.bf16.msra.mxu0 %v5131
    %7556 = vmatprep.subr.bf16.mxu0 %v5124
    %7557 = vmatpush2.bf16.msra.mxu0 %v5123
    %7558 = vmatprep.subr.bf16.mxu0 %v5116
    %7559 = vmatpush2.bf16.msra.mxu0 %v5115
    %7560 = vmatprep.subr.bf16.mxu0 %v5108
    %7561 = vmatpush2.bf16.msra.mxu0 %v5107
    %7562 = vmatprep.subr.bf16.mxu0 %v5100
    %7563 = vmatpush2.bf16.msra.mxu0 %v5099
    %7564 = vmatprep.mubr.bf16.mxu0 %v1227
    %7565 = vmatmul.mubr.bf16.gmra.mxu0 %v1213
    %v7566 = vpop.f32.mrf.mxu0
    %v7567 = vadd.f32 %v7526, %v7566
    %v7568 = vpop.f32.mrf.mxu0
    %v7569 = vadd.f32 %v7528, %v7568
    %v7570 = vpop.f32.mrf.mxu0
    %v7571 = vpop.f32.mrf.mxu0
    %7572 = vdwg.mxu0
    %7573 = vmatprep.subr.bf16.mxu0 %v5220
    %7574 = vmatpush1.bf16.msra.mxu0 %v5219
    %7575 = vmatprep.subr.bf16.mxu0 %v5212
    %7576 = vmatpush1.bf16.msra.mxu0 %v5211
    %7577 = vmatprep.subr.bf16.mxu0 %v5204
    %7578 = vmatpush1.bf16.msra.mxu0 %v5203
    %7579 = vmatprep.subr.bf16.mxu0 %v5196
    %7580 = vmatpush1.bf16.msra.mxu0 %v5195
    %7581 = vmatprep.subr.bf16.mxu0 %v5188
    %7582 = vmatpush1.bf16.msra.mxu0 %v5187
    %7583 = vmatprep.subr.bf16.mxu0 %v5180
    %7584 = vmatpush1.bf16.msra.mxu0 %v5179
    %7585 = vmatprep.subr.bf16.mxu0 %v5172
    %7586 = vmatpush1.bf16.msra.mxu0 %v5171
    %7587 = vmatprep.subr.bf16.mxu0 %v5164
    %7588 = vmatpush1.bf16.msra.mxu0 %v5163
    %7589 = vmatprep.subr.bf16.mxu0 %v5284
    %7590 = vmatpush2.bf16.msra.mxu0 %v5283
    %7591 = vmatprep.subr.bf16.mxu0 %v5276
    %7592 = vmatpush2.bf16.msra.mxu0 %v5275
    %7593 = vmatprep.subr.bf16.mxu0 %v5268
    %7594 = vmatpush2.bf16.msra.mxu0 %v5267
    %7595 = vmatprep.subr.bf16.mxu0 %v5260
    %7596 = vmatpush2.bf16.msra.mxu0 %v5259
    %7597 = vmatprep.subr.bf16.mxu0 %v5252
    %7598 = vmatpush2.bf16.msra.mxu0 %v5251
    %7599 = vmatprep.subr.bf16.mxu0 %v5244
    %7600 = vmatpush2.bf16.msra.mxu0 %v5243
    %7601 = vmatprep.subr.bf16.mxu0 %v5236
    %7602 = vmatpush2.bf16.msra.mxu0 %v5235
    %7603 = vmatprep.subr.bf16.mxu0 %v5228
    %7604 = vmatpush2.bf16.msra.mxu0 %v5227
    %7605 = vmatprep.mubr.bf16.mxu0 %v1231
    %7606 = vmatmul.mubr.bf16.gmra.mxu0 %v1229
    %v7607 = vpop.f32.mrf.mxu0
    %v7608 = vadd.f32 %v7567, %v7607
    %v7609 = vpop.f32.mrf.mxu0
    %v7610 = vadd.f32 %v7569, %v7609
    %v7611 = vpop.f32.mrf.mxu0
    %v7612 = vpop.f32.mrf.mxu0
    %7613 = vdwg.mxu0
    %7614 = vmatprep.subr.bf16.mxu0 %v5348
    %7615 = vmatpush1.bf16.msra.mxu0 %v5347
    %7616 = vmatprep.subr.bf16.mxu0 %v5340
    %7617 = vmatpush1.bf16.msra.mxu0 %v5339
    %7618 = vmatprep.subr.bf16.mxu0 %v5332
    %7619 = vmatpush1.bf16.msra.mxu0 %v5331
    %7620 = vmatprep.subr.bf16.mxu0 %v5324
    %7621 = vmatpush1.bf16.msra.mxu0 %v5323
    %7622 = vmatprep.subr.bf16.mxu0 %v5316
    %7623 = vmatpush1.bf16.msra.mxu0 %v5315
    %7624 = vmatprep.subr.bf16.mxu0 %v5308
    %7625 = vmatpush1.bf16.msra.mxu0 %v5307
    %7626 = vmatprep.subr.bf16.mxu0 %v5300
    %7627 = vmatpush1.bf16.msra.mxu0 %v5299
    %7628 = vmatprep.subr.bf16.mxu0 %v5292
    %7629 = vmatpush1.bf16.msra.mxu0 %v5291
    %7630 = vmatprep.subr.bf16.mxu0 %v5412
    %7631 = vmatpush2.bf16.msra.mxu0 %v5411
    %7632 = vmatprep.subr.bf16.mxu0 %v5404
    %7633 = vmatpush2.bf16.msra.mxu0 %v5403
    %7634 = vmatprep.subr.bf16.mxu0 %v5396
    %7635 = vmatpush2.bf16.msra.mxu0 %v5395
    %7636 = vmatprep.subr.bf16.mxu0 %v5388
    %7637 = vmatpush2.bf16.msra.mxu0 %v5387
    %7638 = vmatprep.subr.bf16.mxu0 %v5380
    %7639 = vmatpush2.bf16.msra.mxu0 %v5379
    %7640 = vmatprep.subr.bf16.mxu0 %v5372
    %7641 = vmatpush2.bf16.msra.mxu0 %v5371
    %7642 = vmatprep.subr.bf16.mxu0 %v5364
    %7643 = vmatpush2.bf16.msra.mxu0 %v5363
    %7644 = vmatprep.subr.bf16.mxu0 %v5356
    %7645 = vmatpush2.bf16.msra.mxu0 %v5355
    %7646 = vmatprep.mubr.bf16.mxu0 %v1269
    %7647 = vmatmul.mubr.bf16.gmra.mxu0 %v1255
    %v7648 = vpop.f32.mrf.mxu0
    %v7649 = vadd.f32 %v7608, %v7648
    %v7650 = vpop.f32.mrf.mxu0
    %v7651 = vadd.f32 %v7610, %v7650
    %v7652 = vpop.f32.mrf.mxu0
    %v7653 = vpop.f32.mrf.mxu0
    %7654 = vdwg.mxu0
    %7655 = vmatprep.subr.bf16.mxu0 %v5476
    %7656 = vmatpush1.bf16.msra.mxu0 %v5475
    %7657 = vmatprep.subr.bf16.mxu0 %v5468
    %7658 = vmatpush1.bf16.msra.mxu0 %v5467
    %7659 = vmatprep.subr.bf16.mxu0 %v5460
    %7660 = vmatpush1.bf16.msra.mxu0 %v5459
    %7661 = vmatprep.subr.bf16.mxu0 %v5452
    %7662 = vmatpush1.bf16.msra.mxu0 %v5451
    %7663 = vmatprep.subr.bf16.mxu0 %v5444
    %7664 = vmatpush1.bf16.msra.mxu0 %v5443
    %7665 = vmatprep.subr.bf16.mxu0 %v5436
    %7666 = vmatpush1.bf16.msra.mxu0 %v5435
    %7667 = vmatprep.subr.bf16.mxu0 %v5428
    %7668 = vmatpush1.bf16.msra.mxu0 %v5427
    %7669 = vmatprep.subr.bf16.mxu0 %v5420
    %7670 = vmatpush1.bf16.msra.mxu0 %v5419
    %7671 = vmatprep.subr.bf16.mxu0 %v5540
    %7672 = vmatpush2.bf16.msra.mxu0 %v5539
    %7673 = vmatprep.subr.bf16.mxu0 %v5532
    %7674 = vmatpush2.bf16.msra.mxu0 %v5531
    %7675 = vmatprep.subr.bf16.mxu0 %v5524
    %7676 = vmatpush2.bf16.msra.mxu0 %v5523
    %7677 = vmatprep.subr.bf16.mxu0 %v5516
    %7678 = vmatpush2.bf16.msra.mxu0 %v5515
    %7679 = vmatprep.subr.bf16.mxu0 %v5508
    %7680 = vmatpush2.bf16.msra.mxu0 %v5507
    %7681 = vmatprep.subr.bf16.mxu0 %v5500
    %7682 = vmatpush2.bf16.msra.mxu0 %v5499
    %7683 = vmatprep.subr.bf16.mxu0 %v5492
    %7684 = vmatpush2.bf16.msra.mxu0 %v5491
    %7685 = vmatprep.subr.bf16.mxu0 %v5484
    %7686 = vmatpush2.bf16.msra.mxu0 %v5483
    %7687 = vmatprep.mubr.bf16.mxu0 %v1279
    %7688 = vmatmul.mubr.bf16.gmra.mxu0 %v1277
    %v7689 = vpop.f32.mrf.mxu0
    %v7690 = vadd.f32 %v7649, %v7689
    %v7691 = vpop.f32.mrf.mxu0
    %v7692 = vadd.f32 %v7651, %v7691
    %v7693 = vpop.f32.mrf.mxu0
    %v7694 = vpop.f32.mrf.mxu0
    %7695 = vdwg.mxu0
    %7696 = vmatprep.subr.bf16.mxu0 %v5604
    %7697 = vmatpush1.bf16.msra.mxu0 %v5603
    %7698 = vmatprep.subr.bf16.mxu0 %v5596
    %7699 = vmatpush1.bf16.msra.mxu0 %v5595
    %7700 = vmatprep.subr.bf16.mxu0 %v5588
    %7701 = vmatpush1.bf16.msra.mxu0 %v5587
    %7702 = vmatprep.subr.bf16.mxu0 %v5580
    %7703 = vmatpush1.bf16.msra.mxu0 %v5579
    %7704 = vmatprep.subr.bf16.mxu0 %v5572
    %7705 = vmatpush1.bf16.msra.mxu0 %v5571
    %7706 = vmatprep.subr.bf16.mxu0 %v5564
    %7707 = vmatpush1.bf16.msra.mxu0 %v5563
    %7708 = vmatprep.subr.bf16.mxu0 %v5556
    %7709 = vmatpush1.bf16.msra.mxu0 %v5555
    %7710 = vmatprep.subr.bf16.mxu0 %v5548
    %7711 = vmatpush1.bf16.msra.mxu0 %v5547
    %7712 = vmatprep.subr.bf16.mxu0 %v5668
    %7713 = vmatpush2.bf16.msra.mxu0 %v5667
    %7714 = vmatprep.subr.bf16.mxu0 %v5660
    %7715 = vmatpush2.bf16.msra.mxu0 %v5659
    %7716 = vmatprep.subr.bf16.mxu0 %v5652
    %7717 = vmatpush2.bf16.msra.mxu0 %v5651
    %7718 = vmatprep.subr.bf16.mxu0 %v5644
    %7719 = vmatpush2.bf16.msra.mxu0 %v5643
    %7720 = vmatprep.subr.bf16.mxu0 %v5636
    %7721 = vmatpush2.bf16.msra.mxu0 %v5635
    %7722 = vmatprep.subr.bf16.mxu0 %v5628
    %7723 = vmatpush2.bf16.msra.mxu0 %v5627
    %7724 = vmatprep.subr.bf16.mxu0 %v5620
    %7725 = vmatpush2.bf16.msra.mxu0 %v5619
    %7726 = vmatprep.subr.bf16.mxu0 %v5612
    %7727 = vmatpush2.bf16.msra.mxu0 %v5611
    %7728 = vmatprep.mubr.bf16.mxu0 %v1276
    %7729 = vmatmul.mubr.bf16.gmra.mxu0 %v1262
    %v7730 = vpop.f32.mrf.mxu0
    %v7731 = vadd.f32 %v7690, %v7730
    %v7732 = vpop.f32.mrf.mxu0
    %v7733 = vadd.f32 %v7692, %v7732
    %v7734 = vpop.f32.mrf.mxu0
    %v7735 = vpop.f32.mrf.mxu0
    %7736 = vdwg.mxu0
    %7737 = vmatprep.subr.bf16.mxu0 %v5732
    %7738 = vmatpush1.bf16.msra.mxu0 %v5731
    %7739 = vmatprep.subr.bf16.mxu0 %v5724
    %7740 = vmatpush1.bf16.msra.mxu0 %v5723
    %7741 = vmatprep.subr.bf16.mxu0 %v5716
    %7742 = vmatpush1.bf16.msra.mxu0 %v5715
    %7743 = vmatprep.subr.bf16.mxu0 %v5708
    %7744 = vmatpush1.bf16.msra.mxu0 %v5707
    %7745 = vmatprep.subr.bf16.mxu0 %v5700
    %7746 = vmatpush1.bf16.msra.mxu0 %v5699
    %7747 = vmatprep.subr.bf16.mxu0 %v5692
    %7748 = vmatpush1.bf16.msra.mxu0 %v5691
    %7749 = vmatprep.subr.bf16.mxu0 %v5684
    %7750 = vmatpush1.bf16.msra.mxu0 %v5683
    %7751 = vmatprep.subr.bf16.mxu0 %v5676
    %7752 = vmatpush1.bf16.msra.mxu0 %v5675
    %7753 = vmatprep.subr.bf16.mxu0 %v5796
    %7754 = vmatpush2.bf16.msra.mxu0 %v5795
    %7755 = vmatprep.subr.bf16.mxu0 %v5788
    %7756 = vmatpush2.bf16.msra.mxu0 %v5787
    %7757 = vmatprep.subr.bf16.mxu0 %v5780
    %7758 = vmatpush2.bf16.msra.mxu0 %v5779
    %7759 = vmatprep.subr.bf16.mxu0 %v5772
    %7760 = vmatpush2.bf16.msra.mxu0 %v5771
    %7761 = vmatprep.subr.bf16.mxu0 %v5764
    %7762 = vmatpush2.bf16.msra.mxu0 %v5763
    %7763 = vmatprep.subr.bf16.mxu0 %v5756
    %7764 = vmatpush2.bf16.msra.mxu0 %v5755
    %7765 = vmatprep.subr.bf16.mxu0 %v5748
    %7766 = vmatpush2.bf16.msra.mxu0 %v5747
    %7767 = vmatprep.subr.bf16.mxu0 %v5740
    %7768 = vmatpush2.bf16.msra.mxu0 %v5739
    %7769 = vmatprep.mubr.bf16.mxu0 %v1280
    %7770 = vmatmul.mubr.bf16.gmra.mxu0 %v1278
    %v7771 = vpop.f32.mrf.mxu0
    %v7772 = vadd.f32 %v7731, %v7771
    %v7773 = vpop.f32.mrf.mxu0
    %v7774 = vadd.f32 %v7733, %v7773
    %v7775 = vpop.f32.mrf.mxu0
    %v7776 = vpop.f32.mrf.mxu0
    %7777 = vdwg.mxu0
    %7778 = vmatprep.subr.bf16.mxu0 %v5860
    %7779 = vmatpush1.bf16.msra.mxu0 %v5859
    %7780 = vmatprep.subr.bf16.mxu0 %v5852
    %7781 = vmatpush1.bf16.msra.mxu0 %v5851
    %7782 = vmatprep.subr.bf16.mxu0 %v5844
    %7783 = vmatpush1.bf16.msra.mxu0 %v5843
    %7784 = vmatprep.subr.bf16.mxu0 %v5836
    %7785 = vmatpush1.bf16.msra.mxu0 %v5835
    %7786 = vmatprep.subr.bf16.mxu0 %v5828
    %7787 = vmatpush1.bf16.msra.mxu0 %v5827
    %7788 = vmatprep.subr.bf16.mxu0 %v5820
    %7789 = vmatpush1.bf16.msra.mxu0 %v5819
    %7790 = vmatprep.subr.bf16.mxu0 %v5812
    %7791 = vmatpush1.bf16.msra.mxu0 %v5811
    %7792 = vmatprep.subr.bf16.mxu0 %v5804
    %7793 = vmatpush1.bf16.msra.mxu0 %v5803
    %7794 = vmatprep.subr.bf16.mxu0 %v5924
    %7795 = vmatpush2.bf16.msra.mxu0 %v5923
    %7796 = vmatprep.subr.bf16.mxu0 %v5916
    %7797 = vmatpush2.bf16.msra.mxu0 %v5915
    %7798 = vmatprep.subr.bf16.mxu0 %v5908
    %7799 = vmatpush2.bf16.msra.mxu0 %v5907
    %7800 = vmatprep.subr.bf16.mxu0 %v5900
    %7801 = vmatpush2.bf16.msra.mxu0 %v5899
    %7802 = vmatprep.subr.bf16.mxu0 %v5892
    %7803 = vmatpush2.bf16.msra.mxu0 %v5891
    %7804 = vmatprep.subr.bf16.mxu0 %v5884
    %7805 = vmatpush2.bf16.msra.mxu0 %v5883
    %7806 = vmatprep.subr.bf16.mxu0 %v5876
    %7807 = vmatpush2.bf16.msra.mxu0 %v5875
    %7808 = vmatprep.subr.bf16.mxu0 %v5868
    %7809 = vmatpush2.bf16.msra.mxu0 %v5867
    %7810 = vmatprep.mubr.bf16.mxu0 %v1302
    %7811 = vmatmul.mubr.bf16.gmra.mxu0 %v1295
    %v7812 = vpop.f32.mrf.mxu0
    %v7813 = vadd.f32 %v7772, %v7812
    %v7814 = vpop.f32.mrf.mxu0
    %v7815 = vadd.f32 %v7774, %v7814
    %v7816 = vpop.f32.mrf.mxu0
    %v7817 = vpop.f32.mrf.mxu0
    %7818 = vdwg.mxu0
    %7819 = vmatprep.subr.bf16.mxu0 %v4838
    %7820 = vmatpush1.bf16.msra.mxu0 %v4837
    %7821 = vmatprep.subr.bf16.mxu0 %v4830
    %7822 = vmatpush1.bf16.msra.mxu0 %v4829
    %7823 = vmatprep.subr.bf16.mxu0 %v4822
    %7824 = vmatpush1.bf16.msra.mxu0 %v4821
    %7825 = vmatprep.subr.bf16.mxu0 %v4814
    %7826 = vmatpush1.bf16.msra.mxu0 %v4813
    %7827 = vmatprep.subr.bf16.mxu0 %v4806
    %7828 = vmatpush1.bf16.msra.mxu0 %v4805
    %7829 = vmatprep.subr.bf16.mxu0 %v4798
    %7830 = vmatpush1.bf16.msra.mxu0 %v4797
    %7831 = vmatprep.subr.bf16.mxu0 %v4790
    %7832 = vmatpush1.bf16.msra.mxu0 %v4789
    %7833 = vmatprep.subr.bf16.mxu0 %v4782
    %7834 = vmatpush1.bf16.msra.mxu0 %v4781
    %7835 = vmatprep.subr.bf16.mxu0 %v4902
    %7836 = vmatpush2.bf16.msra.mxu0 %v4901
    %7837 = vmatprep.subr.bf16.mxu0 %v4894
    %7838 = vmatpush2.bf16.msra.mxu0 %v4893
    %7839 = vmatprep.subr.bf16.mxu0 %v4886
    %7840 = vmatpush2.bf16.msra.mxu0 %v4885
    %7841 = vmatprep.subr.bf16.mxu0 %v4878
    %7842 = vmatpush2.bf16.msra.mxu0 %v4877
    %7843 = vmatprep.subr.bf16.mxu0 %v4870
    %7844 = vmatpush2.bf16.msra.mxu0 %v4869
    %7845 = vmatprep.subr.bf16.mxu0 %v4862
    %7846 = vmatpush2.bf16.msra.mxu0 %v4861
    %7847 = vmatprep.subr.bf16.mxu0 %v4854
    %7848 = vmatpush2.bf16.msra.mxu0 %v4853
    %7849 = vmatprep.subr.bf16.mxu0 %v4846
    %7850 = vmatpush2.bf16.msra.mxu0 %v4845
    %7851 = vmatprep.mubr.bf16.mxu0 %v1220
    %7852 = vmatmul.mubr.bf16.gmra.mxu0 %v1206
    %v7853 = vpop.f32.mrf.mxu0
    %v7854 = vadd.f32 0.0, %v7853
    %v7855 = vpop.f32.mrf.mxu0
    %v7856 = vadd.f32 0.0, %v7855
    %v7857 = vpop.f32.mrf.mxu0
    %v7858 = vpop.f32.mrf.mxu0
    %7859 = vdwg.mxu0
    %7860 = vmatprep.subr.bf16.mxu0 %v4966
    %7861 = vmatpush1.bf16.msra.mxu0 %v4965
    %7862 = vmatprep.subr.bf16.mxu0 %v4958
    %7863 = vmatpush1.bf16.msra.mxu0 %v4957
    %7864 = vmatprep.subr.bf16.mxu0 %v4950
    %7865 = vmatpush1.bf16.msra.mxu0 %v4949
    %7866 = vmatprep.subr.bf16.mxu0 %v4942
    %7867 = vmatpush1.bf16.msra.mxu0 %v4941
    %7868 = vmatprep.subr.bf16.mxu0 %v4934
    %7869 = vmatpush1.bf16.msra.mxu0 %v4933
    %7870 = vmatprep.subr.bf16.mxu0 %v4926
    %7871 = vmatpush1.bf16.msra.mxu0 %v4925
    %7872 = vmatprep.subr.bf16.mxu0 %v4918
    %7873 = vmatpush1.bf16.msra.mxu0 %v4917
    %7874 = vmatprep.subr.bf16.mxu0 %v4910
    %7875 = vmatpush1.bf16.msra.mxu0 %v4909
    %7876 = vmatprep.subr.bf16.mxu0 %v5030
    %7877 = vmatpush2.bf16.msra.mxu0 %v5029
    %7878 = vmatprep.subr.bf16.mxu0 %v5022
    %7879 = vmatpush2.bf16.msra.mxu0 %v5021
    %7880 = vmatprep.subr.bf16.mxu0 %v5014
    %7881 = vmatpush2.bf16.msra.mxu0 %v5013
    %7882 = vmatprep.subr.bf16.mxu0 %v5006
    %7883 = vmatpush2.bf16.msra.mxu0 %v5005
    %7884 = vmatprep.subr.bf16.mxu0 %v4998
    %7885 = vmatpush2.bf16.msra.mxu0 %v4997
    %7886 = vmatprep.subr.bf16.mxu0 %v4990
    %7887 = vmatpush2.bf16.msra.mxu0 %v4989
    %7888 = vmatprep.subr.bf16.mxu0 %v4982
    %7889 = vmatpush2.bf16.msra.mxu0 %v4981
    %7890 = vmatprep.subr.bf16.mxu0 %v4974
    %7891 = vmatpush2.bf16.msra.mxu0 %v4973
    %7892 = vmatprep.mubr.bf16.mxu0 %v1230
    %7893 = vmatmul.mubr.bf16.gmra.mxu0 %v1228
    %v7894 = vpop.f32.mrf.mxu0
    %v7895 = vadd.f32 %v7854, %v7894
    %v7896 = vpop.f32.mrf.mxu0
    %v7897 = vadd.f32 %v7856, %v7896
    %v7898 = vpop.f32.mrf.mxu0
    %v7899 = vpop.f32.mrf.mxu0
    %7900 = vdwg.mxu0
    %7901 = vmatprep.subr.bf16.mxu0 %v5094
    %7902 = vmatpush1.bf16.msra.mxu0 %v5093
    %7903 = vmatprep.subr.bf16.mxu0 %v5086
    %7904 = vmatpush1.bf16.msra.mxu0 %v5085
    %7905 = vmatprep.subr.bf16.mxu0 %v5078
    %7906 = vmatpush1.bf16.msra.mxu0 %v5077
    %7907 = vmatprep.subr.bf16.mxu0 %v5070
    %7908 = vmatpush1.bf16.msra.mxu0 %v5069
    %7909 = vmatprep.subr.bf16.mxu0 %v5062
    %7910 = vmatpush1.bf16.msra.mxu0 %v5061
    %7911 = vmatprep.subr.bf16.mxu0 %v5054
    %7912 = vmatpush1.bf16.msra.mxu0 %v5053
    %7913 = vmatprep.subr.bf16.mxu0 %v5046
    %7914 = vmatpush1.bf16.msra.mxu0 %v5045
    %7915 = vmatprep.subr.bf16.mxu0 %v5038
    %7916 = vmatpush1.bf16.msra.mxu0 %v5037
    %7917 = vmatprep.subr.bf16.mxu0 %v5158
    %7918 = vmatpush2.bf16.msra.mxu0 %v5157
    %7919 = vmatprep.subr.bf16.mxu0 %v5150
    %7920 = vmatpush2.bf16.msra.mxu0 %v5149
    %7921 = vmatprep.subr.bf16.mxu0 %v5142
    %7922 = vmatpush2.bf16.msra.mxu0 %v5141
    %7923 = vmatprep.subr.bf16.mxu0 %v5134
    %7924 = vmatpush2.bf16.msra.mxu0 %v5133
    %7925 = vmatprep.subr.bf16.mxu0 %v5126
    %7926 = vmatpush2.bf16.msra.mxu0 %v5125
    %7927 = vmatprep.subr.bf16.mxu0 %v5118
    %7928 = vmatpush2.bf16.msra.mxu0 %v5117
    %7929 = vmatprep.subr.bf16.mxu0 %v5110
    %7930 = vmatpush2.bf16.msra.mxu0 %v5109
    %7931 = vmatprep.subr.bf16.mxu0 %v5102
    %7932 = vmatpush2.bf16.msra.mxu0 %v5101
    %7933 = vmatprep.mubr.bf16.mxu0 %v1227
    %7934 = vmatmul.mubr.bf16.gmra.mxu0 %v1213
    %v7935 = vpop.f32.mrf.mxu0
    %v7936 = vadd.f32 %v7895, %v7935
    %v7937 = vpop.f32.mrf.mxu0
    %v7938 = vadd.f32 %v7897, %v7937
    %v7939 = vpop.f32.mrf.mxu0
    %v7940 = vpop.f32.mrf.mxu0
    %7941 = vdwg.mxu0
    %7942 = vmatprep.subr.bf16.mxu0 %v5222
    %7943 = vmatpush1.bf16.msra.mxu0 %v5221
    %7944 = vmatprep.subr.bf16.mxu0 %v5214
    %7945 = vmatpush1.bf16.msra.mxu0 %v5213
    %7946 = vmatprep.subr.bf16.mxu0 %v5206
    %7947 = vmatpush1.bf16.msra.mxu0 %v5205
    %7948 = vmatprep.subr.bf16.mxu0 %v5198
    %7949 = vmatpush1.bf16.msra.mxu0 %v5197
    %7950 = vmatprep.subr.bf16.mxu0 %v5190
    %7951 = vmatpush1.bf16.msra.mxu0 %v5189
    %7952 = vmatprep.subr.bf16.mxu0 %v5182
    %7953 = vmatpush1.bf16.msra.mxu0 %v5181
    %7954 = vmatprep.subr.bf16.mxu0 %v5174
    %7955 = vmatpush1.bf16.msra.mxu0 %v5173
    %7956 = vmatprep.subr.bf16.mxu0 %v5166
    %7957 = vmatpush1.bf16.msra.mxu0 %v5165
    %7958 = vmatprep.subr.bf16.mxu0 %v5286
    %7959 = vmatpush2.bf16.msra.mxu0 %v5285
    %7960 = vmatprep.subr.bf16.mxu0 %v5278
    %7961 = vmatpush2.bf16.msra.mxu0 %v5277
    %7962 = vmatprep.subr.bf16.mxu0 %v5270
    %7963 = vmatpush2.bf16.msra.mxu0 %v5269
    %7964 = vmatprep.subr.bf16.mxu0 %v5262
    %7965 = vmatpush2.bf16.msra.mxu0 %v5261
    %7966 = vmatprep.subr.bf16.mxu0 %v5254
    %7967 = vmatpush2.bf16.msra.mxu0 %v5253
    %7968 = vmatprep.subr.bf16.mxu0 %v5246
    %7969 = vmatpush2.bf16.msra.mxu0 %v5245
    %7970 = vmatprep.subr.bf16.mxu0 %v5238
    %7971 = vmatpush2.bf16.msra.mxu0 %v5237
    %7972 = vmatprep.subr.bf16.mxu0 %v5230
    %7973 = vmatpush2.bf16.msra.mxu0 %v5229
    %7974 = vmatprep.mubr.bf16.mxu0 %v1231
    %7975 = vmatmul.mubr.bf16.gmra.mxu0 %v1229
    %v7976 = vpop.f32.mrf.mxu0
    %v7977 = vadd.f32 %v7936, %v7976
    %v7978 = vpop.f32.mrf.mxu0
    %v7979 = vadd.f32 %v7938, %v7978
    %v7980 = vpop.f32.mrf.mxu0
    %v7981 = vpop.f32.mrf.mxu0
    %7982 = vdwg.mxu0
    %7983 = vmatprep.subr.bf16.mxu0 %v5350
    %7984 = vmatpush1.bf16.msra.mxu0 %v5349
    %7985 = vmatprep.subr.bf16.mxu0 %v5342
    %7986 = vmatpush1.bf16.msra.mxu0 %v5341
    %7987 = vmatprep.subr.bf16.mxu0 %v5334
    %7988 = vmatpush1.bf16.msra.mxu0 %v5333
    %7989 = vmatprep.subr.bf16.mxu0 %v5326
    %7990 = vmatpush1.bf16.msra.mxu0 %v5325
    %7991 = vmatprep.subr.bf16.mxu0 %v5318
    %7992 = vmatpush1.bf16.msra.mxu0 %v5317
    %7993 = vmatprep.subr.bf16.mxu0 %v5310
    %7994 = vmatpush1.bf16.msra.mxu0 %v5309
    %7995 = vmatprep.subr.bf16.mxu0 %v5302
    %7996 = vmatpush1.bf16.msra.mxu0 %v5301
    %7997 = vmatprep.subr.bf16.mxu0 %v5294
    %7998 = vmatpush1.bf16.msra.mxu0 %v5293
    %7999 = vmatprep.subr.bf16.mxu0 %v5414
    %8000 = vmatpush2.bf16.msra.mxu0 %v5413
    %8001 = vmatprep.subr.bf16.mxu0 %v5406
    %8002 = vmatpush2.bf16.msra.mxu0 %v5405
    %8003 = vmatprep.subr.bf16.mxu0 %v5398
    %8004 = vmatpush2.bf16.msra.mxu0 %v5397
    %8005 = vmatprep.subr.bf16.mxu0 %v5390
    %8006 = vmatpush2.bf16.msra.mxu0 %v5389
    %8007 = vmatprep.subr.bf16.mxu0 %v5382
    %8008 = vmatpush2.bf16.msra.mxu0 %v5381
    %8009 = vmatprep.subr.bf16.mxu0 %v5374
    %8010 = vmatpush2.bf16.msra.mxu0 %v5373
    %8011 = vmatprep.subr.bf16.mxu0 %v5366
    %8012 = vmatpush2.bf16.msra.mxu0 %v5365
    %8013 = vmatprep.subr.bf16.mxu0 %v5358
    %8014 = vmatpush2.bf16.msra.mxu0 %v5357
    %8015 = vmatprep.mubr.bf16.mxu0 %v1269
    %8016 = vmatmul.mubr.bf16.gmra.mxu0 %v1255
    %v8017 = vpop.f32.mrf.mxu0
    %v8018 = vadd.f32 %v7977, %v8017
    %v8019 = vpop.f32.mrf.mxu0
    %v8020 = vadd.f32 %v7979, %v8019
    %v8021 = vpop.f32.mrf.mxu0
    %v8022 = vpop.f32.mrf.mxu0
    %8023 = vdwg.mxu0
    %8024 = vmatprep.subr.bf16.mxu0 %v5478
    %8025 = vmatpush1.bf16.msra.mxu0 %v5477
    %8026 = vmatprep.subr.bf16.mxu0 %v5470
    %8027 = vmatpush1.bf16.msra.mxu0 %v5469
    %8028 = vmatprep.subr.bf16.mxu0 %v5462
    %8029 = vmatpush1.bf16.msra.mxu0 %v5461
    %8030 = vmatprep.subr.bf16.mxu0 %v5454
    %8031 = vmatpush1.bf16.msra.mxu0 %v5453
    %8032 = vmatprep.subr.bf16.mxu0 %v5446
    %8033 = vmatpush1.bf16.msra.mxu0 %v5445
    %8034 = vmatprep.subr.bf16.mxu0 %v5438
    %8035 = vmatpush1.bf16.msra.mxu0 %v5437
    %8036 = vmatprep.subr.bf16.mxu0 %v5430
    %8037 = vmatpush1.bf16.msra.mxu0 %v5429
    %8038 = vmatprep.subr.bf16.mxu0 %v5422
    %8039 = vmatpush1.bf16.msra.mxu0 %v5421
    %8040 = vmatprep.subr.bf16.mxu0 %v5542
    %8041 = vmatpush2.bf16.msra.mxu0 %v5541
    %8042 = vmatprep.subr.bf16.mxu0 %v5534
    %8043 = vmatpush2.bf16.msra.mxu0 %v5533
    %8044 = vmatprep.subr.bf16.mxu0 %v5526
    %8045 = vmatpush2.bf16.msra.mxu0 %v5525
    %8046 = vmatprep.subr.bf16.mxu0 %v5518
    %8047 = vmatpush2.bf16.msra.mxu0 %v5517
    %8048 = vmatprep.subr.bf16.mxu0 %v5510
    %8049 = vmatpush2.bf16.msra.mxu0 %v5509
    %8050 = vmatprep.subr.bf16.mxu0 %v5502
    %8051 = vmatpush2.bf16.msra.mxu0 %v5501
    %8052 = vmatprep.subr.bf16.mxu0 %v5494
    %8053 = vmatpush2.bf16.msra.mxu0 %v5493
    %8054 = vmatprep.subr.bf16.mxu0 %v5486
    %8055 = vmatpush2.bf16.msra.mxu0 %v5485
    %8056 = vmatprep.mubr.bf16.mxu0 %v1279
    %8057 = vmatmul.mubr.bf16.gmra.mxu0 %v1277
    %v8058 = vpop.f32.mrf.mxu0
    %v8059 = vadd.f32 %v8018, %v8058
    %v8060 = vpop.f32.mrf.mxu0
    %v8061 = vadd.f32 %v8020, %v8060
    %v8062 = vpop.f32.mrf.mxu0
    %v8063 = vpop.f32.mrf.mxu0
    %8064 = vdwg.mxu0
    %8065 = vmatprep.subr.bf16.mxu0 %v5606
    %8066 = vmatpush1.bf16.msra.mxu0 %v5605
    %8067 = vmatprep.subr.bf16.mxu0 %v5598
    %8068 = vmatpush1.bf16.msra.mxu0 %v5597
    %8069 = vmatprep.subr.bf16.mxu0 %v5590
    %8070 = vmatpush1.bf16.msra.mxu0 %v5589
    %8071 = vmatprep.subr.bf16.mxu0 %v5582
    %8072 = vmatpush1.bf16.msra.mxu0 %v5581
    %8073 = vmatprep.subr.bf16.mxu0 %v5574
    %8074 = vmatpush1.bf16.msra.mxu0 %v5573
    %8075 = vmatprep.subr.bf16.mxu0 %v5566
    %8076 = vmatpush1.bf16.msra.mxu0 %v5565
    %8077 = vmatprep.subr.bf16.mxu0 %v5558
    %8078 = vmatpush1.bf16.msra.mxu0 %v5557
    %8079 = vmatprep.subr.bf16.mxu0 %v5550
    %8080 = vmatpush1.bf16.msra.mxu0 %v5549
    %8081 = vmatprep.subr.bf16.mxu0 %v5670
    %8082 = vmatpush2.bf16.msra.mxu0 %v5669
    %8083 = vmatprep.subr.bf16.mxu0 %v5662
    %8084 = vmatpush2.bf16.msra.mxu0 %v5661
    %8085 = vmatprep.subr.bf16.mxu0 %v5654
    %8086 = vmatpush2.bf16.msra.mxu0 %v5653
    %8087 = vmatprep.subr.bf16.mxu0 %v5646
    %8088 = vmatpush2.bf16.msra.mxu0 %v5645
    %8089 = vmatprep.subr.bf16.mxu0 %v5638
    %8090 = vmatpush2.bf16.msra.mxu0 %v5637
    %8091 = vmatprep.subr.bf16.mxu0 %v5630
    %8092 = vmatpush2.bf16.msra.mxu0 %v5629
    %8093 = vmatprep.subr.bf16.mxu0 %v5622
    %8094 = vmatpush2.bf16.msra.mxu0 %v5621
    %8095 = vmatprep.subr.bf16.mxu0 %v5614
    %8096 = vmatpush2.bf16.msra.mxu0 %v5613
    %8097 = vmatprep.mubr.bf16.mxu0 %v1276
    %8098 = vmatmul.mubr.bf16.gmra.mxu0 %v1262
    %v8099 = vpop.f32.mrf.mxu0
    %v8100 = vadd.f32 %v8059, %v8099
    %v8101 = vpop.f32.mrf.mxu0
    %v8102 = vadd.f32 %v8061, %v8101
    %v8103 = vpop.f32.mrf.mxu0
    %v8104 = vpop.f32.mrf.mxu0
    %8105 = vdwg.mxu0
    %8106 = vmatprep.subr.bf16.mxu0 %v5734
    %8107 = vmatpush1.bf16.msra.mxu0 %v5733
    %8108 = vmatprep.subr.bf16.mxu0 %v5726
    %8109 = vmatpush1.bf16.msra.mxu0 %v5725
    %8110 = vmatprep.subr.bf16.mxu0 %v5718
    %8111 = vmatpush1.bf16.msra.mxu0 %v5717
    %8112 = vmatprep.subr.bf16.mxu0 %v5710
    %8113 = vmatpush1.bf16.msra.mxu0 %v5709
    %8114 = vmatprep.subr.bf16.mxu0 %v5702
    %8115 = vmatpush1.bf16.msra.mxu0 %v5701
    %8116 = vmatprep.subr.bf16.mxu0 %v5694
    %8117 = vmatpush1.bf16.msra.mxu0 %v5693
    %8118 = vmatprep.subr.bf16.mxu0 %v5686
    %8119 = vmatpush1.bf16.msra.mxu0 %v5685
    %8120 = vmatprep.subr.bf16.mxu0 %v5678
    %8121 = vmatpush1.bf16.msra.mxu0 %v5677
    %8122 = vmatprep.subr.bf16.mxu0 %v5798
    %8123 = vmatpush2.bf16.msra.mxu0 %v5797
    %8124 = vmatprep.subr.bf16.mxu0 %v5790
    %8125 = vmatpush2.bf16.msra.mxu0 %v5789
    %8126 = vmatprep.subr.bf16.mxu0 %v5782
    %8127 = vmatpush2.bf16.msra.mxu0 %v5781
    %8128 = vmatprep.subr.bf16.mxu0 %v5774
    %8129 = vmatpush2.bf16.msra.mxu0 %v5773
    %8130 = vmatprep.subr.bf16.mxu0 %v5766
    %8131 = vmatpush2.bf16.msra.mxu0 %v5765
    %8132 = vmatprep.subr.bf16.mxu0 %v5758
    %8133 = vmatpush2.bf16.msra.mxu0 %v5757
    %8134 = vmatprep.subr.bf16.mxu0 %v5750
    %8135 = vmatpush2.bf16.msra.mxu0 %v5749
    %8136 = vmatprep.subr.bf16.mxu0 %v5742
    %8137 = vmatpush2.bf16.msra.mxu0 %v5741
    %8138 = vmatprep.mubr.bf16.mxu0 %v1280
    %8139 = vmatmul.mubr.bf16.gmra.mxu0 %v1278
    %v8140 = vpop.f32.mrf.mxu0
    %v8141 = vadd.f32 %v8100, %v8140
    %v8142 = vpop.f32.mrf.mxu0
    %v8143 = vadd.f32 %v8102, %v8142
    %v8144 = vpop.f32.mrf.mxu0
    %v8145 = vpop.f32.mrf.mxu0
    %8146 = vdwg.mxu0
    %8147 = vmatprep.subr.bf16.mxu0 %v5862
    %8148 = vmatpush1.bf16.msra.mxu0 %v5861
    %8149 = vmatprep.subr.bf16.mxu0 %v5854
    %8150 = vmatpush1.bf16.msra.mxu0 %v5853
    %8151 = vmatprep.subr.bf16.mxu0 %v5846
    %8152 = vmatpush1.bf16.msra.mxu0 %v5845
    %8153 = vmatprep.subr.bf16.mxu0 %v5838
    %8154 = vmatpush1.bf16.msra.mxu0 %v5837
    %8155 = vmatprep.subr.bf16.mxu0 %v5830
    %8156 = vmatpush1.bf16.msra.mxu0 %v5829
    %8157 = vmatprep.subr.bf16.mxu0 %v5822
    %8158 = vmatpush1.bf16.msra.mxu0 %v5821
    %8159 = vmatprep.subr.bf16.mxu0 %v5814
    %8160 = vmatpush1.bf16.msra.mxu0 %v5813
    %8161 = vmatprep.subr.bf16.mxu0 %v5806
    %8162 = vmatpush1.bf16.msra.mxu0 %v5805
    %8163 = vmatprep.subr.bf16.mxu0 %v5926
    %8164 = vmatpush2.bf16.msra.mxu0 %v5925
    %8165 = vmatprep.subr.bf16.mxu0 %v5918
    %8166 = vmatpush2.bf16.msra.mxu0 %v5917
    %8167 = vmatprep.subr.bf16.mxu0 %v5910
    %8168 = vmatpush2.bf16.msra.mxu0 %v5909
    %8169 = vmatprep.subr.bf16.mxu0 %v5902
    %8170 = vmatpush2.bf16.msra.mxu0 %v5901
    %8171 = vmatprep.subr.bf16.mxu0 %v5894
    %8172 = vmatpush2.bf16.msra.mxu0 %v5893
    %8173 = vmatprep.subr.bf16.mxu0 %v5886
    %8174 = vmatpush2.bf16.msra.mxu0 %v5885
    %8175 = vmatprep.subr.bf16.mxu0 %v5878
    %8176 = vmatpush2.bf16.msra.mxu0 %v5877
    %8177 = vmatprep.subr.bf16.mxu0 %v5870
    %8178 = vmatpush2.bf16.msra.mxu0 %v5869
    %8179 = vmatprep.mubr.bf16.mxu0 %v1302
    %8180 = vmatmul.mubr.bf16.gmra.mxu0 %v1295
    %v8181 = vpop.f32.mrf.mxu0
    %v8182 = vadd.f32 %v8141, %v8181
    %v8183 = vpop.f32.mrf.mxu0
    %v8184 = vadd.f32 %v8143, %v8183
    %v8185 = vpop.f32.mrf.mxu0
    %v8186 = vpop.f32.mrf.mxu0
    %8187 = vdwg.mxu0
    %8188 = vmatprep.subr.bf16.mxu0 %v4840
    %8189 = vmatpush1.bf16.msra.mxu0 %v4839
    %8190 = vmatprep.subr.bf16.mxu0 %v4832
    %8191 = vmatpush1.bf16.msra.mxu0 %v4831
    %8192 = vmatprep.subr.bf16.mxu0 %v4824
    %8193 = vmatpush1.bf16.msra.mxu0 %v4823
    %8194 = vmatprep.subr.bf16.mxu0 %v4816
    %8195 = vmatpush1.bf16.msra.mxu0 %v4815
    %8196 = vmatprep.subr.bf16.mxu0 %v4808
    %8197 = vmatpush1.bf16.msra.mxu0 %v4807
    %8198 = vmatprep.subr.bf16.mxu0 %v4800
    %8199 = vmatpush1.bf16.msra.mxu0 %v4799
    %8200 = vmatprep.subr.bf16.mxu0 %v4792
    %8201 = vmatpush1.bf16.msra.mxu0 %v4791
    %8202 = vmatprep.subr.bf16.mxu0 %v4784
    %8203 = vmatpush1.bf16.msra.mxu0 %v4783
    %8204 = vmatprep.subr.bf16.mxu0 %v4904
    %8205 = vmatpush2.bf16.msra.mxu0 %v4903
    %8206 = vmatprep.subr.bf16.mxu0 %v4896
    %8207 = vmatpush2.bf16.msra.mxu0 %v4895
    %8208 = vmatprep.subr.bf16.mxu0 %v4888
    %8209 = vmatpush2.bf16.msra.mxu0 %v4887
    %8210 = vmatprep.subr.bf16.mxu0 %v4880
    %8211 = vmatpush2.bf16.msra.mxu0 %v4879
    %8212 = vmatprep.subr.bf16.mxu0 %v4872
    %8213 = vmatpush2.bf16.msra.mxu0 %v4871
    %8214 = vmatprep.subr.bf16.mxu0 %v4864
    %8215 = vmatpush2.bf16.msra.mxu0 %v4863
    %8216 = vmatprep.subr.bf16.mxu0 %v4856
    %8217 = vmatpush2.bf16.msra.mxu0 %v4855
    %8218 = vmatprep.subr.bf16.mxu0 %v4848
    %8219 = vmatpush2.bf16.msra.mxu0 %v4847
    %8220 = vmatprep.mubr.bf16.mxu0 %v1220
    %8221 = vmatmul.mubr.bf16.gmra.mxu0 %v1206
    %v8222 = vpop.f32.mrf.mxu0
    %v8223 = vadd.f32 0.0, %v8222
    %v8224 = vpop.f32.mrf.mxu0
    %v8225 = vadd.f32 0.0, %v8224
    %v8226 = vpop.f32.mrf.mxu0
    %v8227 = vpop.f32.mrf.mxu0
    %8228 = vdwg.mxu0
    %8229 = vmatprep.subr.bf16.mxu0 %v4968
    %8230 = vmatpush1.bf16.msra.mxu0 %v4967
    %8231 = vmatprep.subr.bf16.mxu0 %v4960
    %8232 = vmatpush1.bf16.msra.mxu0 %v4959
    %8233 = vmatprep.subr.bf16.mxu0 %v4952
    %8234 = vmatpush1.bf16.msra.mxu0 %v4951
    %8235 = vmatprep.subr.bf16.mxu0 %v4944
    %8236 = vmatpush1.bf16.msra.mxu0 %v4943
    %8237 = vmatprep.subr.bf16.mxu0 %v4936
    %8238 = vmatpush1.bf16.msra.mxu0 %v4935
    %8239 = vmatprep.subr.bf16.mxu0 %v4928
    %8240 = vmatpush1.bf16.msra.mxu0 %v4927
    %8241 = vmatprep.subr.bf16.mxu0 %v4920
    %8242 = vmatpush1.bf16.msra.mxu0 %v4919
    %8243 = vmatprep.subr.bf16.mxu0 %v4912
    %8244 = vmatpush1.bf16.msra.mxu0 %v4911
    %8245 = vmatprep.subr.bf16.mxu0 %v5032
    %8246 = vmatpush2.bf16.msra.mxu0 %v5031
    %8247 = vmatprep.subr.bf16.mxu0 %v5024
    %8248 = vmatpush2.bf16.msra.mxu0 %v5023
    %8249 = vmatprep.subr.bf16.mxu0 %v5016
    %8250 = vmatpush2.bf16.msra.mxu0 %v5015
    %8251 = vmatprep.subr.bf16.mxu0 %v5008
    %8252 = vmatpush2.bf16.msra.mxu0 %v5007
    %8253 = vmatprep.subr.bf16.mxu0 %v5000
    %8254 = vmatpush2.bf16.msra.mxu0 %v4999
    %8255 = vmatprep.subr.bf16.mxu0 %v4992
    %8256 = vmatpush2.bf16.msra.mxu0 %v4991
    %8257 = vmatprep.subr.bf16.mxu0 %v4984
    %8258 = vmatpush2.bf16.msra.mxu0 %v4983
    %8259 = vmatprep.subr.bf16.mxu0 %v4976
    %8260 = vmatpush2.bf16.msra.mxu0 %v4975
    %8261 = vmatprep.mubr.bf16.mxu0 %v1230
    %8262 = vmatmul.mubr.bf16.gmra.mxu0 %v1228
    %v8263 = vpop.f32.mrf.mxu0
    %v8264 = vadd.f32 %v8223, %v8263
    %v8265 = vpop.f32.mrf.mxu0
    %v8266 = vadd.f32 %v8225, %v8265
    %v8267 = vpop.f32.mrf.mxu0
    %v8268 = vpop.f32.mrf.mxu0
    %8269 = vdwg.mxu0
    %8270 = vmatprep.subr.bf16.mxu0 %v5096
    %8271 = vmatpush1.bf16.msra.mxu0 %v5095
    %8272 = vmatprep.subr.bf16.mxu0 %v5088
    %8273 = vmatpush1.bf16.msra.mxu0 %v5087
    %8274 = vmatprep.subr.bf16.mxu0 %v5080
    %8275 = vmatpush1.bf16.msra.mxu0 %v5079
    %8276 = vmatprep.subr.bf16.mxu0 %v5072
    %8277 = vmatpush1.bf16.msra.mxu0 %v5071
    %8278 = vmatprep.subr.bf16.mxu0 %v5064
    %8279 = vmatpush1.bf16.msra.mxu0 %v5063
    %8280 = vmatprep.subr.bf16.mxu0 %v5056
    %8281 = vmatpush1.bf16.msra.mxu0 %v5055
    %8282 = vmatprep.subr.bf16.mxu0 %v5048
    %8283 = vmatpush1.bf16.msra.mxu0 %v5047
    %8284 = vmatprep.subr.bf16.mxu0 %v5040
    %8285 = vmatpush1.bf16.msra.mxu0 %v5039
    %8286 = vmatprep.subr.bf16.mxu0 %v5160
    %8287 = vmatpush2.bf16.msra.mxu0 %v5159
    %8288 = vmatprep.subr.bf16.mxu0 %v5152
    %8289 = vmatpush2.bf16.msra.mxu0 %v5151
    %8290 = vmatprep.subr.bf16.mxu0 %v5144
    %8291 = vmatpush2.bf16.msra.mxu0 %v5143
    %8292 = vmatprep.subr.bf16.mxu0 %v5136
    %8293 = vmatpush2.bf16.msra.mxu0 %v5135
    %8294 = vmatprep.subr.bf16.mxu0 %v5128
    %8295 = vmatpush2.bf16.msra.mxu0 %v5127
    %8296 = vmatprep.subr.bf16.mxu0 %v5120
    %8297 = vmatpush2.bf16.msra.mxu0 %v5119
    %8298 = vmatprep.subr.bf16.mxu0 %v5112
    %8299 = vmatpush2.bf16.msra.mxu0 %v5111
    %8300 = vmatprep.subr.bf16.mxu0 %v5104
    %8301 = vmatpush2.bf16.msra.mxu0 %v5103
    %8302 = vmatprep.mubr.bf16.mxu0 %v1227
    %8303 = vmatmul.mubr.bf16.gmra.mxu0 %v1213
    %v8304 = vpop.f32.mrf.mxu0
    %v8305 = vadd.f32 %v8264, %v8304
    %v8306 = vpop.f32.mrf.mxu0
    %v8307 = vadd.f32 %v8266, %v8306
    %v8308 = vpop.f32.mrf.mxu0
    %v8309 = vpop.f32.mrf.mxu0
    %8310 = vdwg.mxu0
    %8311 = vmatprep.subr.bf16.mxu0 %v5224
    %8312 = vmatpush1.bf16.msra.mxu0 %v5223
    %8313 = vmatprep.subr.bf16.mxu0 %v5216
    %8314 = vmatpush1.bf16.msra.mxu0 %v5215
    %8315 = vmatprep.subr.bf16.mxu0 %v5208
    %8316 = vmatpush1.bf16.msra.mxu0 %v5207
    %8317 = vmatprep.subr.bf16.mxu0 %v5200
    %8318 = vmatpush1.bf16.msra.mxu0 %v5199
    %8319 = vmatprep.subr.bf16.mxu0 %v5192
    %8320 = vmatpush1.bf16.msra.mxu0 %v5191
    %8321 = vmatprep.subr.bf16.mxu0 %v5184
    %8322 = vmatpush1.bf16.msra.mxu0 %v5183
    %8323 = vmatprep.subr.bf16.mxu0 %v5176
    %8324 = vmatpush1.bf16.msra.mxu0 %v5175
    %8325 = vmatprep.subr.bf16.mxu0 %v5168
    %8326 = vmatpush1.bf16.msra.mxu0 %v5167
    %8327 = vmatprep.subr.bf16.mxu0 %v5288
    %8328 = vmatpush2.bf16.msra.mxu0 %v5287
    %8329 = vmatprep.subr.bf16.mxu0 %v5280
    %8330 = vmatpush2.bf16.msra.mxu0 %v5279
    %8331 = vmatprep.subr.bf16.mxu0 %v5272
    %8332 = vmatpush2.bf16.msra.mxu0 %v5271
    %8333 = vmatprep.subr.bf16.mxu0 %v5264
    %8334 = vmatpush2.bf16.msra.mxu0 %v5263
    %8335 = vmatprep.subr.bf16.mxu0 %v5256
    %8336 = vmatpush2.bf16.msra.mxu0 %v5255
    %8337 = vmatprep.subr.bf16.mxu0 %v5248
    %8338 = vmatpush2.bf16.msra.mxu0 %v5247
    %8339 = vmatprep.subr.bf16.mxu0 %v5240
    %8340 = vmatpush2.bf16.msra.mxu0 %v5239
    %8341 = vmatprep.subr.bf16.mxu0 %v5232
    %8342 = vmatpush2.bf16.msra.mxu0 %v5231
    %8343 = vmatprep.mubr.bf16.mxu0 %v1231
    %8344 = vmatmul.mubr.bf16.gmra.mxu0 %v1229
    %v8345 = vpop.f32.mrf.mxu0
    %v8346 = vadd.f32 %v8305, %v8345
    %v8347 = vpop.f32.mrf.mxu0
    %v8348 = vadd.f32 %v8307, %v8347
    %v8349 = vpop.f32.mrf.mxu0
    %v8350 = vpop.f32.mrf.mxu0
    %8351 = vdwg.mxu0
    %8352 = vmatprep.subr.bf16.mxu0 %v5352
    %8353 = vmatpush1.bf16.msra.mxu0 %v5351
    %8354 = vmatprep.subr.bf16.mxu0 %v5344
    %8355 = vmatpush1.bf16.msra.mxu0 %v5343
    %8356 = vmatprep.subr.bf16.mxu0 %v5336
    %8357 = vmatpush1.bf16.msra.mxu0 %v5335
    %8358 = vmatprep.subr.bf16.mxu0 %v5328
    %8359 = vmatpush1.bf16.msra.mxu0 %v5327
    %8360 = vmatprep.subr.bf16.mxu0 %v5320
    %8361 = vmatpush1.bf16.msra.mxu0 %v5319
    %8362 = vmatprep.subr.bf16.mxu0 %v5312
    %8363 = vmatpush1.bf16.msra.mxu0 %v5311
    %8364 = vmatprep.subr.bf16.mxu0 %v5304
    %8365 = vmatpush1.bf16.msra.mxu0 %v5303
    %8366 = vmatprep.subr.bf16.mxu0 %v5296
    %8367 = vmatpush1.bf16.msra.mxu0 %v5295
    %8368 = vmatprep.subr.bf16.mxu0 %v5416
    %8369 = vmatpush2.bf16.msra.mxu0 %v5415
    %8370 = vmatprep.subr.bf16.mxu0 %v5408
    %8371 = vmatpush2.bf16.msra.mxu0 %v5407
    %8372 = vmatprep.subr.bf16.mxu0 %v5400
    %8373 = vmatpush2.bf16.msra.mxu0 %v5399
    %8374 = vmatprep.subr.bf16.mxu0 %v5392
    %8375 = vmatpush2.bf16.msra.mxu0 %v5391
    %8376 = vmatprep.subr.bf16.mxu0 %v5384
    %8377 = vmatpush2.bf16.msra.mxu0 %v5383
    %8378 = vmatprep.subr.bf16.mxu0 %v5376
    %8379 = vmatpush2.bf16.msra.mxu0 %v5375
    %8380 = vmatprep.subr.bf16.mxu0 %v5368
    %8381 = vmatpush2.bf16.msra.mxu0 %v5367
    %8382 = vmatprep.subr.bf16.mxu0 %v5360
    %8383 = vmatpush2.bf16.msra.mxu0 %v5359
    %8384 = vmatprep.mubr.bf16.mxu0 %v1269
    %8385 = vmatmul.mubr.bf16.gmra.mxu0 %v1255
    %v8386 = vpop.f32.mrf.mxu0
    %v8387 = vadd.f32 %v8346, %v8386
    %v8388 = vpop.f32.mrf.mxu0
    %v8389 = vadd.f32 %v8348, %v8388
    %v8390 = vpop.f32.mrf.mxu0
    %v8391 = vpop.f32.mrf.mxu0
    %8392 = vdwg.mxu0
    %8393 = vmatprep.subr.bf16.mxu0 %v5480
    %8394 = vmatpush1.bf16.msra.mxu0 %v5479
    %8395 = vmatprep.subr.bf16.mxu0 %v5472
    %8396 = vmatpush1.bf16.msra.mxu0 %v5471
    %8397 = vmatprep.subr.bf16.mxu0 %v5464
    %8398 = vmatpush1.bf16.msra.mxu0 %v5463
    %8399 = vmatprep.subr.bf16.mxu0 %v5456
    %8400 = vmatpush1.bf16.msra.mxu0 %v5455
    %8401 = vmatprep.subr.bf16.mxu0 %v5448
    %8402 = vmatpush1.bf16.msra.mxu0 %v5447
    %8403 = vmatprep.subr.bf16.mxu0 %v5440
    %8404 = vmatpush1.bf16.msra.mxu0 %v5439
    %8405 = vmatprep.subr.bf16.mxu0 %v5432
    %8406 = vmatpush1.bf16.msra.mxu0 %v5431
    %8407 = vmatprep.subr.bf16.mxu0 %v5424
    %8408 = vmatpush1.bf16.msra.mxu0 %v5423
    %8409 = vmatprep.subr.bf16.mxu0 %v5544
    %8410 = vmatpush2.bf16.msra.mxu0 %v5543
    %8411 = vmatprep.subr.bf16.mxu0 %v5536
    %8412 = vmatpush2.bf16.msra.mxu0 %v5535
    %8413 = vmatprep.subr.bf16.mxu0 %v5528
    %8414 = vmatpush2.bf16.msra.mxu0 %v5527
    %8415 = vmatprep.subr.bf16.mxu0 %v5520
    %8416 = vmatpush2.bf16.msra.mxu0 %v5519
    %8417 = vmatprep.subr.bf16.mxu0 %v5512
    %8418 = vmatpush2.bf16.msra.mxu0 %v5511
    %8419 = vmatprep.subr.bf16.mxu0 %v5504
    %8420 = vmatpush2.bf16.msra.mxu0 %v5503
    %8421 = vmatprep.subr.bf16.mxu0 %v5496
    %8422 = vmatpush2.bf16.msra.mxu0 %v5495
    %8423 = vmatprep.subr.bf16.mxu0 %v5488
    %8424 = vmatpush2.bf16.msra.mxu0 %v5487
    %8425 = vmatprep.mubr.bf16.mxu0 %v1279
    %8426 = vmatmul.mubr.bf16.gmra.mxu0 %v1277
    %v8427 = vpop.f32.mrf.mxu0
    %v8428 = vadd.f32 %v8387, %v8427
    %v8429 = vpop.f32.mrf.mxu0
    %v8430 = vadd.f32 %v8389, %v8429
    %v8431 = vpop.f32.mrf.mxu0
    %v8432 = vpop.f32.mrf.mxu0
    %8433 = vdwg.mxu0
    %8434 = vmatprep.subr.bf16.mxu0 %v5608
    %8435 = vmatpush1.bf16.msra.mxu0 %v5607
    %8436 = vmatprep.subr.bf16.mxu0 %v5600
    %8437 = vmatpush1.bf16.msra.mxu0 %v5599
    %8438 = vmatprep.subr.bf16.mxu0 %v5592
    %8439 = vmatpush1.bf16.msra.mxu0 %v5591
    %8440 = vmatprep.subr.bf16.mxu0 %v5584
    %8441 = vmatpush1.bf16.msra.mxu0 %v5583
    %8442 = vmatprep.subr.bf16.mxu0 %v5576
    %8443 = vmatpush1.bf16.msra.mxu0 %v5575
    %8444 = vmatprep.subr.bf16.mxu0 %v5568
    %8445 = vmatpush1.bf16.msra.mxu0 %v5567
    %8446 = vmatprep.subr.bf16.mxu0 %v5560
    %8447 = vmatpush1.bf16.msra.mxu0 %v5559
    %8448 = vmatprep.subr.bf16.mxu0 %v5552
    %8449 = vmatpush1.bf16.msra.mxu0 %v5551
    %8450 = vmatprep.subr.bf16.mxu0 %v5672
    %8451 = vmatpush2.bf16.msra.mxu0 %v5671
    %8452 = vmatprep.subr.bf16.mxu0 %v5664
    %8453 = vmatpush2.bf16.msra.mxu0 %v5663
    %8454 = vmatprep.subr.bf16.mxu0 %v5656
    %8455 = vmatpush2.bf16.msra.mxu0 %v5655
    %8456 = vmatprep.subr.bf16.mxu0 %v5648
    %8457 = vmatpush2.bf16.msra.mxu0 %v5647
    %8458 = vmatprep.subr.bf16.mxu0 %v5640
    %8459 = vmatpush2.bf16.msra.mxu0 %v5639
    %8460 = vmatprep.subr.bf16.mxu0 %v5632
    %8461 = vmatpush2.bf16.msra.mxu0 %v5631
    %8462 = vmatprep.subr.bf16.mxu0 %v5624
    %8463 = vmatpush2.bf16.msra.mxu0 %v5623
    %8464 = vmatprep.subr.bf16.mxu0 %v5616
    %8465 = vmatpush2.bf16.msra.mxu0 %v5615
    %8466 = vmatprep.mubr.bf16.mxu0 %v1276
    %8467 = vmatmul.mubr.bf16.gmra.mxu0 %v1262
    %v8468 = vpop.f32.mrf.mxu0
    %v8469 = vadd.f32 %v8428, %v8468
    %v8470 = vpop.f32.mrf.mxu0
    %v8471 = vadd.f32 %v8430, %v8470
    %v8472 = vpop.f32.mrf.mxu0
    %v8473 = vpop.f32.mrf.mxu0
    %8474 = vdwg.mxu0
    %8475 = vmatprep.subr.bf16.mxu0 %v5736
    %8476 = vmatpush1.bf16.msra.mxu0 %v5735
    %8477 = vmatprep.subr.bf16.mxu0 %v5728
    %8478 = vmatpush1.bf16.msra.mxu0 %v5727
    %8479 = vmatprep.subr.bf16.mxu0 %v5720
    %8480 = vmatpush1.bf16.msra.mxu0 %v5719
    %8481 = vmatprep.subr.bf16.mxu0 %v5712
    %8482 = vmatpush1.bf16.msra.mxu0 %v5711
    %8483 = vmatprep.subr.bf16.mxu0 %v5704
    %8484 = vmatpush1.bf16.msra.mxu0 %v5703
    %8485 = vmatprep.subr.bf16.mxu0 %v5696
    %8486 = vmatpush1.bf16.msra.mxu0 %v5695
    %8487 = vmatprep.subr.bf16.mxu0 %v5688
    %8488 = vmatpush1.bf16.msra.mxu0 %v5687
    %8489 = vmatprep.subr.bf16.mxu0 %v5680
    %8490 = vmatpush1.bf16.msra.mxu0 %v5679
    %8491 = vmatprep.subr.bf16.mxu0 %v5800
    %8492 = vmatpush2.bf16.msra.mxu0 %v5799
    %8493 = vmatprep.subr.bf16.mxu0 %v5792
    %8494 = vmatpush2.bf16.msra.mxu0 %v5791
    %8495 = vmatprep.subr.bf16.mxu0 %v5784
    %8496 = vmatpush2.bf16.msra.mxu0 %v5783
    %8497 = vmatprep.subr.bf16.mxu0 %v5776
    %8498 = vmatpush2.bf16.msra.mxu0 %v5775
    %8499 = vmatprep.subr.bf16.mxu0 %v5768
    %8500 = vmatpush2.bf16.msra.mxu0 %v5767
    %8501 = vmatprep.subr.bf16.mxu0 %v5760
    %8502 = vmatpush2.bf16.msra.mxu0 %v5759
    %8503 = vmatprep.subr.bf16.mxu0 %v5752
    %8504 = vmatpush2.bf16.msra.mxu0 %v5751
    %8505 = vmatprep.subr.bf16.mxu0 %v5744
    %8506 = vmatpush2.bf16.msra.mxu0 %v5743
    %8507 = vmatprep.mubr.bf16.mxu0 %v1280
    %8508 = vmatmul.mubr.bf16.gmra.mxu0 %v1278
    %v8509 = vpop.f32.mrf.mxu0
    %v8510 = vadd.f32 %v8469, %v8509
    %v8511 = vpop.f32.mrf.mxu0
    %v8512 = vadd.f32 %v8471, %v8511
    %v8513 = vpop.f32.mrf.mxu0
    %v8514 = vpop.f32.mrf.mxu0
    %8515 = vdwg.mxu0
    %8516 = vmatprep.subr.bf16.mxu0 %v5864
    %8517 = vmatpush1.bf16.msra.mxu0 %v5863
    %8518 = vmatprep.subr.bf16.mxu0 %v5856
    %8519 = vmatpush1.bf16.msra.mxu0 %v5855
    %8520 = vmatprep.subr.bf16.mxu0 %v5848
    %8521 = vmatpush1.bf16.msra.mxu0 %v5847
    %8522 = vmatprep.subr.bf16.mxu0 %v5840
    %8523 = vmatpush1.bf16.msra.mxu0 %v5839
    %8524 = vmatprep.subr.bf16.mxu0 %v5832
    %8525 = vmatpush1.bf16.msra.mxu0 %v5831
    %8526 = vmatprep.subr.bf16.mxu0 %v5824
    %8527 = vmatpush1.bf16.msra.mxu0 %v5823
    %8528 = vmatprep.subr.bf16.mxu0 %v5816
    %8529 = vmatpush1.bf16.msra.mxu0 %v5815
    %8530 = vmatprep.subr.bf16.mxu0 %v5808
    %8531 = vmatpush1.bf16.msra.mxu0 %v5807
    %8532 = vmatprep.subr.bf16.mxu0 %v5928
    %8533 = vmatpush2.bf16.msra.mxu0 %v5927
    %8534 = vmatprep.subr.bf16.mxu0 %v5920
    %8535 = vmatpush2.bf16.msra.mxu0 %v5919
    %8536 = vmatprep.subr.bf16.mxu0 %v5912
    %8537 = vmatpush2.bf16.msra.mxu0 %v5911
    %8538 = vmatprep.subr.bf16.mxu0 %v5904
    %8539 = vmatpush2.bf16.msra.mxu0 %v5903
    %8540 = vmatprep.subr.bf16.mxu0 %v5896
    %8541 = vmatpush2.bf16.msra.mxu0 %v5895
    %8542 = vmatprep.subr.bf16.mxu0 %v5888
    %8543 = vmatpush2.bf16.msra.mxu0 %v5887
    %8544 = vmatprep.subr.bf16.mxu0 %v5880
    %8545 = vmatpush2.bf16.msra.mxu0 %v5879
    %8546 = vmatprep.subr.bf16.mxu0 %v5872
    %8547 = vmatpush2.bf16.msra.mxu0 %v5871
    %8548 = vmatprep.mubr.bf16.mxu0 %v1302
    %8549 = vmatmul.mubr.bf16.gmra.mxu0 %v1295
    %v8550 = vpop.f32.mrf.mxu0
    %v8551 = vadd.f32 %v8510, %v8550
    %v8552 = vpop.f32.mrf.mxu0
    %v8553 = vadd.f32 %v8512, %v8552
    %v8554 = vpop.f32.mrf.mxu0
    %v8555 = vpop.f32.mrf.mxu0
    %8556 = vdwg.mxu0
    %vm8557 = vcmask 1041408
    %v8558 = vsel %vm8557, %v7444, 0.0
    %v8559 = vrot.slane %v8558, 4
    %v8560 = vadd.f32 %v8558, %v8559
    %v8561 = vrot.slane %v8560, 2
    %v8562 = vadd.f32 %v8560, %v8561
    %v8563 = vrot.slane %v8562, 1
    %v8564 = vadd.f32 %v8562, %v8563
    %v8565 = vsel %vm8557, %v7446, 0.0
    %v8566 = vrot.slane %v8565, 4
    %v8567 = vadd.f32 %v8565, %v8566
    %v8568 = vrot.slane %v8567, 2
    %v8569 = vadd.f32 %v8567, %v8568
    %v8570 = vrot.slane %v8569, 1
    %v8571 = vadd.f32 %v8569, %v8570
    %v8572 = vsel %vm8557, %v7813, 0.0
    %v8573 = vrot.slane %v8572, 4
    %v8574 = vadd.f32 %v8572, %v8573
    %v8575 = vrot.slane %v8574, 2
    %v8576 = vadd.f32 %v8574, %v8575
    %v8577 = vrot.slane %v8576, 1
    %v8578 = vadd.f32 %v8576, %v8577
    %v8579 = vsel %vm8557, %v7815, 0.0
    %v8580 = vrot.slane %v8579, 4
    %v8581 = vadd.f32 %v8579, %v8580
    %v8582 = vrot.slane %v8581, 2
    %v8583 = vadd.f32 %v8581, %v8582
    %v8584 = vrot.slane %v8583, 1
    %v8585 = vadd.f32 %v8583, %v8584
    %v8586 = vsel %vm8557, %v8182, 0.0
    %v8587 = vrot.slane %v8586, 4
    %v8588 = vadd.f32 %v8586, %v8587
    %v8589 = vrot.slane %v8588, 2
    %v8590 = vadd.f32 %v8588, %v8589
    %v8591 = vrot.slane %v8590, 1
    %v8592 = vadd.f32 %v8590, %v8591
    %v8593 = vsel %vm8557, %v8184, 0.0
    %v8594 = vrot.slane %v8593, 4
    %v8595 = vadd.f32 %v8593, %v8594
    %v8596 = vrot.slane %v8595, 2
    %v8597 = vadd.f32 %v8595, %v8596
    %v8598 = vrot.slane %v8597, 1
    %v8599 = vadd.f32 %v8597, %v8598
    %v8600 = vsel %vm8557, %v8551, 0.0
    %v8601 = vrot.slane %v8600, 4
    %v8602 = vadd.f32 %v8600, %v8601
    %v8603 = vrot.slane %v8602, 2
    %v8604 = vadd.f32 %v8602, %v8603
    %v8605 = vrot.slane %v8604, 1
    %v8606 = vadd.f32 %v8604, %v8605
    %v8607 = vsel %vm8557, %v8553, 0.0
    %v8608 = vrot.slane %v8607, 4
    %v8609 = vadd.f32 %v8607, %v8608
    %v8610 = vrot.slane %v8609, 2
    %v8611 = vadd.f32 %v8609, %v8610
    %v8612 = vrot.slane %v8611, 1
    %v8613 = vadd.f32 %v8611, %v8612
    %v8614 = vmul.f32 %v7444, %v7444
    %v8615 = vmul.f32 %v7446, %v7446
    %v8616 = vmul.f32 %v7813, %v7813
    %v8617 = vmul.f32 %v7815, %v7815
    %v8618 = vmul.f32 %v8182, %v8182
    %v8619 = vmul.f32 %v8184, %v8184
    %v8620 = vmul.f32 %v8551, %v8551
    %v8621 = vmul.f32 %v8553, %v8553
    %v8622 = vsel %vm8557, %v8614, 0.0
    %v8623 = vrot.slane %v8622, 4
    %v8624 = vadd.f32 %v8622, %v8623
    %v8625 = vrot.slane %v8624, 2
    %v8626 = vadd.f32 %v8624, %v8625
    %v8627 = vrot.slane %v8626, 1
    %v8628 = vadd.f32 %v8626, %v8627
    %v8629 = vsel %vm8557, %v8615, 0.0
    %v8630 = vrot.slane %v8629, 4
    %v8631 = vadd.f32 %v8629, %v8630
    %v8632 = vrot.slane %v8631, 2
    %v8633 = vadd.f32 %v8631, %v8632
    %v8634 = vrot.slane %v8633, 1
    %v8635 = vadd.f32 %v8633, %v8634
    %v8636 = vsel %vm8557, %v8616, 0.0
    %v8637 = vrot.slane %v8636, 4
    %v8638 = vadd.f32 %v8636, %v8637
    %v8639 = vrot.slane %v8638, 2
    %v8640 = vadd.f32 %v8638, %v8639
    %v8641 = vrot.slane %v8640, 1
    %v8642 = vadd.f32 %v8640, %v8641
    %v8643 = vsel %vm8557, %v8617, 0.0
    %v8644 = vrot.slane %v8643, 4
    %v8645 = vadd.f32 %v8643, %v8644
    %v8646 = vrot.slane %v8645, 2
    %v8647 = vadd.f32 %v8645, %v8646
    %v8648 = vrot.slane %v8647, 1
    %v8649 = vadd.f32 %v8647, %v8648
    %v8650 = vsel %vm8557, %v8618, 0.0
    %v8651 = vrot.slane %v8650, 4
    %v8652 = vadd.f32 %v8650, %v8651
    %v8653 = vrot.slane %v8652, 2
    %v8654 = vadd.f32 %v8652, %v8653
    %v8655 = vrot.slane %v8654, 1
    %v8656 = vadd.f32 %v8654, %v8655
    %v8657 = vsel %vm8557, %v8619, 0.0
    %v8658 = vrot.slane %v8657, 4
    %v8659 = vadd.f32 %v8657, %v8658
    %v8660 = vrot.slane %v8659, 2
    %v8661 = vadd.f32 %v8659, %v8660
    %v8662 = vrot.slane %v8661, 1
    %v8663 = vadd.f32 %v8661, %v8662
    %v8664 = vsel %vm8557, %v8620, 0.0
    %v8665 = vrot.slane %v8664, 4
    %v8666 = vadd.f32 %v8664, %v8665
    %v8667 = vrot.slane %v8666, 2
    %v8668 = vadd.f32 %v8666, %v8667
    %v8669 = vrot.slane %v8668, 1
    %v8670 = vadd.f32 %v8668, %v8669
    %v8671 = vsel %vm8557, %v8621, 0.0
    %v8672 = vrot.slane %v8671, 4
    %v8673 = vadd.f32 %v8671, %v8672
    %v8674 = vrot.slane %v8673, 2
    %v8675 = vadd.f32 %v8673, %v8674
    %v8676 = vrot.slane %v8675, 1
    %v8677 = vadd.f32 %v8675, %v8676
    %v8678 = vmul.f32 %v8564, 0.5
    %v8679 = vmul.f32 %v8571, 0.5
    %v8680 = vmul.f32 %v8578, 0.5
    %v8681 = vmul.f32 %v8585, 0.5
    %v8682 = vmul.f32 %v8592, 0.5
    %v8683 = vmul.f32 %v8599, 0.5
    %v8684 = vmul.f32 %v8606, 0.5
    %v8685 = vmul.f32 %v8613, 0.5
    %v8686 = vmul.f32 %v8628, 0.5
    %v8687 = vmul.f32 %v8635, 0.5
    %v8688 = vmul.f32 %v8642, 0.5
    %v8689 = vmul.f32 %v8649, 0.5
    %v8690 = vmul.f32 %v8656, 0.5
    %v8691 = vmul.f32 %v8663, 0.5
    %v8692 = vmul.f32 %v8670, 0.5
    %v8693 = vmul.f32 %v8677, 0.5
    %v8694 = vmul.f32 %v8678, %v8678
    %v8695 = vmul.f32 %v8679, %v8679
    %v8696 = vmul.f32 %v8680, %v8680
    %v8697 = vmul.f32 %v8681, %v8681
    %v8698 = vmul.f32 %v8682, %v8682
    %v8699 = vmul.f32 %v8683, %v8683
    %v8700 = vmul.f32 %v8684, %v8684
    %v8701 = vmul.f32 %v8685, %v8685
    %v8702 = vsub.f32 %v8686, %v8694
    %v8703 = vsub.f32 %v8687, %v8695
    %v8704 = vsub.f32 %v8688, %v8696
    %v8705 = vsub.f32 %v8689, %v8697
    %v8706 = vsub.f32 %v8690, %v8698
    %v8707 = vsub.f32 %v8691, %v8699
    %v8708 = vsub.f32 %v8692, %v8700
    %v8709 = vsub.f32 %v8693, %v8701
    %v8710 = vadd.f32 %v8702, 1e-05
    %v8711 = vadd.f32 %v8703, 1e-05
    %v8712 = vadd.f32 %v8704, 1e-05
    %v8713 = vadd.f32 %v8705, 1e-05
    %v8714 = vadd.f32 %v8706, 1e-05
    %v8715 = vadd.f32 %v8707, 1e-05
    %v8716 = vadd.f32 %v8708, 1e-05
    %v8717 = vadd.f32 %v8709, 1e-05
    %v8718 = vrsqrt.pop %v8710
    %v8719 = vrsqrt.pop %v8711
    %v8720 = vrsqrt.pop %v8712
    %v8721 = vrsqrt.pop %v8713
    %v8722 = vrsqrt.pop %v8714
    %v8723 = vrsqrt.pop %v8715
    %v8724 = vrsqrt.pop %v8716
    %v8725 = vrsqrt.pop %v8717
    %v8726 = vld [vmem:[%s2] sm:$0xff]
    %v8735 = vcombine.low %v8718, %v8719
    %v8736 = vcombine.low %v8720, %v8721
    %v8737 = vcombine.low %v8722, %v8723
    %v8738 = vcombine.low %v8724, %v8725
    %v8740 = vunpack.c.l.s4 1966171168
    %v8741 = vunpack.c.0.s8 %v8740
    %v8742 = vlaneseq
    %v8743 = vshrl.u32 %v8742, 7
    %v8744 = vsub.s32 %v8741, %v8743
    %v8745 = vrot.slane %v8735, %v8744
    %v8747 = vunpack.c.l.s4 1966171168
    %v8748 = vunpack.c.0.s8 %v8747
    %v8749 = vlaneseq
    %v8750 = vshrl.u32 %v8749, 7
    %v8751 = vsub.s32 %v8748, %v8750
    %v8752 = vrot.slane %v8736, %v8751
    %v8754 = vunpack.c.l.s4 1966171168
    %v8755 = vunpack.c.0.s8 %v8754
    %v8756 = vlaneseq
    %v8757 = vshrl.u32 %v8756, 7
    %v8758 = vsub.s32 %v8755, %v8757
    %v8759 = vrot.slane %v8737, %v8758
    %v8761 = vunpack.c.l.s4 1966171168
    %v8762 = vunpack.c.0.s8 %v8761
    %v8763 = vlaneseq
    %v8764 = vshrl.u32 %v8763, 7
    %v8765 = vsub.s32 %v8762, %v8764
    %v8766 = vrot.slane %v8738, %v8765
    %v8767 = vcombine.low %v8745, %v8752
    %v8768 = vcombine.low %v8759, %v8766
    %v8770 = vunpack.c.l.s4 1966171168
    %v8771 = vunpack.c.0.s8 %v8770
    %v8772 = vlaneseq
    %v8773 = vshrl.u32 %v8772, 7
    %v8774 = vsub.s32 %v8771, %v8773
    %v8775 = vrot.slane %v8767, %v8774
    %v8777 = vunpack.c.l.s4 1966171168
    %v8778 = vunpack.c.0.s8 %v8777
    %v8779 = vlaneseq
    %v8780 = vshrl.u32 %v8779, 7
    %v8781 = vsub.s32 %v8778, %v8780
    %v8782 = vrot.slane %v8768, %v8781
    %v8783 = vcombine.low %v8775, %v8782
    %v8785 = vmul.f32 %v8726, %v8783
    %v8786 = vld [vmem:[%s3] sm:$0xff]
    %v8788 = vlaneseq
    %v8789 = vshrl.u32 %v8788, 7
    %v8790 = vsub.s32 0, %v8789
    %v8791 = vrot.slane %v8785, %v8790
    %v8792 = vlaneseq
    %v8793 = vshrl.u32 %v8792, 7
    %v8794 = vsub.s32 1, %v8793
    %v8795 = vrot.slane %v8785, %v8794
    %v8796 = vlaneseq
    %v8797 = vshrl.u32 %v8796, 7
    %v8798 = vsub.s32 2, %v8797
    %v8799 = vrot.slane %v8785, %v8798
    %v8800 = vlaneseq
    %v8801 = vshrl.u32 %v8800, 7
    %v8802 = vsub.s32 3, %v8801
    %v8803 = vrot.slane %v8785, %v8802
    %v8804 = vlaneseq
    %v8805 = vshrl.u32 %v8804, 7
    %v8806 = vsub.s32 4, %v8805
    %v8807 = vrot.slane %v8785, %v8806
    %v8808 = vlaneseq
    %v8809 = vshrl.u32 %v8808, 7
    %v8810 = vsub.s32 5, %v8809
    %v8811 = vrot.slane %v8785, %v8810
    %v8812 = vlaneseq
    %v8813 = vshrl.u32 %v8812, 7
    %v8814 = vsub.s32 6, %v8813
    %v8815 = vrot.slane %v8785, %v8814
    %v8816 = vlaneseq
    %v8817 = vshrl.u32 %v8816, 7
    %v8818 = vsub.s32 7, %v8817
    %v8819 = vrot.slane %v8785, %v8818
    %v8828 = vmul.f32 %v8678, %v8791
    %v8829 = vmul.f32 %v8679, %v8795
    %v8830 = vmul.f32 %v8680, %v8799
    %v8831 = vmul.f32 %v8681, %v8803
    %v8832 = vmul.f32 %v8682, %v8807
    %v8833 = vmul.f32 %v8683, %v8811
    %v8834 = vmul.f32 %v8684, %v8815
    %v8835 = vmul.f32 %v8685, %v8819
    %v8844 = vcombine.low %v8828, %v8829
    %v8845 = vcombine.low %v8830, %v8831
    %v8846 = vcombine.low %v8832, %v8833
    %v8847 = vcombine.low %v8834, %v8835
    %v8849 = vunpack.c.l.s4 1966171168
    %v8850 = vunpack.c.0.s8 %v8849
    %v8851 = vlaneseq
    %v8852 = vshrl.u32 %v8851, 7
    %v8853 = vsub.s32 %v8850, %v8852
    %v8854 = vrot.slane %v8844, %v8853
    %v8856 = vunpack.c.l.s4 1966171168
    %v8857 = vunpack.c.0.s8 %v8856
    %v8858 = vlaneseq
    %v8859 = vshrl.u32 %v8858, 7
    %v8860 = vsub.s32 %v8857, %v8859
    %v8861 = vrot.slane %v8845, %v8860
    %v8863 = vunpack.c.l.s4 1966171168
    %v8864 = vunpack.c.0.s8 %v8863
    %v8865 = vlaneseq
    %v8866 = vshrl.u32 %v8865, 7
    %v8867 = vsub.s32 %v8864, %v8866
    %v8868 = vrot.slane %v8846, %v8867
    %v8870 = vunpack.c.l.s4 1966171168
    %v8871 = vunpack.c.0.s8 %v8870
    %v8872 = vlaneseq
    %v8873 = vshrl.u32 %v8872, 7
    %v8874 = vsub.s32 %v8871, %v8873
    %v8875 = vrot.slane %v8847, %v8874
    %v8876 = vcombine.low %v8854, %v8861
    %v8877 = vcombine.low %v8868, %v8875
    %v8879 = vunpack.c.l.s4 1966171168
    %v8880 = vunpack.c.0.s8 %v8879
    %v8881 = vlaneseq
    %v8882 = vshrl.u32 %v8881, 7
    %v8883 = vsub.s32 %v8880, %v8882
    %v8884 = vrot.slane %v8876, %v8883
    %v8886 = vunpack.c.l.s4 1966171168
    %v8887 = vunpack.c.0.s8 %v8886
    %v8888 = vlaneseq
    %v8889 = vshrl.u32 %v8888, 7
    %v8890 = vsub.s32 %v8887, %v8889
    %v8891 = vrot.slane %v8877, %v8890
    %v8892 = vcombine.low %v8884, %v8891
    %v8894 = vsub.f32 %v8786, %v8892
    %v8895 = vmul.f32 %v7444, %v8791
    %v8896 = vmul.f32 %v7446, %v8795
    %v8897 = vmul.f32 %v7813, %v8799
    %v8898 = vmul.f32 %v7815, %v8803
    %v8899 = vmul.f32 %v8182, %v8807
    %v8900 = vmul.f32 %v8184, %v8811
    %v8901 = vmul.f32 %v8551, %v8815
    %v8902 = vmul.f32 %v8553, %v8819
    %v8904 = vlaneseq
    %v8905 = vshrl.u32 %v8904, 7
    %v8906 = vsub.s32 0, %v8905
    %v8907 = vrot.slane %v8894, %v8906
    %v8908 = vlaneseq
    %v8909 = vshrl.u32 %v8908, 7
    %v8910 = vsub.s32 1, %v8909
    %v8911 = vrot.slane %v8894, %v8910
    %v8912 = vlaneseq
    %v8913 = vshrl.u32 %v8912, 7
    %v8914 = vsub.s32 2, %v8913
    %v8915 = vrot.slane %v8894, %v8914
    %v8916 = vlaneseq
    %v8917 = vshrl.u32 %v8916, 7
    %v8918 = vsub.s32 3, %v8917
    %v8919 = vrot.slane %v8894, %v8918
    %v8920 = vlaneseq
    %v8921 = vshrl.u32 %v8920, 7
    %v8922 = vsub.s32 4, %v8921
    %v8923 = vrot.slane %v8894, %v8922
    %v8924 = vlaneseq
    %v8925 = vshrl.u32 %v8924, 7
    %v8926 = vsub.s32 5, %v8925
    %v8927 = vrot.slane %v8894, %v8926
    %v8928 = vlaneseq
    %v8929 = vshrl.u32 %v8928, 7
    %v8930 = vsub.s32 6, %v8929
    %v8931 = vrot.slane %v8894, %v8930
    %v8932 = vlaneseq
    %v8933 = vshrl.u32 %v8932, 7
    %v8934 = vsub.s32 7, %v8933
    %v8935 = vrot.slane %v8894, %v8934
    %v8944 = vadd.f32 %v8895, %v8907
    %v8945 = vadd.f32 %v8896, %v8911
    %v8946 = vadd.f32 %v8897, %v8915
    %v8947 = vadd.f32 %v8898, %v8919
    %v8948 = vadd.f32 %v8899, %v8923
    %v8949 = vadd.f32 %v8900, %v8927
    %v8950 = vadd.f32 %v8901, %v8931
    %v8951 = vadd.f32 %v8902, %v8935
    %vm8952 = vcmp.gt.f32.partialorder %v8944, 0.0
    %vm8953 = vcmp.gt.f32.partialorder %v8945, 0.0
    %vm8954 = vcmp.gt.f32.partialorder %v8946, 0.0
    %vm8955 = vcmp.gt.f32.partialorder %v8947, 0.0
    %vm8956 = vcmp.gt.f32.partialorder %v8948, 0.0
    %vm8957 = vcmp.gt.f32.partialorder %v8949, 0.0
    %vm8958 = vcmp.gt.f32.partialorder %v8950, 0.0
    %vm8959 = vcmp.gt.f32.partialorder %v8951, 0.0
    %v8960 = vmul.f32 %v8944, 0.2
    %v8961 = vmul.f32 %v8945, 0.2
    %v8962 = vmul.f32 %v8946, 0.2
    %v8963 = vmul.f32 %v8947, 0.2
    %v8964 = vmul.f32 %v8948, 0.2
    %v8965 = vmul.f32 %v8949, 0.2
    %v8966 = vmul.f32 %v8950, 0.2
    %v8967 = vmul.f32 %v8951, 0.2
    %v8968 = vsel %vm8952, %v8944, %v8960
    %v8969 = vsel %vm8953, %v8945, %v8961
    %v8970 = vsel %vm8954, %v8946, %v8962
    %v8971 = vsel %vm8955, %v8947, %v8963
    %v8972 = vsel %vm8956, %v8948, %v8964
    %v8973 = vsel %vm8957, %v8949, %v8965
    %v8974 = vsel %vm8958, %v8950, %v8966
    %v8975 = vsel %vm8959, %v8951, %v8967
    %v8976 = vpack.c.bf16 %v8968, %v8968
    %v8977 = vpack.c.bf16 %v8969, %v8969
    %v8978 = vpack.c.bf16 %v8970, %v8970
    %v8979 = vpack.c.bf16 %v8971, %v8971
    %v8980 = vpack.c.bf16 %v8972, %v8972
    %v8981 = vpack.c.bf16 %v8973, %v8973
    %v8982 = vpack.c.bf16 %v8974, %v8974
    %v8983 = vpack.c.bf16 %v8975, %v8975
    %v8984 = vld [vmem:[%s4] sm:$0xf]
    %v8985 = vld [vmem:[%s4 + $0x4] sm:$0xf]
    %v8986 = vld [vmem:[%s4 + $0x8] sm:$0xf]
    %v8987 = vld [vmem:[%s4 + $0xc] sm:$0xf]
    %v8988 = vld [vmem:[%s4 + $0x10] sm:$0xf]
    %v8989 = vld [vmem:[%s4 + $0x14] sm:$0xf]
    %v8990 = vld [vmem:[%s4 + $0x18] sm:$0xf]
    %v8991 = vld [vmem:[%s4 + $0x1c] sm:$0xf]
    %v8992 = vld [vmem:[%s4 + $0x20] sm:$0xf]
    %v8993 = vld [vmem:[%s4 + $0x24] sm:$0xf]
    %v8994 = vld [vmem:[%s4 + $0x28] sm:$0xf]
    %v8995 = vld [vmem:[%s4 + $0x2c] sm:$0xf]
    %v8996 = vld [vmem:[%s4 + $0x30] sm:$0xf]
    %v8997 = vld [vmem:[%s4 + $0x34] sm:$0xf]
    %v8998 = vld [vmem:[%s4 + $0x38] sm:$0xf]
    %v8999 = vld [vmem:[%s4 + $0x3c] sm:$0xf]
    %v9000 = vld [vmem:[%s4 + $0x40] sm:$0xf]
    %v9001 = vld [vmem:[%s4 + $0x44] sm:$0xf]
    %v9002 = vld [vmem:[%s4 + $0x48] sm:$0xf]
    %v9003 = vld [vmem:[%s4 + $0x4c] sm:$0xf]
    %v9004 = vld [vmem:[%s4 + $0x50] sm:$0xf]
    %v9005 = vld [vmem:[%s4 + $0x54] sm:$0xf]
    %v9006 = vld [vmem:[%s4 + $0x58] sm:$0xf]
    %v9007 = vld [vmem:[%s4 + $0x5c] sm:$0xf]
    %v9008 = vld [vmem:[%s4 + $0x60] sm:$0xf]
    %v9009 = vld [vmem:[%s4 + $0x64] sm:$0xf]
    %v9010 = vld [vmem:[%s4 + $0x68] sm:$0xf]
    %v9011 = vld [vmem:[%s4 + $0x6c] sm:$0xf]
    %v9012 = vld [vmem:[%s4 + $0x70] sm:$0xf]
    %v9013 = vld [vmem:[%s4 + $0x74] sm:$0xf]
    %v9014 = vld [vmem:[%s4 + $0x78] sm:$0xf]
    %v9015 = vld [vmem:[%s4 + $0x7c] sm:$0xf]
    %v9016 = vld [vmem:[%s4 + $0x80] sm:$0xf]
    %v9017 = vld [vmem:[%s4 + $0x84] sm:$0xf]
    %v9018 = vld [vmem:[%s4 + $0x88] sm:$0xf]
    %v9019 = vld [vmem:[%s4 + $0x8c] sm:$0xf]
    %v9020 = vld [vmem:[%s4 + $0x90] sm:$0xf]
    %v9021 = vld [vmem:[%s4 + $0x94] sm:$0xf]
    %v9022 = vld [vmem:[%s4 + $0x98] sm:$0xf]
    %v9023 = vld [vmem:[%s4 + $0x9c] sm:$0xf]
    %v9024 = vld [vmem:[%s4 + $0xa0] sm:$0xf]
    %v9025 = vld [vmem:[%s4 + $0xa4] sm:$0xf]
    %v9026 = vld [vmem:[%s4 + $0xa8] sm:$0xf]
    %v9027 = vld [vmem:[%s4 + $0xac] sm:$0xf]
    %v9028 = vld [vmem:[%s4 + $0xb0] sm:$0xf]
    %v9029 = vld [vmem:[%s4 + $0xb4] sm:$0xf]
    %v9030 = vld [vmem:[%s4 + $0xb8] sm:$0xf]
    %v9031 = vld [vmem:[%s4 + $0xbc] sm:$0xf]
    %v9032 = vld [vmem:[%s4 + $0xc0] sm:$0xf]
    %v9033 = vld [vmem:[%s4 + $0xc4] sm:$0xf]
    %v9034 = vld [vmem:[%s4 + $0xc8] sm:$0xf]
    %v9035 = vld [vmem:[%s4 + $0xcc] sm:$0xf]
    %v9036 = vld [vmem:[%s4 + $0xd0] sm:$0xf]
    %v9037 = vld [vmem:[%s4 + $0xd4] sm:$0xf]
    %v9038 = vld [vmem:[%s4 + $0xd8] sm:$0xf]
    %v9039 = vld [vmem:[%s4 + $0xdc] sm:$0xf]
    %v9040 = vld [vmem:[%s4 + $0xe0] sm:$0xf]
    %v9041 = vld [vmem:[%s4 + $0xe4] sm:$0xf]
    %v9042 = vld [vmem:[%s4 + $0xe8] sm:$0xf]
    %v9043 = vld [vmem:[%s4 + $0xec] sm:$0xf]
    %v9044 = vld [vmem:[%s4 + $0xf0] sm:$0xf]
    %v9045 = vld [vmem:[%s4 + $0xf4] sm:$0xf]
    %v9046 = vld [vmem:[%s4 + $0xf8] sm:$0xf]
    %v9047 = vld [vmem:[%s4 + $0xfc] sm:$0xf]
    %v9048 = vld [vmem:[%s4 + $0x100] sm:$0xf]
    %v9049 = vld [vmem:[%s4 + $0x104] sm:$0xf]
    %v9050 = vld [vmem:[%s4 + $0x108] sm:$0xf]
    %v9051 = vld [vmem:[%s4 + $0x10c] sm:$0xf]
    %v9052 = vld [vmem:[%s4 + $0x110] sm:$0xf]
    %v9053 = vld [vmem:[%s4 + $0x114] sm:$0xf]
    %v9054 = vld [vmem:[%s4 + $0x118] sm:$0xf]
    %v9055 = vld [vmem:[%s4 + $0x11c] sm:$0xf]
    %v9056 = vld [vmem:[%s4 + $0x120] sm:$0xf]
    %v9057 = vld [vmem:[%s4 + $0x124] sm:$0xf]
    %v9058 = vld [vmem:[%s4 + $0x128] sm:$0xf]
    %v9059 = vld [vmem:[%s4 + $0x12c] sm:$0xf]
    %v9060 = vld [vmem:[%s4 + $0x130] sm:$0xf]
    %v9061 = vld [vmem:[%s4 + $0x134] sm:$0xf]
    %v9062 = vld [vmem:[%s4 + $0x138] sm:$0xf]
    %v9063 = vld [vmem:[%s4 + $0x13c] sm:$0xf]
    %v9064 = vld [vmem:[%s4 + $0x140] sm:$0xf]
    %v9065 = vld [vmem:[%s4 + $0x144] sm:$0xf]
    %v9066 = vld [vmem:[%s4 + $0x148] sm:$0xf]
    %v9067 = vld [vmem:[%s4 + $0x14c] sm:$0xf]
    %v9068 = vld [vmem:[%s4 + $0x150] sm:$0xf]
    %v9069 = vld [vmem:[%s4 + $0x154] sm:$0xf]
    %v9070 = vld [vmem:[%s4 + $0x158] sm:$0xf]
    %v9071 = vld [vmem:[%s4 + $0x15c] sm:$0xf]
    %v9072 = vld [vmem:[%s4 + $0x160] sm:$0xf]
    %v9073 = vld [vmem:[%s4 + $0x164] sm:$0xf]
    %v9074 = vld [vmem:[%s4 + $0x168] sm:$0xf]
    %v9075 = vld [vmem:[%s4 + $0x16c] sm:$0xf]
    %v9076 = vld [vmem:[%s4 + $0x170] sm:$0xf]
    %v9077 = vld [vmem:[%s4 + $0x174] sm:$0xf]
    %v9078 = vld [vmem:[%s4 + $0x178] sm:$0xf]
    %v9079 = vld [vmem:[%s4 + $0x17c] sm:$0xf]
    %v9080 = vld [vmem:[%s4 + $0x180] sm:$0xf]
    %v9081 = vld [vmem:[%s4 + $0x184] sm:$0xf]
    %v9082 = vld [vmem:[%s4 + $0x188] sm:$0xf]
    %v9083 = vld [vmem:[%s4 + $0x18c] sm:$0xf]
    %v9084 = vld [vmem:[%s4 + $0x190] sm:$0xf]
    %v9085 = vld [vmem:[%s4 + $0x194] sm:$0xf]
    %v9086 = vld [vmem:[%s4 + $0x198] sm:$0xf]
    %v9087 = vld [vmem:[%s4 + $0x19c] sm:$0xf]
    %v9088 = vld [vmem:[%s4 + $0x1a0] sm:$0xf]
    %v9089 = vld [vmem:[%s4 + $0x1a4] sm:$0xf]
    %v9090 = vld [vmem:[%s4 + $0x1a8] sm:$0xf]
    %v9091 = vld [vmem:[%s4 + $0x1ac] sm:$0xf]
    %v9092 = vld [vmem:[%s4 + $0x1b0] sm:$0xf]
    %v9093 = vld [vmem:[%s4 + $0x1b4] sm:$0xf]
    %v9094 = vld [vmem:[%s4 + $0x1b8] sm:$0xf]
    %v9095 = vld [vmem:[%s4 + $0x1bc] sm:$0xf]
    %v9096 = vld [vmem:[%s4 + $0x1c0] sm:$0xf]
    %v9097 = vld [vmem:[%s4 + $0x1c4] sm:$0xf]
    %v9098 = vld [vmem:[%s4 + $0x1c8] sm:$0xf]
    %v9099 = vld [vmem:[%s4 + $0x1cc] sm:$0xf]
    %v9100 = vld [vmem:[%s4 + $0x1d0] sm:$0xf]
    %v9101 = vld [vmem:[%s4 + $0x1d4] sm:$0xf]
    %v9102 = vld [vmem:[%s4 + $0x1d8] sm:$0xf]
    %v9103 = vld [vmem:[%s4 + $0x1dc] sm:$0xf]
    %v9104 = vld [vmem:[%s4 + $0x1e0] sm:$0xf]
    %v9105 = vld [vmem:[%s4 + $0x1e4] sm:$0xf]
    %v9106 = vld [vmem:[%s4 + $0x1e8] sm:$0xf]
    %v9107 = vld [vmem:[%s4 + $0x1ec] sm:$0xf]
    %v9108 = vld [vmem:[%s4 + $0x1f0] sm:$0xf]
    %v9109 = vld [vmem:[%s4 + $0x1f4] sm:$0xf]
    %v9110 = vld [vmem:[%s4 + $0x1f8] sm:$0xf]
    %v9111 = vld [vmem:[%s4 + $0x1fc] sm:$0xf]
    %v9112 = vld [vmem:[%s5] sm:$0x1]
    %v9114 = vlaneseq
    %v9115 = vshrl.u32 %v9114, 7
    %v9116 = vsub.s32 0, %v9115
    %v9117 = vrot.slane %v9112, %v9116
    %v9247 = vunpack.c.l.b16 %v8984
    %v9248 = vunpack.c.l.b16 %v8985
    %v9249 = vunpack.c.l.b16 %v8986
    %v9250 = vunpack.c.l.b16 %v8987
    %v9251 = vunpack.c.l.b16 %v8988
    %v9252 = vunpack.c.l.b16 %v8989
    %v9253 = vunpack.c.l.b16 %v8990
    %v9254 = vunpack.c.l.b16 %v8991
    %v9255 = vunpack.c.l.b16 %v8992
    %v9256 = vunpack.c.l.b16 %v8993
    %v9257 = vunpack.c.l.b16 %v8994
    %v9258 = vunpack.c.l.b16 %v8995
    %v9259 = vunpack.c.l.b16 %v8996
    %v9260 = vunpack.c.l.b16 %v8997
    %v9261 = vunpack.c.l.b16 %v8998
    %v9262 = vunpack.c.l.b16 %v8999
    %v9263 = vunpack.c.l.b16 %v9000
    %v9264 = vunpack.c.l.b16 %v9001
    %v9265 = vunpack.c.l.b16 %v9002
    %v9266 = vunpack.c.l.b16 %v9003
    %v9267 = vunpack.c.l.b16 %v9004
    %v9268 = vunpack.c.l.b16 %v9005
    %v9269 = vunpack.c.l.b16 %v9006
    %v9270 = vunpack.c.l.b16 %v9007
    %v9271 = vunpack.c.l.b16 %v9008
    %v9272 = vunpack.c.l.b16 %v9009
    %v9273 = vunpack.c.l.b16 %v9010
    %v9274 = vunpack.c.l.b16 %v9011
    %v9275 = vunpack.c.l.b16 %v9012
    %v9276 = vunpack.c.l.b16 %v9013
    %v9277 = vunpack.c.l.b16 %v9014
    %v9278 = vunpack.c.l.b16 %v9015
    %v9279 = vunpack.c.l.b16 %v9016
    %v9280 = vunpack.c.l.b16 %v9017
    %v9281 = vunpack.c.l.b16 %v9018
    %v9282 = vunpack.c.l.b16 %v9019
    %v9283 = vunpack.c.l.b16 %v9020
    %v9284 = vunpack.c.l.b16 %v9021
    %v9285 = vunpack.c.l.b16 %v9022
    %v9286 = vunpack.c.l.b16 %v9023
    %v9287 = vunpack.c.l.b16 %v9024
    %v9288 = vunpack.c.l.b16 %v9025
    %v9289 = vunpack.c.l.b16 %v9026
    %v9290 = vunpack.c.l.b16 %v9027
    %v9291 = vunpack.c.l.b16 %v9028
    %v9292 = vunpack.c.l.b16 %v9029
    %v9293 = vunpack.c.l.b16 %v9030
    %v9294 = vunpack.c.l.b16 %v9031
    %v9295 = vunpack.c.l.b16 %v9032
    %v9296 = vunpack.c.l.b16 %v9033
    %v9297 = vunpack.c.l.b16 %v9034
    %v9298 = vunpack.c.l.b16 %v9035
    %v9299 = vunpack.c.l.b16 %v9036
    %v9300 = vunpack.c.l.b16 %v9037
    %v9301 = vunpack.c.l.b16 %v9038
    %v9302 = vunpack.c.l.b16 %v9039
    %v9303 = vunpack.c.l.b16 %v9040
    %v9304 = vunpack.c.l.b16 %v9041
    %v9305 = vunpack.c.l.b16 %v9042
    %v9306 = vunpack.c.l.b16 %v9043
    %v9307 = vunpack.c.l.b16 %v9044
    %v9308 = vunpack.c.l.b16 %v9045
    %v9309 = vunpack.c.l.b16 %v9046
    %v9310 = vunpack.c.l.b16 %v9047
    %v9311 = vunpack.c.l.b16 %v9048
    %v9312 = vunpack.c.l.b16 %v9049
    %v9313 = vunpack.c.l.b16 %v9050
    %v9314 = vunpack.c.l.b16 %v9051
    %v9315 = vunpack.c.l.b16 %v9052
    %v9316 = vunpack.c.l.b16 %v9053
    %v9317 = vunpack.c.l.b16 %v9054
    %v9318 = vunpack.c.l.b16 %v9055
    %v9319 = vunpack.c.l.b16 %v9056
    %v9320 = vunpack.c.l.b16 %v9057
    %v9321 = vunpack.c.l.b16 %v9058
    %v9322 = vunpack.c.l.b16 %v9059
    %v9323 = vunpack.c.l.b16 %v9060
    %v9324 = vunpack.c.l.b16 %v9061
    %v9325 = vunpack.c.l.b16 %v9062
    %v9326 = vunpack.c.l.b16 %v9063
    %v9327 = vunpack.c.l.b16 %v9064
    %v9328 = vunpack.c.l.b16 %v9065
    %v9329 = vunpack.c.l.b16 %v9066
    %v9330 = vunpack.c.l.b16 %v9067
    %v9331 = vunpack.c.l.b16 %v9068
    %v9332 = vunpack.c.l.b16 %v9069
    %v9333 = vunpack.c.l.b16 %v9070
    %v9334 = vunpack.c.l.b16 %v9071
    %v9335 = vunpack.c.l.b16 %v9072
    %v9336 = vunpack.c.l.b16 %v9073
    %v9337 = vunpack.c.l.b16 %v9074
    %v9338 = vunpack.c.l.b16 %v9075
    %v9339 = vunpack.c.l.b16 %v9076
    %v9340 = vunpack.c.l.b16 %v9077
    %v9341 = vunpack.c.l.b16 %v9078
    %v9342 = vunpack.c.l.b16 %v9079
    %v9343 = vunpack.c.l.b16 %v9080
    %v9344 = vunpack.c.l.b16 %v9081
    %v9345 = vunpack.c.l.b16 %v9082
    %v9346 = vunpack.c.l.b16 %v9083
    %v9347 = vunpack.c.l.b16 %v9084
    %v9348 = vunpack.c.l.b16 %v9085
    %v9349 = vunpack.c.l.b16 %v9086
    %v9350 = vunpack.c.l.b16 %v9087
    %v9351 = vunpack.c.l.b16 %v9088
    %v9352 = vunpack.c.l.b16 %v9089
    %v9353 = vunpack.c.l.b16 %v9090
    %v9354 = vunpack.c.l.b16 %v9091
    %v9355 = vunpack.c.l.b16 %v9092
    %v9356 = vunpack.c.l.b16 %v9093
    %v9357 = vunpack.c.l.b16 %v9094
    %v9358 = vunpack.c.l.b16 %v9095
    %v9359 = vunpack.c.l.b16 %v9096
    %v9360 = vunpack.c.l.b16 %v9097
    %v9361 = vunpack.c.l.b16 %v9098
    %v9362 = vunpack.c.l.b16 %v9099
    %v9363 = vunpack.c.l.b16 %v9100
    %v9364 = vunpack.c.l.b16 %v9101
    %v9365 = vunpack.c.l.b16 %v9102
    %v9366 = vunpack.c.l.b16 %v9103
    %v9367 = vunpack.c.l.b16 %v9104
    %v9368 = vunpack.c.l.b16 %v9105
    %v9369 = vunpack.c.l.b16 %v9106
    %v9370 = vunpack.c.l.b16 %v9107
    %v9371 = vunpack.c.l.b16 %v9108
    %v9372 = vunpack.c.l.b16 %v9109
    %v9373 = vunpack.c.l.b16 %v9110
    %v9374 = vunpack.c.l.b16 %v9111
    %v9375 = vpack.c.b16 %v9248, %v9247
    %v9376 = vpack.c.b16 %v9250, %v9249
    %v9377 = vpack.c.b16 %v9252, %v9251
    %v9378 = vpack.c.b16 %v9254, %v9253
    %v9379 = vpack.c.b16 %v9256, %v9255
    %v9380 = vpack.c.b16 %v9258, %v9257
    %v9381 = vpack.c.b16 %v9260, %v9259
    %v9382 = vpack.c.b16 %v9262, %v9261
    %v9383 = vpack.c.b16 %v9264, %v9263
    %v9384 = vpack.c.b16 %v9266, %v9265
    %v9385 = vpack.c.b16 %v9268, %v9267
    %v9386 = vpack.c.b16 %v9270, %v9269
    %v9387 = vpack.c.b16 %v9272, %v9271
    %v9388 = vpack.c.b16 %v9274, %v9273
    %v9389 = vpack.c.b16 %v9276, %v9275
    %v9390 = vpack.c.b16 %v9278, %v9277
    %v9391 = vpack.c.b16 %v9280, %v9279
    %v9392 = vpack.c.b16 %v9282, %v9281
    %v9393 = vpack.c.b16 %v9284, %v9283
    %v9394 = vpack.c.b16 %v9286, %v9285
    %v9395 = vpack.c.b16 %v9288, %v9287
    %v9396 = vpack.c.b16 %v9290, %v9289
    %v9397 = vpack.c.b16 %v9292, %v9291
    %v9398 = vpack.c.b16 %v9294, %v9293
    %v9399 = vpack.c.b16 %v9296, %v9295
    %v9400 = vpack.c.b16 %v9298, %v9297
    %v9401 = vpack.c.b16 %v9300, %v9299
    %v9402 = vpack.c.b16 %v9302, %v9301
    %v9403 = vpack.c.b16 %v9304, %v9303
    %v9404 = vpack.c.b16 %v9306, %v9305
    %v9405 = vpack.c.b16 %v9308, %v9307
    %v9406 = vpack.c.b16 %v9310, %v9309
    %v9407 = vpack.c.b16 %v9312, %v9311
    %v9408 = vpack.c.b16 %v9314, %v9313
    %v9409 = vpack.c.b16 %v9316, %v9315
    %v9410 = vpack.c.b16 %v9318, %v9317
    %v9411 = vpack.c.b16 %v9320, %v9319
    %v9412 = vpack.c.b16 %v9322, %v9321
    %v9413 = vpack.c.b16 %v9324, %v9323
    %v9414 = vpack.c.b16 %v9326, %v9325
    %v9415 = vpack.c.b16 %v9328, %v9327
    %v9416 = vpack.c.b16 %v9330, %v9329
    %v9417 = vpack.c.b16 %v9332, %v9331
    %v9418 = vpack.c.b16 %v9334, %v9333
    %v9419 = vpack.c.b16 %v9336, %v9335
    %v9420 = vpack.c.b16 %v9338, %v9337
    %v9421 = vpack.c.b16 %v9340, %v9339
    %v9422 = vpack.c.b16 %v9342, %v9341
    %v9423 = vpack.c.b16 %v9344, %v9343
    %v9424 = vpack.c.b16 %v9346, %v9345
    %v9425 = vpack.c.b16 %v9348, %v9347
    %v9426 = vpack.c.b16 %v9350, %v9349
    %v9427 = vpack.c.b16 %v9352, %v9351
    %v9428 = vpack.c.b16 %v9354, %v9353
    %v9429 = vpack.c.b16 %v9356, %v9355
    %v9430 = vpack.c.b16 %v9358, %v9357
    %v9431 = vpack.c.b16 %v9360, %v9359
    %v9432 = vpack.c.b16 %v9362, %v9361
    %v9433 = vpack.c.b16 %v9364, %v9363
    %v9434 = vpack.c.b16 %v9366, %v9365
    %v9435 = vpack.c.b16 %v9368, %v9367
    %v9436 = vpack.c.b16 %v9370, %v9369
    %v9437 = vpack.c.b16 %v9372, %v9371
    %v9438 = vpack.c.b16 %v9374, %v9373
    %9503 = vmatprep.subr.bf16.mxu0 0
    %9504 = vmatpush1.bf16.msra.mxu0 %v9382
    %9505 = vmatprep.subr.bf16.mxu0 0
    %9506 = vmatpush1.bf16.msra.mxu0 %v9381
    %9507 = vmatprep.subr.bf16.mxu0 0
    %9508 = vmatpush1.bf16.msra.mxu0 %v9380
    %9509 = vmatprep.subr.bf16.mxu0 0
    %9510 = vmatpush1.bf16.msra.mxu0 %v9379
    %9511 = vmatprep.subr.bf16.mxu0 0
    %9512 = vmatpush1.bf16.msra.mxu0 %v9378
    %9513 = vmatprep.subr.bf16.mxu0 0
    %9514 = vmatpush1.bf16.msra.mxu0 %v9377
    %9515 = vmatprep.subr.bf16.mxu0 0
    %9516 = vmatpush1.bf16.msra.mxu0 %v9376
    %9517 = vmatprep.subr.bf16.mxu0 0
    %9518 = vmatpush1.bf16.msra.mxu0 %v9375
    %9519 = vmatprep.subr.bf16.mxu0 0
    %9520 = vmatpush2.bf16.msra.mxu0 %v9390
    %9521 = vmatprep.subr.bf16.mxu0 0
    %9522 = vmatpush2.bf16.msra.mxu0 %v9389
    %9523 = vmatprep.subr.bf16.mxu0 0
    %9524 = vmatpush2.bf16.msra.mxu0 %v9388
    %9525 = vmatprep.subr.bf16.mxu0 0
    %9526 = vmatpush2.bf16.msra.mxu0 %v9387
    %9527 = vmatprep.subr.bf16.mxu0 0
    %9528 = vmatpush2.bf16.msra.mxu0 %v9386
    %9529 = vmatprep.subr.bf16.mxu0 0
    %9530 = vmatpush2.bf16.msra.mxu0 %v9385
    %9531 = vmatprep.subr.bf16.mxu0 0
    %9532 = vmatpush2.bf16.msra.mxu0 %v9384
    %9533 = vmatprep.subr.bf16.mxu0 0
    %9534 = vmatpush2.bf16.msra.mxu0 %v9383
    %9535 = vmatprep.mubr.bf16.mxu0 %v8977
    %9536 = vmatmul.mubr.bf16.gmra.mxu0 %v8976
    %v9537 = vpop.f32.mrf.mxu0
    %v9538 = vadd.f32 %v9117, %v9537
    %v9539 = vpop.f32.mrf.mxu0
    %v9540 = vpop.f32.mrf.mxu0
    %v9541 = vpop.f32.mrf.mxu0
    %9542 = vdwg.mxu0
    %9543 = vmatprep.subr.bf16.mxu0 0
    %9544 = vmatpush1.bf16.msra.mxu0 %v9398
    %9545 = vmatprep.subr.bf16.mxu0 0
    %9546 = vmatpush1.bf16.msra.mxu0 %v9397
    %9547 = vmatprep.subr.bf16.mxu0 0
    %9548 = vmatpush1.bf16.msra.mxu0 %v9396
    %9549 = vmatprep.subr.bf16.mxu0 0
    %9550 = vmatpush1.bf16.msra.mxu0 %v9395
    %9551 = vmatprep.subr.bf16.mxu0 0
    %9552 = vmatpush1.bf16.msra.mxu0 %v9394
    %9553 = vmatprep.subr.bf16.mxu0 0
    %9554 = vmatpush1.bf16.msra.mxu0 %v9393
    %9555 = vmatprep.subr.bf16.mxu0 0
    %9556 = vmatpush1.bf16.msra.mxu0 %v9392
    %9557 = vmatprep.subr.bf16.mxu0 0
    %9558 = vmatpush1.bf16.msra.mxu0 %v9391
    %9559 = vmatprep.subr.bf16.mxu0 0
    %9560 = vmatpush2.bf16.msra.mxu0 %v9406
    %9561 = vmatprep.subr.bf16.mxu0 0
    %9562 = vmatpush2.bf16.msra.mxu0 %v9405
    %9563 = vmatprep.subr.bf16.mxu0 0
    %9564 = vmatpush2.bf16.msra.mxu0 %v9404
    %9565 = vmatprep.subr.bf16.mxu0 0
    %9566 = vmatpush2.bf16.msra.mxu0 %v9403
    %9567 = vmatprep.subr.bf16.mxu0 0
    %9568 = vmatpush2.bf16.msra.mxu0 %v9402
    %9569 = vmatprep.subr.bf16.mxu0 0
    %9570 = vmatpush2.bf16.msra.mxu0 %v9401
    %9571 = vmatprep.subr.bf16.mxu0 0
    %9572 = vmatpush2.bf16.msra.mxu0 %v9400
    %9573 = vmatprep.subr.bf16.mxu0 0
    %9574 = vmatpush2.bf16.msra.mxu0 %v9399
    %9575 = vmatprep.mubr.bf16.mxu0 %v8979
    %9576 = vmatmul.mubr.bf16.gmra.mxu0 %v8978
    %v9577 = vpop.f32.mrf.mxu0
    %v9578 = vadd.f32 %v9538, %v9577
    %v9579 = vpop.f32.mrf.mxu0
    %v9580 = vpop.f32.mrf.mxu0
    %v9581 = vpop.f32.mrf.mxu0
    %9582 = vdwg.mxu0
    %9583 = vmatprep.subr.bf16.mxu0 0
    %9584 = vmatpush1.bf16.msra.mxu0 %v9414
    %9585 = vmatprep.subr.bf16.mxu0 0
    %9586 = vmatpush1.bf16.msra.mxu0 %v9413
    %9587 = vmatprep.subr.bf16.mxu0 0
    %9588 = vmatpush1.bf16.msra.mxu0 %v9412
    %9589 = vmatprep.subr.bf16.mxu0 0
    %9590 = vmatpush1.bf16.msra.mxu0 %v9411
    %9591 = vmatprep.subr.bf16.mxu0 0
    %9592 = vmatpush1.bf16.msra.mxu0 %v9410
    %9593 = vmatprep.subr.bf16.mxu0 0
    %9594 = vmatpush1.bf16.msra.mxu0 %v9409
    %9595 = vmatprep.subr.bf16.mxu0 0
    %9596 = vmatpush1.bf16.msra.mxu0 %v9408
    %9597 = vmatprep.subr.bf16.mxu0 0
    %9598 = vmatpush1.bf16.msra.mxu0 %v9407
    %9599 = vmatprep.subr.bf16.mxu0 0
    %9600 = vmatpush2.bf16.msra.mxu0 %v9422
    %9601 = vmatprep.subr.bf16.mxu0 0
    %9602 = vmatpush2.bf16.msra.mxu0 %v9421
    %9603 = vmatprep.subr.bf16.mxu0 0
    %9604 = vmatpush2.bf16.msra.mxu0 %v9420
    %9605 = vmatprep.subr.bf16.mxu0 0
    %9606 = vmatpush2.bf16.msra.mxu0 %v9419
    %9607 = vmatprep.subr.bf16.mxu0 0
    %9608 = vmatpush2.bf16.msra.mxu0 %v9418
    %9609 = vmatprep.subr.bf16.mxu0 0
    %9610 = vmatpush2.bf16.msra.mxu0 %v9417
    %9611 = vmatprep.subr.bf16.mxu0 0
    %9612 = vmatpush2.bf16.msra.mxu0 %v9416
    %9613 = vmatprep.subr.bf16.mxu0 0
    %9614 = vmatpush2.bf16.msra.mxu0 %v9415
    %9615 = vmatprep.mubr.bf16.mxu0 %v8981
    %9616 = vmatmul.mubr.bf16.gmra.mxu0 %v8980
    %v9617 = vpop.f32.mrf.mxu0
    %v9618 = vadd.f32 %v9578, %v9617
    %v9619 = vpop.f32.mrf.mxu0
    %v9620 = vpop.f32.mrf.mxu0
    %v9621 = vpop.f32.mrf.mxu0
    %9622 = vdwg.mxu0
    %9623 = vmatprep.subr.bf16.mxu0 0
    %9624 = vmatpush1.bf16.msra.mxu0 %v9430
    %9625 = vmatprep.subr.bf16.mxu0 0
    %9626 = vmatpush1.bf16.msra.mxu0 %v9429
    %9627 = vmatprep.subr.bf16.mxu0 0
    %9628 = vmatpush1.bf16.msra.mxu0 %v9428
    %9629 = vmatprep.subr.bf16.mxu0 0
    %9630 = vmatpush1.bf16.msra.mxu0 %v9427
    %9631 = vmatprep.subr.bf16.mxu0 0
    %9632 = vmatpush1.bf16.msra.mxu0 %v9426
    %9633 = vmatprep.subr.bf16.mxu0 0
    %9634 = vmatpush1.bf16.msra.mxu0 %v9425
    %9635 = vmatprep.subr.bf16.mxu0 0
    %9636 = vmatpush1.bf16.msra.mxu0 %v9424
    %9637 = vmatprep.subr.bf16.mxu0 0
    %9638 = vmatpush1.bf16.msra.mxu0 %v9423
    %9639 = vmatprep.subr.bf16.mxu0 0
    %9640 = vmatpush2.bf16.msra.mxu0 %v9438
    %9641 = vmatprep.subr.bf16.mxu0 0
    %9642 = vmatpush2.bf16.msra.mxu0 %v9437
    %9643 = vmatprep.subr.bf16.mxu0 0
    %9644 = vmatpush2.bf16.msra.mxu0 %v9436
    %9645 = vmatprep.subr.bf16.mxu0 0
    %9646 = vmatpush2.bf16.msra.mxu0 %v9435
    %9647 = vmatprep.subr.bf16.mxu0 0
    %9648 = vmatpush2.bf16.msra.mxu0 %v9434
    %9649 = vmatprep.subr.bf16.mxu0 0
    %9650 = vmatpush2.bf16.msra.mxu0 %v9433
    %9651 = vmatprep.subr.bf16.mxu0 0
    %9652 = vmatpush2.bf16.msra.mxu0 %v9432
    %9653 = vmatprep.subr.bf16.mxu0 0
    %9654 = vmatpush2.bf16.msra.mxu0 %v9431
    %9655 = vmatprep.mubr.bf16.mxu0 %v8983
    %9656 = vmatmul.mubr.bf16.gmra.mxu0 %v8982
    %v9657 = vpop.f32.mrf.mxu0
    %v9658 = vadd.f32 %v9618, %v9657
    %v9659 = vpop.f32.mrf.mxu0
    %v9660 = vpop.f32.mrf.mxu0
    %v9661 = vpop.f32.mrf.mxu0
    %9662 = vdwg.mxu0
    %9663 = vst [vmem:[#allocation2] sm:$0x3] %v9658
    // Predicated region
    $region26: #{discriminator_forward.7} parent=1 // pred_check
      _
    $region27: #{discriminator_forward.7} parent=1 // pred_check_branch
      %9665 = sbr.rel (0) target = $region29
    $region28: #{discriminator_forward.7} parent=1 // pred_region
      %s9667 = ssub.s32 32, 32
      %9668 = vsyncadd [#allocation3], %s9667
      %s9670 = sshll.u32 [#allocation2], 4
      %s9671 = int_to_ptr.vmem [resolvable:$true] %s9670
      %9673 = dma.vmem_to_hbm [thread:$0]  %s9671, 32, %s6, [#allocation3]
    $region29: #{discriminator_forward.7} parent=1 // pred_fallthru
      _
    // Predicated region
    $region30: #{discriminator_forward.7} parent=1 // pred_check
      _
    $region31: #{discriminator_forward.7} parent=1 // pred_check_branch
      %9675 = sbr.rel (0) target = $region33
    $region32: #{discriminator_forward.7} parent=1 // pred_region
      %9676 = dma.done [#allocation3], 32
    $region33: #{discriminator_forward.7} parent=1 // pred_fallthru
      _
    %9677 = vsyncpa [#allocation3], 1

</llo_original>
